<compile_context>
chip_gen: v5e
topology: v5e:2x2
jax: 0.10.0
libtpu: 0.0.40
codegen_flags: <defaults>
</compile_context>

<pallas_src>
import jax
import jax.numpy as jnp
from jax.experimental import pallas as pl
from jax.experimental.pallas import tpu as pltpu

EPS = 1e-5                      # nn.BatchNorm default eps
K = 5
PAD = 2
C_OUT = 16
KV = K * K * K                  # 125 real taps
KV_PAD = 128                    # contraction padded to 128 (tap 125 = bias, 126/127 = 0)
CENTER = (PAD * K + PAD) * K + PAD   # 62: tap (2,2,2) == x itself


def _round_up(n, m):
    return (n + m - 1) // m * m


@jax.jit
def step1_forward(x, conv_w, conv_b, bn_gamma, bn_beta):
    """x: (1, 1, D, H, W) float32 NCDHW.  Returns (16, 16, D, H, W)."""
    assert x.shape[0] == 1 and x.shape[1] == 1, "torch.cat(dim=0) add only broadcasts for N=1"
    _, _, D, H, W = x.shape
    Dp, Hp, Wp = D + 2 * PAD, H + 2 * PAD, W + 2 * PAD
    JOUT = _round_up(H * Wp, 128)                 # per-plane output columns (lane-dense)
    L = _round_up(JOUT + 2 * PAD * Wp + 2 * PAD, 128)   # padded plane-row length
    count = float(D * H * W)

    # ---------------- wrapper-side prep (O(input), tiny) ----------------
    xpad = jnp.pad(x[0, 0].astype(jnp.float32), ((PAD, PAD),) * 3)       # (Dp,Hp,Wp)
    xrows = jnp.pad(xpad.reshape(Dp, Hp * Wp), ((0, 0), (0, L - Hp * Wp)))
    xrows = xrows.reshape(Dp, 1, L)                                      # (Dp,1,L)

    # conv weights flattened; bias folded into tap 125, taps 126/127 zero.
    w_aug = jnp.concatenate(
        [conv_w.reshape(C_OUT, KV).astype(jnp.float32),
         conv_b.reshape(C_OUT, 1).astype(jnp.float32),
         jnp.zeros((C_OUT, KV_PAD - KV - 1), jnp.float32)], axis=1)      # (16,128)

    # 1 where a plane column corresponds to a valid (h, w) voxel.
    j = jnp.arange(JOUT)
    mask = ((j < H * Wp) & (j % Wp < W)).astype(jnp.float32).reshape(1, JOUT)

    # ---------------- shared in-kernel im2col + MXU conv ----------------
    def conv_tile(w_ref, rows, patch):
        # Build the (128, JOUT) patch tile in VMEM from 5 haloed plane rows.
        for kd in range(K):
            r = rows[kd]
            for kh in range(K):
                for kw in range(K):
                    s = kh * Wp + kw
                    t = (kd * K + kh) * K + kw
                    patch[t:t + 1, :] = r[0, 0:1, s:s + JOUT]
        patch[KV:KV + 1, :] = jnp.ones((1, JOUT), jnp.float32)           # bias tap
        patch[KV + 1:KV_PAD, :] = jnp.zeros((KV_PAD - KV - 1, JOUT), jnp.float32)
        return jnp.dot(w_ref[...], patch[...],
                       preferred_element_type=jnp.float32,
                       precision=jax.lax.Precision.HIGHEST)              # (16, JOUT)

    # ---------------- pass 1: per-channel sum / sum-of-squares ----------------
    def stats_kernel(mask_ref, w_ref, r0, r1, r2, r3, r4, sum_ref, ssq_ref, patch):
        d = pl.program_id(0)
        conv = conv_tile(w_ref, (r0, r1, r2, r3, r4), patch)

        @pl.when(d == 0)
        def _():
            sum_ref[...] = jnp.zeros_like(sum_ref)
            ssq_ref[...] = jnp.zeros_like(ssq_ref)

        cm = conv * mask_ref[...]                                        # mask out pad columns
        sum_ref[...] += jnp.sum(cm, axis=1, keepdims=True)
        ssq_ref[...] += jnp.sum(cm * conv, axis=1, keepdims=True)

    row_specs = [pl.BlockSpec((1, 1, L), lambda d, kd=kd: (d + kd, 0, 0))
                 for kd in range(K)]

    vmem_need = 4 * (KV_PAD * JOUT + 2 * K * L + 10 * C_OUT * JOUT)
    vmem_limit = int(min(max(2 * vmem_need, 32 << 20), 56 << 20))        # fits v5e/v6e/v7x

    csum, cssq = pl.pallas_call(
        stats_kernel,
        out_shape=(jax.ShapeDtypeStruct((C_OUT, 1), jnp.float32),
                   jax.ShapeDtypeStruct((C_OUT, 1), jnp.float32)),
        grid=(D,),
        in_specs=[pl.BlockSpec((1, JOUT), lambda d: (0, 0)),
                  pl.BlockSpec((C_OUT, KV_PAD), lambda d: (0, 0))] + row_specs,
        out_specs=(pl.BlockSpec((C_OUT, 1), lambda d: (0, 0)),
                   pl.BlockSpec((C_OUT, 1), lambda d: (0, 0))),
        scratch_shapes=[pltpu.VMEM((KV_PAD, JOUT), jnp.float32)],
        compiler_params=pltpu.CompilerParams(
            dimension_semantics=("arbitrary",),
            vmem_limit_bytes=vmem_limit),
        cost_estimate=pl.CostEstimate(
            flops=2 * C_OUT * KV_PAD * JOUT * D,
            transcendentals=0,
            bytes_accessed=4 * (D * K * L + C_OUT * KV_PAD + JOUT + 2 * C_OUT)),
    )(mask, w_aug, xrows, xrows, xrows, xrows, xrows)

    # Tiny (16,) math in plain XLA between the two passes.
    mean = csum / count
    var = cssq / count - mean * mean                                     # biased variance
    inv = jax.lax.rsqrt(var + EPS)
    scale = bn_gamma.reshape(C_OUT, 1).astype(jnp.float32) * inv
    shift = bn_beta.reshape(C_OUT, 1).astype(jnp.float32) - mean * scale

    # ---------------- pass 2: conv -> BN -> +x -> ELU ----------------
    def apply_kernel(scale_ref, shift_ref, w_ref, r0, r1, r2, r3, r4, o_ref, patch):
        conv = conv_tile(w_ref, (r0, r1, r2, r3, r4), patch)
        z = conv * scale_ref[...] + shift_ref[...]                       # BN affine
        z = z + patch[CENTER:CENTER + 1, :]                              # + x (centre tap)
        # ELU(alpha=1); clamp so the discarded branch stays finite.
        # TODO(synk): use jnp.expm1 for slightly better accuracy near 0 once verified on Mosaic.
        o_ref[0] = jnp.where(z > 0.0, z, jnp.exp(jnp.minimum(z, 0.0)) - 1.0)

    y_planes = pl.pallas_call(
        apply_kernel,
        out_shape=jax.ShapeDtypeStruct((D, C_OUT, JOUT), jnp.float32),
        grid=(D,),
        in_specs=[pl.BlockSpec((C_OUT, 1), lambda d: (0, 0)),
                  pl.BlockSpec((C_OUT, 1), lambda d: (0, 0)),
                  pl.BlockSpec((C_OUT, KV_PAD), lambda d: (0, 0))] + row_specs,
        out_specs=pl.BlockSpec((1, C_OUT, JOUT), lambda d: (d, 0, 0)),
        scratch_shapes=[pltpu.VMEM((KV_PAD, JOUT), jnp.float32)],
        compiler_params=pltpu.CompilerParams(
            dimension_semantics=("parallel",),
            vmem_limit_bytes=vmem_limit),
        cost_estimate=pl.CostEstimate(
            flops=(2 * C_OUT * KV_PAD + 6 * C_OUT) * JOUT * D,
            transcendentals=C_OUT * JOUT * D,
            bytes_accessed=4 * (D * K * L + D * C_OUT * JOUT)),
    )(scale, shift, w_aug, xrows, xrows, xrows, xrows, xrows)

    # Crop the padded plane layout back to the unique (16, D, H, W) result.
    y = y_planes[:, :, :H * Wp].reshape(D, C_OUT, H, Wp)[:, :, :, :W]
    y = jnp.transpose(y, (1, 0, 2, 3))                                   # (16, D, H, W)

    # torch.cat((x,)*16, 0) + broadcasting makes every batch slice identical;
    # materialize the redundant 16x copy only here to match module semantics.
    return jnp.broadcast_to(y[None], (C_OUT, C_OUT, D, H, W))


def _reference(x, conv_w, conv_b, bn_gamma, bn_beta):
    """Independent pure-JAX reference of the PyTorch module (N=1)."""
    conv = jax.lax.conv_general_dilated(
        x.astype(jnp.float32), conv_w.astype(jnp.float32),
        window_strides=(1, 1, 1), padding=((PAD, PAD),) * 3,
        dimension_numbers=("NCDHW", "OIDHW", "NCDHW"),
        precision=jax.lax.Precision.HIGHEST)
    conv = conv + conv_b.reshape(1, C_OUT, 1, 1, 1)
    mean = jnp.mean(conv, axis=(0, 2, 3, 4), keepdims=True)
    var = jnp.mean((conv - mean) ** 2, axis=(0, 2, 3, 4), keepdims=True)
    bn = (conv - mean) / jnp.sqrt(var + EPS) * bn_gamma.reshape(1, C_OUT, 1, 1, 1) \
         + bn_beta.reshape(1, C_OUT, 1, 1, 1)
    x16 = jnp.broadcast_to(x, (C_OUT, 1) + x.shape[2:])
    z = bn + x16                                                         # (16,16,D,H,W)
    return jnp.where(z > 0, z, jnp.exp(jnp.minimum(z, 0.0)) - 1.0)


if __name__ == "__main__":
    key = jax.random.PRNGKey(0)
    k_x, k_w, k_b = jax.random.split(key, 3)

    # Small shapes consistent with the module: N=1, C_in=1 (required), D=H=W=8
    D = H = W = 8
    x = jax.random.normal(k_x, (1, 1, D, H, W), dtype=jnp.float32)

    # Conv3d(1,16,5) + BN(16) defaults (gamma=1, beta=0)
    conv_w = 0.05 * jax.random.normal(k_w, (C_OUT, 1, K, K, K), dtype=jnp.float32)
    conv_b = 0.01 * jax.random.normal(k_b, (C_OUT,), dtype=jnp.float32)
    bn_gamma = jnp.ones((C_OUT,), dtype=jnp.float32)
    bn_beta = jnp.zeros((C_OUT,), dtype=jnp.float32)

    out = jax.block_until_ready(step1_forward(x, conv_w, conv_b, bn_gamma, bn_beta))
    ref = jax.block_until_ready(_reference(x, conv_w, conv_b, bn_gamma, bn_beta))

    assert out.shape == (C_OUT, C_OUT, D, H, W)
    err = float(jnp.max(jnp.abs(out - ref)))
    assert jnp.allclose(out, ref, rtol=2e-3, atol=2e-3), err

    print("KERNEL_OK")
</pallas_src>

<mosaic_0001>
module attributes {stable_mosaic.version = 11 : i64} {
  func.func @stats_kernel(%arg0: i32, %arg1: memref<1x128xf32, #tpu.memory_space<vmem>>, %arg2: memref<16x128xf32, #tpu.memory_space<vmem>>, %arg3: memref<1x1x256xf32, #tpu.memory_space<vmem>>, %arg4: memref<1x1x256xf32, #tpu.memory_space<vmem>>, %arg5: memref<1x1x256xf32, #tpu.memory_space<vmem>>, %arg6: memref<1x1x256xf32, #tpu.memory_space<vmem>>, %arg7: memref<1x1x256xf32, #tpu.memory_space<vmem>>, %arg8: memref<16x1xf32, #tpu.memory_space<vmem>>, %arg9: memref<16x1xf32, #tpu.memory_space<vmem>>, %arg10: memref<128x128xf32, #tpu.memory_space<vmem>>) attributes {dimension_semantics = [#tpu.dimension_semantics<arbitrary>], iteration_bounds = array<i64: 8>, scalar_prefetch = 0 : i64, scratch_operands = 1 : i64, tpu.core_type = #tpu.core_type<tc>, window_params = [{pipeline_mode = #tpu.pipeline_mode<synchronous>, transform_indices = @transform_0, window_bounds = array<i64: 1, 128>}, {pipeline_mode = #tpu.pipeline_mode<synchronous>, transform_indices = @transform_1, window_bounds = array<i64: 16, 128>}, {transform_indices = @transform_2, window_bounds = array<i64: 1, 1, 256>}, {transform_indices = @transform_3, window_bounds = array<i64: 1, 1, 256>}, {transform_indices = @transform_4, window_bounds = array<i64: 1, 1, 256>}, {transform_indices = @transform_5, window_bounds = array<i64: 1, 1, 256>}, {transform_indices = @transform_6, window_bounds = array<i64: 1, 1, 256>}, {pipeline_mode = #tpu.pipeline_mode<synchronous>, transform_indices = @transform_7, window_bounds = array<i64: 16, 1>}, {pipeline_mode = #tpu.pipeline_mode<synchronous>, transform_indices = @transform_8, window_bounds = array<i64: 16, 1>}]} {
    %c0 = arith.constant 0 : index
    %c0_0 = arith.constant 0 : index
    %c0_1 = arith.constant 0 : index
    %0 = vector.load %arg3[%c0, %c0_0, %c0_1] : memref<1x1x256xf32, #tpu.memory_space<vmem>>, vector<1x1x128xf32>
    %1 = vector.shape_cast %0 : vector<1x1x128xf32> to vector<1x128xf32>
    %c0_2 = arith.constant 0 : index
    %c0_3 = arith.constant 0 : index
    %2 = vector.load %arg10[%c0_2, %c0_3] : memref<128x128xf32, #tpu.memory_space<vmem>>, vector<1x128xf32>
    tpu.vector_store %arg10[%c0_2, %c0_3], %1 {strides = array<i32>} : memref<128x128xf32, #tpu.memory_space<vmem>>, vector<1x128xf32>,
    %c0_4 = arith.constant 0 : index
    %c0_5 = arith.constant 0 : index
    %c1 = arith.constant 1 : index
    %3 = vector.load %arg3[%c0_4, %c0_5, %c1] : memref<1x1x256xf32, #tpu.memory_space<vmem>>, vector<1x1x128xf32>
    %4 = vector.shape_cast %3 : vector<1x1x128xf32> to vector<1x128xf32>
    %c1_6 = arith.constant 1 : index
    %c0_7 = arith.constant 0 : index
    %5 = vector.load %arg10[%c1_6, %c0_7] : memref<128x128xf32, #tpu.memory_space<vmem>>, vector<1x128xf32>
    tpu.vector_store %arg10[%c1_6, %c0_7], %4 {strides = array<i32>} : memref<128x128xf32, #tpu.memory_space<vmem>>, vector<1x128xf32>,
    %c0_8 = arith.constant 0 : index
    %c0_9 = arith.constant 0 : index
    %c2 = arith.constant 2 : index
    %6 = vector.load %arg3[%c0_8, %c0_9, %c2] : memref<1x1x256xf32, #tpu.memory_space<vmem>>, vector<1x1x128xf32>
    %7 = vector.shape_cast %6 : vector<1x1x128xf32> to vector<1x128xf32>
    %c2_10 = arith.constant 2 : index
    %c0_11 = arith.constant 0 : index
    %8 = vector.load %arg10[%c2_10, %c0_11] : memref<128x128xf32, #tpu.memory_space<vmem>>, vector<1x128xf32>
    tpu.vector_store %arg10[%c2_10, %c0_11], %7 {strides = array<i32>} : memref<128x128xf32, #tpu.memory_space<vmem>>, vector<1x128xf32>,
    %c0_12 = arith.constant 0 : index
    %c0_13 = arith.constant 0 : index
    %c3 = arith.constant 3 : index
    %9 = vector.load %arg3[%c0_12, %c0_13, %c3] : memref<1x1x256xf32, #tpu.memory_space<vmem>>, vector<1x1x128xf32>
    %10 = vector.shape_cast %9 : vector<1x1x128xf32> to vector<1x128xf32>
    %c3_14 = arith.constant 3 : index
    %c0_15 = arith.constant 0 : index
    %11 = vector.load %arg10[%c3_14, %c0_15] : memref<128x128xf32, #tpu.memory_space<vmem>>, vector<1x128xf32>
    tpu.vector_store %arg10[%c3_14, %c0_15], %10 {strides = array<i32>} : memref<128x128xf32, #tpu.memory_space<vmem>>, vector<1x128xf32>,
    %c0_16 = arith.constant 0 : index
    %c0_17 = arith.constant 0 : index
    %c4 = arith.constant 4 : index
    %12 = vector.load %arg3[%c0_16, %c0_17, %c4] : memref<1x1x256xf32, #tpu.memory_space<vmem>>, vector<1x1x128xf32>
    %13 = vector.shape_cast %12 : vector<1x1x128xf32> to vector<1x128xf32>
    %c4_18 = arith.constant 4 : index
    %c0_19 = arith.constant 0 : index
    %14 = vector.load %arg10[%c4_18, %c0_19] : memref<128x128xf32, #tpu.memory_space<vmem>>, vector<1x128xf32>
    tpu.vector_store %arg10[%c4_18, %c0_19], %13 {strides = array<i32>} : memref<128x128xf32, #tpu.memory_space<vmem>>, vector<1x128xf32>,
    %c0_20 = arith.constant 0 : index
    %c0_21 = arith.constant 0 : index
    %c12 = arith.constant 12 : index
    %15 = vector.load %arg3[%c0_20, %c0_21, %c12] : memref<1x1x256xf32, #tpu.memory_space<vmem>>, vector<1x1x128xf32>
    %16 = vector.shape_cast %15 : vector<1x1x128xf32> to vector<1x128xf32>
    %c5 = arith.constant 5 : index
    %c0_22 = arith.constant 0 : index
    %17 = vector.load %arg10[%c5, %c0_22] : memref<128x128xf32, #tpu.memory_space<vmem>>, vector<1x128xf32>
    tpu.vector_store %arg10[%c5, %c0_22], %16 {strides = array<i32>} : memref<128x128xf32, #tpu.memory_space<vmem>>, vector<1x128xf32>,
    %c0_23 = arith.constant 0 : index
    %c0_24 = arith.constant 0 : index
    %c13 = arith.constant 13 : index
    %18 = vector.load %arg3[%c0_23, %c0_24, %c13] : memref<1x1x256xf32, #tpu.memory_space<vmem>>, vector<1x1x128xf32>
    %19 = vector.shape_cast %18 : vector<1x1x128xf32> to vector<1x128xf32>
    %c6 = arith.constant 6 : index
    %c0_25 = arith.constant 0 : index
    %20 = vector.load %arg10[%c6, %c0_25] : memref<128x128xf32, #tpu.memory_space<vmem>>, vector<1x128xf32>
    tpu.vector_store %arg10[%c6, %c0_25], %19 {strides = array<i32>} : memref<128x128xf32, #tpu.memory_space<vmem>>, vector<1x128xf32>,
    %c0_26 = arith.constant 0 : index
    %c0_27 = arith.constant 0 : index
    %c14 = arith.constant 14 : index
    %21 = vector.load %arg3[%c0_26, %c0_27, %c14] : memref<1x1x256xf32, #tpu.memory_space<vmem>>, vector<1x1x128xf32>
    %22 = vector.shape_cast %21 : vector<1x1x128xf32> to vector<1x128xf32>
    %c7 = arith.constant 7 : index
    %c0_28 = arith.constant 0 : index
    %23 = vector.load %arg10[%c7, %c0_28] : memref<128x128xf32, #tpu.memory_space<vmem>>, vector<1x128xf32>
    tpu.vector_store %arg10[%c7, %c0_28], %22 {strides = array<i32>} : memref<128x128xf32, #tpu.memory_space<vmem>>, vector<1x128xf32>,
    %c0_29 = arith.constant 0 : index
    %c0_30 = arith.constant 0 : index
    %c15 = arith.constant 15 : index
    %24 = vector.load %arg3[%c0_29, %c0_30, %c15] : memref<1x1x256xf32, #tpu.memory_space<vmem>>, vector<1x1x128xf32>
    %25 = vector.shape_cast %24 : vector<1x1x128xf32> to vector<1x128xf32>
    %c8 = arith.constant 8 : index
    %c0_31 = arith.constant 0 : index
    %26 = vector.load %arg10[%c8, %c0_31] : memref<128x128xf32, #tpu.memory_space<vmem>>, vector<1x128xf32>
    tpu.vector_store %arg10[%c8, %c0_31], %25 {strides = array<i32>} : memref<128x128xf32, #tpu.memory_space<vmem>>, vector<1x128xf32>,
    %c0_32 = arith.constant 0 : index
    %c0_33 = arith.constant 0 : index
    %c16 = arith.constant 16 : index
    %27 = vector.load %arg3[%c0_32, %c0_33, %c16] : memref<1x1x256xf32, #tpu.memory_space<vmem>>, vector<1x1x128xf32>
    %28 = vector.shape_cast %27 : vector<1x1x128xf32> to vector<1x128xf32>
    %c9 = arith.constant 9 : index
    %c0_34 = arith.constant 0 : index
    %29 = vector.load %arg10[%c9, %c0_34] : memref<128x128xf32, #tpu.memory_space<vmem>>, vector<1x128xf32>
    tpu.vector_store %arg10[%c9, %c0_34], %28 {strides = array<i32>} : memref<128x128xf32, #tpu.memory_space<vmem>>, vector<1x128xf32>,
    %c0_35 = arith.constant 0 : index
    %c0_36 = arith.constant 0 : index
    %c24 = arith.constant 24 : index
    %30 = vector.load %arg3[%c0_35, %c0_36, %c24] : memref<1x1x256xf32, #tpu.memory_space<vmem>>, vector<1x1x128xf32>
    %31 = vector.shape_cast %30 : vector<1x1x128xf32> to vector<1x128xf32>
    %c10 = arith.constant 10 : index
    %c0_37 = arith.constant 0 : index
    %32 = vector.load %arg10[%c10, %c0_37] : memref<128x128xf32, #tpu.memory_space<vmem>>, vector<1x128xf32>
    tpu.vector_store %arg10[%c10, %c0_37], %31 {strides = array<i32>} : memref<128x128xf32, #tpu.memory_space<vmem>>, vector<1x128xf32>,
    %c0_38 = arith.constant 0 : index
    %c0_39 = arith.constant 0 : index
    %c25 = arith.constant 25 : index
    %33 = vector.load %arg3[%c0_38, %c0_39, %c25] : memref<1x1x256xf32, #tpu.memory_space<vmem>>, vector<1x1x128xf32>
    %34 = vector.shape_cast %33 : vector<1x1x128xf32> to vector<1x128xf32>
    %c11 = arith.constant 11 : index
    %c0_40 = arith.constant 0 : index
    %35 = vector.load %arg10[%c11, %c0_40] : memref<128x128xf32, #tpu.memory_space<vmem>>, vector<1x128xf32>
    tpu.vector_store %arg10[%c11, %c0_40], %34 {strides = array<i32>} : memref<128x128xf32, #tpu.memory_space<vmem>>, vector<1x128xf32>,
    %c0_41 = arith.constant 0 : index
    %c0_42 = arith.constant 0 : index
    %c26 = arith.constant 26 : index
    %36 = vector.load %arg3[%c0_41, %c0_42, %c26] : memref<1x1x256xf32, #tpu.memory_space<vmem>>, vector<1x1x128xf32>
    %37 = vector.shape_cast %36 : vector<1x1x128xf32> to vector<1x128xf32>
    %c12_43 = arith.constant 12 : index
    %c0_44 = arith.constant 0 : index
    %38 = vector.load %arg10[%c12_43, %c0_44] : memref<128x128xf32, #tpu.memory_space<vmem>>, vector<1x128xf32>
    tpu.vector_store %arg10[%c12_43, %c0_44], %37 {strides = array<i32>} : memref<128x128xf32, #tpu.memory_space<vmem>>, vector<1x128xf32>,
    %c0_45 = arith.constant 0 : index
    %c0_46 = arith.constant 0 : index
    %c27 = arith.constant 27 : index
    %39 = vector.load %arg3[%c0_45, %c0_46, %c27] : memref<1x1x256xf32, #tpu.memory_space<vmem>>, vector<1x1x128xf32>
    %40 = vector.shape_cast %39 : vector<1x1x128xf32> to vector<1x128xf32>
    %c13_47 = arith.constant 13 : index
    %c0_48 = arith.constant 0 : index
    %41 = vector.load %arg10[%c13_47, %c0_48] : memref<128x128xf32, #tpu.memory_space<vmem>>, vector<1x128xf32>
    tpu.vector_store %arg10[%c13_47, %c0_48], %40 {strides = array<i32>} : memref<128x128xf32, #tpu.memory_space<vmem>>, vector<1x128xf32>,
    %c0_49 = arith.constant 0 : index
    %c0_50 = arith.constant 0 : index
    %c28 = arith.constant 28 : index
    %42 = vector.load %arg3[%c0_49, %c0_50, %c28] : memref<1x1x256xf32, #tpu.memory_space<vmem>>, vector<1x1x128xf32>
    %43 = vector.shape_cast %42 : vector<1x1x128xf32> to vector<1x128xf32>
    %c14_51 = arith.constant 14 : index
    %c0_52 = arith.constant 0 : index
    %44 = vector.load %arg10[%c14_51, %c0_52] : memref<128x128xf32, #tpu.memory_space<vmem>>, vector<1x128xf32>
    tpu.vector_store %arg10[%c14_51, %c0_52], %43 {strides = array<i32>} : memref<128x128xf32, #tpu.memory_space<vmem>>, vector<1x128xf32>,
    %c0_53 = arith.constant 0 : index
    %c0_54 = arith.constant 0 : index
    %c36 = arith.constant 36 : index
    %45 = vector.load %arg3[%c0_53, %c0_54, %c36] : memref<1x1x256xf32, #tpu.memory_space<vmem>>, vector<1x1x128xf32>
    %46 = vector.shape_cast %45 : vector<1x1x128xf32> to vector<1x128xf32>
    %c15_55 = arith.constant 15 : index
    %c0_56 = arith.constant 0 : index
    %47 = vector.load %arg10[%c15_55, %c0_56] : memref<128x128xf32, #tpu.memory_space<vmem>>, vector<1x128xf32>
    tpu.vector_store %arg10[%c15_55, %c0_56], %46 {strides = array<i32>} : memref<128x128xf32, #tpu.memory_space<vmem>>, vector<1x128xf32>,
    %c0_57 = arith.constant 0 : index
    %c0_58 = arith.constant 0 : index
    %c37 = arith.constant 37 : index
    %48 = vector.load %arg3[%c0_57, %c0_58, %c37] : memref<1x1x256xf32, #tpu.memory_space<vmem>>, vector<1x1x128xf32>
    %49 = vector.shape_cast %48 : vector<1x1x128xf32> to vector<1x128xf32>
    %c16_59 = arith.constant 16 : index
    %c0_60 = arith.constant 0 : index
    %50 = vector.load %arg10[%c16_59, %c0_60] : memref<128x128xf32, #tpu.memory_space<vmem>>, vector<1x128xf32>
    tpu.vector_store %arg10[%c16_59, %c0_60], %49 {strides = array<i32>} : memref<128x128xf32, #tpu.memory_space<vmem>>, vector<1x128xf32>,
    %c0_61 = arith.constant 0 : index
    %c0_62 = arith.constant 0 : index
    %c38 = arith.constant 38 : index
    %51 = vector.load %arg3[%c0_61, %c0_62, %c38] : memref<1x1x256xf32, #tpu.memory_space<vmem>>, vector<1x1x128xf32>
    %52 = vector.shape_cast %51 : vector<1x1x128xf32> to vector<1x128xf32>
    %c17 = arith.constant 17 : index
    %c0_63 = arith.constant 0 : index
    %53 = vector.load %arg10[%c17, %c0_63] : memref<128x128xf32, #tpu.memory_space<vmem>>, vector<1x128xf32>
    tpu.vector_store %arg10[%c17, %c0_63], %52 {strides = array<i32>} : memref<128x128xf32, #tpu.memory_space<vmem>>, vector<1x128xf32>,
    %c0_64 = arith.constant 0 : index
    %c0_65 = arith.constant 0 : index
    %c39 = arith.constant 39 : index
    %54 = vector.load %arg3[%c0_64, %c0_65, %c39] : memref<1x1x256xf32, #tpu.memory_space<vmem>>, vector<1x1x128xf32>
    %55 = vector.shape_cast %54 : vector<1x1x128xf32> to vector<1x128xf32>
    %c18 = arith.constant 18 : index
    %c0_66 = arith.constant 0 : index
    %56 = vector.load %arg10[%c18, %c0_66] : memref<128x128xf32, #tpu.memory_space<vmem>>, vector<1x128xf32>
    tpu.vector_store %arg10[%c18, %c0_66], %55 {strides = array<i32>} : memref<128x128xf32, #tpu.memory_space<vmem>>, vector<1x128xf32>,
    %c0_67 = arith.constant 0 : index
    %c0_68 = arith.constant 0 : index
    %c40 = arith.constant 40 : index
    %57 = vector.load %arg3[%c0_67, %c0_68, %c40] : memref<1x1x256xf32, #tpu.memory_space<vmem>>, vector<1x1x128xf32>
    %58 = vector.shape_cast %57 : vector<1x1x128xf32> to vector<1x128xf32>
    %c19 = arith.constant 19 : index
    %c0_69 = arith.constant 0 : index
    %59 = vector.load %arg10[%c19, %c0_69] : memref<128x128xf32, #tpu.memory_space<vmem>>, vector<1x128xf32>
    tpu.vector_store %arg10[%c19, %c0_69], %58 {strides = array<i32>} : memref<128x128xf32, #tpu.memory_space<vmem>>, vector<1x128xf32>,
    %c0_70 = arith.constant 0 : index
    %c0_71 = arith.constant 0 : index
    %c48 = arith.constant 48 : index
    %60 = vector.load %arg3[%c0_70, %c0_71, %c48] : memref<1x1x256xf32, #tpu.memory_space<vmem>>, vector<1x1x128xf32>
    %61 = vector.shape_cast %60 : vector<1x1x128xf32> to vector<1x128xf32>
    %c20 = arith.constant 20 : index
    %c0_72 = arith.constant 0 : index
    %62 = vector.load %arg10[%c20, %c0_72] : memref<128x128xf32, #tpu.memory_space<vmem>>, vector<1x128xf32>
    tpu.vector_store %arg10[%c20, %c0_72], %61 {strides = array<i32>} : memref<128x128xf32, #tpu.memory_space<vmem>>, vector<1x128xf32>,
    %c0_73 = arith.constant 0 : index
    %c0_74 = arith.constant 0 : index
    %c49 = arith.constant 49 : index
    %63 = vector.load %arg3[%c0_73, %c0_74, %c49] : memref<1x1x256xf32, #tpu.memory_space<vmem>>, vector<1x1x128xf32>
    %64 = vector.shape_cast %63 : vector<1x1x128xf32> to vector<1x128xf32>
    %c21 = arith.constant 21 : index
    %c0_75 = arith.constant 0 : index
    %65 = vector.load %arg10[%c21, %c0_75] : memref<128x128xf32, #tpu.memory_space<vmem>>, vector<1x128xf32>
    tpu.vector_store %arg10[%c21, %c0_75], %64 {strides = array<i32>} : memref<128x128xf32, #tpu.memory_space<vmem>>, vector<1x128xf32>,
    %c0_76 = arith.constant 0 : index
    %c0_77 = arith.constant 0 : index
    %c50 = arith.constant 50 : index
    %66 = vector.load %arg3[%c0_76, %c0_77, %c50] : memref<1x1x256xf32, #tpu.memory_space<vmem>>, vector<1x1x128xf32>
    %67 = vector.shape_cast %66 : vector<1x1x128xf32> to vector<1x128xf32>
    %c22 = arith.constant 22 : index
    %c0_78 = arith.constant 0 : index
    %68 = vector.load %arg10[%c22, %c0_78] : memref<128x128xf32, #tpu.memory_space<vmem>>, vector<1x128xf32>
    tpu.vector_store %arg10[%c22, %c0_78], %67 {strides = array<i32>} : memref<128x128xf32, #tpu.memory_space<vmem>>, vector<1x128xf32>,
    %c0_79 = arith.constant 0 : index
    %c0_80 = arith.constant 0 : index
    %c51 = arith.constant 51 : index
    %69 = vector.load %arg3[%c0_79, %c0_80, %c51] : memref<1x1x256xf32, #tpu.memory_space<vmem>>, vector<1x1x128xf32>
    %70 = vector.shape_cast %69 : vector<1x1x128xf32> to vector<1x128xf32>
    %c23 = arith.constant 23 : index
    %c0_81 = arith.constant 0 : index
    %71 = vector.load %arg10[%c23, %c0_81] : memref<128x128xf32, #tpu.memory_space<vmem>>, vector<1x128xf32>
    tpu.vector_store %arg10[%c23, %c0_81], %70 {strides = array<i32>} : memref<128x128xf32, #tpu.memory_space<vmem>>, vector<1x128xf32>,
    %c0_82 = arith.constant 0 : index
    %c0_83 = arith.constant 0 : index
    %c52 = arith.constant 52 : index
    %72 = vector.load %arg3[%c0_82, %c0_83, %c52] : memref<1x1x256xf32, #tpu.memory_space<vmem>>, vector<1x1x128xf32>
    %73 = vector.shape_cast %72 : vector<1x1x128xf32> to vector<1x128xf32>
    %c24_84 = arith.constant 24 : index
    %c0_85 = arith.constant 0 : index
    %74 = vector.load %arg10[%c24_84, %c0_85] : memref<128x128xf32, #tpu.memory_space<vmem>>, vector<1x128xf32>
    tpu.vector_store %arg10[%c24_84, %c0_85], %73 {strides = array<i32>} : memref<128x128xf32, #tpu.memory_space<vmem>>, vector<1x128xf32>,
    %c0_86 = arith.constant 0 : index
    %c0_87 = arith.constant 0 : index
    %c0_88 = arith.constant 0 : index
    %75 = vector.load %arg4[%c0_86, %c0_87, %c0_88] : memref<1x1x256xf32, #tpu.memory_space<vmem>>, vector<1x1x128xf32>
    %76 = vector.shape_cast %75 : vector<1x1x128xf32> to vector<1x128xf32>
    %c25_89 = arith.constant 25 : index
    %c0_90 = arith.constant 0 : index
    %77 = vector.load %arg10[%c25_89, %c0_90] : memref<128x128xf32, #tpu.memory_space<vmem>>, vector<1x128xf32>
    tpu.vector_store %arg10[%c25_89, %c0_90], %76 {strides = array<i32>} : memref<128x128xf32, #tpu.memory_space<vmem>>, vector<1x128xf32>,
    %c0_91 = arith.constant 0 : index
    %c0_92 = arith.constant 0 : index
    %c1_93 = arith.constant 1 : index
    %78 = vector.load %arg4[%c0_91, %c0_92, %c1_93] : memref<1x1x256xf32, #tpu.memory_space<vmem>>, vector<1x1x128xf32>
    %79 = vector.shape_cast %78 : vector<1x1x128xf32> to vector<1x128xf32>
    %c26_94 = arith.constant 26 : index
    %c0_95 = arith.constant 0 : index
    %80 = vector.load %arg10[%c26_94, %c0_95] : memref<128x128xf32, #tpu.memory_space<vmem>>, vector<1x128xf32>
    tpu.vector_store %arg10[%c26_94, %c0_95], %79 {strides = array<i32>} : memref<128x128xf32, #tpu.memory_space<vmem>>, vector<1x128xf32>,
    %c0_96 = arith.constant 0 : index
    %c0_97 = arith.constant 0 : index
    %c2_98 = arith.constant 2 : index
    %81 = vector.load %arg4[%c0_96, %c0_97, %c2_98] : memref<1x1x256xf32, #tpu.memory_space<vmem>>, vector<1x1x128xf32>
    %82 = vector.shape_cast %81 : vector<1x1x128xf32> to vector<1x128xf32>
    %c27_99 = arith.constant 27 : index
    %c0_100 = arith.constant 0 : index
    %83 = vector.load %arg10[%c27_99, %c0_100] : memref<128x128xf32, #tpu.memory_space<vmem>>, vector<1x128xf32>
    tpu.vector_store %arg10[%c27_99, %c0_100], %82 {strides = array<i32>} : memref<128x128xf32, #tpu.memory_space<vmem>>, vector<1x128xf32>,
    %c0_101 = arith.constant 0 : index
    %c0_102 = arith.constant 0 : index
    %c3_103 = arith.constant 3 : index
    %84 = vector.load %arg4[%c0_101, %c0_102, %c3_103] : memref<1x1x256xf32, #tpu.memory_space<vmem>>, vector<1x1x128xf32>
    %85 = vector.shape_cast %84 : vector<1x1x128xf32> to vector<1x128xf32>
    %c28_104 = arith.constant 28 : index
    %c0_105 = arith.constant 0 : index
    %86 = vector.load %arg10[%c28_104, %c0_105] : memref<128x128xf32, #tpu.memory_space<vmem>>, vector<1x128xf32>
    tpu.vector_store %arg10[%c28_104, %c0_105], %85 {strides = array<i32>} : memref<128x128xf32, #tpu.memory_space<vmem>>, vector<1x128xf32>,
    %c0_106 = arith.constant 0 : index
    %c0_107 = arith.constant 0 : index
    %c4_108 = arith.constant 4 : index
    %87 = vector.load %arg4[%c0_106, %c0_107, %c4_108] : memref<1x1x256xf32, #tpu.memory_space<vmem>>, vector<1x1x128xf32>
    %88 = vector.shape_cast %87 : vector<1x1x128xf32> to vector<1x128xf32>
    %c29 = arith.constant 29 : index
    %c0_109 = arith.constant 0 : index
    %89 = vector.load %arg10[%c29, %c0_109] : memref<128x128xf32, #tpu.memory_space<vmem>>, vector<1x128xf32>
    tpu.vector_store %arg10[%c29, %c0_109], %88 {strides = array<i32>} : memref<128x128xf32, #tpu.memory_space<vmem>>, vector<1x128xf32>,
    %c0_110 = arith.constant 0 : index
    %c0_111 = arith.constant 0 : index
    %c12_112 = arith.constant 12 : index
    %90 = vector.load %arg4[%c0_110, %c0_111, %c12_112] : memref<1x1x256xf32, #tpu.memory_space<vmem>>, vector<1x1x128xf32>
    %91 = vector.shape_cast %90 : vector<1x1x128xf32> to vector<1x128xf32>
    %c30 = arith.constant 30 : index
    %c0_113 = arith.constant 0 : index
    %92 = vector.load %arg10[%c30, %c0_113] : memref<128x128xf32, #tpu.memory_space<vmem>>, vector<1x128xf32>
    tpu.vector_store %arg10[%c30, %c0_113], %91 {strides = array<i32>} : memref<128x128xf32, #tpu.memory_space<vmem>>, vector<1x128xf32>,
    %c0_114 = arith.constant 0 : index
    %c0_115 = arith.constant 0 : index
    %c13_116 = arith.constant 13 : index
    %93 = vector.load %arg4[%c0_114, %c0_115, %c13_116] : memref<1x1x256xf32, #tpu.memory_space<vmem>>, vector<1x1x128xf32>
    %94 = vector.shape_cast %93 : vector<1x1x128xf32> to vector<1x128xf32>
    %c31 = arith.constant 31 : index
    %c0_117 = arith.constant 0 : index
    %95 = vector.load %arg10[%c31, %c0_117] : memref<128x128xf32, #tpu.memory_space<vmem>>, vector<1x128xf32>
    tpu.vector_store %arg10[%c31, %c0_117], %94 {strides = array<i32>} : memref<128x128xf32, #tpu.memory_space<vmem>>, vector<1x128xf32>,
    %c0_118 = arith.constant 0 : index
    %c0_119 = arith.constant 0 : index
    %c14_120 = arith.constant 14 : index
    %96 = vector.load %arg4[%c0_118, %c0_119, %c14_120] : memref<1x1x256xf32, #tpu.memory_space<vmem>>, vector<1x1x128xf32>
    %97 = vector.shape_cast %96 : vector<1x1x128xf32> to vector<1x128xf32>
    %c32 = arith.constant 32 : index
    %c0_121 = arith.constant 0 : index
    %98 = vector.load %arg10[%c32, %c0_121] : memref<128x128xf32, #tpu.memory_space<vmem>>, vector<1x128xf32>
    tpu.vector_store %arg10[%c32, %c0_121], %97 {strides = array<i32>} : memref<128x128xf32, #tpu.memory_space<vmem>>, vector<1x128xf32>,
    %c0_122 = arith.constant 0 : index
    %c0_123 = arith.constant 0 : index
    %c15_124 = arith.constant 15 : index
    %99 = vector.load %arg4[%c0_122, %c0_123, %c15_124] : memref<1x1x256xf32, #tpu.memory_space<vmem>>, vector<1x1x128xf32>
    %100 = vector.shape_cast %99 : vector<1x1x128xf32> to vector<1x128xf32>
    %c33 = arith.constant 33 : index
    %c0_125 = arith.constant 0 : index
    %101 = vector.load %arg10[%c33, %c0_125] : memref<128x128xf32, #tpu.memory_space<vmem>>, vector<1x128xf32>
    tpu.vector_store %arg10[%c33, %c0_125], %100 {strides = array<i32>} : memref<128x128xf32, #tpu.memory_space<vmem>>, vector<1x128xf32>,
    %c0_126 = arith.constant 0 : index
    %c0_127 = arith.constant 0 : index
    %c16_128 = arith.constant 16 : index
    %102 = vector.load %arg4[%c0_126, %c0_127, %c16_128] : memref<1x1x256xf32, #tpu.memory_space<vmem>>, vector<1x1x128xf32>
    %103 = vector.shape_cast %102 : vector<1x1x128xf32> to vector<1x128xf32>
    %c34 = arith.constant 34 : index
    %c0_129 = arith.constant 0 : index
    %104 = vector.load %arg10[%c34, %c0_129] : memref<128x128xf32, #tpu.memory_space<vmem>>, vector<1x128xf32>
    tpu.vector_store %arg10[%c34, %c0_129], %103 {strides = array<i32>} : memref<128x128xf32, #tpu.memory_space<vmem>>, vector<1x128xf32>,
    %c0_130 = arith.constant 0 : index
    %c0_131 = arith.constant 0 : index
    %c24_132 = arith.constant 24 : index
    %105 = vector.load %arg4[%c0_130, %c0_131, %c24_132] : memref<1x1x256xf32, #tpu.memory_space<vmem>>, vector<1x1x128xf32>
    %106 = vector.shape_cast %105 : vector<1x1x128xf32> to vector<1x128xf32>
    %c35 = arith.constant 35 : index
    %c0_133 = arith.constant 0 : index
    %107 = vector.load %arg10[%c35, %c0_133] : memref<128x128xf32, #tpu.memory_space<vmem>>, vector<1x128xf32>
    tpu.vector_store %arg10[%c35, %c0_133], %106 {strides = array<i32>} : memref<128x128xf32, #tpu.memory_space<vmem>>, vector<1x128xf32>,
    %c0_134 = arith.constant 0 : index
    %c0_135 = arith.constant 0 : index
    %c25_136 = arith.constant 25 : index
    %108 = vector.load %arg4[%c0_134, %c0_135, %c25_136] : memref<1x1x256xf32, #tpu.memory_space<vmem>>, vector<1x1x128xf32>
    %109 = vector.shape_cast %108 : vector<1x1x128xf32> to vector<1x128xf32>
    %c36_137 = arith.constant 36 : index
    %c0_138 = arith.constant 0 : index
    %110 = vector.load %arg10[%c36_137, %c0_138] : memref<128x128xf32, #tpu.memory_space<vmem>>, vector<1x128xf32>
    tpu.vector_store %arg10[%c36_137, %c0_138], %109 {strides = array<i32>} : memref<128x128xf32, #tpu.memory_space<vmem>>, vector<1x128xf32>,
    %c0_139 = arith.constant 0 : index
    %c0_140 = arith.constant 0 : index
    %c26_141 = arith.constant 26 : index
    %111 = vector.load %arg4[%c0_139, %c0_140, %c26_141] : memref<1x1x256xf32, #tpu.memory_space<vmem>>, vector<1x1x128xf32>
    %112 = vector.shape_cast %111 : vector<1x1x128xf32> to vector<1x128xf32>
    %c37_142 = arith.constant 37 : index
    %c0_143 = arith.constant 0 : index
    %113 = vector.load %arg10[%c37_142, %c0_143] : memref<128x128xf32, #tpu.memory_space<vmem>>, vector<1x128xf32>
    tpu.vector_store %arg10[%c37_142, %c0_143], %112 {strides = array<i32>} : memref<128x128xf32, #tpu.memory_space<vmem>>, vector<1x128xf32>,
    %c0_144 = arith.constant 0 : index
    %c0_145 = arith.constant 0 : index
    %c27_146 = arith.constant 27 : index
    %114 = vector.load %arg4[%c0_144, %c0_145, %c27_146] : memref<1x1x256xf32, #tpu.memory_space<vmem>>, vector<1x1x128xf32>
    %115 = vector.shape_cast %114 : vector<1x1x128xf32> to vector<1x128xf32>
    %c38_147 = arith.constant 38 : index
    %c0_148 = arith.constant 0 : index
    %116 = vector.load %arg10[%c38_147, %c0_148] : memref<128x128xf32, #tpu.memory_space<vmem>>, vector<1x128xf32>
    tpu.vector_store %arg10[%c38_147, %c0_148], %115 {strides = array<i32>} : memref<128x128xf32, #tpu.memory_space<vmem>>, vector<1x128xf32>,
    %c0_149 = arith.constant 0 : index
    %c0_150 = arith.constant 0 : index
    %c28_151 = arith.constant 28 : index
    %117 = vector.load %arg4[%c0_149, %c0_150, %c28_151] : memref<1x1x256xf32, #tpu.memory_space<vmem>>, vector<1x1x128xf32>
    %118 = vector.shape_cast %117 : vector<1x1x128xf32> to vector<1x128xf32>
    %c39_152 = arith.constant 39 : index
    %c0_153 = arith.constant 0 : index
    %119 = vector.load %arg10[%c39_152, %c0_153] : memref<128x128xf32, #tpu.memory_space<vmem>>, vector<1x128xf32>
    tpu.vector_store %arg10[%c39_152, %c0_153], %118 {strides = array<i32>} : memref<128x128xf32, #tpu.memory_space<vmem>>, vector<1x128xf32>,
    %c0_154 = arith.constant 0 : index
    %c0_155 = arith.constant 0 : index
    %c36_156 = arith.constant 36 : index
    %120 = vector.load %arg4[%c0_154, %c0_155, %c36_156] : memref<1x1x256xf32, #tpu.memory_space<vmem>>, vector<1x1x128xf32>
    %121 = vector.shape_cast %120 : vector<1x1x128xf32> to vector<1x128xf32>
    %c40_157 = arith.constant 40 : index
    %c0_158 = arith.constant 0 : index
    %122 = vector.load %arg10[%c40_157, %c0_158] : memref<128x128xf32, #tpu.memory_space<vmem>>, vector<1x128xf32>
    tpu.vector_store %arg10[%c40_157, %c0_158], %121 {strides = array<i32>} : memref<128x128xf32, #tpu.memory_space<vmem>>, vector<1x128xf32>,
    %c0_159 = arith.constant 0 : index
    %c0_160 = arith.constant 0 : index
    %c37_161 = arith.constant 37 : index
    %123 = vector.load %arg4[%c0_159, %c0_160, %c37_161] : memref<1x1x256xf32, #tpu.memory_space<vmem>>, vector<1x1x128xf32>
    %124 = vector.shape_cast %123 : vector<1x1x128xf32> to vector<1x128xf32>
    %c41 = arith.constant 41 : index
    %c0_162 = arith.constant 0 : index
    %125 = vector.load %arg10[%c41, %c0_162] : memref<128x128xf32, #tpu.memory_space<vmem>>, vector<1x128xf32>
    tpu.vector_store %arg10[%c41, %c0_162], %124 {strides = array<i32>} : memref<128x128xf32, #tpu.memory_space<vmem>>, vector<1x128xf32>,
    %c0_163 = arith.constant 0 : index
    %c0_164 = arith.constant 0 : index
    %c38_165 = arith.constant 38 : index
    %126 = vector.load %arg4[%c0_163, %c0_164, %c38_165] : memref<1x1x256xf32, #tpu.memory_space<vmem>>, vector<1x1x128xf32>
    %127 = vector.shape_cast %126 : vector<1x1x128xf32> to vector<1x128xf32>
    %c42 = arith.constant 42 : index
    %c0_166 = arith.constant 0 : index
    %128 = vector.load %arg10[%c42, %c0_166] : memref<128x128xf32, #tpu.memory_space<vmem>>, vector<1x128xf32>
    tpu.vector_store %arg10[%c42, %c0_166], %127 {strides = array<i32>} : memref<128x128xf32, #tpu.memory_space<vmem>>, vector<1x128xf32>,
    %c0_167 = arith.constant 0 : index
    %c0_168 = arith.constant 0 : index
    %c39_169 = arith.constant 39 : index
    %129 = vector.load %arg4[%c0_167, %c0_168, %c39_169] : memref<1x1x256xf32, #tpu.memory_space<vmem>>, vector<1x1x128xf32>
    %130 = vector.shape_cast %129 : vector<1x1x128xf32> to vector<1x128xf32>
    %c43 = arith.constant 43 : index
    %c0_170 = arith.constant 0 : index
    %131 = vector.load %arg10[%c43, %c0_170] : memref<128x128xf32, #tpu.memory_space<vmem>>, vector<1x128xf32>
    tpu.vector_store %arg10[%c43, %c0_170], %130 {strides = array<i32>} : memref<128x128xf32, #tpu.memory_space<vmem>>, vector<1x128xf32>,
    %c0_171 = arith.constant 0 : index
    %c0_172 = arith.constant 0 : index
    %c40_173 = arith.constant 40 : index
    %132 = vector.load %arg4[%c0_171, %c0_172, %c40_173] : memref<1x1x256xf32, #tpu.memory_space<vmem>>, vector<1x1x128xf32>
    %133 = vector.shape_cast %132 : vector<1x1x128xf32> to vector<1x128xf32>
    %c44 = arith.constant 44 : index
    %c0_174 = arith.constant 0 : index
    %134 = vector.load %arg10[%c44, %c0_174] : memref<128x128xf32, #tpu.memory_space<vmem>>, vector<1x128xf32>
    tpu.vector_store %arg10[%c44, %c0_174], %133 {strides = array<i32>} : memref<128x128xf32, #tpu.memory_space<vmem>>, vector<1x128xf32>,
    %c0_175 = arith.constant 0 : index
    %c0_176 = arith.constant 0 : index
    %c48_177 = arith.constant 48 : index
    %135 = vector.load %arg4[%c0_175, %c0_176, %c48_177] : memref<1x1x256xf32, #tpu.memory_space<vmem>>, vector<1x1x128xf32>
    %136 = vector.shape_cast %135 : vector<1x1x128xf32> to vector<1x128xf32>
    %c45 = arith.constant 45 : index
    %c0_178 = arith.constant 0 : index
    %137 = vector.load %arg10[%c45, %c0_178] : memref<128x128xf32, #tpu.memory_space<vmem>>, vector<1x128xf32>
    tpu.vector_store %arg10[%c45, %c0_178], %136 {strides = array<i32>} : memref<128x128xf32, #tpu.memory_space<vmem>>, vector<1x128xf32>,
    %c0_179 = arith.constant 0 : index
    %c0_180 = arith.constant 0 : index
    %c49_181 = arith.constant 49 : index
    %138 = vector.load %arg4[%c0_179, %c0_180, %c49_181] : memref<1x1x256xf32, #tpu.memory_space<vmem>>, vector<1x1x128xf32>
    %139 = vector.shape_cast %138 : vector<1x1x128xf32> to vector<1x128xf32>
    %c46 = arith.constant 46 : index
    %c0_182 = arith.constant 0 : index
    %140 = vector.load %arg10[%c46, %c0_182] : memref<128x128xf32, #tpu.memory_space<vmem>>, vector<1x128xf32>
    tpu.vector_store %arg10[%c46, %c0_182], %139 {strides = array<i32>} : memref<128x128xf32, #tpu.memory_space<vmem>>, vector<1x128xf32>,
    %c0_183 = arith.constant 0 : index
    %c0_184 = arith.constant 0 : index
    %c50_185 = arith.constant 50 : index
    %141 = vector.load %arg4[%c0_183, %c0_184, %c50_185] : memref<1x1x256xf32, #tpu.memory_space<vmem>>, vector<1x1x128xf32>
    %142 = vector.shape_cast %141 : vector<1x1x128xf32> to vector<1x128xf32>
    %c47 = arith.constant 47 : index
    %c0_186 = arith.constant 0 : index
    %143 = vector.load %arg10[%c47, %c0_186] : memref<128x128xf32, #tpu.memory_space<vmem>>, vector<1x128xf32>
    tpu.vector_store %arg10[%c47, %c0_186], %142 {strides = array<i32>} : memref<128x128xf32, #tpu.memory_space<vmem>>, vector<1x128xf32>,
    %c0_187 = arith.constant 0 : index
    %c0_188 = arith.constant 0 : index
    %c51_189 = arith.constant 51 : index
    %144 = vector.load %arg4[%c0_187, %c0_188, %c51_189] : memref<1x1x256xf32, #tpu.memory_space<vmem>>, vector<1x1x128xf32>
    %145 = vector.shape_cast %144 : vector<1x1x128xf32> to vector<1x128xf32>
    %c48_190 = arith.constant 48 : index
    %c0_191 = arith.constant 0 : index
    %146 = vector.load %arg10[%c48_190, %c0_191] : memref<128x128xf32, #tpu.memory_space<vmem>>, vector<1x128xf32>
    tpu.vector_store %arg10[%c48_190, %c0_191], %145 {strides = array<i32>} : memref<128x128xf32, #tpu.memory_space<vmem>>, vector<1x128xf32>,
    %c0_192 = arith.constant 0 : index
    %c0_193 = arith.constant 0 : index
    %c52_194 = arith.constant 52 : index
    %147 = vector.load %arg4[%c0_192, %c0_193, %c52_194] : memref<1x1x256xf32, #tpu.memory_space<vmem>>, vector<1x1x128xf32>
    %148 = vector.shape_cast %147 : vector<1x1x128xf32> to vector<1x128xf32>
    %c49_195 = arith.constant 49 : index
    %c0_196 = arith.constant 0 : index
    %149 = vector.load %arg10[%c49_195, %c0_196] : memref<128x128xf32, #tpu.memory_space<vmem>>, vector<1x128xf32>
    tpu.vector_store %arg10[%c49_195, %c0_196], %148 {strides = array<i32>} : memref<128x128xf32, #tpu.memory_space<vmem>>, vector<1x128xf32>,
    %c0_197 = arith.constant 0 : index
    %c0_198 = arith.constant 0 : index
    %c0_199 = arith.constant 0 : index
    %150 = vector.load %arg5[%c0_197, %c0_198, %c0_199] : memref<1x1x256xf32, #tpu.memory_space<vmem>>, vector<1x1x128xf32>
    %151 = vector.shape_cast %150 : vector<1x1x128xf32> to vector<1x128xf32>
    %c50_200 = arith.constant 50 : index
    %c0_201 = arith.constant 0 : index
    %152 = vector.load %arg10[%c50_200, %c0_201] : memref<128x128xf32, #tpu.memory_space<vmem>>, vector<1x128xf32>
    tpu.vector_store %arg10[%c50_200, %c0_201], %151 {strides = array<i32>} : memref<128x128xf32, #tpu.memory_space<vmem>>, vector<1x128xf32>,
    %c0_202 = arith.constant 0 : index
    %c0_203 = arith.constant 0 : index
    %c1_204 = arith.constant 1 : index
    %153 = vector.load %arg5[%c0_202, %c0_203, %c1_204] : memref<1x1x256xf32, #tpu.memory_space<vmem>>, vector<1x1x128xf32>
    %154 = vector.shape_cast %153 : vector<1x1x128xf32> to vector<1x128xf32>
    %c51_205 = arith.constant 51 : index
    %c0_206 = arith.constant 0 : index
    %155 = vector.load %arg10[%c51_205, %c0_206] : memref<128x128xf32, #tpu.memory_space<vmem>>, vector<1x128xf32>
    tpu.vector_store %arg10[%c51_205, %c0_206], %154 {strides = array<i32>} : memref<128x128xf32, #tpu.memory_space<vmem>>, vector<1x128xf32>,
    %c0_207 = arith.constant 0 : index
    %c0_208 = arith.constant 0 : index
    %c2_209 = arith.constant 2 : index
    %156 = vector.load %arg5[%c0_207, %c0_208, %c2_209] : memref<1x1x256xf32, #tpu.memory_space<vmem>>, vector<1x1x128xf32>
    %157 = vector.shape_cast %156 : vector<1x1x128xf32> to vector<1x128xf32>
    %c52_210 = arith.constant 52 : index
    %c0_211 = arith.constant 0 : index
    %158 = vector.load %arg10[%c52_210, %c0_211] : memref<128x128xf32, #tpu.memory_space<vmem>>, vector<1x128xf32>
    tpu.vector_store %arg10[%c52_210, %c0_211], %157 {strides = array<i32>} : memref<128x128xf32, #tpu.memory_space<vmem>>, vector<1x128xf32>,
    %c0_212 = arith.constant 0 : index
    %c0_213 = arith.constant 0 : index
    %c3_214 = arith.constant 3 : index
    %159 = vector.load %arg5[%c0_212, %c0_213, %c3_214] : memref<1x1x256xf32, #tpu.memory_space<vmem>>, vector<1x1x128xf32>
    %160 = vector.shape_cast %159 : vector<1x1x128xf32> to vector<1x128xf32>
    %c53 = arith.constant 53 : index
    %c0_215 = arith.constant 0 : index
    %161 = vector.load %arg10[%c53, %c0_215] : memref<128x128xf32, #tpu.memory_space<vmem>>, vector<1x128xf32>
    tpu.vector_store %arg10[%c53, %c0_215], %160 {strides = array<i32>} : memref<128x128xf32, #tpu.memory_space<vmem>>, vector<1x128xf32>,
    %c0_216 = arith.constant 0 : index
    %c0_217 = arith.constant 0 : index
    %c4_218 = arith.constant 4 : index
    %162 = vector.load %arg5[%c0_216, %c0_217, %c4_218] : memref<1x1x256xf32, #tpu.memory_space<vmem>>, vector<1x1x128xf32>
    %163 = vector.shape_cast %162 : vector<1x1x128xf32> to vector<1x128xf32>
    %c54 = arith.constant 54 : index
    %c0_219 = arith.constant 0 : index
    %164 = vector.load %arg10[%c54, %c0_219] : memref<128x128xf32, #tpu.memory_space<vmem>>, vector<1x128xf32>
    tpu.vector_store %arg10[%c54, %c0_219], %163 {strides = array<i32>} : memref<128x128xf32, #tpu.memory_space<vmem>>, vector<1x128xf32>,
    %c0_220 = arith.constant 0 : index
    %c0_221 = arith.constant 0 : index
    %c12_222 = arith.constant 12 : index
    %165 = vector.load %arg5[%c0_220, %c0_221, %c12_222] : memref<1x1x256xf32, #tpu.memory_space<vmem>>, vector<1x1x128xf32>
    %166 = vector.shape_cast %165 : vector<1x1x128xf32> to vector<1x128xf32>
    %c55 = arith.constant 55 : index
    %c0_223 = arith.constant 0 : index
    %167 = vector.load %arg10[%c55, %c0_223] : memref<128x128xf32, #tpu.memory_space<vmem>>, vector<1x128xf32>
    tpu.vector_store %arg10[%c55, %c0_223], %166 {strides = array<i32>} : memref<128x128xf32, #tpu.memory_space<vmem>>, vector<1x128xf32>,
    %c0_224 = arith.constant 0 : index
    %c0_225 = arith.constant 0 : index
    %c13_226 = arith.constant 13 : index
    %168 = vector.load %arg5[%c0_224, %c0_225, %c13_226] : memref<1x1x256xf32, #tpu.memory_space<vmem>>, vector<1x1x128xf32>
    %169 = vector.shape_cast %168 : vector<1x1x128xf32> to vector<1x128xf32>
    %c56 = arith.constant 56 : index
    %c0_227 = arith.constant 0 : index
    %170 = vector.load %arg10[%c56, %c0_227] : memref<128x128xf32, #tpu.memory_space<vmem>>, vector<1x128xf32>
    tpu.vector_store %arg10[%c56, %c0_227], %169 {strides = array<i32>} : memref<128x128xf32, #tpu.memory_space<vmem>>, vector<1x128xf32>,
    %c0_228 = arith.constant 0 : index
    %c0_229 = arith.constant 0 : index
    %c14_230 = arith.constant 14 : index
    %171 = vector.load %arg5[%c0_228, %c0_229, %c14_230] : memref<1x1x256xf32, #tpu.memory_space<vmem>>, vector<1x1x128xf32>
    %172 = vector.shape_cast %171 : vector<1x1x128xf32> to vector<1x128xf32>
    %c57 = arith.constant 57 : index
    %c0_231 = arith.constant 0 : index
    %173 = vector.load %arg10[%c57, %c0_231] : memref<128x128xf32, #tpu.memory_space<vmem>>, vector<1x128xf32>
    tpu.vector_store %arg10[%c57, %c0_231], %172 {strides = array<i32>} : memref<128x128xf32, #tpu.memory_space<vmem>>, vector<1x128xf32>,
    %c0_232 = arith.constant 0 : index
    %c0_233 = arith.constant 0 : index
    %c15_234 = arith.constant 15 : index
    %174 = vector.load %arg5[%c0_232, %c0_233, %c15_234] : memref<1x1x256xf32, #tpu.memory_space<vmem>>, vector<1x1x128xf32>
    %175 = vector.shape_cast %174 : vector<1x1x128xf32> to vector<1x128xf32>
    %c58 = arith.constant 58 : index
    %c0_235 = arith.constant 0 : index
    %176 = vector.load %arg10[%c58, %c0_235] : memref<128x128xf32, #tpu.memory_space<vmem>>, vector<1x128xf32>
    tpu.vector_store %arg10[%c58, %c0_235], %175 {strides = array<i32>} : memref<128x128xf32, #tpu.memory_space<vmem>>, vector<1x128xf32>,
    %c0_236 = arith.constant 0 : index
    %c0_237 = arith.constant 0 : index
    %c16_238 = arith.constant 16 : index
    %177 = vector.load %arg5[%c0_236, %c0_237, %c16_238] : memref<1x1x256xf32, #tpu.memory_space<vmem>>, vector<1x1x128xf32>
    %178 = vector.shape_cast %177 : vector<1x1x128xf32> to vector<1x128xf32>
    %c59 = arith.constant 59 : index
    %c0_239 = arith.constant 0 : index
    %179 = vector.load %arg10[%c59, %c0_239] : memref<128x128xf32, #tpu.memory_space<vmem>>, vector<1x128xf32>
    tpu.vector_store %arg10[%c59, %c0_239], %178 {strides = array<i32>} : memref<128x128xf32, #tpu.memory_space<vmem>>, vector<1x128xf32>,
    %c0_240 = arith.constant 0 : index
    %c0_241 = arith.constant 0 : index
    %c24_242 = arith.constant 24 : index
    %180 = vector.load %arg5[%c0_240, %c0_241, %c24_242] : memref<1x1x256xf32, #tpu.memory_space<vmem>>, vector<1x1x128xf32>
    %181 = vector.shape_cast %180 : vector<1x1x128xf32> to vector<1x128xf32>
    %c60 = arith.constant 60 : index
    %c0_243 = arith.constant 0 : index
    %182 = vector.load %arg10[%c60, %c0_243] : memref<128x128xf32, #tpu.memory_space<vmem>>, vector<1x128xf32>
    tpu.vector_store %arg10[%c60, %c0_243], %181 {strides = array<i32>} : memref<128x128xf32, #tpu.memory_space<vmem>>, vector<1x128xf32>,
    %c0_244 = arith.constant 0 : index
    %c0_245 = arith.constant 0 : index
    %c25_246 = arith.constant 25 : index
    %183 = vector.load %arg5[%c0_244, %c0_245, %c25_246] : memref<1x1x256xf32, #tpu.memory_space<vmem>>, vector<1x1x128xf32>
    %184 = vector.shape_cast %183 : vector<1x1x128xf32> to vector<1x128xf32>
    %c61 = arith.constant 61 : index
    %c0_247 = arith.constant 0 : index
    %185 = vector.load %arg10[%c61, %c0_247] : memref<128x128xf32, #tpu.memory_space<vmem>>, vector<1x128xf32>
    tpu.vector_store %arg10[%c61, %c0_247], %184 {strides = array<i32>} : memref<128x128xf32, #tpu.memory_space<vmem>>, vector<1x128xf32>,
    %c0_248 = arith.constant 0 : index
    %c0_249 = arith.constant 0 : index
    %c26_250 = arith.constant 26 : index
    %186 = vector.load %arg5[%c0_248, %c0_249, %c26_250] : memref<1x1x256xf32, #tpu.memory_space<vmem>>, vector<1x1x128xf32>
    %187 = vector.shape_cast %186 : vector<1x1x128xf32> to vector<1x128xf32>
    %c62 = arith.constant 62 : index
    %c0_251 = arith.constant 0 : index
    %188 = vector.load %arg10[%c62, %c0_251] : memref<128x128xf32, #tpu.memory_space<vmem>>, vector<1x128xf32>
    tpu.vector_store %arg10[%c62, %c0_251], %187 {strides = array<i32>} : memref<128x128xf32, #tpu.memory_space<vmem>>, vector<1x128xf32>,
    %c0_252 = arith.constant 0 : index
    %c0_253 = arith.constant 0 : index
    %c27_254 = arith.constant 27 : index
    %189 = vector.load %arg5[%c0_252, %c0_253, %c27_254] : memref<1x1x256xf32, #tpu.memory_space<vmem>>, vector<1x1x128xf32>
    %190 = vector.shape_cast %189 : vector<1x1x128xf32> to vector<1x128xf32>
    %c63 = arith.constant 63 : index
    %c0_255 = arith.constant 0 : index
    %191 = vector.load %arg10[%c63, %c0_255] : memref<128x128xf32, #tpu.memory_space<vmem>>, vector<1x128xf32>
    tpu.vector_store %arg10[%c63, %c0_255], %190 {strides = array<i32>} : memref<128x128xf32, #tpu.memory_space<vmem>>, vector<1x128xf32>,
    %c0_256 = arith.constant 0 : index
    %c0_257 = arith.constant 0 : index
    %c28_258 = arith.constant 28 : index
    %192 = vector.load %arg5[%c0_256, %c0_257, %c28_258] : memref<1x1x256xf32, #tpu.memory_space<vmem>>, vector<1x1x128xf32>
    %193 = vector.shape_cast %192 : vector<1x1x128xf32> to vector<1x128xf32>
    %c64 = arith.constant 64 : index
    %c0_259 = arith.constant 0 : index
    %194 = vector.load %arg10[%c64, %c0_259] : memref<128x128xf32, #tpu.memory_space<vmem>>, vector<1x128xf32>
    tpu.vector_store %arg10[%c64, %c0_259], %193 {strides = array<i32>} : memref<128x128xf32, #tpu.memory_space<vmem>>, vector<1x128xf32>,
    %c0_260 = arith.constant 0 : index
    %c0_261 = arith.constant 0 : index
    %c36_262 = arith.constant 36 : index
    %195 = vector.load %arg5[%c0_260, %c0_261, %c36_262] : memref<1x1x256xf32, #tpu.memory_space<vmem>>, vector<1x1x128xf32>
    %196 = vector.shape_cast %195 : vector<1x1x128xf32> to vector<1x128xf32>
    %c65 = arith.constant 65 : index
    %c0_263 = arith.constant 0 : index
    %197 = vector.load %arg10[%c65, %c0_263] : memref<128x128xf32, #tpu.memory_space<vmem>>, vector<1x128xf32>
    tpu.vector_store %arg10[%c65, %c0_263], %196 {strides = array<i32>} : memref<128x128xf32, #tpu.memory_space<vmem>>, vector<1x128xf32>,
    %c0_264 = arith.constant 0 : index
    %c0_265 = arith.constant 0 : index
    %c37_266 = arith.constant 37 : index
    %198 = vector.load %arg5[%c0_264, %c0_265, %c37_266] : memref<1x1x256xf32, #tpu.memory_space<vmem>>, vector<1x1x128xf32>
    %199 = vector.shape_cast %198 : vector<1x1x128xf32> to vector<1x128xf32>
    %c66 = arith.constant 66 : index
    %c0_267 = arith.constant 0 : index
    %200 = vector.load %arg10[%c66, %c0_267] : memref<128x128xf32, #tpu.memory_space<vmem>>, vector<1x128xf32>
    tpu.vector_store %arg10[%c66, %c0_267], %199 {strides = array<i32>} : memref<128x128xf32, #tpu.memory_space<vmem>>, vector<1x128xf32>,
    %c0_268 = arith.constant 0 : index
    %c0_269 = arith.constant 0 : index
    %c38_270 = arith.constant 38 : index
    %201 = vector.load %arg5[%c0_268, %c0_269, %c38_270] : memref<1x1x256xf32, #tpu.memory_space<vmem>>, vector<1x1x128xf32>
    %202 = vector.shape_cast %201 : vector<1x1x128xf32> to vector<1x128xf32>
    %c67 = arith.constant 67 : index
    %c0_271 = arith.constant 0 : index
    %203 = vector.load %arg10[%c67, %c0_271] : memref<128x128xf32, #tpu.memory_space<vmem>>, vector<1x128xf32>
    tpu.vector_store %arg10[%c67, %c0_271], %202 {strides = array<i32>} : memref<128x128xf32, #tpu.memory_space<vmem>>, vector<1x128xf32>,
    %c0_272 = arith.constant 0 : index
    %c0_273 = arith.constant 0 : index
    %c39_274 = arith.constant 39 : index
    %204 = vector.load %arg5[%c0_272, %c0_273, %c39_274] : memref<1x1x256xf32, #tpu.memory_space<vmem>>, vector<1x1x128xf32>
    %205 = vector.shape_cast %204 : vector<1x1x128xf32> to vector<1x128xf32>
    %c68 = arith.constant 68 : index
    %c0_275 = arith.constant 0 : index
    %206 = vector.load %arg10[%c68, %c0_275] : memref<128x128xf32, #tpu.memory_space<vmem>>, vector<1x128xf32>
    tpu.vector_store %arg10[%c68, %c0_275], %205 {strides = array<i32>} : memref<128x128xf32, #tpu.memory_space<vmem>>, vector<1x128xf32>,
    %c0_276 = arith.constant 0 : index
    %c0_277 = arith.constant 0 : index
    %c40_278 = arith.constant 40 : index
    %207 = vector.load %arg5[%c0_276, %c0_277, %c40_278] : memref<1x1x256xf32, #tpu.memory_space<vmem>>, vector<1x1x128xf32>
    %208 = vector.shape_cast %207 : vector<1x1x128xf32> to vector<1x128xf32>
    %c69 = arith.constant 69 : index
    %c0_279 = arith.constant 0 : index
    %209 = vector.load %arg10[%c69, %c0_279] : memref<128x128xf32, #tpu.memory_space<vmem>>, vector<1x128xf32>
    tpu.vector_store %arg10[%c69, %c0_279], %208 {strides = array<i32>} : memref<128x128xf32, #tpu.memory_space<vmem>>, vector<1x128xf32>,
    %c0_280 = arith.constant 0 : index
    %c0_281 = arith.constant 0 : index
    %c48_282 = arith.constant 48 : index
    %210 = vector.load %arg5[%c0_280, %c0_281, %c48_282] : memref<1x1x256xf32, #tpu.memory_space<vmem>>, vector<1x1x128xf32>
    %211 = vector.shape_cast %210 : vector<1x1x128xf32> to vector<1x128xf32>
    %c70 = arith.constant 70 : index
    %c0_283 = arith.constant 0 : index
    %212 = vector.load %arg10[%c70, %c0_283] : memref<128x128xf32, #tpu.memory_space<vmem>>, vector<1x128xf32>
    tpu.vector_store %arg10[%c70, %c0_283], %211 {strides = array<i32>} : memref<128x128xf32, #tpu.memory_space<vmem>>, vector<1x128xf32>,
    %c0_284 = arith.constant 0 : index
    %c0_285 = arith.constant 0 : index
    %c49_286 = arith.constant 49 : index
    %213 = vector.load %arg5[%c0_284, %c0_285, %c49_286] : memref<1x1x256xf32, #tpu.memory_space<vmem>>, vector<1x1x128xf32>
    %214 = vector.shape_cast %213 : vector<1x1x128xf32> to vector<1x128xf32>
    %c71 = arith.constant 71 : index
    %c0_287 = arith.constant 0 : index
    %215 = vector.load %arg10[%c71, %c0_287] : memref<128x128xf32, #tpu.memory_space<vmem>>, vector<1x128xf32>
    tpu.vector_store %arg10[%c71, %c0_287], %214 {strides = array<i32>} : memref<128x128xf32, #tpu.memory_space<vmem>>, vector<1x128xf32>,
    %c0_288 = arith.constant 0 : index
    %c0_289 = arith.constant 0 : index
    %c50_290 = arith.constant 50 : index
    %216 = vector.load %arg5[%c0_288, %c0_289, %c50_290] : memref<1x1x256xf32, #tpu.memory_space<vmem>>, vector<1x1x128xf32>
    %217 = vector.shape_cast %216 : vector<1x1x128xf32> to vector<1x128xf32>
    %c72 = arith.constant 72 : index
    %c0_291 = arith.constant 0 : index
    %218 = vector.load %arg10[%c72, %c0_291] : memref<128x128xf32, #tpu.memory_space<vmem>>, vector<1x128xf32>
    tpu.vector_store %arg10[%c72, %c0_291], %217 {strides = array<i32>} : memref<128x128xf32, #tpu.memory_space<vmem>>, vector<1x128xf32>,
    %c0_292 = arith.constant 0 : index
    %c0_293 = arith.constant 0 : index
    %c51_294 = arith.constant 51 : index
    %219 = vector.load %arg5[%c0_292, %c0_293, %c51_294] : memref<1x1x256xf32, #tpu.memory_space<vmem>>, vector<1x1x128xf32>
    %220 = vector.shape_cast %219 : vector<1x1x128xf32> to vector<1x128xf32>
    %c73 = arith.constant 73 : index
    %c0_295 = arith.constant 0 : index
    %221 = vector.load %arg10[%c73, %c0_295] : memref<128x128xf32, #tpu.memory_space<vmem>>, vector<1x128xf32>
    tpu.vector_store %arg10[%c73, %c0_295], %220 {strides = array<i32>} : memref<128x128xf32, #tpu.memory_space<vmem>>, vector<1x128xf32>,
    %c0_296 = arith.constant 0 : index
    %c0_297 = arith.constant 0 : index
    %c52_298 = arith.constant 52 : index
    %222 = vector.load %arg5[%c0_296, %c0_297, %c52_298] : memref<1x1x256xf32, #tpu.memory_space<vmem>>, vector<1x1x128xf32>
    %223 = vector.shape_cast %222 : vector<1x1x128xf32> to vector<1x128xf32>
    %c74 = arith.constant 74 : index
    %c0_299 = arith.constant 0 : index
    %224 = vector.load %arg10[%c74, %c0_299] : memref<128x128xf32, #tpu.memory_space<vmem>>, vector<1x128xf32>
    tpu.vector_store %arg10[%c74, %c0_299], %223 {strides = array<i32>} : memref<128x128xf32, #tpu.memory_space<vmem>>, vector<1x128xf32>,
    %c0_300 = arith.constant 0 : index
    %c0_301 = arith.constant 0 : index
    %c0_302 = arith.constant 0 : index
    %225 = vector.load %arg6[%c0_300, %c0_301, %c0_302] : memref<1x1x256xf32, #tpu.memory_space<vmem>>, vector<1x1x128xf32>
    %226 = vector.shape_cast %225 : vector<1x1x128xf32> to vector<1x128xf32>
    %c75 = arith.constant 75 : index
    %c0_303 = arith.constant 0 : index
    %227 = vector.load %arg10[%c75, %c0_303] : memref<128x128xf32, #tpu.memory_space<vmem>>, vector<1x128xf32>
    tpu.vector_store %arg10[%c75, %c0_303], %226 {strides = array<i32>} : memref<128x128xf32, #tpu.memory_space<vmem>>, vector<1x128xf32>,
    %c0_304 = arith.constant 0 : index
    %c0_305 = arith.constant 0 : index
    %c1_306 = arith.constant 1 : index
    %228 = vector.load %arg6[%c0_304, %c0_305, %c1_306] : memref<1x1x256xf32, #tpu.memory_space<vmem>>, vector<1x1x128xf32>
    %229 = vector.shape_cast %228 : vector<1x1x128xf32> to vector<1x128xf32>
    %c76 = arith.constant 76 : index
    %c0_307 = arith.constant 0 : index
    %230 = vector.load %arg10[%c76, %c0_307] : memref<128x128xf32, #tpu.memory_space<vmem>>, vector<1x128xf32>
    tpu.vector_store %arg10[%c76, %c0_307], %229 {strides = array<i32>} : memref<128x128xf32, #tpu.memory_space<vmem>>, vector<1x128xf32>,
    %c0_308 = arith.constant 0 : index
    %c0_309 = arith.constant 0 : index
    %c2_310 = arith.constant 2 : index
    %231 = vector.load %arg6[%c0_308, %c0_309, %c2_310] : memref<1x1x256xf32, #tpu.memory_space<vmem>>, vector<1x1x128xf32>
    %232 = vector.shape_cast %231 : vector<1x1x128xf32> to vector<1x128xf32>
    %c77 = arith.constant 77 : index
    %c0_311 = arith.constant 0 : index
    %233 = vector.load %arg10[%c77, %c0_311] : memref<128x128xf32, #tpu.memory_space<vmem>>, vector<1x128xf32>
    tpu.vector_store %arg10[%c77, %c0_311], %232 {strides = array<i32>} : memref<128x128xf32, #tpu.memory_space<vmem>>, vector<1x128xf32>,
    %c0_312 = arith.constant 0 : index
    %c0_313 = arith.constant 0 : index
    %c3_314 = arith.constant 3 : index
    %234 = vector.load %arg6[%c0_312, %c0_313, %c3_314] : memref<1x1x256xf32, #tpu.memory_space<vmem>>, vector<1x1x128xf32>
    %235 = vector.shape_cast %234 : vector<1x1x128xf32> to vector<1x128xf32>
    %c78 = arith.constant 78 : index
    %c0_315 = arith.constant 0 : index
    %236 = vector.load %arg10[%c78, %c0_315] : memref<128x128xf32, #tpu.memory_space<vmem>>, vector<1x128xf32>
    tpu.vector_store %arg10[%c78, %c0_315], %235 {strides = array<i32>} : memref<128x128xf32, #tpu.memory_space<vmem>>, vector<1x128xf32>,
    %c0_316 = arith.constant 0 : index
    %c0_317 = arith.constant 0 : index
    %c4_318 = arith.constant 4 : index
    %237 = vector.load %arg6[%c0_316, %c0_317, %c4_318] : memref<1x1x256xf32, #tpu.memory_space<vmem>>, vector<1x1x128xf32>
    %238 = vector.shape_cast %237 : vector<1x1x128xf32> to vector<1x128xf32>
    %c79 = arith.constant 79 : index
    %c0_319 = arith.constant 0 : index
    %239 = vector.load %arg10[%c79, %c0_319] : memref<128x128xf32, #tpu.memory_space<vmem>>, vector<1x128xf32>
    tpu.vector_store %arg10[%c79, %c0_319], %238 {strides = array<i32>} : memref<128x128xf32, #tpu.memory_space<vmem>>, vector<1x128xf32>,
    %c0_320 = arith.constant 0 : index
    %c0_321 = arith.constant 0 : index
    %c12_322 = arith.constant 12 : index
    %240 = vector.load %arg6[%c0_320, %c0_321, %c12_322] : memref<1x1x256xf32, #tpu.memory_space<vmem>>, vector<1x1x128xf32>
    %241 = vector.shape_cast %240 : vector<1x1x128xf32> to vector<1x128xf32>
    %c80 = arith.constant 80 : index
    %c0_323 = arith.constant 0 : index
    %242 = vector.load %arg10[%c80, %c0_323] : memref<128x128xf32, #tpu.memory_space<vmem>>, vector<1x128xf32>
    tpu.vector_store %arg10[%c80, %c0_323], %241 {strides = array<i32>} : memref<128x128xf32, #tpu.memory_space<vmem>>, vector<1x128xf32>,
    %c0_324 = arith.constant 0 : index
    %c0_325 = arith.constant 0 : index
    %c13_326 = arith.constant 13 : index
    %243 = vector.load %arg6[%c0_324, %c0_325, %c13_326] : memref<1x1x256xf32, #tpu.memory_space<vmem>>, vector<1x1x128xf32>
    %244 = vector.shape_cast %243 : vector<1x1x128xf32> to vector<1x128xf32>
    %c81 = arith.constant 81 : index
    %c0_327 = arith.constant 0 : index
    %245 = vector.load %arg10[%c81, %c0_327] : memref<128x128xf32, #tpu.memory_space<vmem>>, vector<1x128xf32>
    tpu.vector_store %arg10[%c81, %c0_327], %244 {strides = array<i32>} : memref<128x128xf32, #tpu.memory_space<vmem>>, vector<1x128xf32>,
    %c0_328 = arith.constant 0 : index
    %c0_329 = arith.constant 0 : index
    %c14_330 = arith.constant 14 : index
    %246 = vector.load %arg6[%c0_328, %c0_329, %c14_330] : memref<1x1x256xf32, #tpu.memory_space<vmem>>, vector<1x1x128xf32>
    %247 = vector.shape_cast %246 : vector<1x1x128xf32> to vector<1x128xf32>
    %c82 = arith.constant 82 : index
    %c0_331 = arith.constant 0 : index
    %248 = vector.load %arg10[%c82, %c0_331] : memref<128x128xf32, #tpu.memory_space<vmem>>, vector<1x128xf32>
    tpu.vector_store %arg10[%c82, %c0_331], %247 {strides = array<i32>} : memref<128x128xf32, #tpu.memory_space<vmem>>, vector<1x128xf32>,
    %c0_332 = arith.constant 0 : index
    %c0_333 = arith.constant 0 : index
    %c15_334 = arith.constant 15 : index
    %249 = vector.load %arg6[%c0_332, %c0_333, %c15_334] : memref<1x1x256xf32, #tpu.memory_space<vmem>>, vector<1x1x128xf32>
    %250 = vector.shape_cast %249 : vector<1x1x128xf32> to vector<1x128xf32>
    %c83 = arith.constant 83 : index
    %c0_335 = arith.constant 0 : index
    %251 = vector.load %arg10[%c83, %c0_335] : memref<128x128xf32, #tpu.memory_space<vmem>>, vector<1x128xf32>
    tpu.vector_store %arg10[%c83, %c0_335], %250 {strides = array<i32>} : memref<128x128xf32, #tpu.memory_space<vmem>>, vector<1x128xf32>,
    %c0_336 = arith.constant 0 : index
    %c0_337 = arith.constant 0 : index
    %c16_338 = arith.constant 16 : index
    %252 = vector.load %arg6[%c0_336, %c0_337, %c16_338] : memref<1x1x256xf32, #tpu.memory_space<vmem>>, vector<1x1x128xf32>
    %253 = vector.shape_cast %252 : vector<1x1x128xf32> to vector<1x128xf32>
    %c84 = arith.constant 84 : index
    %c0_339 = arith.constant 0 : index
    %254 = vector.load %arg10[%c84, %c0_339] : memref<128x128xf32, #tpu.memory_space<vmem>>, vector<1x128xf32>
    tpu.vector_store %arg10[%c84, %c0_339], %253 {strides = array<i32>} : memref<128x128xf32, #tpu.memory_space<vmem>>, vector<1x128xf32>,
    %c0_340 = arith.constant 0 : index
    %c0_341 = arith.constant 0 : index
    %c24_342 = arith.constant 24 : index
    %255 = vector.load %arg6[%c0_340, %c0_341, %c24_342] : memref<1x1x256xf32, #tpu.memory_space<vmem>>, vector<1x1x128xf32>
    %256 = vector.shape_cast %255 : vector<1x1x128xf32> to vector<1x128xf32>
    %c85 = arith.constant 85 : index
    %c0_343 = arith.constant 0 : index
    %257 = vector.load %arg10[%c85, %c0_343] : memref<128x128xf32, #tpu.memory_space<vmem>>, vector<1x128xf32>
    tpu.vector_store %arg10[%c85, %c0_343], %256 {strides = array<i32>} : memref<128x128xf32, #tpu.memory_space<vmem>>, vector<1x128xf32>,
    %c0_344 = arith.constant 0 : index
    %c0_345 = arith.constant 0 : index
    %c25_346 = arith.constant 25 : index
    %258 = vector.load %arg6[%c0_344, %c0_345, %c25_346] : memref<1x1x256xf32, #tpu.memory_space<vmem>>, vector<1x1x128xf32>
    %259 = vector.shape_cast %258 : vector<1x1x128xf32> to vector<1x128xf32>
    %c86 = arith.constant 86 : index
    %c0_347 = arith.constant 0 : index
    %260 = vector.load %arg10[%c86, %c0_347] : memref<128x128xf32, #tpu.memory_space<vmem>>, vector<1x128xf32>
    tpu.vector_store %arg10[%c86, %c0_347], %259 {strides = array<i32>} : memref<128x128xf32, #tpu.memory_space<vmem>>, vector<1x128xf32>,
    %c0_348 = arith.constant 0 : index
    %c0_349 = arith.constant 0 : index
    %c26_350 = arith.constant 26 : index
    %261 = vector.load %arg6[%c0_348, %c0_349, %c26_350] : memref<1x1x256xf32, #tpu.memory_space<vmem>>, vector<1x1x128xf32>
    %262 = vector.shape_cast %261 : vector<1x1x128xf32> to vector<1x128xf32>
    %c87 = arith.constant 87 : index
    %c0_351 = arith.constant 0 : index
    %263 = vector.load %arg10[%c87, %c0_351] : memref<128x128xf32, #tpu.memory_space<vmem>>, vector<1x128xf32>
    tpu.vector_store %arg10[%c87, %c0_351], %262 {strides = array<i32>} : memref<128x128xf32, #tpu.memory_space<vmem>>, vector<1x128xf32>,
    %c0_352 = arith.constant 0 : index
    %c0_353 = arith.constant 0 : index
    %c27_354 = arith.constant 27 : index
    %264 = vector.load %arg6[%c0_352, %c0_353, %c27_354] : memref<1x1x256xf32, #tpu.memory_space<vmem>>, vector<1x1x128xf32>
    %265 = vector.shape_cast %264 : vector<1x1x128xf32> to vector<1x128xf32>
    %c88 = arith.constant 88 : index
    %c0_355 = arith.constant 0 : index
    %266 = vector.load %arg10[%c88, %c0_355] : memref<128x128xf32, #tpu.memory_space<vmem>>, vector<1x128xf32>
    tpu.vector_store %arg10[%c88, %c0_355], %265 {strides = array<i32>} : memref<128x128xf32, #tpu.memory_space<vmem>>, vector<1x128xf32>,
    %c0_356 = arith.constant 0 : index
    %c0_357 = arith.constant 0 : index
    %c28_358 = arith.constant 28 : index
    %267 = vector.load %arg6[%c0_356, %c0_357, %c28_358] : memref<1x1x256xf32, #tpu.memory_space<vmem>>, vector<1x1x128xf32>
    %268 = vector.shape_cast %267 : vector<1x1x128xf32> to vector<1x128xf32>
    %c89 = arith.constant 89 : index
    %c0_359 = arith.constant 0 : index
    %269 = vector.load %arg10[%c89, %c0_359] : memref<128x128xf32, #tpu.memory_space<vmem>>, vector<1x128xf32>
    tpu.vector_store %arg10[%c89, %c0_359], %268 {strides = array<i32>} : memref<128x128xf32, #tpu.memory_space<vmem>>, vector<1x128xf32>,
    %c0_360 = arith.constant 0 : index
    %c0_361 = arith.constant 0 : index
    %c36_362 = arith.constant 36 : index
    %270 = vector.load %arg6[%c0_360, %c0_361, %c36_362] : memref<1x1x256xf32, #tpu.memory_space<vmem>>, vector<1x1x128xf32>
    %271 = vector.shape_cast %270 : vector<1x1x128xf32> to vector<1x128xf32>
    %c90 = arith.constant 90 : index
    %c0_363 = arith.constant 0 : index
    %272 = vector.load %arg10[%c90, %c0_363] : memref<128x128xf32, #tpu.memory_space<vmem>>, vector<1x128xf32>
    tpu.vector_store %arg10[%c90, %c0_363], %271 {strides = array<i32>} : memref<128x128xf32, #tpu.memory_space<vmem>>, vector<1x128xf32>,
    %c0_364 = arith.constant 0 : index
    %c0_365 = arith.constant 0 : index
    %c37_366 = arith.constant 37 : index
    %273 = vector.load %arg6[%c0_364, %c0_365, %c37_366] : memref<1x1x256xf32, #tpu.memory_space<vmem>>, vector<1x1x128xf32>
    %274 = vector.shape_cast %273 : vector<1x1x128xf32> to vector<1x128xf32>
    %c91 = arith.constant 91 : index
    %c0_367 = arith.constant 0 : index
    %275 = vector.load %arg10[%c91, %c0_367] : memref<128x128xf32, #tpu.memory_space<vmem>>, vector<1x128xf32>
    tpu.vector_store %arg10[%c91, %c0_367], %274 {strides = array<i32>} : memref<128x128xf32, #tpu.memory_space<vmem>>, vector<1x128xf32>,
    %c0_368 = arith.constant 0 : index
    %c0_369 = arith.constant 0 : index
    %c38_370 = arith.constant 38 : index
    %276 = vector.load %arg6[%c0_368, %c0_369, %c38_370] : memref<1x1x256xf32, #tpu.memory_space<vmem>>, vector<1x1x128xf32>
    %277 = vector.shape_cast %276 : vector<1x1x128xf32> to vector<1x128xf32>
    %c92 = arith.constant 92 : index
    %c0_371 = arith.constant 0 : index
    %278 = vector.load %arg10[%c92, %c0_371] : memref<128x128xf32, #tpu.memory_space<vmem>>, vector<1x128xf32>
    tpu.vector_store %arg10[%c92, %c0_371], %277 {strides = array<i32>} : memref<128x128xf32, #tpu.memory_space<vmem>>, vector<1x128xf32>,
    %c0_372 = arith.constant 0 : index
    %c0_373 = arith.constant 0 : index
    %c39_374 = arith.constant 39 : index
    %279 = vector.load %arg6[%c0_372, %c0_373, %c39_374] : memref<1x1x256xf32, #tpu.memory_space<vmem>>, vector<1x1x128xf32>
    %280 = vector.shape_cast %279 : vector<1x1x128xf32> to vector<1x128xf32>
    %c93 = arith.constant 93 : index
    %c0_375 = arith.constant 0 : index
    %281 = vector.load %arg10[%c93, %c0_375] : memref<128x128xf32, #tpu.memory_space<vmem>>, vector<1x128xf32>
    tpu.vector_store %arg10[%c93, %c0_375], %280 {strides = array<i32>} : memref<128x128xf32, #tpu.memory_space<vmem>>, vector<1x128xf32>,
    %c0_376 = arith.constant 0 : index
    %c0_377 = arith.constant 0 : index
    %c40_378 = arith.constant 40 : index
    %282 = vector.load %arg6[%c0_376, %c0_377, %c40_378] : memref<1x1x256xf32, #tpu.memory_space<vmem>>, vector<1x1x128xf32>
    %283 = vector.shape_cast %282 : vector<1x1x128xf32> to vector<1x128xf32>
    %c94 = arith.constant 94 : index
    %c0_379 = arith.constant 0 : index
    %284 = vector.load %arg10[%c94, %c0_379] : memref<128x128xf32, #tpu.memory_space<vmem>>, vector<1x128xf32>
    tpu.vector_store %arg10[%c94, %c0_379], %283 {strides = array<i32>} : memref<128x128xf32, #tpu.memory_space<vmem>>, vector<1x128xf32>,
    %c0_380 = arith.constant 0 : index
    %c0_381 = arith.constant 0 : index
    %c48_382 = arith.constant 48 : index
    %285 = vector.load %arg6[%c0_380, %c0_381, %c48_382] : memref<1x1x256xf32, #tpu.memory_space<vmem>>, vector<1x1x128xf32>
    %286 = vector.shape_cast %285 : vector<1x1x128xf32> to vector<1x128xf32>
    %c95 = arith.constant 95 : index
    %c0_383 = arith.constant 0 : index
    %287 = vector.load %arg10[%c95, %c0_383] : memref<128x128xf32, #tpu.memory_space<vmem>>, vector<1x128xf32>
    tpu.vector_store %arg10[%c95, %c0_383], %286 {strides = array<i32>} : memref<128x128xf32, #tpu.memory_space<vmem>>, vector<1x128xf32>,
    %c0_384 = arith.constant 0 : index
    %c0_385 = arith.constant 0 : index
    %c49_386 = arith.constant 49 : index
    %288 = vector.load %arg6[%c0_384, %c0_385, %c49_386] : memref<1x1x256xf32, #tpu.memory_space<vmem>>, vector<1x1x128xf32>
    %289 = vector.shape_cast %288 : vector<1x1x128xf32> to vector<1x128xf32>
    %c96 = arith.constant 96 : index
    %c0_387 = arith.constant 0 : index
    %290 = vector.load %arg10[%c96, %c0_387] : memref<128x128xf32, #tpu.memory_space<vmem>>, vector<1x128xf32>
    tpu.vector_store %arg10[%c96, %c0_387], %289 {strides = array<i32>} : memref<128x128xf32, #tpu.memory_space<vmem>>, vector<1x128xf32>,
    %c0_388 = arith.constant 0 : index
    %c0_389 = arith.constant 0 : index
    %c50_390 = arith.constant 50 : index
    %291 = vector.load %arg6[%c0_388, %c0_389, %c50_390] : memref<1x1x256xf32, #tpu.memory_space<vmem>>, vector<1x1x128xf32>
    %292 = vector.shape_cast %291 : vector<1x1x128xf32> to vector<1x128xf32>
    %c97 = arith.constant 97 : index
    %c0_391 = arith.constant 0 : index
    %293 = vector.load %arg10[%c97, %c0_391] : memref<128x128xf32, #tpu.memory_space<vmem>>, vector<1x128xf32>
    tpu.vector_store %arg10[%c97, %c0_391], %292 {strides = array<i32>} : memref<128x128xf32, #tpu.memory_space<vmem>>, vector<1x128xf32>,
    %c0_392 = arith.constant 0 : index
    %c0_393 = arith.constant 0 : index
    %c51_394 = arith.constant 51 : index
    %294 = vector.load %arg6[%c0_392, %c0_393, %c51_394] : memref<1x1x256xf32, #tpu.memory_space<vmem>>, vector<1x1x128xf32>
    %295 = vector.shape_cast %294 : vector<1x1x128xf32> to vector<1x128xf32>
    %c98 = arith.constant 98 : index
    %c0_395 = arith.constant 0 : index
    %296 = vector.load %arg10[%c98, %c0_395] : memref<128x128xf32, #tpu.memory_space<vmem>>, vector<1x128xf32>
    tpu.vector_store %arg10[%c98, %c0_395], %295 {strides = array<i32>} : memref<128x128xf32, #tpu.memory_space<vmem>>, vector<1x128xf32>,
    %c0_396 = arith.constant 0 : index
    %c0_397 = arith.constant 0 : index
    %c52_398 = arith.constant 52 : index
    %297 = vector.load %arg6[%c0_396, %c0_397, %c52_398] : memref<1x1x256xf32, #tpu.memory_space<vmem>>, vector<1x1x128xf32>
    %298 = vector.shape_cast %297 : vector<1x1x128xf32> to vector<1x128xf32>
    %c99 = arith.constant 99 : index
    %c0_399 = arith.constant 0 : index
    %299 = vector.load %arg10[%c99, %c0_399] : memref<128x128xf32, #tpu.memory_space<vmem>>, vector<1x128xf32>
    tpu.vector_store %arg10[%c99, %c0_399], %298 {strides = array<i32>} : memref<128x128xf32, #tpu.memory_space<vmem>>, vector<1x128xf32>,
    %c0_400 = arith.constant 0 : index
    %c0_401 = arith.constant 0 : index
    %c0_402 = arith.constant 0 : index
    %300 = vector.load %arg7[%c0_400, %c0_401, %c0_402] : memref<1x1x256xf32, #tpu.memory_space<vmem>>, vector<1x1x128xf32>
    %301 = vector.shape_cast %300 : vector<1x1x128xf32> to vector<1x128xf32>
    %c100 = arith.constant 100 : index
    %c0_403 = arith.constant 0 : index
    %302 = vector.load %arg10[%c100, %c0_403] : memref<128x128xf32, #tpu.memory_space<vmem>>, vector<1x128xf32>
    tpu.vector_store %arg10[%c100, %c0_403], %301 {strides = array<i32>} : memref<128x128xf32, #tpu.memory_space<vmem>>, vector<1x128xf32>,
    %c0_404 = arith.constant 0 : index
    %c0_405 = arith.constant 0 : index
    %c1_406 = arith.constant 1 : index
    %303 = vector.load %arg7[%c0_404, %c0_405, %c1_406] : memref<1x1x256xf32, #tpu.memory_space<vmem>>, vector<1x1x128xf32>
    %304 = vector.shape_cast %303 : vector<1x1x128xf32> to vector<1x128xf32>
    %c101 = arith.constant 101 : index
    %c0_407 = arith.constant 0 : index
    %305 = vector.load %arg10[%c101, %c0_407] : memref<128x128xf32, #tpu.memory_space<vmem>>, vector<1x128xf32>
    tpu.vector_store %arg10[%c101, %c0_407], %304 {strides = array<i32>} : memref<128x128xf32, #tpu.memory_space<vmem>>, vector<1x128xf32>,
    %c0_408 = arith.constant 0 : index
    %c0_409 = arith.constant 0 : index
    %c2_410 = arith.constant 2 : index
    %306 = vector.load %arg7[%c0_408, %c0_409, %c2_410] : memref<1x1x256xf32, #tpu.memory_space<vmem>>, vector<1x1x128xf32>
    %307 = vector.shape_cast %306 : vector<1x1x128xf32> to vector<1x128xf32>
    %c102 = arith.constant 102 : index
    %c0_411 = arith.constant 0 : index
    %308 = vector.load %arg10[%c102, %c0_411] : memref<128x128xf32, #tpu.memory_space<vmem>>, vector<1x128xf32>
    tpu.vector_store %arg10[%c102, %c0_411], %307 {strides = array<i32>} : memref<128x128xf32, #tpu.memory_space<vmem>>, vector<1x128xf32>,
    %c0_412 = arith.constant 0 : index
    %c0_413 = arith.constant 0 : index
    %c3_414 = arith.constant 3 : index
    %309 = vector.load %arg7[%c0_412, %c0_413, %c3_414] : memref<1x1x256xf32, #tpu.memory_space<vmem>>, vector<1x1x128xf32>
    %310 = vector.shape_cast %309 : vector<1x1x128xf32> to vector<1x128xf32>
    %c103 = arith.constant 103 : index
    %c0_415 = arith.constant 0 : index
    %311 = vector.load %arg10[%c103, %c0_415] : memref<128x128xf32, #tpu.memory_space<vmem>>, vector<1x128xf32>
    tpu.vector_store %arg10[%c103, %c0_415], %310 {strides = array<i32>} : memref<128x128xf32, #tpu.memory_space<vmem>>, vector<1x128xf32>,
    %c0_416 = arith.constant 0 : index
    %c0_417 = arith.constant 0 : index
    %c4_418 = arith.constant 4 : index
    %312 = vector.load %arg7[%c0_416, %c0_417, %c4_418] : memref<1x1x256xf32, #tpu.memory_space<vmem>>, vector<1x1x128xf32>
    %313 = vector.shape_cast %312 : vector<1x1x128xf32> to vector<1x128xf32>
    %c104 = arith.constant 104 : index
    %c0_419 = arith.constant 0 : index
    %314 = vector.load %arg10[%c104, %c0_419] : memref<128x128xf32, #tpu.memory_space<vmem>>, vector<1x128xf32>
    tpu.vector_store %arg10[%c104, %c0_419], %313 {strides = array<i32>} : memref<128x128xf32, #tpu.memory_space<vmem>>, vector<1x128xf32>,
    %c0_420 = arith.constant 0 : index
    %c0_421 = arith.constant 0 : index
    %c12_422 = arith.constant 12 : index
    %315 = vector.load %arg7[%c0_420, %c0_421, %c12_422] : memref<1x1x256xf32, #tpu.memory_space<vmem>>, vector<1x1x128xf32>
    %316 = vector.shape_cast %315 : vector<1x1x128xf32> to vector<1x128xf32>
    %c105 = arith.constant 105 : index
    %c0_423 = arith.constant 0 : index
    %317 = vector.load %arg10[%c105, %c0_423] : memref<128x128xf32, #tpu.memory_space<vmem>>, vector<1x128xf32>
    tpu.vector_store %arg10[%c105, %c0_423], %316 {strides = array<i32>} : memref<128x128xf32, #tpu.memory_space<vmem>>, vector<1x128xf32>,
    %c0_424 = arith.constant 0 : index
    %c0_425 = arith.constant 0 : index
    %c13_426 = arith.constant 13 : index
    %318 = vector.load %arg7[%c0_424, %c0_425, %c13_426] : memref<1x1x256xf32, #tpu.memory_space<vmem>>, vector<1x1x128xf32>
    %319 = vector.shape_cast %318 : vector<1x1x128xf32> to vector<1x128xf32>
    %c106 = arith.constant 106 : index
    %c0_427 = arith.constant 0 : index
    %320 = vector.load %arg10[%c106, %c0_427] : memref<128x128xf32, #tpu.memory_space<vmem>>, vector<1x128xf32>
    tpu.vector_store %arg10[%c106, %c0_427], %319 {strides = array<i32>} : memref<128x128xf32, #tpu.memory_space<vmem>>, vector<1x128xf32>,
    %c0_428 = arith.constant 0 : index
    %c0_429 = arith.constant 0 : index
    %c14_430 = arith.constant 14 : index
    %321 = vector.load %arg7[%c0_428, %c0_429, %c14_430] : memref<1x1x256xf32, #tpu.memory_space<vmem>>, vector<1x1x128xf32>
    %322 = vector.shape_cast %321 : vector<1x1x128xf32> to vector<1x128xf32>
    %c107 = arith.constant 107 : index
    %c0_431 = arith.constant 0 : index
    %323 = vector.load %arg10[%c107, %c0_431] : memref<128x128xf32, #tpu.memory_space<vmem>>, vector<1x128xf32>
    tpu.vector_store %arg10[%c107, %c0_431], %322 {strides = array<i32>} : memref<128x128xf32, #tpu.memory_space<vmem>>, vector<1x128xf32>,
    %c0_432 = arith.constant 0 : index
    %c0_433 = arith.constant 0 : index
    %c15_434 = arith.constant 15 : index
    %324 = vector.load %arg7[%c0_432, %c0_433, %c15_434] : memref<1x1x256xf32, #tpu.memory_space<vmem>>, vector<1x1x128xf32>
    %325 = vector.shape_cast %324 : vector<1x1x128xf32> to vector<1x128xf32>
    %c108 = arith.constant 108 : index
    %c0_435 = arith.constant 0 : index
    %326 = vector.load %arg10[%c108, %c0_435] : memref<128x128xf32, #tpu.memory_space<vmem>>, vector<1x128xf32>
    tpu.vector_store %arg10[%c108, %c0_435], %325 {strides = array<i32>} : memref<128x128xf32, #tpu.memory_space<vmem>>, vector<1x128xf32>,
    %c0_436 = arith.constant 0 : index
    %c0_437 = arith.constant 0 : index
    %c16_438 = arith.constant 16 : index
    %327 = vector.load %arg7[%c0_436, %c0_437, %c16_438] : memref<1x1x256xf32, #tpu.memory_space<vmem>>, vector<1x1x128xf32>
    %328 = vector.shape_cast %327 : vector<1x1x128xf32> to vector<1x128xf32>
    %c109 = arith.constant 109 : index
    %c0_439 = arith.constant 0 : index
    %329 = vector.load %arg10[%c109, %c0_439] : memref<128x128xf32, #tpu.memory_space<vmem>>, vector<1x128xf32>
    tpu.vector_store %arg10[%c109, %c0_439], %328 {strides = array<i32>} : memref<128x128xf32, #tpu.memory_space<vmem>>, vector<1x128xf32>,
    %c0_440 = arith.constant 0 : index
    %c0_441 = arith.constant 0 : index
    %c24_442 = arith.constant 24 : index
    %330 = vector.load %arg7[%c0_440, %c0_441, %c24_442] : memref<1x1x256xf32, #tpu.memory_space<vmem>>, vector<1x1x128xf32>
    %331 = vector.shape_cast %330 : vector<1x1x128xf32> to vector<1x128xf32>
    %c110 = arith.constant 110 : index
    %c0_443 = arith.constant 0 : index
    %332 = vector.load %arg10[%c110, %c0_443] : memref<128x128xf32, #tpu.memory_space<vmem>>, vector<1x128xf32>
    tpu.vector_store %arg10[%c110, %c0_443], %331 {strides = array<i32>} : memref<128x128xf32, #tpu.memory_space<vmem>>, vector<1x128xf32>,
    %c0_444 = arith.constant 0 : index
    %c0_445 = arith.constant 0 : index
    %c25_446 = arith.constant 25 : index
    %333 = vector.load %arg7[%c0_444, %c0_445, %c25_446] : memref<1x1x256xf32, #tpu.memory_space<vmem>>, vector<1x1x128xf32>
    %334 = vector.shape_cast %333 : vector<1x1x128xf32> to vector<1x128xf32>
    %c111 = arith.constant 111 : index
    %c0_447 = arith.constant 0 : index
    %335 = vector.load %arg10[%c111, %c0_447] : memref<128x128xf32, #tpu.memory_space<vmem>>, vector<1x128xf32>
    tpu.vector_store %arg10[%c111, %c0_447], %334 {strides = array<i32>} : memref<128x128xf32, #tpu.memory_space<vmem>>, vector<1x128xf32>,
    %c0_448 = arith.constant 0 : index
    %c0_449 = arith.constant 0 : index
    %c26_450 = arith.constant 26 : index
    %336 = vector.load %arg7[%c0_448, %c0_449, %c26_450] : memref<1x1x256xf32, #tpu.memory_space<vmem>>, vector<1x1x128xf32>
    %337 = vector.shape_cast %336 : vector<1x1x128xf32> to vector<1x128xf32>
    %c112 = arith.constant 112 : index
    %c0_451 = arith.constant 0 : index
    %338 = vector.load %arg10[%c112, %c0_451] : memref<128x128xf32, #tpu.memory_space<vmem>>, vector<1x128xf32>
    tpu.vector_store %arg10[%c112, %c0_451], %337 {strides = array<i32>} : memref<128x128xf32, #tpu.memory_space<vmem>>, vector<1x128xf32>,
    %c0_452 = arith.constant 0 : index
    %c0_453 = arith.constant 0 : index
    %c27_454 = arith.constant 27 : index
    %339 = vector.load %arg7[%c0_452, %c0_453, %c27_454] : memref<1x1x256xf32, #tpu.memory_space<vmem>>, vector<1x1x128xf32>
    %340 = vector.shape_cast %339 : vector<1x1x128xf32> to vector<1x128xf32>
    %c113 = arith.constant 113 : index
    %c0_455 = arith.constant 0 : index
    %341 = vector.load %arg10[%c113, %c0_455] : memref<128x128xf32, #tpu.memory_space<vmem>>, vector<1x128xf32>
    tpu.vector_store %arg10[%c113, %c0_455], %340 {strides = array<i32>} : memref<128x128xf32, #tpu.memory_space<vmem>>, vector<1x128xf32>,
    %c0_456 = arith.constant 0 : index
    %c0_457 = arith.constant 0 : index
    %c28_458 = arith.constant 28 : index
    %342 = vector.load %arg7[%c0_456, %c0_457, %c28_458] : memref<1x1x256xf32, #tpu.memory_space<vmem>>, vector<1x1x128xf32>
    %343 = vector.shape_cast %342 : vector<1x1x128xf32> to vector<1x128xf32>
    %c114 = arith.constant 114 : index
    %c0_459 = arith.constant 0 : index
    %344 = vector.load %arg10[%c114, %c0_459] : memref<128x128xf32, #tpu.memory_space<vmem>>, vector<1x128xf32>
    tpu.vector_store %arg10[%c114, %c0_459], %343 {strides = array<i32>} : memref<128x128xf32, #tpu.memory_space<vmem>>, vector<1x128xf32>,
    %c0_460 = arith.constant 0 : index
    %c0_461 = arith.constant 0 : index
    %c36_462 = arith.constant 36 : index
    %345 = vector.load %arg7[%c0_460, %c0_461, %c36_462] : memref<1x1x256xf32, #tpu.memory_space<vmem>>, vector<1x1x128xf32>
    %346 = vector.shape_cast %345 : vector<1x1x128xf32> to vector<1x128xf32>
    %c115 = arith.constant 115 : index
    %c0_463 = arith.constant 0 : index
    %347 = vector.load %arg10[%c115, %c0_463] : memref<128x128xf32, #tpu.memory_space<vmem>>, vector<1x128xf32>
    tpu.vector_store %arg10[%c115, %c0_463], %346 {strides = array<i32>} : memref<128x128xf32, #tpu.memory_space<vmem>>, vector<1x128xf32>,
    %c0_464 = arith.constant 0 : index
    %c0_465 = arith.constant 0 : index
    %c37_466 = arith.constant 37 : index
    %348 = vector.load %arg7[%c0_464, %c0_465, %c37_466] : memref<1x1x256xf32, #tpu.memory_space<vmem>>, vector<1x1x128xf32>
    %349 = vector.shape_cast %348 : vector<1x1x128xf32> to vector<1x128xf32>
    %c116 = arith.constant 116 : index
    %c0_467 = arith.constant 0 : index
    %350 = vector.load %arg10[%c116, %c0_467] : memref<128x128xf32, #tpu.memory_space<vmem>>, vector<1x128xf32>
    tpu.vector_store %arg10[%c116, %c0_467], %349 {strides = array<i32>} : memref<128x128xf32, #tpu.memory_space<vmem>>, vector<1x128xf32>,
    %c0_468 = arith.constant 0 : index
    %c0_469 = arith.constant 0 : index
    %c38_470 = arith.constant 38 : index
    %351 = vector.load %arg7[%c0_468, %c0_469, %c38_470] : memref<1x1x256xf32, #tpu.memory_space<vmem>>, vector<1x1x128xf32>
    %352 = vector.shape_cast %351 : vector<1x1x128xf32> to vector<1x128xf32>
    %c117 = arith.constant 117 : index
    %c0_471 = arith.constant 0 : index
    %353 = vector.load %arg10[%c117, %c0_471] : memref<128x128xf32, #tpu.memory_space<vmem>>, vector<1x128xf32>
    tpu.vector_store %arg10[%c117, %c0_471], %352 {strides = array<i32>} : memref<128x128xf32, #tpu.memory_space<vmem>>, vector<1x128xf32>,
    %c0_472 = arith.constant 0 : index
    %c0_473 = arith.constant 0 : index
    %c39_474 = arith.constant 39 : index
    %354 = vector.load %arg7[%c0_472, %c0_473, %c39_474] : memref<1x1x256xf32, #tpu.memory_space<vmem>>, vector<1x1x128xf32>
    %355 = vector.shape_cast %354 : vector<1x1x128xf32> to vector<1x128xf32>
    %c118 = arith.constant 118 : index
    %c0_475 = arith.constant 0 : index
    %356 = vector.load %arg10[%c118, %c0_475] : memref<128x128xf32, #tpu.memory_space<vmem>>, vector<1x128xf32>
    tpu.vector_store %arg10[%c118, %c0_475], %355 {strides = array<i32>} : memref<128x128xf32, #tpu.memory_space<vmem>>, vector<1x128xf32>,
    %c0_476 = arith.constant 0 : index
    %c0_477 = arith.constant 0 : index
    %c40_478 = arith.constant 40 : index
    %357 = vector.load %arg7[%c0_476, %c0_477, %c40_478] : memref<1x1x256xf32, #tpu.memory_space<vmem>>, vector<1x1x128xf32>
    %358 = vector.shape_cast %357 : vector<1x1x128xf32> to vector<1x128xf32>
    %c119 = arith.constant 119 : index
    %c0_479 = arith.constant 0 : index
    %359 = vector.load %arg10[%c119, %c0_479] : memref<128x128xf32, #tpu.memory_space<vmem>>, vector<1x128xf32>
    tpu.vector_store %arg10[%c119, %c0_479], %358 {strides = array<i32>} : memref<128x128xf32, #tpu.memory_space<vmem>>, vector<1x128xf32>,
    %c0_480 = arith.constant 0 : index
    %c0_481 = arith.constant 0 : index
    %c48_482 = arith.constant 48 : index
    %360 = vector.load %arg7[%c0_480, %c0_481, %c48_482] : memref<1x1x256xf32, #tpu.memory_space<vmem>>, vector<1x1x128xf32>
    %361 = vector.shape_cast %360 : vector<1x1x128xf32> to vector<1x128xf32>
    %c120 = arith.constant 120 : index
    %c0_483 = arith.constant 0 : index
    %362 = vector.load %arg10[%c120, %c0_483] : memref<128x128xf32, #tpu.memory_space<vmem>>, vector<1x128xf32>
    tpu.vector_store %arg10[%c120, %c0_483], %361 {strides = array<i32>} : memref<128x128xf32, #tpu.memory_space<vmem>>, vector<1x128xf32>,
    %c0_484 = arith.constant 0 : index
    %c0_485 = arith.constant 0 : index
    %c49_486 = arith.constant 49 : index
    %363 = vector.load %arg7[%c0_484, %c0_485, %c49_486] : memref<1x1x256xf32, #tpu.memory_space<vmem>>, vector<1x1x128xf32>
    %364 = vector.shape_cast %363 : vector<1x1x128xf32> to vector<1x128xf32>
    %c121 = arith.constant 121 : index
    %c0_487 = arith.constant 0 : index
    %365 = vector.load %arg10[%c121, %c0_487] : memref<128x128xf32, #tpu.memory_space<vmem>>, vector<1x128xf32>
    tpu.vector_store %arg10[%c121, %c0_487], %364 {strides = array<i32>} : memref<128x128xf32, #tpu.memory_space<vmem>>, vector<1x128xf32>,
    %c0_488 = arith.constant 0 : index
    %c0_489 = arith.constant 0 : index
    %c50_490 = arith.constant 50 : index
    %366 = vector.load %arg7[%c0_488, %c0_489, %c50_490] : memref<1x1x256xf32, #tpu.memory_space<vmem>>, vector<1x1x128xf32>
    %367 = vector.shape_cast %366 : vector<1x1x128xf32> to vector<1x128xf32>
    %c122 = arith.constant 122 : index
    %c0_491 = arith.constant 0 : index
    %368 = vector.load %arg10[%c122, %c0_491] : memref<128x128xf32, #tpu.memory_space<vmem>>, vector<1x128xf32>
    tpu.vector_store %arg10[%c122, %c0_491], %367 {strides = array<i32>} : memref<128x128xf32, #tpu.memory_space<vmem>>, vector<1x128xf32>,
    %c0_492 = arith.constant 0 : index
    %c0_493 = arith.constant 0 : index
    %c51_494 = arith.constant 51 : index
    %369 = vector.load %arg7[%c0_492, %c0_493, %c51_494] : memref<1x1x256xf32, #tpu.memory_space<vmem>>, vector<1x1x128xf32>
    %370 = vector.shape_cast %369 : vector<1x1x128xf32> to vector<1x128xf32>
    %c123 = arith.constant 123 : index
    %c0_495 = arith.constant 0 : index
    %371 = vector.load %arg10[%c123, %c0_495] : memref<128x128xf32, #tpu.memory_space<vmem>>, vector<1x128xf32>
    tpu.vector_store %arg10[%c123, %c0_495], %370 {strides = array<i32>} : memref<128x128xf32, #tpu.memory_space<vmem>>, vector<1x128xf32>,
    %c0_496 = arith.constant 0 : index
    %c0_497 = arith.constant 0 : index
    %c52_498 = arith.constant 52 : index
    %372 = vector.load %arg7[%c0_496, %c0_497, %c52_498] : memref<1x1x256xf32, #tpu.memory_space<vmem>>, vector<1x1x128xf32>
    %373 = vector.shape_cast %372 : vector<1x1x128xf32> to vector<1x128xf32>
    %c124 = arith.constant 124 : index
    %c0_499 = arith.constant 0 : index
    %374 = vector.load %arg10[%c124, %c0_499] : memref<128x128xf32, #tpu.memory_space<vmem>>, vector<1x128xf32>
    tpu.vector_store %arg10[%c124, %c0_499], %373 {strides = array<i32>} : memref<128x128xf32, #tpu.memory_space<vmem>>, vector<1x128xf32>,
    %cst = arith.constant 1.000000e+00 : f32
    %375 = vector.broadcast %cst : f32 to vector<1x128xf32>
    %c125 = arith.constant 125 : index
    %c0_500 = arith.constant 0 : index
    %376 = vector.load %arg10[%c125, %c0_500] : memref<128x128xf32, #tpu.memory_space<vmem>>, vector<1x128xf32>
    tpu.vector_store %arg10[%c125, %c0_500], %375 {strides = array<i32>} : memref<128x128xf32, #tpu.memory_space<vmem>>, vector<1x128xf32>,
    %cst_501 = arith.constant 0.000000e+00 : f32
    %377 = vector.broadcast %cst_501 : f32 to vector<2x128xf32>
    %c126 = arith.constant 126 : index
    %c0_502 = arith.constant 0 : index
    %378 = vector.load %arg10[%c126, %c0_502] : memref<128x128xf32, #tpu.memory_space<vmem>>, vector<2x128xf32>
    tpu.vector_store %arg10[%c126, %c0_502], %377 {strides = array<i32>} : memref<128x128xf32, #tpu.memory_space<vmem>>, vector<2x128xf32>,
    %c0_503 = arith.constant 0 : index
    %c0_504 = arith.constant 0 : index
    %379 = vector.load %arg2[%c0_503, %c0_504] : memref<16x128xf32, #tpu.memory_space<vmem>>, vector<16x128xf32>
    %c0_505 = arith.constant 0 : index
    %c0_506 = arith.constant 0 : index
    %380 = vector.load %arg10[%c0_505, %c0_506] : memref<128x128xf32, #tpu.memory_space<vmem>>, vector<128x128xf32>
    %cst_507 = arith.constant dense<0.000000e+00> : vector<16x128xf32>
    %381 = tpu.matmul %379, %380, %cst_507 {dimension_numbers = #tpu.dot_dimension_numbers<[1], [0], [0], [1], [0, 0, 1, 1], [], []>, precision = #tpu.contract_precision<fp32>} : vector<16x128xf32>, vector<128x128xf32>, vector<16x128xf32> -> vector<16x128xf32>
    %c0_i32 = arith.constant 0 : i32
    %382 = arith.cmpi eq, %arg0, %c0_i32 : i32
    %383 = arith.extui %382 : i1 to i32
    %c0_i32_508 = arith.constant 0 : i32
    %384 = arith.cmpi ne, %383, %c0_i32_508 : i32
    scf.if %384 {
      %cst_521 = arith.constant 0.000000e+00 : f32
      %399 = vector.broadcast %cst_521 : f32 to vector<16x1xf32>
      %c0_522 = arith.constant 0 : index
      %c0_523 = arith.constant 0 : index
      %400 = vector.load %arg8[%c0_522, %c0_523] : memref<16x1xf32, #tpu.memory_space<vmem>>, vector<16x1xf32>
      tpu.vector_store %arg8[%c0_522, %c0_523], %399 {strides = array<i32>} : memref<16x1xf32, #tpu.memory_space<vmem>>, vector<16x1xf32>,
      %cst_524 = arith.constant 0.000000e+00 : f32
      %401 = vector.broadcast %cst_524 : f32 to vector<16x1xf32>
      %c0_525 = arith.constant 0 : index
      %c0_526 = arith.constant 0 : index
      %402 = vector.load %arg9[%c0_525, %c0_526] : memref<16x1xf32, #tpu.memory_space<vmem>>, vector<16x1xf32>
      tpu.vector_store %arg9[%c0_525, %c0_526], %401 {strides = array<i32>} : memref<16x1xf32, #tpu.memory_space<vmem>>, vector<16x1xf32>,
    } else {
    }
    %c0_509 = arith.constant 0 : index
    %c0_510 = arith.constant 0 : index
    %385 = vector.load %arg1[%c0_509, %c0_510] : memref<1x128xf32, #tpu.memory_space<vmem>>, vector<1x128xf32>
    %386 = vector.broadcast %385 : vector<1x128xf32> to vector<16x128xf32>
    %387 = arith.mulf %381, %386 : vector<16x128xf32>
    %c0_511 = arith.constant 0 : index
    %c0_512 = arith.constant 0 : index
    %388 = vector.load %arg8[%c0_511, %c0_512] : memref<16x1xf32, #tpu.memory_space<vmem>>, vector<16x1xf32>
    %cst_513 = arith.constant dense<0.000000e+00> : vector<16xf32>
    %389 = vector.multi_reduction <add>, %387, %cst_513 [1] : vector<16x128xf32> to vector<16xf32>
    %390 = vector.shape_cast %389 : vector<16xf32> to vector<16x1xf32>
    %391 = arith.addf %388, %390 : vector<16x1xf32>
    %c0_514 = arith.constant 0 : index
    %c0_515 = arith.constant 0 : index
    %392 = vector.load %arg8[%c0_514, %c0_515] : memref<16x1xf32, #tpu.memory_space<vmem>>, vector<16x1xf32>
    tpu.vector_store %arg8[%c0_514, %c0_515], %391 {strides = array<i32>} : memref<16x1xf32, #tpu.memory_space<vmem>>, vector<16x1xf32>,
    %c0_516 = arith.constant 0 : index
    %c0_517 = arith.constant 0 : index
    %393 = vector.load %arg9[%c0_516, %c0_517] : memref<16x1xf32, #tpu.memory_space<vmem>>, vector<16x1xf32>
    %394 = arith.mulf %387, %381 : vector<16x128xf32>
    %cst_518 = arith.constant dense<0.000000e+00> : vector<16xf32>
    %395 = vector.multi_reduction <add>, %394, %cst_518 [1] : vector<16x128xf32> to vector<16xf32>
    %396 = vector.shape_cast %395 : vector<16xf32> to vector<16x1xf32>
    %397 = arith.addf %393, %396 : vector<16x1xf32>
    %c0_519 = arith.constant 0 : index
    %c0_520 = arith.constant 0 : index
    %398 = vector.load %arg9[%c0_519, %c0_520] : memref<16x1xf32, #tpu.memory_space<vmem>>, vector<16x1xf32>
    tpu.vector_store %arg9[%c0_519, %c0_520], %397 {strides = array<i32>} : memref<16x1xf32, #tpu.memory_space<vmem>>, vector<16x1xf32>,
    return
  }
  func.func @transform_0(%arg0: i32) -> (i32, i32) {
    %c0_i32 = arith.constant 0 : i32
    %c0_i32_0 = arith.constant 0 : i32
    %c0_i32_1 = arith.constant 0 : i32
    return %c0_i32, %c0_i32_0 : i32, i32
  }
  func.func @transform_1(%arg0: i32) -> (i32, i32) {
    %c0_i32 = arith.constant 0 : i32
    %c0_i32_0 = arith.constant 0 : i32
    %c0_i32_1 = arith.constant 0 : i32
    return %c0_i32, %c0_i32_0 : i32, i32
  }
  func.func @transform_2(%arg0: i32) -> (i32, i32, i32) {
    %c0_i32 = arith.constant 0 : i32
    %0 = arith.addi %arg0, %c0_i32 : i32
    %c0_i32_0 = arith.constant 0 : i32
    %c0_i32_1 = arith.constant 0 : i32
    %c0_i32_2 = arith.constant 0 : i32
    return %0, %c0_i32_0, %c0_i32_1 : i32, i32, i32
  }
  func.func @transform_3(%arg0: i32) -> (i32, i32, i32) {
    %c1_i32 = arith.constant 1 : i32
    %0 = arith.addi %arg0, %c1_i32 : i32
    %c0_i32 = arith.constant 0 : i32
    %c0_i32_0 = arith.constant 0 : i32
    %c0_i32_1 = arith.constant 0 : i32
    return %0, %c0_i32, %c0_i32_0 : i32, i32, i32
  }
  func.func @transform_4(%arg0: i32) -> (i32, i32, i32) {
    %c2_i32 = arith.constant 2 : i32
    %0 = arith.addi %arg0, %c2_i32 : i32
    %c0_i32 = arith.constant 0 : i32
    %c0_i32_0 = arith.constant 0 : i32
    %c0_i32_1 = arith.constant 0 : i32
    return %0, %c0_i32, %c0_i32_0 : i32, i32, i32
  }
  func.func @transform_5(%arg0: i32) -> (i32, i32, i32) {
    %c3_i32 = arith.constant 3 : i32
    %0 = arith.addi %arg0, %c3_i32 : i32
    %c0_i32 = arith.constant 0 : i32
    %c0_i32_0 = arith.constant 0 : i32
    %c0_i32_1 = arith.constant 0 : i32
    return %0, %c0_i32, %c0_i32_0 : i32, i32, i32
  }
  func.func @transform_6(%arg0: i32) -> (i32, i32, i32) {
    %c4_i32 = arith.constant 4 : i32
    %0 = arith.addi %arg0, %c4_i32 : i32
    %c0_i32 = arith.constant 0 : i32
    %c0_i32_0 = arith.constant 0 : i32
    %c0_i32_1 = arith.constant 0 : i32
    return %0, %c0_i32, %c0_i32_0 : i32, i32, i32
  }
  func.func @transform_7(%arg0: i32) -> (i32, i32) {
    %c0_i32 = arith.constant 0 : i32
    %c0_i32_0 = arith.constant 0 : i32
    %c0_i32_1 = arith.constant 0 : i32
    return %c0_i32, %c0_i32_0 : i32, i32
  }
  func.func @transform_8(%arg0: i32) -> (i32, i32) {
    %c0_i32 = arith.constant 0 : i32
    %c0_i32_0 = arith.constant 0 : i32
    %c0_i32_1 = arith.constant 0 : i32
    return %c0_i32, %c0_i32_0 : i32, i32
  }
}

module attributes {stable_mosaic.version = 11 : i64} {
  func.func @apply_kernel(%arg0: i32, %arg1: memref<16x1xf32, #tpu.memory_space<vmem>>, %arg2: memref<16x1xf32, #tpu.memory_space<vmem>>, %arg3: memref<16x128xf32, #tpu.memory_space<vmem>>, %arg4: memref<1x1x256xf32, #tpu.memory_space<vmem>>, %arg5: memref<1x1x256xf32, #tpu.memory_space<vmem>>, %arg6: memref<1x1x256xf32, #tpu.memory_space<vmem>>, %arg7: memref<1x1x256xf32, #tpu.memory_space<vmem>>, %arg8: memref<1x1x256xf32, #tpu.memory_space<vmem>>, %arg9: memref<1x16x128xf32, #tpu.memory_space<vmem>>, %arg10: memref<128x128xf32, #tpu.memory_space<vmem>>) attributes {dimension_semantics = [#tpu.dimension_semantics<parallel>], iteration_bounds = array<i64: 8>, scalar_prefetch = 0 : i64, scratch_operands = 1 : i64, tpu.core_type = #tpu.core_type<tc>, window_params = [{pipeline_mode = #tpu.pipeline_mode<synchronous>, transform_indices = @transform_0, window_bounds = array<i64: 16, 1>}, {pipeline_mode = #tpu.pipeline_mode<synchronous>, transform_indices = @transform_1, window_bounds = array<i64: 16, 1>}, {pipeline_mode = #tpu.pipeline_mode<synchronous>, transform_indices = @transform_2, window_bounds = array<i64: 16, 128>}, {transform_indices = @transform_3, window_bounds = array<i64: 1, 1, 256>}, {transform_indices = @transform_4, window_bounds = array<i64: 1, 1, 256>}, {transform_indices = @transform_5, window_bounds = array<i64: 1, 1, 256>}, {transform_indices = @transform_6, window_bounds = array<i64: 1, 1, 256>}, {transform_indices = @transform_7, window_bounds = array<i64: 1, 1, 256>}, {transform_indices = @transform_8, window_bounds = array<i64: 1, 16, 128>}]} {
    %c0 = arith.constant 0 : index
    %c0_0 = arith.constant 0 : index
    %c0_1 = arith.constant 0 : index
    %0 = vector.load %arg4[%c0, %c0_0, %c0_1] : memref<1x1x256xf32, #tpu.memory_space<vmem>>, vector<1x1x128xf32>
    %1 = vector.shape_cast %0 : vector<1x1x128xf32> to vector<1x128xf32>
    %c0_2 = arith.constant 0 : index
    %c0_3 = arith.constant 0 : index
    %2 = vector.load %arg10[%c0_2, %c0_3] : memref<128x128xf32, #tpu.memory_space<vmem>>, vector<1x128xf32>
    tpu.vector_store %arg10[%c0_2, %c0_3], %1 {strides = array<i32>} : memref<128x128xf32, #tpu.memory_space<vmem>>, vector<1x128xf32>,
    %c0_4 = arith.constant 0 : index
    %c0_5 = arith.constant 0 : index
    %c1 = arith.constant 1 : index
    %3 = vector.load %arg4[%c0_4, %c0_5, %c1] : memref<1x1x256xf32, #tpu.memory_space<vmem>>, vector<1x1x128xf32>
    %4 = vector.shape_cast %3 : vector<1x1x128xf32> to vector<1x128xf32>
    %c1_6 = arith.constant 1 : index
    %c0_7 = arith.constant 0 : index
    %5 = vector.load %arg10[%c1_6, %c0_7] : memref<128x128xf32, #tpu.memory_space<vmem>>, vector<1x128xf32>
    tpu.vector_store %arg10[%c1_6, %c0_7], %4 {strides = array<i32>} : memref<128x128xf32, #tpu.memory_space<vmem>>, vector<1x128xf32>,
    %c0_8 = arith.constant 0 : index
    %c0_9 = arith.constant 0 : index
    %c2 = arith.constant 2 : index
    %6 = vector.load %arg4[%c0_8, %c0_9, %c2] : memref<1x1x256xf32, #tpu.memory_space<vmem>>, vector<1x1x128xf32>
    %7 = vector.shape_cast %6 : vector<1x1x128xf32> to vector<1x128xf32>
    %c2_10 = arith.constant 2 : index
    %c0_11 = arith.constant 0 : index
    %8 = vector.load %arg10[%c2_10, %c0_11] : memref<128x128xf32, #tpu.memory_space<vmem>>, vector<1x128xf32>
    tpu.vector_store %arg10[%c2_10, %c0_11], %7 {strides = array<i32>} : memref<128x128xf32, #tpu.memory_space<vmem>>, vector<1x128xf32>,
    %c0_12 = arith.constant 0 : index
    %c0_13 = arith.constant 0 : index
    %c3 = arith.constant 3 : index
    %9 = vector.load %arg4[%c0_12, %c0_13, %c3] : memref<1x1x256xf32, #tpu.memory_space<vmem>>, vector<1x1x128xf32>
    %10 = vector.shape_cast %9 : vector<1x1x128xf32> to vector<1x128xf32>
    %c3_14 = arith.constant 3 : index
    %c0_15 = arith.constant 0 : index
    %11 = vector.load %arg10[%c3_14, %c0_15] : memref<128x128xf32, #tpu.memory_space<vmem>>, vector<1x128xf32>
    tpu.vector_store %arg10[%c3_14, %c0_15], %10 {strides = array<i32>} : memref<128x128xf32, #tpu.memory_space<vmem>>, vector<1x128xf32>,
    %c0_16 = arith.constant 0 : index
    %c0_17 = arith.constant 0 : index
    %c4 = arith.constant 4 : index
    %12 = vector.load %arg4[%c0_16, %c0_17, %c4] : memref<1x1x256xf32, #tpu.memory_space<vmem>>, vector<1x1x128xf32>
    %13 = vector.shape_cast %12 : vector<1x1x128xf32> to vector<1x128xf32>
    %c4_18 = arith.constant 4 : index
    %c0_19 = arith.constant 0 : index
    %14 = vector.load %arg10[%c4_18, %c0_19] : memref<128x128xf32, #tpu.memory_space<vmem>>, vector<1x128xf32>
    tpu.vector_store %arg10[%c4_18, %c0_19], %13 {strides = array<i32>} : memref<128x128xf32, #tpu.memory_space<vmem>>, vector<1x128xf32>,
    %c0_20 = arith.constant 0 : index
    %c0_21 = arith.constant 0 : index
    %c12 = arith.constant 12 : index
    %15 = vector.load %arg4[%c0_20, %c0_21, %c12] : memref<1x1x256xf32, #tpu.memory_space<vmem>>, vector<1x1x128xf32>
    %16 = vector.shape_cast %15 : vector<1x1x128xf32> to vector<1x128xf32>
    %c5 = arith.constant 5 : index
    %c0_22 = arith.constant 0 : index
    %17 = vector.load %arg10[%c5, %c0_22] : memref<128x128xf32, #tpu.memory_space<vmem>>, vector<1x128xf32>
    tpu.vector_store %arg10[%c5, %c0_22], %16 {strides = array<i32>} : memref<128x128xf32, #tpu.memory_space<vmem>>, vector<1x128xf32>,
    %c0_23 = arith.constant 0 : index
    %c0_24 = arith.constant 0 : index
    %c13 = arith.constant 13 : index
    %18 = vector.load %arg4[%c0_23, %c0_24, %c13] : memref<1x1x256xf32, #tpu.memory_space<vmem>>, vector<1x1x128xf32>
    %19 = vector.shape_cast %18 : vector<1x1x128xf32> to vector<1x128xf32>
    %c6 = arith.constant 6 : index
    %c0_25 = arith.constant 0 : index
    %20 = vector.load %arg10[%c6, %c0_25] : memref<128x128xf32, #tpu.memory_space<vmem>>, vector<1x128xf32>
    tpu.vector_store %arg10[%c6, %c0_25], %19 {strides = array<i32>} : memref<128x128xf32, #tpu.memory_space<vmem>>, vector<1x128xf32>,
    %c0_26 = arith.constant 0 : index
    %c0_27 = arith.constant 0 : index
    %c14 = arith.constant 14 : index
    %21 = vector.load %arg4[%c0_26, %c0_27, %c14] : memref<1x1x256xf32, #tpu.memory_space<vmem>>, vector<1x1x128xf32>
    %22 = vector.shape_cast %21 : vector<1x1x128xf32> to vector<1x128xf32>
    %c7 = arith.constant 7 : index
    %c0_28 = arith.constant 0 : index
    %23 = vector.load %arg10[%c7, %c0_28] : memref<128x128xf32, #tpu.memory_space<vmem>>, vector<1x128xf32>
    tpu.vector_store %arg10[%c7, %c0_28], %22 {strides = array<i32>} : memref<128x128xf32, #tpu.memory_space<vmem>>, vector<1x128xf32>,
    %c0_29 = arith.constant 0 : index
    %c0_30 = arith.constant 0 : index
    %c15 = arith.constant 15 : index
    %24 = vector.load %arg4[%c0_29, %c0_30, %c15] : memref<1x1x256xf32, #tpu.memory_space<vmem>>, vector<1x1x128xf32>
    %25 = vector.shape_cast %24 : vector<1x1x128xf32> to vector<1x128xf32>
    %c8 = arith.constant 8 : index
    %c0_31 = arith.constant 0 : index
    %26 = vector.load %arg10[%c8, %c0_31] : memref<128x128xf32, #tpu.memory_space<vmem>>, vector<1x128xf32>
    tpu.vector_store %arg10[%c8, %c0_31], %25 {strides = array<i32>} : memref<128x128xf32, #tpu.memory_space<vmem>>, vector<1x128xf32>,
    %c0_32 = arith.constant 0 : index
    %c0_33 = arith.constant 0 : index
    %c16 = arith.constant 16 : index
    %27 = vector.load %arg4[%c0_32, %c0_33, %c16] : memref<1x1x256xf32, #tpu.memory_space<vmem>>, vector<1x1x128xf32>
    %28 = vector.shape_cast %27 : vector<1x1x128xf32> to vector<1x128xf32>
    %c9 = arith.constant 9 : index
    %c0_34 = arith.constant 0 : index
    %29 = vector.load %arg10[%c9, %c0_34] : memref<128x128xf32, #tpu.memory_space<vmem>>, vector<1x128xf32>
    tpu.vector_store %arg10[%c9, %c0_34], %28 {strides = array<i32>} : memref<128x128xf32, #tpu.memory_space<vmem>>, vector<1x128xf32>,
    %c0_35 = arith.constant 0 : index
    %c0_36 = arith.constant 0 : index
    %c24 = arith.constant 24 : index
    %30 = vector.load %arg4[%c0_35, %c0_36, %c24] : memref<1x1x256xf32, #tpu.memory_space<vmem>>, vector<1x1x128xf32>
    %31 = vector.shape_cast %30 : vector<1x1x128xf32> to vector<1x128xf32>
    %c10 = arith.constant 10 : index
    %c0_37 = arith.constant 0 : index
    %32 = vector.load %arg10[%c10, %c0_37] : memref<128x128xf32, #tpu.memory_space<vmem>>, vector<1x128xf32>
    tpu.vector_store %arg10[%c10, %c0_37], %31 {strides = array<i32>} : memref<128x128xf32, #tpu.memory_space<vmem>>, vector<1x128xf32>,
    %c0_38 = arith.constant 0 : index
    %c0_39 = arith.constant 0 : index
    %c25 = arith.constant 25 : index
    %33 = vector.load %arg4[%c0_38, %c0_39, %c25] : memref<1x1x256xf32, #tpu.memory_space<vmem>>, vector<1x1x128xf32>
    %34 = vector.shape_cast %33 : vector<1x1x128xf32> to vector<1x128xf32>
    %c11 = arith.constant 11 : index
    %c0_40 = arith.constant 0 : index
    %35 = vector.load %arg10[%c11, %c0_40] : memref<128x128xf32, #tpu.memory_space<vmem>>, vector<1x128xf32>
    tpu.vector_store %arg10[%c11, %c0_40], %34 {strides = array<i32>} : memref<128x128xf32, #tpu.memory_space<vmem>>, vector<1x128xf32>,
    %c0_41 = arith.constant 0 : index
    %c0_42 = arith.constant 0 : index
    %c26 = arith.constant 26 : index
    %36 = vector.load %arg4[%c0_41, %c0_42, %c26] : memref<1x1x256xf32, #tpu.memory_space<vmem>>, vector<1x1x128xf32>
    %37 = vector.shape_cast %36 : vector<1x1x128xf32> to vector<1x128xf32>
    %c12_43 = arith.constant 12 : index
    %c0_44 = arith.constant 0 : index
    %38 = vector.load %arg10[%c12_43, %c0_44] : memref<128x128xf32, #tpu.memory_space<vmem>>, vector<1x128xf32>
    tpu.vector_store %arg10[%c12_43, %c0_44], %37 {strides = array<i32>} : memref<128x128xf32, #tpu.memory_space<vmem>>, vector<1x128xf32>,
    %c0_45 = arith.constant 0 : index
    %c0_46 = arith.constant 0 : index
    %c27 = arith.constant 27 : index
    %39 = vector.load %arg4[%c0_45, %c0_46, %c27] : memref<1x1x256xf32, #tpu.memory_space<vmem>>, vector<1x1x128xf32>
    %40 = vector.shape_cast %39 : vector<1x1x128xf32> to vector<1x128xf32>
    %c13_47 = arith.constant 13 : index
    %c0_48 = arith.constant 0 : index
    %41 = vector.load %arg10[%c13_47, %c0_48] : memref<128x128xf32, #tpu.memory_space<vmem>>, vector<1x128xf32>
    tpu.vector_store %arg10[%c13_47, %c0_48], %40 {strides = array<i32>} : memref<128x128xf32, #tpu.memory_space<vmem>>, vector<1x128xf32>,
    %c0_49 = arith.constant 0 : index
    %c0_50 = arith.constant 0 : index
    %c28 = arith.constant 28 : index
    %42 = vector.load %arg4[%c0_49, %c0_50, %c28] : memref<1x1x256xf32, #tpu.memory_space<vmem>>, vector<1x1x128xf32>
    %43 = vector.shape_cast %42 : vector<1x1x128xf32> to vector<1x128xf32>
    %c14_51 = arith.constant 14 : index
    %c0_52 = arith.constant 0 : index
    %44 = vector.load %arg10[%c14_51, %c0_52] : memref<128x128xf32, #tpu.memory_space<vmem>>, vector<1x128xf32>
    tpu.vector_store %arg10[%c14_51, %c0_52], %43 {strides = array<i32>} : memref<128x128xf32, #tpu.memory_space<vmem>>, vector<1x128xf32>,
    %c0_53 = arith.constant 0 : index
    %c0_54 = arith.constant 0 : index
    %c36 = arith.constant 36 : index
    %45 = vector.load %arg4[%c0_53, %c0_54, %c36] : memref<1x1x256xf32, #tpu.memory_space<vmem>>, vector<1x1x128xf32>
    %46 = vector.shape_cast %45 : vector<1x1x128xf32> to vector<1x128xf32>
    %c15_55 = arith.constant 15 : index
    %c0_56 = arith.constant 0 : index
    %47 = vector.load %arg10[%c15_55, %c0_56] : memref<128x128xf32, #tpu.memory_space<vmem>>, vector<1x128xf32>
    tpu.vector_store %arg10[%c15_55, %c0_56], %46 {strides = array<i32>} : memref<128x128xf32, #tpu.memory_space<vmem>>, vector<1x128xf32>,
    %c0_57 = arith.constant 0 : index
    %c0_58 = arith.constant 0 : index
    %c37 = arith.constant 37 : index
    %48 = vector.load %arg4[%c0_57, %c0_58, %c37] : memref<1x1x256xf32, #tpu.memory_space<vmem>>, vector<1x1x128xf32>
    %49 = vector.shape_cast %48 : vector<1x1x128xf32> to vector<1x128xf32>
    %c16_59 = arith.constant 16 : index
    %c0_60 = arith.constant 0 : index
    %50 = vector.load %arg10[%c16_59, %c0_60] : memref<128x128xf32, #tpu.memory_space<vmem>>, vector<1x128xf32>
    tpu.vector_store %arg10[%c16_59, %c0_60], %49 {strides = array<i32>} : memref<128x128xf32, #tpu.memory_space<vmem>>, vector<1x128xf32>,
    %c0_61 = arith.constant 0 : index
    %c0_62 = arith.constant 0 : index
    %c38 = arith.constant 38 : index
    %51 = vector.load %arg4[%c0_61, %c0_62, %c38] : memref<1x1x256xf32, #tpu.memory_space<vmem>>, vector<1x1x128xf32>
    %52 = vector.shape_cast %51 : vector<1x1x128xf32> to vector<1x128xf32>
    %c17 = arith.constant 17 : index
    %c0_63 = arith.constant 0 : index
    %53 = vector.load %arg10[%c17, %c0_63] : memref<128x128xf32, #tpu.memory_space<vmem>>, vector<1x128xf32>
    tpu.vector_store %arg10[%c17, %c0_63], %52 {strides = array<i32>} : memref<128x128xf32, #tpu.memory_space<vmem>>, vector<1x128xf32>,
    %c0_64 = arith.constant 0 : index
    %c0_65 = arith.constant 0 : index
    %c39 = arith.constant 39 : index
    %54 = vector.load %arg4[%c0_64, %c0_65, %c39] : memref<1x1x256xf32, #tpu.memory_space<vmem>>, vector<1x1x128xf32>
    %55 = vector.shape_cast %54 : vector<1x1x128xf32> to vector<1x128xf32>
    %c18 = arith.constant 18 : index
    %c0_66 = arith.constant 0 : index
    %56 = vector.load %arg10[%c18, %c0_66] : memref<128x128xf32, #tpu.memory_space<vmem>>, vector<1x128xf32>
    tpu.vector_store %arg10[%c18, %c0_66], %55 {strides = array<i32>} : memref<128x128xf32, #tpu.memory_space<vmem>>, vector<1x128xf32>,
    %c0_67 = arith.constant 0 : index
    %c0_68 = arith.constant 0 : index
    %c40 = arith.constant 40 : index
    %57 = vector.load %arg4[%c0_67, %c0_68, %c40] : memref<1x1x256xf32, #tpu.memory_space<vmem>>, vector<1x1x128xf32>
    %58 = vector.shape_cast %57 : vector<1x1x128xf32> to vector<1x128xf32>
    %c19 = arith.constant 19 : index
    %c0_69 = arith.constant 0 : index
    %59 = vector.load %arg10[%c19, %c0_69] : memref<128x128xf32, #tpu.memory_space<vmem>>, vector<1x128xf32>
    tpu.vector_store %arg10[%c19, %c0_69], %58 {strides = array<i32>} : memref<128x128xf32, #tpu.memory_space<vmem>>, vector<1x128xf32>,
    %c0_70 = arith.constant 0 : index
    %c0_71 = arith.constant 0 : index
    %c48 = arith.constant 48 : index
    %60 = vector.load %arg4[%c0_70, %c0_71, %c48] : memref<1x1x256xf32, #tpu.memory_space<vmem>>, vector<1x1x128xf32>
    %61 = vector.shape_cast %60 : vector<1x1x128xf32> to vector<1x128xf32>
    %c20 = arith.constant 20 : index
    %c0_72 = arith.constant 0 : index
    %62 = vector.load %arg10[%c20, %c0_72] : memref<128x128xf32, #tpu.memory_space<vmem>>, vector<1x128xf32>
    tpu.vector_store %arg10[%c20, %c0_72], %61 {strides = array<i32>} : memref<128x128xf32, #tpu.memory_space<vmem>>, vector<1x128xf32>,
    %c0_73 = arith.constant 0 : index
    %c0_74 = arith.constant 0 : index
    %c49 = arith.constant 49 : index
    %63 = vector.load %arg4[%c0_73, %c0_74, %c49] : memref<1x1x256xf32, #tpu.memory_space<vmem>>, vector<1x1x128xf32>
    %64 = vector.shape_cast %63 : vector<1x1x128xf32> to vector<1x128xf32>
    %c21 = arith.constant 21 : index
    %c0_75 = arith.constant 0 : index
    %65 = vector.load %arg10[%c21, %c0_75] : memref<128x128xf32, #tpu.memory_space<vmem>>, vector<1x128xf32>
    tpu.vector_store %arg10[%c21, %c0_75], %64 {strides = array<i32>} : memref<128x128xf32, #tpu.memory_space<vmem>>, vector<1x128xf32>,
    %c0_76 = arith.constant 0 : index
    %c0_77 = arith.constant 0 : index
    %c50 = arith.constant 50 : index
    %66 = vector.load %arg4[%c0_76, %c0_77, %c50] : memref<1x1x256xf32, #tpu.memory_space<vmem>>, vector<1x1x128xf32>
    %67 = vector.shape_cast %66 : vector<1x1x128xf32> to vector<1x128xf32>
    %c22 = arith.constant 22 : index
    %c0_78 = arith.constant 0 : index
    %68 = vector.load %arg10[%c22, %c0_78] : memref<128x128xf32, #tpu.memory_space<vmem>>, vector<1x128xf32>
    tpu.vector_store %arg10[%c22, %c0_78], %67 {strides = array<i32>} : memref<128x128xf32, #tpu.memory_space<vmem>>, vector<1x128xf32>,
    %c0_79 = arith.constant 0 : index
    %c0_80 = arith.constant 0 : index
    %c51 = arith.constant 51 : index
    %69 = vector.load %arg4[%c0_79, %c0_80, %c51] : memref<1x1x256xf32, #tpu.memory_space<vmem>>, vector<1x1x128xf32>
    %70 = vector.shape_cast %69 : vector<1x1x128xf32> to vector<1x128xf32>
    %c23 = arith.constant 23 : index
    %c0_81 = arith.constant 0 : index
    %71 = vector.load %arg10[%c23, %c0_81] : memref<128x128xf32, #tpu.memory_space<vmem>>, vector<1x128xf32>
    tpu.vector_store %arg10[%c23, %c0_81], %70 {strides = array<i32>} : memref<128x128xf32, #tpu.memory_space<vmem>>, vector<1x128xf32>,
    %c0_82 = arith.constant 0 : index
    %c0_83 = arith.constant 0 : index
    %c52 = arith.constant 52 : index
    %72 = vector.load %arg4[%c0_82, %c0_83, %c52] : memref<1x1x256xf32, #tpu.memory_space<vmem>>, vector<1x1x128xf32>
    %73 = vector.shape_cast %72 : vector<1x1x128xf32> to vector<1x128xf32>
    %c24_84 = arith.constant 24 : index
    %c0_85 = arith.constant 0 : index
    %74 = vector.load %arg10[%c24_84, %c0_85] : memref<128x128xf32, #tpu.memory_space<vmem>>, vector<1x128xf32>
    tpu.vector_store %arg10[%c24_84, %c0_85], %73 {strides = array<i32>} : memref<128x128xf32, #tpu.memory_space<vmem>>, vector<1x128xf32>,
    %c0_86 = arith.constant 0 : index
    %c0_87 = arith.constant 0 : index
    %c0_88 = arith.constant 0 : index
    %75 = vector.load %arg5[%c0_86, %c0_87, %c0_88] : memref<1x1x256xf32, #tpu.memory_space<vmem>>, vector<1x1x128xf32>
    %76 = vector.shape_cast %75 : vector<1x1x128xf32> to vector<1x128xf32>
    %c25_89 = arith.constant 25 : index
    %c0_90 = arith.constant 0 : index
    %77 = vector.load %arg10[%c25_89, %c0_90] : memref<128x128xf32, #tpu.memory_space<vmem>>, vector<1x128xf32>
    tpu.vector_store %arg10[%c25_89, %c0_90], %76 {strides = array<i32>} : memref<128x128xf32, #tpu.memory_space<vmem>>, vector<1x128xf32>,
    %c0_91 = arith.constant 0 : index
    %c0_92 = arith.constant 0 : index
    %c1_93 = arith.constant 1 : index
    %78 = vector.load %arg5[%c0_91, %c0_92, %c1_93] : memref<1x1x256xf32, #tpu.memory_space<vmem>>, vector<1x1x128xf32>
    %79 = vector.shape_cast %78 : vector<1x1x128xf32> to vector<1x128xf32>
    %c26_94 = arith.constant 26 : index
    %c0_95 = arith.constant 0 : index
    %80 = vector.load %arg10[%c26_94, %c0_95] : memref<128x128xf32, #tpu.memory_space<vmem>>, vector<1x128xf32>
    tpu.vector_store %arg10[%c26_94, %c0_95], %79 {strides = array<i32>} : memref<128x128xf32, #tpu.memory_space<vmem>>, vector<1x128xf32>,
    %c0_96 = arith.constant 0 : index
    %c0_97 = arith.constant 0 : index
    %c2_98 = arith.constant 2 : index
    %81 = vector.load %arg5[%c0_96, %c0_97, %c2_98] : memref<1x1x256xf32, #tpu.memory_space<vmem>>, vector<1x1x128xf32>
    %82 = vector.shape_cast %81 : vector<1x1x128xf32> to vector<1x128xf32>
    %c27_99 = arith.constant 27 : index
    %c0_100 = arith.constant 0 : index
    %83 = vector.load %arg10[%c27_99, %c0_100] : memref<128x128xf32, #tpu.memory_space<vmem>>, vector<1x128xf32>
    tpu.vector_store %arg10[%c27_99, %c0_100], %82 {strides = array<i32>} : memref<128x128xf32, #tpu.memory_space<vmem>>, vector<1x128xf32>,
    %c0_101 = arith.constant 0 : index
    %c0_102 = arith.constant 0 : index
    %c3_103 = arith.constant 3 : index
    %84 = vector.load %arg5[%c0_101, %c0_102, %c3_103] : memref<1x1x256xf32, #tpu.memory_space<vmem>>, vector<1x1x128xf32>
    %85 = vector.shape_cast %84 : vector<1x1x128xf32> to vector<1x128xf32>
    %c28_104 = arith.constant 28 : index
    %c0_105 = arith.constant 0 : index
    %86 = vector.load %arg10[%c28_104, %c0_105] : memref<128x128xf32, #tpu.memory_space<vmem>>, vector<1x128xf32>
    tpu.vector_store %arg10[%c28_104, %c0_105], %85 {strides = array<i32>} : memref<128x128xf32, #tpu.memory_space<vmem>>, vector<1x128xf32>,
    %c0_106 = arith.constant 0 : index
    %c0_107 = arith.constant 0 : index
    %c4_108 = arith.constant 4 : index
    %87 = vector.load %arg5[%c0_106, %c0_107, %c4_108] : memref<1x1x256xf32, #tpu.memory_space<vmem>>, vector<1x1x128xf32>
    %88 = vector.shape_cast %87 : vector<1x1x128xf32> to vector<1x128xf32>
    %c29 = arith.constant 29 : index
    %c0_109 = arith.constant 0 : index
    %89 = vector.load %arg10[%c29, %c0_109] : memref<128x128xf32, #tpu.memory_space<vmem>>, vector<1x128xf32>
    tpu.vector_store %arg10[%c29, %c0_109], %88 {strides = array<i32>} : memref<128x128xf32, #tpu.memory_space<vmem>>, vector<1x128xf32>,
    %c0_110 = arith.constant 0 : index
    %c0_111 = arith.constant 0 : index
    %c12_112 = arith.constant 12 : index
    %90 = vector.load %arg5[%c0_110, %c0_111, %c12_112] : memref<1x1x256xf32, #tpu.memory_space<vmem>>, vector<1x1x128xf32>
    %91 = vector.shape_cast %90 : vector<1x1x128xf32> to vector<1x128xf32>
    %c30 = arith.constant 30 : index
    %c0_113 = arith.constant 0 : index
    %92 = vector.load %arg10[%c30, %c0_113] : memref<128x128xf32, #tpu.memory_space<vmem>>, vector<1x128xf32>
    tpu.vector_store %arg10[%c30, %c0_113], %91 {strides = array<i32>} : memref<128x128xf32, #tpu.memory_space<vmem>>, vector<1x128xf32>,
    %c0_114 = arith.constant 0 : index
    %c0_115 = arith.constant 0 : index
    %c13_116 = arith.constant 13 : index
    %93 = vector.load %arg5[%c0_114, %c0_115, %c13_116] : memref<1x1x256xf32, #tpu.memory_space<vmem>>, vector<1x1x128xf32>
    %94 = vector.shape_cast %93 : vector<1x1x128xf32> to vector<1x128xf32>
    %c31 = arith.constant 31 : index
    %c0_117 = arith.constant 0 : index
    %95 = vector.load %arg10[%c31, %c0_117] : memref<128x128xf32, #tpu.memory_space<vmem>>, vector<1x128xf32>
    tpu.vector_store %arg10[%c31, %c0_117], %94 {strides = array<i32>} : memref<128x128xf32, #tpu.memory_space<vmem>>, vector<1x128xf32>,
    %c0_118 = arith.constant 0 : index
    %c0_119 = arith.constant 0 : index
    %c14_120 = arith.constant 14 : index
    %96 = vector.load %arg5[%c0_118, %c0_119, %c14_120] : memref<1x1x256xf32, #tpu.memory_space<vmem>>, vector<1x1x128xf32>
    %97 = vector.shape_cast %96 : vector<1x1x128xf32> to vector<1x128xf32>
    %c32 = arith.constant 32 : index
    %c0_121 = arith.constant 0 : index
    %98 = vector.load %arg10[%c32, %c0_121] : memref<128x128xf32, #tpu.memory_space<vmem>>, vector<1x128xf32>
    tpu.vector_store %arg10[%c32, %c0_121], %97 {strides = array<i32>} : memref<128x128xf32, #tpu.memory_space<vmem>>, vector<1x128xf32>,
    %c0_122 = arith.constant 0 : index
    %c0_123 = arith.constant 0 : index
    %c15_124 = arith.constant 15 : index
    %99 = vector.load %arg5[%c0_122, %c0_123, %c15_124] : memref<1x1x256xf32, #tpu.memory_space<vmem>>, vector<1x1x128xf32>
    %100 = vector.shape_cast %99 : vector<1x1x128xf32> to vector<1x128xf32>
    %c33 = arith.constant 33 : index
    %c0_125 = arith.constant 0 : index
    %101 = vector.load %arg10[%c33, %c0_125] : memref<128x128xf32, #tpu.memory_space<vmem>>, vector<1x128xf32>
    tpu.vector_store %arg10[%c33, %c0_125], %100 {strides = array<i32>} : memref<128x128xf32, #tpu.memory_space<vmem>>, vector<1x128xf32>,
    %c0_126 = arith.constant 0 : index
    %c0_127 = arith.constant 0 : index
    %c16_128 = arith.constant 16 : index
    %102 = vector.load %arg5[%c0_126, %c0_127, %c16_128] : memref<1x1x256xf32, #tpu.memory_space<vmem>>, vector<1x1x128xf32>
    %103 = vector.shape_cast %102 : vector<1x1x128xf32> to vector<1x128xf32>
    %c34 = arith.constant 34 : index
    %c0_129 = arith.constant 0 : index
    %104 = vector.load %arg10[%c34, %c0_129] : memref<128x128xf32, #tpu.memory_space<vmem>>, vector<1x128xf32>
    tpu.vector_store %arg10[%c34, %c0_129], %103 {strides = array<i32>} : memref<128x128xf32, #tpu.memory_space<vmem>>, vector<1x128xf32>,
    %c0_130 = arith.constant 0 : index
    %c0_131 = arith.constant 0 : index
    %c24_132 = arith.constant 24 : index
    %105 = vector.load %arg5[%c0_130, %c0_131, %c24_132] : memref<1x1x256xf32, #tpu.memory_space<vmem>>, vector<1x1x128xf32>
    %106 = vector.shape_cast %105 : vector<1x1x128xf32> to vector<1x128xf32>
    %c35 = arith.constant 35 : index
    %c0_133 = arith.constant 0 : index
    %107 = vector.load %arg10[%c35, %c0_133] : memref<128x128xf32, #tpu.memory_space<vmem>>, vector<1x128xf32>
    tpu.vector_store %arg10[%c35, %c0_133], %106 {strides = array<i32>} : memref<128x128xf32, #tpu.memory_space<vmem>>, vector<1x128xf32>,
    %c0_134 = arith.constant 0 : index
    %c0_135 = arith.constant 0 : index
    %c25_136 = arith.constant 25 : index
    %108 = vector.load %arg5[%c0_134, %c0_135, %c25_136] : memref<1x1x256xf32, #tpu.memory_space<vmem>>, vector<1x1x128xf32>
    %109 = vector.shape_cast %108 : vector<1x1x128xf32> to vector<1x128xf32>
    %c36_137 = arith.constant 36 : index
    %c0_138 = arith.constant 0 : index
    %110 = vector.load %arg10[%c36_137, %c0_138] : memref<128x128xf32, #tpu.memory_space<vmem>>, vector<1x128xf32>
    tpu.vector_store %arg10[%c36_137, %c0_138], %109 {strides = array<i32>} : memref<128x128xf32, #tpu.memory_space<vmem>>, vector<1x128xf32>,
    %c0_139 = arith.constant 0 : index
    %c0_140 = arith.constant 0 : index
    %c26_141 = arith.constant 26 : index
    %111 = vector.load %arg5[%c0_139, %c0_140, %c26_141] : memref<1x1x256xf32, #tpu.memory_space<vmem>>, vector<1x1x128xf32>
    %112 = vector.shape_cast %111 : vector<1x1x128xf32> to vector<1x128xf32>
    %c37_142 = arith.constant 37 : index
    %c0_143 = arith.constant 0 : index
    %113 = vector.load %arg10[%c37_142, %c0_143] : memref<128x128xf32, #tpu.memory_space<vmem>>, vector<1x128xf32>
    tpu.vector_store %arg10[%c37_142, %c0_143], %112 {strides = array<i32>} : memref<128x128xf32, #tpu.memory_space<vmem>>, vector<1x128xf32>,
    %c0_144 = arith.constant 0 : index
    %c0_145 = arith.constant 0 : index
    %c27_146 = arith.constant 27 : index
    %114 = vector.load %arg5[%c0_144, %c0_145, %c27_146] : memref<1x1x256xf32, #tpu.memory_space<vmem>>, vector<1x1x128xf32>
    %115 = vector.shape_cast %114 : vector<1x1x128xf32> to vector<1x128xf32>
    %c38_147 = arith.constant 38 : index
    %c0_148 = arith.constant 0 : index
    %116 = vector.load %arg10[%c38_147, %c0_148] : memref<128x128xf32, #tpu.memory_space<vmem>>, vector<1x128xf32>
    tpu.vector_store %arg10[%c38_147, %c0_148], %115 {strides = array<i32>} : memref<128x128xf32, #tpu.memory_space<vmem>>, vector<1x128xf32>,
    %c0_149 = arith.constant 0 : index
    %c0_150 = arith.constant 0 : index
    %c28_151 = arith.constant 28 : index
    %117 = vector.load %arg5[%c0_149, %c0_150, %c28_151] : memref<1x1x256xf32, #tpu.memory_space<vmem>>, vector<1x1x128xf32>
    %118 = vector.shape_cast %117 : vector<1x1x128xf32> to vector<1x128xf32>
    %c39_152 = arith.constant 39 : index
    %c0_153 = arith.constant 0 : index
    %119 = vector.load %arg10[%c39_152, %c0_153] : memref<128x128xf32, #tpu.memory_space<vmem>>, vector<1x128xf32>
    tpu.vector_store %arg10[%c39_152, %c0_153], %118 {strides = array<i32>} : memref<128x128xf32, #tpu.memory_space<vmem>>, vector<1x128xf32>,
    %c0_154 = arith.constant 0 : index
    %c0_155 = arith.constant 0 : index
    %c36_156 = arith.constant 36 : index
    %120 = vector.load %arg5[%c0_154, %c0_155, %c36_156] : memref<1x1x256xf32, #tpu.memory_space<vmem>>, vector<1x1x128xf32>
    %121 = vector.shape_cast %120 : vector<1x1x128xf32> to vector<1x128xf32>
    %c40_157 = arith.constant 40 : index
    %c0_158 = arith.constant 0 : index
    %122 = vector.load %arg10[%c40_157, %c0_158] : memref<128x128xf32, #tpu.memory_space<vmem>>, vector<1x128xf32>
    tpu.vector_store %arg10[%c40_157, %c0_158], %121 {strides = array<i32>} : memref<128x128xf32, #tpu.memory_space<vmem>>, vector<1x128xf32>,
    %c0_159 = arith.constant 0 : index
    %c0_160 = arith.constant 0 : index
    %c37_161 = arith.constant 37 : index
    %123 = vector.load %arg5[%c0_159, %c0_160, %c37_161] : memref<1x1x256xf32, #tpu.memory_space<vmem>>, vector<1x1x128xf32>
    %124 = vector.shape_cast %123 : vector<1x1x128xf32> to vector<1x128xf32>
    %c41 = arith.constant 41 : index
    %c0_162 = arith.constant 0 : index
    %125 = vector.load %arg10[%c41, %c0_162] : memref<128x128xf32, #tpu.memory_space<vmem>>, vector<1x128xf32>
    tpu.vector_store %arg10[%c41, %c0_162], %124 {strides = array<i32>} : memref<128x128xf32, #tpu.memory_space<vmem>>, vector<1x128xf32>,
    %c0_163 = arith.constant 0 : index
    %c0_164 = arith.constant 0 : index
    %c38_165 = arith.constant 38 : index
    %126 = vector.load %arg5[%c0_163, %c0_164, %c38_165] : memref<1x1x256xf32, #tpu.memory_space<vmem>>, vector<1x1x128xf32>
    %127 = vector.shape_cast %126 : vector<1x1x128xf32> to vector<1x128xf32>
    %c42 = arith.constant 42 : index
    %c0_166 = arith.constant 0 : index
    %128 = vector.load %arg10[%c42, %c0_166] : memref<128x128xf32, #tpu.memory_space<vmem>>, vector<1x128xf32>
    tpu.vector_store %arg10[%c42, %c0_166], %127 {strides = array<i32>} : memref<128x128xf32, #tpu.memory_space<vmem>>, vector<1x128xf32>,
    %c0_167 = arith.constant 0 : index
    %c0_168 = arith.constant 0 : index
    %c39_169 = arith.constant 39 : index
    %129 = vector.load %arg5[%c0_167, %c0_168, %c39_169] : memref<1x1x256xf32, #tpu.memory_space<vmem>>, vector<1x1x128xf32>
    %130 = vector.shape_cast %129 : vector<1x1x128xf32> to vector<1x128xf32>
    %c43 = arith.constant 43 : index
    %c0_170 = arith.constant 0 : index
    %131 = vector.load %arg10[%c43, %c0_170] : memref<128x128xf32, #tpu.memory_space<vmem>>, vector<1x128xf32>
    tpu.vector_store %arg10[%c43, %c0_170], %130 {strides = array<i32>} : memref<128x128xf32, #tpu.memory_space<vmem>>, vector<1x128xf32>,
    %c0_171 = arith.constant 0 : index
    %c0_172 = arith.constant 0 : index
    %c40_173 = arith.constant 40 : index
    %132 = vector.load %arg5[%c0_171, %c0_172, %c40_173] : memref<1x1x256xf32, #tpu.memory_space<vmem>>, vector<1x1x128xf32>
    %133 = vector.shape_cast %132 : vector<1x1x128xf32> to vector<1x128xf32>
    %c44 = arith.constant 44 : index
    %c0_174 = arith.constant 0 : index
    %134 = vector.load %arg10[%c44, %c0_174] : memref<128x128xf32, #tpu.memory_space<vmem>>, vector<1x128xf32>
    tpu.vector_store %arg10[%c44, %c0_174], %133 {strides = array<i32>} : memref<128x128xf32, #tpu.memory_space<vmem>>, vector<1x128xf32>,
    %c0_175 = arith.constant 0 : index
    %c0_176 = arith.constant 0 : index
    %c48_177 = arith.constant 48 : index
    %135 = vector.load %arg5[%c0_175, %c0_176, %c48_177] : memref<1x1x256xf32, #tpu.memory_space<vmem>>, vector<1x1x128xf32>
    %136 = vector.shape_cast %135 : vector<1x1x128xf32> to vector<1x128xf32>
    %c45 = arith.constant 45 : index
    %c0_178 = arith.constant 0 : index
    %137 = vector.load %arg10[%c45, %c0_178] : memref<128x128xf32, #tpu.memory_space<vmem>>, vector<1x128xf32>
    tpu.vector_store %arg10[%c45, %c0_178], %136 {strides = array<i32>} : memref<128x128xf32, #tpu.memory_space<vmem>>, vector<1x128xf32>,
    %c0_179 = arith.constant 0 : index
    %c0_180 = arith.constant 0 : index
    %c49_181 = arith.constant 49 : index
    %138 = vector.load %arg5[%c0_179, %c0_180, %c49_181] : memref<1x1x256xf32, #tpu.memory_space<vmem>>, vector<1x1x128xf32>
    %139 = vector.shape_cast %138 : vector<1x1x128xf32> to vector<1x128xf32>
    %c46 = arith.constant 46 : index
    %c0_182 = arith.constant 0 : index
    %140 = vector.load %arg10[%c46, %c0_182] : memref<128x128xf32, #tpu.memory_space<vmem>>, vector<1x128xf32>
    tpu.vector_store %arg10[%c46, %c0_182], %139 {strides = array<i32>} : memref<128x128xf32, #tpu.memory_space<vmem>>, vector<1x128xf32>,
    %c0_183 = arith.constant 0 : index
    %c0_184 = arith.constant 0 : index
    %c50_185 = arith.constant 50 : index
    %141 = vector.load %arg5[%c0_183, %c0_184, %c50_185] : memref<1x1x256xf32, #tpu.memory_space<vmem>>, vector<1x1x128xf32>
    %142 = vector.shape_cast %141 : vector<1x1x128xf32> to vector<1x128xf32>
    %c47 = arith.constant 47 : index
    %c0_186 = arith.constant 0 : index
    %143 = vector.load %arg10[%c47, %c0_186] : memref<128x128xf32, #tpu.memory_space<vmem>>, vector<1x128xf32>
    tpu.vector_store %arg10[%c47, %c0_186], %142 {strides = array<i32>} : memref<128x128xf32, #tpu.memory_space<vmem>>, vector<1x128xf32>,
    %c0_187 = arith.constant 0 : index
    %c0_188 = arith.constant 0 : index
    %c51_189 = arith.constant 51 : index
    %144 = vector.load %arg5[%c0_187, %c0_188, %c51_189] : memref<1x1x256xf32, #tpu.memory_space<vmem>>, vector<1x1x128xf32>
    %145 = vector.shape_cast %144 : vector<1x1x128xf32> to vector<1x128xf32>
    %c48_190 = arith.constant 48 : index
    %c0_191 = arith.constant 0 : index
    %146 = vector.load %arg10[%c48_190, %c0_191] : memref<128x128xf32, #tpu.memory_space<vmem>>, vector<1x128xf32>
    tpu.vector_store %arg10[%c48_190, %c0_191], %145 {strides = array<i32>} : memref<128x128xf32, #tpu.memory_space<vmem>>, vector<1x128xf32>,
    %c0_192 = arith.constant 0 : index
    %c0_193 = arith.constant 0 : index
    %c52_194 = arith.constant 52 : index
    %147 = vector.load %arg5[%c0_192, %c0_193, %c52_194] : memref<1x1x256xf32, #tpu.memory_space<vmem>>, vector<1x1x128xf32>
    %148 = vector.shape_cast %147 : vector<1x1x128xf32> to vector<1x128xf32>
    %c49_195 = arith.constant 49 : index
    %c0_196 = arith.constant 0 : index
    %149 = vector.load %arg10[%c49_195, %c0_196] : memref<128x128xf32, #tpu.memory_space<vmem>>, vector<1x128xf32>
    tpu.vector_store %arg10[%c49_195, %c0_196], %148 {strides = array<i32>} : memref<128x128xf32, #tpu.memory_space<vmem>>, vector<1x128xf32>,
    %c0_197 = arith.constant 0 : index
    %c0_198 = arith.constant 0 : index
    %c0_199 = arith.constant 0 : index
    %150 = vector.load %arg6[%c0_197, %c0_198, %c0_199] : memref<1x1x256xf32, #tpu.memory_space<vmem>>, vector<1x1x128xf32>
    %151 = vector.shape_cast %150 : vector<1x1x128xf32> to vector<1x128xf32>
    %c50_200 = arith.constant 50 : index
    %c0_201 = arith.constant 0 : index
    %152 = vector.load %arg10[%c50_200, %c0_201] : memref<128x128xf32, #tpu.memory_space<vmem>>, vector<1x128xf32>
    tpu.vector_store %arg10[%c50_200, %c0_201], %151 {strides = array<i32>} : memref<128x128xf32, #tpu.memory_space<vmem>>, vector<1x128xf32>,
    %c0_202 = arith.constant 0 : index
    %c0_203 = arith.constant 0 : index
    %c1_204 = arith.constant 1 : index
    %153 = vector.load %arg6[%c0_202, %c0_203, %c1_204] : memref<1x1x256xf32, #tpu.memory_space<vmem>>, vector<1x1x128xf32>
    %154 = vector.shape_cast %153 : vector<1x1x128xf32> to vector<1x128xf32>
    %c51_205 = arith.constant 51 : index
    %c0_206 = arith.constant 0 : index
    %155 = vector.load %arg10[%c51_205, %c0_206] : memref<128x128xf32, #tpu.memory_space<vmem>>, vector<1x128xf32>
    tpu.vector_store %arg10[%c51_205, %c0_206], %154 {strides = array<i32>} : memref<128x128xf32, #tpu.memory_space<vmem>>, vector<1x128xf32>,
    %c0_207 = arith.constant 0 : index
    %c0_208 = arith.constant 0 : index
    %c2_209 = arith.constant 2 : index
    %156 = vector.load %arg6[%c0_207, %c0_208, %c2_209] : memref<1x1x256xf32, #tpu.memory_space<vmem>>, vector<1x1x128xf32>
    %157 = vector.shape_cast %156 : vector<1x1x128xf32> to vector<1x128xf32>
    %c52_210 = arith.constant 52 : index
    %c0_211 = arith.constant 0 : index
    %158 = vector.load %arg10[%c52_210, %c0_211] : memref<128x128xf32, #tpu.memory_space<vmem>>, vector<1x128xf32>
    tpu.vector_store %arg10[%c52_210, %c0_211], %157 {strides = array<i32>} : memref<128x128xf32, #tpu.memory_space<vmem>>, vector<1x128xf32>,
    %c0_212 = arith.constant 0 : index
    %c0_213 = arith.constant 0 : index
    %c3_214 = arith.constant 3 : index
    %159 = vector.load %arg6[%c0_212, %c0_213, %c3_214] : memref<1x1x256xf32, #tpu.memory_space<vmem>>, vector<1x1x128xf32>
    %160 = vector.shape_cast %159 : vector<1x1x128xf32> to vector<1x128xf32>
    %c53 = arith.constant 53 : index
    %c0_215 = arith.constant 0 : index
    %161 = vector.load %arg10[%c53, %c0_215] : memref<128x128xf32, #tpu.memory_space<vmem>>, vector<1x128xf32>
    tpu.vector_store %arg10[%c53, %c0_215], %160 {strides = array<i32>} : memref<128x128xf32, #tpu.memory_space<vmem>>, vector<1x128xf32>,
    %c0_216 = arith.constant 0 : index
    %c0_217 = arith.constant 0 : index
    %c4_218 = arith.constant 4 : index
    %162 = vector.load %arg6[%c0_216, %c0_217, %c4_218] : memref<1x1x256xf32, #tpu.memory_space<vmem>>, vector<1x1x128xf32>
    %163 = vector.shape_cast %162 : vector<1x1x128xf32> to vector<1x128xf32>
    %c54 = arith.constant 54 : index
    %c0_219 = arith.constant 0 : index
    %164 = vector.load %arg10[%c54, %c0_219] : memref<128x128xf32, #tpu.memory_space<vmem>>, vector<1x128xf32>
    tpu.vector_store %arg10[%c54, %c0_219], %163 {strides = array<i32>} : memref<128x128xf32, #tpu.memory_space<vmem>>, vector<1x128xf32>,
    %c0_220 = arith.constant 0 : index
    %c0_221 = arith.constant 0 : index
    %c12_222 = arith.constant 12 : index
    %165 = vector.load %arg6[%c0_220, %c0_221, %c12_222] : memref<1x1x256xf32, #tpu.memory_space<vmem>>, vector<1x1x128xf32>
    %166 = vector.shape_cast %165 : vector<1x1x128xf32> to vector<1x128xf32>
    %c55 = arith.constant 55 : index
    %c0_223 = arith.constant 0 : index
    %167 = vector.load %arg10[%c55, %c0_223] : memref<128x128xf32, #tpu.memory_space<vmem>>, vector<1x128xf32>
    tpu.vector_store %arg10[%c55, %c0_223], %166 {strides = array<i32>} : memref<128x128xf32, #tpu.memory_space<vmem>>, vector<1x128xf32>,
    %c0_224 = arith.constant 0 : index
    %c0_225 = arith.constant 0 : index
    %c13_226 = arith.constant 13 : index
    %168 = vector.load %arg6[%c0_224, %c0_225, %c13_226] : memref<1x1x256xf32, #tpu.memory_space<vmem>>, vector<1x1x128xf32>
    %169 = vector.shape_cast %168 : vector<1x1x128xf32> to vector<1x128xf32>
    %c56 = arith.constant 56 : index
    %c0_227 = arith.constant 0 : index
    %170 = vector.load %arg10[%c56, %c0_227] : memref<128x128xf32, #tpu.memory_space<vmem>>, vector<1x128xf32>
    tpu.vector_store %arg10[%c56, %c0_227], %169 {strides = array<i32>} : memref<128x128xf32, #tpu.memory_space<vmem>>, vector<1x128xf32>,
    %c0_228 = arith.constant 0 : index
    %c0_229 = arith.constant 0 : index
    %c14_230 = arith.constant 14 : index
    %171 = vector.load %arg6[%c0_228, %c0_229, %c14_230] : memref<1x1x256xf32, #tpu.memory_space<vmem>>, vector<1x1x128xf32>
    %172 = vector.shape_cast %171 : vector<1x1x128xf32> to vector<1x128xf32>
    %c57 = arith.constant 57 : index
    %c0_231 = arith.constant 0 : index
    %173 = vector.load %arg10[%c57, %c0_231] : memref<128x128xf32, #tpu.memory_space<vmem>>, vector<1x128xf32>
    tpu.vector_store %arg10[%c57, %c0_231], %172 {strides = array<i32>} : memref<128x128xf32, #tpu.memory_space<vmem>>, vector<1x128xf32>,
    %c0_232 = arith.constant 0 : index
    %c0_233 = arith.constant 0 : index
    %c15_234 = arith.constant 15 : index
    %174 = vector.load %arg6[%c0_232, %c0_233, %c15_234] : memref<1x1x256xf32, #tpu.memory_space<vmem>>, vector<1x1x128xf32>
    %175 = vector.shape_cast %174 : vector<1x1x128xf32> to vector<1x128xf32>
    %c58 = arith.constant 58 : index
    %c0_235 = arith.constant 0 : index
    %176 = vector.load %arg10[%c58, %c0_235] : memref<128x128xf32, #tpu.memory_space<vmem>>, vector<1x128xf32>
    tpu.vector_store %arg10[%c58, %c0_235], %175 {strides = array<i32>} : memref<128x128xf32, #tpu.memory_space<vmem>>, vector<1x128xf32>,
    %c0_236 = arith.constant 0 : index
    %c0_237 = arith.constant 0 : index
    %c16_238 = arith.constant 16 : index
    %177 = vector.load %arg6[%c0_236, %c0_237, %c16_238] : memref<1x1x256xf32, #tpu.memory_space<vmem>>, vector<1x1x128xf32>
    %178 = vector.shape_cast %177 : vector<1x1x128xf32> to vector<1x128xf32>
    %c59 = arith.constant 59 : index
    %c0_239 = arith.constant 0 : index
    %179 = vector.load %arg10[%c59, %c0_239] : memref<128x128xf32, #tpu.memory_space<vmem>>, vector<1x128xf32>
    tpu.vector_store %arg10[%c59, %c0_239], %178 {strides = array<i32>} : memref<128x128xf32, #tpu.memory_space<vmem>>, vector<1x128xf32>,
    %c0_240 = arith.constant 0 : index
    %c0_241 = arith.constant 0 : index
    %c24_242 = arith.constant 24 : index
    %180 = vector.load %arg6[%c0_240, %c0_241, %c24_242] : memref<1x1x256xf32, #tpu.memory_space<vmem>>, vector<1x1x128xf32>
    %181 = vector.shape_cast %180 : vector<1x1x128xf32> to vector<1x128xf32>
    %c60 = arith.constant 60 : index
    %c0_243 = arith.constant 0 : index
    %182 = vector.load %arg10[%c60, %c0_243] : memref<128x128xf32, #tpu.memory_space<vmem>>, vector<1x128xf32>
    tpu.vector_store %arg10[%c60, %c0_243], %181 {strides = array<i32>} : memref<128x128xf32, #tpu.memory_space<vmem>>, vector<1x128xf32>,
    %c0_244 = arith.constant 0 : index
    %c0_245 = arith.constant 0 : index
    %c25_246 = arith.constant 25 : index
    %183 = vector.load %arg6[%c0_244, %c0_245, %c25_246] : memref<1x1x256xf32, #tpu.memory_space<vmem>>, vector<1x1x128xf32>
    %184 = vector.shape_cast %183 : vector<1x1x128xf32> to vector<1x128xf32>
    %c61 = arith.constant 61 : index
    %c0_247 = arith.constant 0 : index
    %185 = vector.load %arg10[%c61, %c0_247] : memref<128x128xf32, #tpu.memory_space<vmem>>, vector<1x128xf32>
    tpu.vector_store %arg10[%c61, %c0_247], %184 {strides = array<i32>} : memref<128x128xf32, #tpu.memory_space<vmem>>, vector<1x128xf32>,
    %c0_248 = arith.constant 0 : index
    %c0_249 = arith.constant 0 : index
    %c26_250 = arith.constant 26 : index
    %186 = vector.load %arg6[%c0_248, %c0_249, %c26_250] : memref<1x1x256xf32, #tpu.memory_space<vmem>>, vector<1x1x128xf32>
    %187 = vector.shape_cast %186 : vector<1x1x128xf32> to vector<1x128xf32>
    %c62 = arith.constant 62 : index
    %c0_251 = arith.constant 0 : index
    %188 = vector.load %arg10[%c62, %c0_251] : memref<128x128xf32, #tpu.memory_space<vmem>>, vector<1x128xf32>
    tpu.vector_store %arg10[%c62, %c0_251], %187 {strides = array<i32>} : memref<128x128xf32, #tpu.memory_space<vmem>>, vector<1x128xf32>,
    %c0_252 = arith.constant 0 : index
    %c0_253 = arith.constant 0 : index
    %c27_254 = arith.constant 27 : index
    %189 = vector.load %arg6[%c0_252, %c0_253, %c27_254] : memref<1x1x256xf32, #tpu.memory_space<vmem>>, vector<1x1x128xf32>
    %190 = vector.shape_cast %189 : vector<1x1x128xf32> to vector<1x128xf32>
    %c63 = arith.constant 63 : index
    %c0_255 = arith.constant 0 : index
    %191 = vector.load %arg10[%c63, %c0_255] : memref<128x128xf32, #tpu.memory_space<vmem>>, vector<1x128xf32>
    tpu.vector_store %arg10[%c63, %c0_255], %190 {strides = array<i32>} : memref<128x128xf32, #tpu.memory_space<vmem>>, vector<1x128xf32>,
    %c0_256 = arith.constant 0 : index
    %c0_257 = arith.constant 0 : index
    %c28_258 = arith.constant 28 : index
    %192 = vector.load %arg6[%c0_256, %c0_257, %c28_258] : memref<1x1x256xf32, #tpu.memory_space<vmem>>, vector<1x1x128xf32>
    %193 = vector.shape_cast %192 : vector<1x1x128xf32> to vector<1x128xf32>
    %c64 = arith.constant 64 : index
    %c0_259 = arith.constant 0 : index
    %194 = vector.load %arg10[%c64, %c0_259] : memref<128x128xf32, #tpu.memory_space<vmem>>, vector<1x128xf32>
    tpu.vector_store %arg10[%c64, %c0_259], %193 {strides = array<i32>} : memref<128x128xf32, #tpu.memory_space<vmem>>, vector<1x128xf32>,
    %c0_260 = arith.constant 0 : index
    %c0_261 = arith.constant 0 : index
    %c36_262 = arith.constant 36 : index
    %195 = vector.load %arg6[%c0_260, %c0_261, %c36_262] : memref<1x1x256xf32, #tpu.memory_space<vmem>>, vector<1x1x128xf32>
    %196 = vector.shape_cast %195 : vector<1x1x128xf32> to vector<1x128xf32>
    %c65 = arith.constant 65 : index
    %c0_263 = arith.constant 0 : index
    %197 = vector.load %arg10[%c65, %c0_263] : memref<128x128xf32, #tpu.memory_space<vmem>>, vector<1x128xf32>
    tpu.vector_store %arg10[%c65, %c0_263], %196 {strides = array<i32>} : memref<128x128xf32, #tpu.memory_space<vmem>>, vector<1x128xf32>,
    %c0_264 = arith.constant 0 : index
    %c0_265 = arith.constant 0 : index
    %c37_266 = arith.constant 37 : index
    %198 = vector.load %arg6[%c0_264, %c0_265, %c37_266] : memref<1x1x256xf32, #tpu.memory_space<vmem>>, vector<1x1x128xf32>
    %199 = vector.shape_cast %198 : vector<1x1x128xf32> to vector<1x128xf32>
    %c66 = arith.constant 66 : index
    %c0_267 = arith.constant 0 : index
    %200 = vector.load %arg10[%c66, %c0_267] : memref<128x128xf32, #tpu.memory_space<vmem>>, vector<1x128xf32>
    tpu.vector_store %arg10[%c66, %c0_267], %199 {strides = array<i32>} : memref<128x128xf32, #tpu.memory_space<vmem>>, vector<1x128xf32>,
    %c0_268 = arith.constant 0 : index
    %c0_269 = arith.constant 0 : index
    %c38_270 = arith.constant 38 : index
    %201 = vector.load %arg6[%c0_268, %c0_269, %c38_270] : memref<1x1x256xf32, #tpu.memory_space<vmem>>, vector<1x1x128xf32>
    %202 = vector.shape_cast %201 : vector<1x1x128xf32> to vector<1x128xf32>
    %c67 = arith.constant 67 : index
    %c0_271 = arith.constant 0 : index
    %203 = vector.load %arg10[%c67, %c0_271] : memref<128x128xf32, #tpu.memory_space<vmem>>, vector<1x128xf32>
    tpu.vector_store %arg10[%c67, %c0_271], %202 {strides = array<i32>} : memref<128x128xf32, #tpu.memory_space<vmem>>, vector<1x128xf32>,
    %c0_272 = arith.constant 0 : index
    %c0_273 = arith.constant 0 : index
    %c39_274 = arith.constant 39 : index
    %204 = vector.load %arg6[%c0_272, %c0_273, %c39_274] : memref<1x1x256xf32, #tpu.memory_space<vmem>>, vector<1x1x128xf32>
    %205 = vector.shape_cast %204 : vector<1x1x128xf32> to vector<1x128xf32>
    %c68 = arith.constant 68 : index
    %c0_275 = arith.constant 0 : index
    %206 = vector.load %arg10[%c68, %c0_275] : memref<128x128xf32, #tpu.memory_space<vmem>>, vector<1x128xf32>
    tpu.vector_store %arg10[%c68, %c0_275], %205 {strides = array<i32>} : memref<128x128xf32, #tpu.memory_space<vmem>>, vector<1x128xf32>,
    %c0_276 = arith.constant 0 : index
    %c0_277 = arith.constant 0 : index
    %c40_278 = arith.constant 40 : index
    %207 = vector.load %arg6[%c0_276, %c0_277, %c40_278] : memref<1x1x256xf32, #tpu.memory_space<vmem>>, vector<1x1x128xf32>
    %208 = vector.shape_cast %207 : vector<1x1x128xf32> to vector<1x128xf32>
    %c69 = arith.constant 69 : index
    %c0_279 = arith.constant 0 : index
    %209 = vector.load %arg10[%c69, %c0_279] : memref<128x128xf32, #tpu.memory_space<vmem>>, vector<1x128xf32>
    tpu.vector_store %arg10[%c69, %c0_279], %208 {strides = array<i32>} : memref<128x128xf32, #tpu.memory_space<vmem>>, vector<1x128xf32>,
    %c0_280 = arith.constant 0 : index
    %c0_281 = arith.constant 0 : index
    %c48_282 = arith.constant 48 : index
    %210 = vector.load %arg6[%c0_280, %c0_281, %c48_282] : memref<1x1x256xf32, #tpu.memory_space<vmem>>, vector<1x1x128xf32>
    %211 = vector.shape_cast %210 : vector<1x1x128xf32> to vector<1x128xf32>
    %c70 = arith.constant 70 : index
    %c0_283 = arith.constant 0 : index
    %212 = vector.load %arg10[%c70, %c0_283] : memref<128x128xf32, #tpu.memory_space<vmem>>, vector<1x128xf32>
    tpu.vector_store %arg10[%c70, %c0_283], %211 {strides = array<i32>} : memref<128x128xf32, #tpu.memory_space<vmem>>, vector<1x128xf32>,
    %c0_284 = arith.constant 0 : index
    %c0_285 = arith.constant 0 : index
    %c49_286 = arith.constant 49 : index
    %213 = vector.load %arg6[%c0_284, %c0_285, %c49_286] : memref<1x1x256xf32, #tpu.memory_space<vmem>>, vector<1x1x128xf32>
    %214 = vector.shape_cast %213 : vector<1x1x128xf32> to vector<1x128xf32>
    %c71 = arith.constant 71 : index
    %c0_287 = arith.constant 0 : index
    %215 = vector.load %arg10[%c71, %c0_287] : memref<128x128xf32, #tpu.memory_space<vmem>>, vector<1x128xf32>
    tpu.vector_store %arg10[%c71, %c0_287], %214 {strides = array<i32>} : memref<128x128xf32, #tpu.memory_space<vmem>>, vector<1x128xf32>,
    %c0_288 = arith.constant 0 : index
    %c0_289 = arith.constant 0 : index
    %c50_290 = arith.constant 50 : index
    %216 = vector.load %arg6[%c0_288, %c0_289, %c50_290] : memref<1x1x256xf32, #tpu.memory_space<vmem>>, vector<1x1x128xf32>
    %217 = vector.shape_cast %216 : vector<1x1x128xf32> to vector<1x128xf32>
    %c72 = arith.constant 72 : index
    %c0_291 = arith.constant 0 : index
    %218 = vector.load %arg10[%c72, %c0_291] : memref<128x128xf32, #tpu.memory_space<vmem>>, vector<1x128xf32>
    tpu.vector_store %arg10[%c72, %c0_291], %217 {strides = array<i32>} : memref<128x128xf32, #tpu.memory_space<vmem>>, vector<1x128xf32>,
    %c0_292 = arith.constant 0 : index
    %c0_293 = arith.constant 0 : index
    %c51_294 = arith.constant 51 : index
    %219 = vector.load %arg6[%c0_292, %c0_293, %c51_294] : memref<1x1x256xf32, #tpu.memory_space<vmem>>, vector<1x1x128xf32>
    %220 = vector.shape_cast %219 : vector<1x1x128xf32> to vector<1x128xf32>
    %c73 = arith.constant 73 : index
    %c0_295 = arith.constant 0 : index
    %221 = vector.load %arg10[%c73, %c0_295] : memref<128x128xf32, #tpu.memory_space<vmem>>, vector<1x128xf32>
    tpu.vector_store %arg10[%c73, %c0_295], %220 {strides = array<i32>} : memref<128x128xf32, #tpu.memory_space<vmem>>, vector<1x128xf32>,
    %c0_296 = arith.constant 0 : index
    %c0_297 = arith.constant 0 : index
    %c52_298 = arith.constant 52 : index
    %222 = vector.load %arg6[%c0_296, %c0_297, %c52_298] : memref<1x1x256xf32, #tpu.memory_space<vmem>>, vector<1x1x128xf32>
    %223 = vector.shape_cast %222 : vector<1x1x128xf32> to vector<1x128xf32>
    %c74 = arith.constant 74 : index
    %c0_299 = arith.constant 0 : index
    %224 = vector.load %arg10[%c74, %c0_299] : memref<128x128xf32, #tpu.memory_space<vmem>>, vector<1x128xf32>
    tpu.vector_store %arg10[%c74, %c0_299], %223 {strides = array<i32>} : memref<128x128xf32, #tpu.memory_space<vmem>>, vector<1x128xf32>,
    %c0_300 = arith.constant 0 : index
    %c0_301 = arith.constant 0 : index
    %c0_302 = arith.constant 0 : index
    %225 = vector.load %arg7[%c0_300, %c0_301, %c0_302] : memref<1x1x256xf32, #tpu.memory_space<vmem>>, vector<1x1x128xf32>
    %226 = vector.shape_cast %225 : vector<1x1x128xf32> to vector<1x128xf32>
    %c75 = arith.constant 75 : index
    %c0_303 = arith.constant 0 : index
    %227 = vector.load %arg10[%c75, %c0_303] : memref<128x128xf32, #tpu.memory_space<vmem>>, vector<1x128xf32>
    tpu.vector_store %arg10[%c75, %c0_303], %226 {strides = array<i32>} : memref<128x128xf32, #tpu.memory_space<vmem>>, vector<1x128xf32>,
    %c0_304 = arith.constant 0 : index
    %c0_305 = arith.constant 0 : index
    %c1_306 = arith.constant 1 : index
    %228 = vector.load %arg7[%c0_304, %c0_305, %c1_306] : memref<1x1x256xf32, #tpu.memory_space<vmem>>, vector<1x1x128xf32>
    %229 = vector.shape_cast %228 : vector<1x1x128xf32> to vector<1x128xf32>
    %c76 = arith.constant 76 : index
    %c0_307 = arith.constant 0 : index
    %230 = vector.load %arg10[%c76, %c0_307] : memref<128x128xf32, #tpu.memory_space<vmem>>, vector<1x128xf32>
    tpu.vector_store %arg10[%c76, %c0_307], %229 {strides = array<i32>} : memref<128x128xf32, #tpu.memory_space<vmem>>, vector<1x128xf32>,
    %c0_308 = arith.constant 0 : index
    %c0_309 = arith.constant 0 : index
    %c2_310 = arith.constant 2 : index
    %231 = vector.load %arg7[%c0_308, %c0_309, %c2_310] : memref<1x1x256xf32, #tpu.memory_space<vmem>>, vector<1x1x128xf32>
    %232 = vector.shape_cast %231 : vector<1x1x128xf32> to vector<1x128xf32>
    %c77 = arith.constant 77 : index
    %c0_311 = arith.constant 0 : index
    %233 = vector.load %arg10[%c77, %c0_311] : memref<128x128xf32, #tpu.memory_space<vmem>>, vector<1x128xf32>
    tpu.vector_store %arg10[%c77, %c0_311], %232 {strides = array<i32>} : memref<128x128xf32, #tpu.memory_space<vmem>>, vector<1x128xf32>,
    %c0_312 = arith.constant 0 : index
    %c0_313 = arith.constant 0 : index
    %c3_314 = arith.constant 3 : index
    %234 = vector.load %arg7[%c0_312, %c0_313, %c3_314] : memref<1x1x256xf32, #tpu.memory_space<vmem>>, vector<1x1x128xf32>
    %235 = vector.shape_cast %234 : vector<1x1x128xf32> to vector<1x128xf32>
    %c78 = arith.constant 78 : index
    %c0_315 = arith.constant 0 : index
    %236 = vector.load %arg10[%c78, %c0_315] : memref<128x128xf32, #tpu.memory_space<vmem>>, vector<1x128xf32>
    tpu.vector_store %arg10[%c78, %c0_315], %235 {strides = array<i32>} : memref<128x128xf32, #tpu.memory_space<vmem>>, vector<1x128xf32>,
    %c0_316 = arith.constant 0 : index
    %c0_317 = arith.constant 0 : index
    %c4_318 = arith.constant 4 : index
    %237 = vector.load %arg7[%c0_316, %c0_317, %c4_318] : memref<1x1x256xf32, #tpu.memory_space<vmem>>, vector<1x1x128xf32>
    %238 = vector.shape_cast %237 : vector<1x1x128xf32> to vector<1x128xf32>
    %c79 = arith.constant 79 : index
    %c0_319 = arith.constant 0 : index
    %239 = vector.load %arg10[%c79, %c0_319] : memref<128x128xf32, #tpu.memory_space<vmem>>, vector<1x128xf32>
    tpu.vector_store %arg10[%c79, %c0_319], %238 {strides = array<i32>} : memref<128x128xf32, #tpu.memory_space<vmem>>, vector<1x128xf32>,
    %c0_320 = arith.constant 0 : index
    %c0_321 = arith.constant 0 : index
    %c12_322 = arith.constant 12 : index
    %240 = vector.load %arg7[%c0_320, %c0_321, %c12_322] : memref<1x1x256xf32, #tpu.memory_space<vmem>>, vector<1x1x128xf32>
    %241 = vector.shape_cast %240 : vector<1x1x128xf32> to vector<1x128xf32>
    %c80 = arith.constant 80 : index
    %c0_323 = arith.constant 0 : index
    %242 = vector.load %arg10[%c80, %c0_323] : memref<128x128xf32, #tpu.memory_space<vmem>>, vector<1x128xf32>
    tpu.vector_store %arg10[%c80, %c0_323], %241 {strides = array<i32>} : memref<128x128xf32, #tpu.memory_space<vmem>>, vector<1x128xf32>,
    %c0_324 = arith.constant 0 : index
    %c0_325 = arith.constant 0 : index
    %c13_326 = arith.constant 13 : index
    %243 = vector.load %arg7[%c0_324, %c0_325, %c13_326] : memref<1x1x256xf32, #tpu.memory_space<vmem>>, vector<1x1x128xf32>
    %244 = vector.shape_cast %243 : vector<1x1x128xf32> to vector<1x128xf32>
    %c81 = arith.constant 81 : index
    %c0_327 = arith.constant 0 : index
    %245 = vector.load %arg10[%c81, %c0_327] : memref<128x128xf32, #tpu.memory_space<vmem>>, vector<1x128xf32>
    tpu.vector_store %arg10[%c81, %c0_327], %244 {strides = array<i32>} : memref<128x128xf32, #tpu.memory_space<vmem>>, vector<1x128xf32>,
    %c0_328 = arith.constant 0 : index
    %c0_329 = arith.constant 0 : index
    %c14_330 = arith.constant 14 : index
    %246 = vector.load %arg7[%c0_328, %c0_329, %c14_330] : memref<1x1x256xf32, #tpu.memory_space<vmem>>, vector<1x1x128xf32>
    %247 = vector.shape_cast %246 : vector<1x1x128xf32> to vector<1x128xf32>
    %c82 = arith.constant 82 : index
    %c0_331 = arith.constant 0 : index
    %248 = vector.load %arg10[%c82, %c0_331] : memref<128x128xf32, #tpu.memory_space<vmem>>, vector<1x128xf32>
    tpu.vector_store %arg10[%c82, %c0_331], %247 {strides = array<i32>} : memref<128x128xf32, #tpu.memory_space<vmem>>, vector<1x128xf32>,
    %c0_332 = arith.constant 0 : index
    %c0_333 = arith.constant 0 : index
    %c15_334 = arith.constant 15 : index
    %249 = vector.load %arg7[%c0_332, %c0_333, %c15_334] : memref<1x1x256xf32, #tpu.memory_space<vmem>>, vector<1x1x128xf32>
    %250 = vector.shape_cast %249 : vector<1x1x128xf32> to vector<1x128xf32>
    %c83 = arith.constant 83 : index
    %c0_335 = arith.constant 0 : index
    %251 = vector.load %arg10[%c83, %c0_335] : memref<128x128xf32, #tpu.memory_space<vmem>>, vector<1x128xf32>
    tpu.vector_store %arg10[%c83, %c0_335], %250 {strides = array<i32>} : memref<128x128xf32, #tpu.memory_space<vmem>>, vector<1x128xf32>,
    %c0_336 = arith.constant 0 : index
    %c0_337 = arith.constant 0 : index
    %c16_338 = arith.constant 16 : index
    %252 = vector.load %arg7[%c0_336, %c0_337, %c16_338] : memref<1x1x256xf32, #tpu.memory_space<vmem>>, vector<1x1x128xf32>
    %253 = vector.shape_cast %252 : vector<1x1x128xf32> to vector<1x128xf32>
    %c84 = arith.constant 84 : index
    %c0_339 = arith.constant 0 : index
    %254 = vector.load %arg10[%c84, %c0_339] : memref<128x128xf32, #tpu.memory_space<vmem>>, vector<1x128xf32>
    tpu.vector_store %arg10[%c84, %c0_339], %253 {strides = array<i32>} : memref<128x128xf32, #tpu.memory_space<vmem>>, vector<1x128xf32>,
    %c0_340 = arith.constant 0 : index
    %c0_341 = arith.constant 0 : index
    %c24_342 = arith.constant 24 : index
    %255 = vector.load %arg7[%c0_340, %c0_341, %c24_342] : memref<1x1x256xf32, #tpu.memory_space<vmem>>, vector<1x1x128xf32>
    %256 = vector.shape_cast %255 : vector<1x1x128xf32> to vector<1x128xf32>
    %c85 = arith.constant 85 : index
    %c0_343 = arith.constant 0 : index
    %257 = vector.load %arg10[%c85, %c0_343] : memref<128x128xf32, #tpu.memory_space<vmem>>, vector<1x128xf32>
    tpu.vector_store %arg10[%c85, %c0_343], %256 {strides = array<i32>} : memref<128x128xf32, #tpu.memory_space<vmem>>, vector<1x128xf32>,
    %c0_344 = arith.constant 0 : index
    %c0_345 = arith.constant 0 : index
    %c25_346 = arith.constant 25 : index
    %258 = vector.load %arg7[%c0_344, %c0_345, %c25_346] : memref<1x1x256xf32, #tpu.memory_space<vmem>>, vector<1x1x128xf32>
    %259 = vector.shape_cast %258 : vector<1x1x128xf32> to vector<1x128xf32>
    %c86 = arith.constant 86 : index
    %c0_347 = arith.constant 0 : index
    %260 = vector.load %arg10[%c86, %c0_347] : memref<128x128xf32, #tpu.memory_space<vmem>>, vector<1x128xf32>
    tpu.vector_store %arg10[%c86, %c0_347], %259 {strides = array<i32>} : memref<128x128xf32, #tpu.memory_space<vmem>>, vector<1x128xf32>,
    %c0_348 = arith.constant 0 : index
    %c0_349 = arith.constant 0 : index
    %c26_350 = arith.constant 26 : index
    %261 = vector.load %arg7[%c0_348, %c0_349, %c26_350] : memref<1x1x256xf32, #tpu.memory_space<vmem>>, vector<1x1x128xf32>
    %262 = vector.shape_cast %261 : vector<1x1x128xf32> to vector<1x128xf32>
    %c87 = arith.constant 87 : index
    %c0_351 = arith.constant 0 : index
    %263 = vector.load %arg10[%c87, %c0_351] : memref<128x128xf32, #tpu.memory_space<vmem>>, vector<1x128xf32>
    tpu.vector_store %arg10[%c87, %c0_351], %262 {strides = array<i32>} : memref<128x128xf32, #tpu.memory_space<vmem>>, vector<1x128xf32>,
    %c0_352 = arith.constant 0 : index
    %c0_353 = arith.constant 0 : index
    %c27_354 = arith.constant 27 : index
    %264 = vector.load %arg7[%c0_352, %c0_353, %c27_354] : memref<1x1x256xf32, #tpu.memory_space<vmem>>, vector<1x1x128xf32>
    %265 = vector.shape_cast %264 : vector<1x1x128xf32> to vector<1x128xf32>
    %c88 = arith.constant 88 : index
    %c0_355 = arith.constant 0 : index
    %266 = vector.load %arg10[%c88, %c0_355] : memref<128x128xf32, #tpu.memory_space<vmem>>, vector<1x128xf32>
    tpu.vector_store %arg10[%c88, %c0_355], %265 {strides = array<i32>} : memref<128x128xf32, #tpu.memory_space<vmem>>, vector<1x128xf32>,
    %c0_356 = arith.constant 0 : index
    %c0_357 = arith.constant 0 : index
    %c28_358 = arith.constant 28 : index
    %267 = vector.load %arg7[%c0_356, %c0_357, %c28_358] : memref<1x1x256xf32, #tpu.memory_space<vmem>>, vector<1x1x128xf32>
    %268 = vector.shape_cast %267 : vector<1x1x128xf32> to vector<1x128xf32>
    %c89 = arith.constant 89 : index
    %c0_359 = arith.constant 0 : index
    %269 = vector.load %arg10[%c89, %c0_359] : memref<128x128xf32, #tpu.memory_space<vmem>>, vector<1x128xf32>
    tpu.vector_store %arg10[%c89, %c0_359], %268 {strides = array<i32>} : memref<128x128xf32, #tpu.memory_space<vmem>>, vector<1x128xf32>,
    %c0_360 = arith.constant 0 : index
    %c0_361 = arith.constant 0 : index
    %c36_362 = arith.constant 36 : index
    %270 = vector.load %arg7[%c0_360, %c0_361, %c36_362] : memref<1x1x256xf32, #tpu.memory_space<vmem>>, vector<1x1x128xf32>
    %271 = vector.shape_cast %270 : vector<1x1x128xf32> to vector<1x128xf32>
    %c90 = arith.constant 90 : index
    %c0_363 = arith.constant 0 : index
    %272 = vector.load %arg10[%c90, %c0_363] : memref<128x128xf32, #tpu.memory_space<vmem>>, vector<1x128xf32>
    tpu.vector_store %arg10[%c90, %c0_363], %271 {strides = array<i32>} : memref<128x128xf32, #tpu.memory_space<vmem>>, vector<1x128xf32>,
    %c0_364 = arith.constant 0 : index
    %c0_365 = arith.constant 0 : index
    %c37_366 = arith.constant 37 : index
    %273 = vector.load %arg7[%c0_364, %c0_365, %c37_366] : memref<1x1x256xf32, #tpu.memory_space<vmem>>, vector<1x1x128xf32>
    %274 = vector.shape_cast %273 : vector<1x1x128xf32> to vector<1x128xf32>
    %c91 = arith.constant 91 : index
    %c0_367 = arith.constant 0 : index
    %275 = vector.load %arg10[%c91, %c0_367] : memref<128x128xf32, #tpu.memory_space<vmem>>, vector<1x128xf32>
    tpu.vector_store %arg10[%c91, %c0_367], %274 {strides = array<i32>} : memref<128x128xf32, #tpu.memory_space<vmem>>, vector<1x128xf32>,
    %c0_368 = arith.constant 0 : index
    %c0_369 = arith.constant 0 : index
    %c38_370 = arith.constant 38 : index
    %276 = vector.load %arg7[%c0_368, %c0_369, %c38_370] : memref<1x1x256xf32, #tpu.memory_space<vmem>>, vector<1x1x128xf32>
    %277 = vector.shape_cast %276 : vector<1x1x128xf32> to vector<1x128xf32>
    %c92 = arith.constant 92 : index
    %c0_371 = arith.constant 0 : index
    %278 = vector.load %arg10[%c92, %c0_371] : memref<128x128xf32, #tpu.memory_space<vmem>>, vector<1x128xf32>
    tpu.vector_store %arg10[%c92, %c0_371], %277 {strides = array<i32>} : memref<128x128xf32, #tpu.memory_space<vmem>>, vector<1x128xf32>,
    %c0_372 = arith.constant 0 : index
    %c0_373 = arith.constant 0 : index
    %c39_374 = arith.constant 39 : index
    %279 = vector.load %arg7[%c0_372, %c0_373, %c39_374] : memref<1x1x256xf32, #tpu.memory_space<vmem>>, vector<1x1x128xf32>
    %280 = vector.shape_cast %279 : vector<1x1x128xf32> to vector<1x128xf32>
    %c93 = arith.constant 93 : index
    %c0_375 = arith.constant 0 : index
    %281 = vector.load %arg10[%c93, %c0_375] : memref<128x128xf32, #tpu.memory_space<vmem>>, vector<1x128xf32>
    tpu.vector_store %arg10[%c93, %c0_375], %280 {strides = array<i32>} : memref<128x128xf32, #tpu.memory_space<vmem>>, vector<1x128xf32>,
    %c0_376 = arith.constant 0 : index
    %c0_377 = arith.constant 0 : index
    %c40_378 = arith.constant 40 : index
    %282 = vector.load %arg7[%c0_376, %c0_377, %c40_378] : memref<1x1x256xf32, #tpu.memory_space<vmem>>, vector<1x1x128xf32>
    %283 = vector.shape_cast %282 : vector<1x1x128xf32> to vector<1x128xf32>
    %c94 = arith.constant 94 : index
    %c0_379 = arith.constant 0 : index
    %284 = vector.load %arg10[%c94, %c0_379] : memref<128x128xf32, #tpu.memory_space<vmem>>, vector<1x128xf32>
    tpu.vector_store %arg10[%c94, %c0_379], %283 {strides = array<i32>} : memref<128x128xf32, #tpu.memory_space<vmem>>, vector<1x128xf32>,
    %c0_380 = arith.constant 0 : index
    %c0_381 = arith.constant 0 : index
    %c48_382 = arith.constant 48 : index
    %285 = vector.load %arg7[%c0_380, %c0_381, %c48_382] : memref<1x1x256xf32, #tpu.memory_space<vmem>>, vector<1x1x128xf32>
    %286 = vector.shape_cast %285 : vector<1x1x128xf32> to vector<1x128xf32>
    %c95 = arith.constant 95 : index
    %c0_383 = arith.constant 0 : index
    %287 = vector.load %arg10[%c95, %c0_383] : memref<128x128xf32, #tpu.memory_space<vmem>>, vector<1x128xf32>
    tpu.vector_store %arg10[%c95, %c0_383], %286 {strides = array<i32>} : memref<128x128xf32, #tpu.memory_space<vmem>>, vector<1x128xf32>,
    %c0_384 = arith.constant 0 : index
    %c0_385 = arith.constant 0 : index
    %c49_386 = arith.constant 49 : index
    %288 = vector.load %arg7[%c0_384, %c0_385, %c49_386] : memref<1x1x256xf32, #tpu.memory_space<vmem>>, vector<1x1x128xf32>
    %289 = vector.shape_cast %288 : vector<1x1x128xf32> to vector<1x128xf32>
    %c96 = arith.constant 96 : index
    %c0_387 = arith.constant 0 : index
    %290 = vector.load %arg10[%c96, %c0_387] : memref<128x128xf32, #tpu.memory_space<vmem>>, vector<1x128xf32>
    tpu.vector_store %arg10[%c96, %c0_387], %289 {strides = array<i32>} : memref<128x128xf32, #tpu.memory_space<vmem>>, vector<1x128xf32>,
    %c0_388 = arith.constant 0 : index
    %c0_389 = arith.constant 0 : index
    %c50_390 = arith.constant 50 : index
    %291 = vector.load %arg7[%c0_388, %c0_389, %c50_390] : memref<1x1x256xf32, #tpu.memory_space<vmem>>, vector<1x1x128xf32>
    %292 = vector.shape_cast %291 : vector<1x1x128xf32> to vector<1x128xf32>
    %c97 = arith.constant 97 : index
    %c0_391 = arith.constant 0 : index
    %293 = vector.load %arg10[%c97, %c0_391] : memref<128x128xf32, #tpu.memory_space<vmem>>, vector<1x128xf32>
    tpu.vector_store %arg10[%c97, %c0_391], %292 {strides = array<i32>} : memref<128x128xf32, #tpu.memory_space<vmem>>, vector<1x128xf32>,
    %c0_392 = arith.constant 0 : index
    %c0_393 = arith.constant 0 : index
    %c51_394 = arith.constant 51 : index
    %294 = vector.load %arg7[%c0_392, %c0_393, %c51_394] : memref<1x1x256xf32, #tpu.memory_space<vmem>>, vector<1x1x128xf32>
    %295 = vector.shape_cast %294 : vector<1x1x128xf32> to vector<1x128xf32>
    %c98 = arith.constant 98 : index
    %c0_395 = arith.constant 0 : index
    %296 = vector.load %arg10[%c98, %c0_395] : memref<128x128xf32, #tpu.memory_space<vmem>>, vector<1x128xf32>
    tpu.vector_store %arg10[%c98, %c0_395], %295 {strides = array<i32>} : memref<128x128xf32, #tpu.memory_space<vmem>>, vector<1x128xf32>,
    %c0_396 = arith.constant 0 : index
    %c0_397 = arith.constant 0 : index
    %c52_398 = arith.constant 52 : index
    %297 = vector.load %arg7[%c0_396, %c0_397, %c52_398] : memref<1x1x256xf32, #tpu.memory_space<vmem>>, vector<1x1x128xf32>
    %298 = vector.shape_cast %297 : vector<1x1x128xf32> to vector<1x128xf32>
    %c99 = arith.constant 99 : index
    %c0_399 = arith.constant 0 : index
    %299 = vector.load %arg10[%c99, %c0_399] : memref<128x128xf32, #tpu.memory_space<vmem>>, vector<1x128xf32>
    tpu.vector_store %arg10[%c99, %c0_399], %298 {strides = array<i32>} : memref<128x128xf32, #tpu.memory_space<vmem>>, vector<1x128xf32>,
    %c0_400 = arith.constant 0 : index
    %c0_401 = arith.constant 0 : index
    %c0_402 = arith.constant 0 : index
    %300 = vector.load %arg8[%c0_400, %c0_401, %c0_402] : memref<1x1x256xf32, #tpu.memory_space<vmem>>, vector<1x1x128xf32>
    %301 = vector.shape_cast %300 : vector<1x1x128xf32> to vector<1x128xf32>
    %c100 = arith.constant 100 : index
    %c0_403 = arith.constant 0 : index
    %302 = vector.load %arg10[%c100, %c0_403] : memref<128x128xf32, #tpu.memory_space<vmem>>, vector<1x128xf32>
    tpu.vector_store %arg10[%c100, %c0_403], %301 {strides = array<i32>} : memref<128x128xf32, #tpu.memory_space<vmem>>, vector<1x128xf32>,
    %c0_404 = arith.constant 0 : index
    %c0_405 = arith.constant 0 : index
    %c1_406 = arith.constant 1 : index
    %303 = vector.load %arg8[%c0_404, %c0_405, %c1_406] : memref<1x1x256xf32, #tpu.memory_space<vmem>>, vector<1x1x128xf32>
    %304 = vector.shape_cast %303 : vector<1x1x128xf32> to vector<1x128xf32>
    %c101 = arith.constant 101 : index
    %c0_407 = arith.constant 0 : index
    %305 = vector.load %arg10[%c101, %c0_407] : memref<128x128xf32, #tpu.memory_space<vmem>>, vector<1x128xf32>
    tpu.vector_store %arg10[%c101, %c0_407], %304 {strides = array<i32>} : memref<128x128xf32, #tpu.memory_space<vmem>>, vector<1x128xf32>,
    %c0_408 = arith.constant 0 : index
    %c0_409 = arith.constant 0 : index
    %c2_410 = arith.constant 2 : index
    %306 = vector.load %arg8[%c0_408, %c0_409, %c2_410] : memref<1x1x256xf32, #tpu.memory_space<vmem>>, vector<1x1x128xf32>
    %307 = vector.shape_cast %306 : vector<1x1x128xf32> to vector<1x128xf32>
    %c102 = arith.constant 102 : index
    %c0_411 = arith.constant 0 : index
    %308 = vector.load %arg10[%c102, %c0_411] : memref<128x128xf32, #tpu.memory_space<vmem>>, vector<1x128xf32>
    tpu.vector_store %arg10[%c102, %c0_411], %307 {strides = array<i32>} : memref<128x128xf32, #tpu.memory_space<vmem>>, vector<1x128xf32>,
    %c0_412 = arith.constant 0 : index
    %c0_413 = arith.constant 0 : index
    %c3_414 = arith.constant 3 : index
    %309 = vector.load %arg8[%c0_412, %c0_413, %c3_414] : memref<1x1x256xf32, #tpu.memory_space<vmem>>, vector<1x1x128xf32>
    %310 = vector.shape_cast %309 : vector<1x1x128xf32> to vector<1x128xf32>
    %c103 = arith.constant 103 : index
    %c0_415 = arith.constant 0 : index
    %311 = vector.load %arg10[%c103, %c0_415] : memref<128x128xf32, #tpu.memory_space<vmem>>, vector<1x128xf32>
    tpu.vector_store %arg10[%c103, %c0_415], %310 {strides = array<i32>} : memref<128x128xf32, #tpu.memory_space<vmem>>, vector<1x128xf32>,
    %c0_416 = arith.constant 0 : index
    %c0_417 = arith.constant 0 : index
    %c4_418 = arith.constant 4 : index
    %312 = vector.load %arg8[%c0_416, %c0_417, %c4_418] : memref<1x1x256xf32, #tpu.memory_space<vmem>>, vector<1x1x128xf32>
    %313 = vector.shape_cast %312 : vector<1x1x128xf32> to vector<1x128xf32>
    %c104 = arith.constant 104 : index
    %c0_419 = arith.constant 0 : index
    %314 = vector.load %arg10[%c104, %c0_419] : memref<128x128xf32, #tpu.memory_space<vmem>>, vector<1x128xf32>
    tpu.vector_store %arg10[%c104, %c0_419], %313 {strides = array<i32>} : memref<128x128xf32, #tpu.memory_space<vmem>>, vector<1x128xf32>,
    %c0_420 = arith.constant 0 : index
    %c0_421 = arith.constant 0 : index
    %c12_422 = arith.constant 12 : index
    %315 = vector.load %arg8[%c0_420, %c0_421, %c12_422] : memref<1x1x256xf32, #tpu.memory_space<vmem>>, vector<1x1x128xf32>
    %316 = vector.shape_cast %315 : vector<1x1x128xf32> to vector<1x128xf32>
    %c105 = arith.constant 105 : index
    %c0_423 = arith.constant 0 : index
    %317 = vector.load %arg10[%c105, %c0_423] : memref<128x128xf32, #tpu.memory_space<vmem>>, vector<1x128xf32>
    tpu.vector_store %arg10[%c105, %c0_423], %316 {strides = array<i32>} : memref<128x128xf32, #tpu.memory_space<vmem>>, vector<1x128xf32>,
    %c0_424 = arith.constant 0 : index
    %c0_425 = arith.constant 0 : index
    %c13_426 = arith.constant 13 : index
    %318 = vector.load %arg8[%c0_424, %c0_425, %c13_426] : memref<1x1x256xf32, #tpu.memory_space<vmem>>, vector<1x1x128xf32>
    %319 = vector.shape_cast %318 : vector<1x1x128xf32> to vector<1x128xf32>
    %c106 = arith.constant 106 : index
    %c0_427 = arith.constant 0 : index
    %320 = vector.load %arg10[%c106, %c0_427] : memref<128x128xf32, #tpu.memory_space<vmem>>, vector<1x128xf32>
    tpu.vector_store %arg10[%c106, %c0_427], %319 {strides = array<i32>} : memref<128x128xf32, #tpu.memory_space<vmem>>, vector<1x128xf32>,
    %c0_428 = arith.constant 0 : index
    %c0_429 = arith.constant 0 : index
    %c14_430 = arith.constant 14 : index
    %321 = vector.load %arg8[%c0_428, %c0_429, %c14_430] : memref<1x1x256xf32, #tpu.memory_space<vmem>>, vector<1x1x128xf32>
    %322 = vector.shape_cast %321 : vector<1x1x128xf32> to vector<1x128xf32>
    %c107 = arith.constant 107 : index
    %c0_431 = arith.constant 0 : index
    %323 = vector.load %arg10[%c107, %c0_431] : memref<128x128xf32, #tpu.memory_space<vmem>>, vector<1x128xf32>
    tpu.vector_store %arg10[%c107, %c0_431], %322 {strides = array<i32>} : memref<128x128xf32, #tpu.memory_space<vmem>>, vector<1x128xf32>,
    %c0_432 = arith.constant 0 : index
    %c0_433 = arith.constant 0 : index
    %c15_434 = arith.constant 15 : index
    %324 = vector.load %arg8[%c0_432, %c0_433, %c15_434] : memref<1x1x256xf32, #tpu.memory_space<vmem>>, vector<1x1x128xf32>
    %325 = vector.shape_cast %324 : vector<1x1x128xf32> to vector<1x128xf32>
    %c108 = arith.constant 108 : index
    %c0_435 = arith.constant 0 : index
    %326 = vector.load %arg10[%c108, %c0_435] : memref<128x128xf32, #tpu.memory_space<vmem>>, vector<1x128xf32>
    tpu.vector_store %arg10[%c108, %c0_435], %325 {strides = array<i32>} : memref<128x128xf32, #tpu.memory_space<vmem>>, vector<1x128xf32>,
    %c0_436 = arith.constant 0 : index
    %c0_437 = arith.constant 0 : index
    %c16_438 = arith.constant 16 : index
    %327 = vector.load %arg8[%c0_436, %c0_437, %c16_438] : memref<1x1x256xf32, #tpu.memory_space<vmem>>, vector<1x1x128xf32>
    %328 = vector.shape_cast %327 : vector<1x1x128xf32> to vector<1x128xf32>
    %c109 = arith.constant 109 : index
    %c0_439 = arith.constant 0 : index
    %329 = vector.load %arg10[%c109, %c0_439] : memref<128x128xf32, #tpu.memory_space<vmem>>, vector<1x128xf32>
    tpu.vector_store %arg10[%c109, %c0_439], %328 {strides = array<i32>} : memref<128x128xf32, #tpu.memory_space<vmem>>, vector<1x128xf32>,
    %c0_440 = arith.constant 0 : index
    %c0_441 = arith.constant 0 : index
    %c24_442 = arith.constant 24 : index
    %330 = vector.load %arg8[%c0_440, %c0_441, %c24_442] : memref<1x1x256xf32, #tpu.memory_space<vmem>>, vector<1x1x128xf32>
    %331 = vector.shape_cast %330 : vector<1x1x128xf32> to vector<1x128xf32>
    %c110 = arith.constant 110 : index
    %c0_443 = arith.constant 0 : index
    %332 = vector.load %arg10[%c110, %c0_443] : memref<128x128xf32, #tpu.memory_space<vmem>>, vector<1x128xf32>
    tpu.vector_store %arg10[%c110, %c0_443], %331 {strides = array<i32>} : memref<128x128xf32, #tpu.memory_space<vmem>>, vector<1x128xf32>,
    %c0_444 = arith.constant 0 : index
    %c0_445 = arith.constant 0 : index
    %c25_446 = arith.constant 25 : index
    %333 = vector.load %arg8[%c0_444, %c0_445, %c25_446] : memref<1x1x256xf32, #tpu.memory_space<vmem>>, vector<1x1x128xf32>
    %334 = vector.shape_cast %333 : vector<1x1x128xf32> to vector<1x128xf32>
    %c111 = arith.constant 111 : index
    %c0_447 = arith.constant 0 : index
    %335 = vector.load %arg10[%c111, %c0_447] : memref<128x128xf32, #tpu.memory_space<vmem>>, vector<1x128xf32>
    tpu.vector_store %arg10[%c111, %c0_447], %334 {strides = array<i32>} : memref<128x128xf32, #tpu.memory_space<vmem>>, vector<1x128xf32>,
    %c0_448 = arith.constant 0 : index
    %c0_449 = arith.constant 0 : index
    %c26_450 = arith.constant 26 : index
    %336 = vector.load %arg8[%c0_448, %c0_449, %c26_450] : memref<1x1x256xf32, #tpu.memory_space<vmem>>, vector<1x1x128xf32>
    %337 = vector.shape_cast %336 : vector<1x1x128xf32> to vector<1x128xf32>
    %c112 = arith.constant 112 : index
    %c0_451 = arith.constant 0 : index
    %338 = vector.load %arg10[%c112, %c0_451] : memref<128x128xf32, #tpu.memory_space<vmem>>, vector<1x128xf32>
    tpu.vector_store %arg10[%c112, %c0_451], %337 {strides = array<i32>} : memref<128x128xf32, #tpu.memory_space<vmem>>, vector<1x128xf32>,
    %c0_452 = arith.constant 0 : index
    %c0_453 = arith.constant 0 : index
    %c27_454 = arith.constant 27 : index
    %339 = vector.load %arg8[%c0_452, %c0_453, %c27_454] : memref<1x1x256xf32, #tpu.memory_space<vmem>>, vector<1x1x128xf32>
    %340 = vector.shape_cast %339 : vector<1x1x128xf32> to vector<1x128xf32>
    %c113 = arith.constant 113 : index
    %c0_455 = arith.constant 0 : index
    %341 = vector.load %arg10[%c113, %c0_455] : memref<128x128xf32, #tpu.memory_space<vmem>>, vector<1x128xf32>
    tpu.vector_store %arg10[%c113, %c0_455], %340 {strides = array<i32>} : memref<128x128xf32, #tpu.memory_space<vmem>>, vector<1x128xf32>,
    %c0_456 = arith.constant 0 : index
    %c0_457 = arith.constant 0 : index
    %c28_458 = arith.constant 28 : index
    %342 = vector.load %arg8[%c0_456, %c0_457, %c28_458] : memref<1x1x256xf32, #tpu.memory_space<vmem>>, vector<1x1x128xf32>
    %343 = vector.shape_cast %342 : vector<1x1x128xf32> to vector<1x128xf32>
    %c114 = arith.constant 114 : index
    %c0_459 = arith.constant 0 : index
    %344 = vector.load %arg10[%c114, %c0_459] : memref<128x128xf32, #tpu.memory_space<vmem>>, vector<1x128xf32>
    tpu.vector_store %arg10[%c114, %c0_459], %343 {strides = array<i32>} : memref<128x128xf32, #tpu.memory_space<vmem>>, vector<1x128xf32>,
    %c0_460 = arith.constant 0 : index
    %c0_461 = arith.constant 0 : index
    %c36_462 = arith.constant 36 : index
    %345 = vector.load %arg8[%c0_460, %c0_461, %c36_462] : memref<1x1x256xf32, #tpu.memory_space<vmem>>, vector<1x1x128xf32>
    %346 = vector.shape_cast %345 : vector<1x1x128xf32> to vector<1x128xf32>
    %c115 = arith.constant 115 : index
    %c0_463 = arith.constant 0 : index
    %347 = vector.load %arg10[%c115, %c0_463] : memref<128x128xf32, #tpu.memory_space<vmem>>, vector<1x128xf32>
    tpu.vector_store %arg10[%c115, %c0_463], %346 {strides = array<i32>} : memref<128x128xf32, #tpu.memory_space<vmem>>, vector<1x128xf32>,
    %c0_464 = arith.constant 0 : index
    %c0_465 = arith.constant 0 : index
    %c37_466 = arith.constant 37 : index
    %348 = vector.load %arg8[%c0_464, %c0_465, %c37_466] : memref<1x1x256xf32, #tpu.memory_space<vmem>>, vector<1x1x128xf32>
    %349 = vector.shape_cast %348 : vector<1x1x128xf32> to vector<1x128xf32>
    %c116 = arith.constant 116 : index
    %c0_467 = arith.constant 0 : index
    %350 = vector.load %arg10[%c116, %c0_467] : memref<128x128xf32, #tpu.memory_space<vmem>>, vector<1x128xf32>
    tpu.vector_store %arg10[%c116, %c0_467], %349 {strides = array<i32>} : memref<128x128xf32, #tpu.memory_space<vmem>>, vector<1x128xf32>,
    %c0_468 = arith.constant 0 : index
    %c0_469 = arith.constant 0 : index
    %c38_470 = arith.constant 38 : index
    %351 = vector.load %arg8[%c0_468, %c0_469, %c38_470] : memref<1x1x256xf32, #tpu.memory_space<vmem>>, vector<1x1x128xf32>
    %352 = vector.shape_cast %351 : vector<1x1x128xf32> to vector<1x128xf32>
    %c117 = arith.constant 117 : index
    %c0_471 = arith.constant 0 : index
    %353 = vector.load %arg10[%c117, %c0_471] : memref<128x128xf32, #tpu.memory_space<vmem>>, vector<1x128xf32>
    tpu.vector_store %arg10[%c117, %c0_471], %352 {strides = array<i32>} : memref<128x128xf32, #tpu.memory_space<vmem>>, vector<1x128xf32>,
    %c0_472 = arith.constant 0 : index
    %c0_473 = arith.constant 0 : index
    %c39_474 = arith.constant 39 : index
    %354 = vector.load %arg8[%c0_472, %c0_473, %c39_474] : memref<1x1x256xf32, #tpu.memory_space<vmem>>, vector<1x1x128xf32>
    %355 = vector.shape_cast %354 : vector<1x1x128xf32> to vector<1x128xf32>
    %c118 = arith.constant 118 : index
    %c0_475 = arith.constant 0 : index
    %356 = vector.load %arg10[%c118, %c0_475] : memref<128x128xf32, #tpu.memory_space<vmem>>, vector<1x128xf32>
    tpu.vector_store %arg10[%c118, %c0_475], %355 {strides = array<i32>} : memref<128x128xf32, #tpu.memory_space<vmem>>, vector<1x128xf32>,
    %c0_476 = arith.constant 0 : index
    %c0_477 = arith.constant 0 : index
    %c40_478 = arith.constant 40 : index
    %357 = vector.load %arg8[%c0_476, %c0_477, %c40_478] : memref<1x1x256xf32, #tpu.memory_space<vmem>>, vector<1x1x128xf32>
    %358 = vector.shape_cast %357 : vector<1x1x128xf32> to vector<1x128xf32>
    %c119 = arith.constant 119 : index
    %c0_479 = arith.constant 0 : index
    %359 = vector.load %arg10[%c119, %c0_479] : memref<128x128xf32, #tpu.memory_space<vmem>>, vector<1x128xf32>
    tpu.vector_store %arg10[%c119, %c0_479], %358 {strides = array<i32>} : memref<128x128xf32, #tpu.memory_space<vmem>>, vector<1x128xf32>,
    %c0_480 = arith.constant 0 : index
    %c0_481 = arith.constant 0 : index
    %c48_482 = arith.constant 48 : index
    %360 = vector.load %arg8[%c0_480, %c0_481, %c48_482] : memref<1x1x256xf32, #tpu.memory_space<vmem>>, vector<1x1x128xf32>
    %361 = vector.shape_cast %360 : vector<1x1x128xf32> to vector<1x128xf32>
    %c120 = arith.constant 120 : index
    %c0_483 = arith.constant 0 : index
    %362 = vector.load %arg10[%c120, %c0_483] : memref<128x128xf32, #tpu.memory_space<vmem>>, vector<1x128xf32>
    tpu.vector_store %arg10[%c120, %c0_483], %361 {strides = array<i32>} : memref<128x128xf32, #tpu.memory_space<vmem>>, vector<1x128xf32>,
    %c0_484 = arith.constant 0 : index
    %c0_485 = arith.constant 0 : index
    %c49_486 = arith.constant 49 : index
    %363 = vector.load %arg8[%c0_484, %c0_485, %c49_486] : memref<1x1x256xf32, #tpu.memory_space<vmem>>, vector<1x1x128xf32>
    %364 = vector.shape_cast %363 : vector<1x1x128xf32> to vector<1x128xf32>
    %c121 = arith.constant 121 : index
    %c0_487 = arith.constant 0 : index
    %365 = vector.load %arg10[%c121, %c0_487] : memref<128x128xf32, #tpu.memory_space<vmem>>, vector<1x128xf32>
    tpu.vector_store %arg10[%c121, %c0_487], %364 {strides = array<i32>} : memref<128x128xf32, #tpu.memory_space<vmem>>, vector<1x128xf32>,
    %c0_488 = arith.constant 0 : index
    %c0_489 = arith.constant 0 : index
    %c50_490 = arith.constant 50 : index
    %366 = vector.load %arg8[%c0_488, %c0_489, %c50_490] : memref<1x1x256xf32, #tpu.memory_space<vmem>>, vector<1x1x128xf32>
    %367 = vector.shape_cast %366 : vector<1x1x128xf32> to vector<1x128xf32>
    %c122 = arith.constant 122 : index
    %c0_491 = arith.constant 0 : index
    %368 = vector.load %arg10[%c122, %c0_491] : memref<128x128xf32, #tpu.memory_space<vmem>>, vector<1x128xf32>
    tpu.vector_store %arg10[%c122, %c0_491], %367 {strides = array<i32>} : memref<128x128xf32, #tpu.memory_space<vmem>>, vector<1x128xf32>,
    %c0_492 = arith.constant 0 : index
    %c0_493 = arith.constant 0 : index
    %c51_494 = arith.constant 51 : index
    %369 = vector.load %arg8[%c0_492, %c0_493, %c51_494] : memref<1x1x256xf32, #tpu.memory_space<vmem>>, vector<1x1x128xf32>
    %370 = vector.shape_cast %369 : vector<1x1x128xf32> to vector<1x128xf32>
    %c123 = arith.constant 123 : index
    %c0_495 = arith.constant 0 : index
    %371 = vector.load %arg10[%c123, %c0_495] : memref<128x128xf32, #tpu.memory_space<vmem>>, vector<1x128xf32>
    tpu.vector_store %arg10[%c123, %c0_495], %370 {strides = array<i32>} : memref<128x128xf32, #tpu.memory_space<vmem>>, vector<1x128xf32>,
    %c0_496 = arith.constant 0 : index
    %c0_497 = arith.constant 0 : index
    %c52_498 = arith.constant 52 : index
    %372 = vector.load %arg8[%c0_496, %c0_497, %c52_498] : memref<1x1x256xf32, #tpu.memory_space<vmem>>, vector<1x1x128xf32>
    %373 = vector.shape_cast %372 : vector<1x1x128xf32> to vector<1x128xf32>
    %c124 = arith.constant 124 : index
    %c0_499 = arith.constant 0 : index
    %374 = vector.load %arg10[%c124, %c0_499] : memref<128x128xf32, #tpu.memory_space<vmem>>, vector<1x128xf32>
    tpu.vector_store %arg10[%c124, %c0_499], %373 {strides = array<i32>} : memref<128x128xf32, #tpu.memory_space<vmem>>, vector<1x128xf32>,
    %cst = arith.constant 1.000000e+00 : f32
    %375 = vector.broadcast %cst : f32 to vector<1x128xf32>
    %c125 = arith.constant 125 : index
    %c0_500 = arith.constant 0 : index
    %376 = vector.load %arg10[%c125, %c0_500] : memref<128x128xf32, #tpu.memory_space<vmem>>, vector<1x128xf32>
    tpu.vector_store %arg10[%c125, %c0_500], %375 {strides = array<i32>} : memref<128x128xf32, #tpu.memory_space<vmem>>, vector<1x128xf32>,
    %cst_501 = arith.constant 0.000000e+00 : f32
    %377 = vector.broadcast %cst_501 : f32 to vector<2x128xf32>
    %c126 = arith.constant 126 : index
    %c0_502 = arith.constant 0 : index
    %378 = vector.load %arg10[%c126, %c0_502] : memref<128x128xf32, #tpu.memory_space<vmem>>, vector<2x128xf32>
    tpu.vector_store %arg10[%c126, %c0_502], %377 {strides = array<i32>} : memref<128x128xf32, #tpu.memory_space<vmem>>, vector<2x128xf32>,
    %c0_503 = arith.constant 0 : index
    %c0_504 = arith.constant 0 : index
    %379 = vector.load %arg3[%c0_503, %c0_504] : memref<16x128xf32, #tpu.memory_space<vmem>>, vector<16x128xf32>
    %c0_505 = arith.constant 0 : index
    %c0_506 = arith.constant 0 : index
    %380 = vector.load %arg10[%c0_505, %c0_506] : memref<128x128xf32, #tpu.memory_space<vmem>>, vector<128x128xf32>
    %cst_507 = arith.constant dense<0.000000e+00> : vector<16x128xf32>
    %381 = tpu.matmul %379, %380, %cst_507 {dimension_numbers = #tpu.dot_dimension_numbers<[1], [0], [0], [1], [0, 0, 1, 1], [], []>, precision = #tpu.contract_precision<fp32>} : vector<16x128xf32>, vector<128x128xf32>, vector<16x128xf32> -> vector<16x128xf32>
    %c0_508 = arith.constant 0 : index
    %c0_509 = arith.constant 0 : index
    %382 = vector.load %arg1[%c0_508, %c0_509] : memref<16x1xf32, #tpu.memory_space<vmem>>, vector<16x1xf32>
    %383 = vector.broadcast %382 : vector<16x1xf32> to vector<16x128xf32>
    %384 = arith.mulf %381, %383 : vector<16x128xf32>
    %c0_510 = arith.constant 0 : index
    %c0_511 = arith.constant 0 : index
    %385 = vector.load %arg2[%c0_510, %c0_511] : memref<16x1xf32, #tpu.memory_space<vmem>>, vector<16x1xf32>
    %386 = vector.broadcast %385 : vector<16x1xf32> to vector<16x128xf32>
    %387 = arith.addf %384, %386 : vector<16x128xf32>
    %c62_512 = arith.constant 62 : index
    %c0_513 = arith.constant 0 : index
    %388 = vector.load %arg10[%c62_512, %c0_513] : memref<128x128xf32, #tpu.memory_space<vmem>>, vector<1x128xf32>
    %389 = vector.broadcast %388 : vector<1x128xf32> to vector<16x128xf32>
    %390 = arith.addf %387, %389 : vector<16x128xf32>
    %cst_514 = arith.constant 0.000000e+00 : f32
    %391 = vector.broadcast %cst_514 : f32 to vector<16x128xf32>
    %392 = arith.cmpf ogt, %390, %391 : vector<16x128xf32>
    %cst_515 = arith.constant 0.000000e+00 : f32
    %393 = vector.broadcast %cst_515 : f32 to vector<16x128xf32>
    %394 = arith.minimumf %390, %393 : vector<16x128xf32>
    %395 = math.exp %394 : vector<16x128xf32>
    %cst_516 = arith.constant 1.000000e+00 : f32
    %396 = vector.broadcast %cst_516 : f32 to vector<16x128xf32>
    %397 = arith.subf %395, %396 : vector<16x128xf32>
    %398 = arith.select %392, %390, %397 : vector<16x128xi1>, vector<16x128xf32>
    %c0_517 = arith.constant 0 : index
    %c0_518 = arith.constant 0 : index
    %c0_519 = arith.constant 0 : index
    %399 = vector.load %arg9[%c0_517, %c0_518, %c0_519] : memref<1x16x128xf32, #tpu.memory_space<vmem>>, vector<1x16x128xf32>
    %400 = vector.shape_cast %399 : vector<1x16x128xf32> to vector<16x128xf32>
    %401 = vector.shape_cast %398 : vector<16x128xf32> to vector<1x16x128xf32>
    tpu.vector_store %arg9[%c0_517, %c0_518, %c0_519], %401 {strides = array<i32>} : memref<1x16x128xf32, #tpu.memory_space<vmem>>, vector<1x16x128xf32>,
    return
  }
  func.func @transform_0(%arg0: i32) -> (i32, i32) {
    %c0_i32 = arith.constant 0 : i32
    %c0_i32_0 = arith.constant 0 : i32
    %c0_i32_1 = arith.constant 0 : i32
    return %c0_i32, %c0_i32_0 : i32, i32
  }
  func.func @transform_1(%arg0: i32) -> (i32, i32) {
    %c0_i32 = arith.constant 0 : i32
    %c0_i32_0 = arith.constant 0 : i32
    %c0_i32_1 = arith.constant 0 : i32
    return %c0_i32, %c0_i32_0 : i32, i32
  }
  func.func @transform_2(%arg0: i32) -> (i32, i32) {
    %c0_i32 = arith.constant 0 : i32
    %c0_i32_0 = arith.constant 0 : i32
    %c0_i32_1 = arith.constant 0 : i32
    return %c0_i32, %c0_i32_0 : i32, i32
  }
  func.func @transform_3(%arg0: i32) -> (i32, i32, i32) {
    %c0_i32 = arith.constant 0 : i32
    %0 = arith.addi %arg0, %c0_i32 : i32
    %c0_i32_0 = arith.constant 0 : i32
    %c0_i32_1 = arith.constant 0 : i32
    %c0_i32_2 = arith.constant 0 : i32
    return %0, %c0_i32_0, %c0_i32_1 : i32, i32, i32
  }
  func.func @transform_4(%arg0: i32) -> (i32, i32, i32) {
    %c1_i32 = arith.constant 1 : i32
    %0 = arith.addi %arg0, %c1_i32 : i32
    %c0_i32 = arith.constant 0 : i32
    %c0_i32_0 = arith.constant 0 : i32
    %c0_i32_1 = arith.constant 0 : i32
    return %0, %c0_i32, %c0_i32_0 : i32, i32, i32
  }
  func.func @transform_5(%arg0: i32) -> (i32, i32, i32) {
    %c2_i32 = arith.constant 2 : i32
    %0 = arith.addi %arg0, %c2_i32 : i32
    %c0_i32 = arith.constant 0 : i32
    %c0_i32_0 = arith.constant 0 : i32
    %c0_i32_1 = arith.constant 0 : i32
    return %0, %c0_i32, %c0_i32_0 : i32, i32, i32
  }
  func.func @transform_6(%arg0: i32) -> (i32, i32, i32) {
    %c3_i32 = arith.constant 3 : i32
    %0 = arith.addi %arg0, %c3_i32 : i32
    %c0_i32 = arith.constant 0 : i32
    %c0_i32_0 = arith.constant 0 : i32
    %c0_i32_1 = arith.constant 0 : i32
    return %0, %c0_i32, %c0_i32_0 : i32, i32, i32
  }
  func.func @transform_7(%arg0: i32) -> (i32, i32, i32) {
    %c4_i32 = arith.constant 4 : i32
    %0 = arith.addi %arg0, %c4_i32 : i32
    %c0_i32 = arith.constant 0 : i32
    %c0_i32_0 = arith.constant 0 : i32
    %c0_i32_1 = arith.constant 0 : i32
    return %0, %c0_i32, %c0_i32_0 : i32, i32, i32
  }
  func.func @transform_8(%arg0: i32) -> (i32, i32, i32) {
    %c0_i32 = arith.constant 0 : i32
    %c0_i32_0 = arith.constant 0 : i32
    %c0_i32_1 = arith.constant 0 : i32
    return %arg0, %c0_i32, %c0_i32_0 : i32, i32, i32
  }
}

</mosaic_0001>

<llo_original>
// kernel: step1_forward.3
$region0: #{step1_forward.3}
  #allocation0 [shape = 'u32[]', space=smem, size = 0x4, offset = 0x4, fixed_abs, tag = 'smem constant byte address 0x4 - core index']
  #allocation1 [shape = 'u32[72,128]{1,0:T(1,128)}', space=vmem, size = 0x9000, scoped, tag = 'internal scratch']
  #allocation2 [shape = 'f32[128,128]{1,0:T(8,128)}', space=vmem, size = 0x10000, scoped, tag = 'scratch operand']
  %s0 = inlined_call_operand.vmem [shape: f32[16,1], index: 0, kind: input, shape index: {}]
  %s1 = inlined_call_operand.vmem [shape: f32[16,1], index: 1, kind: input, shape index: {}]
  %s2 = inlined_call_operand.vmem [shape: f32[16,128], index: 2, kind: input, shape index: {}]
  %s3 = inlined_call_operand.vmem [shape: f32[12,1,256], index: 3, kind: input, shape index: {}, may-alias: {3,4,5,6,7}]
  %s4 = inlined_call_operand.vmem [shape: f32[12,1,256], index: 4, kind: input, shape index: {}, may-alias: {3,4,5,6,7}]
  %s5 = inlined_call_operand.vmem [shape: f32[12,1,256], index: 5, kind: input, shape index: {}, may-alias: {3,4,5,6,7}]
  %s6 = inlined_call_operand.vmem [shape: f32[12,1,256], index: 6, kind: input, shape index: {}, may-alias: {3,4,5,6,7}]
  %s7 = inlined_call_operand.vmem [shape: f32[12,1,256], index: 7, kind: input, shape index: {}, may-alias: {3,4,5,6,7}]
  %s8 = inlined_call_operand.vmem [shape: f32[8,16,128], index: 8, kind: output, shape index: {}]
  %s9 = sld [smem:[#allocation0]]
  $region65: #{step1_forward.3} parent=0
    _
  %s11 = ssub.s32 1, %s9
  %s12 = scalar_select 0, %s11, %s9
  loop: start=0, step=1, limit=10
  $region2: #{step1_forward.3} parent=0 // loop_pre_header
    _
  $region3: #{step1_forward.3} parent=0 // loop_header
    %s14 = sphi 0, %s18
    %p15 = scmp.ge.s32.totalorder %s14, 10
    %s22 = sphi 0, %s22
    %s24 = sphi 0, %s22
    %s25 = sphi 0, %s24
    %s39 = sphi 0, %s25
    %s43 = sphi 0, %s43
    %s45 = sphi 0, %s43
    %s46 = sphi 0, %s45
    %s60 = sphi 0, %s46
    %s64 = sphi 0, %s64
    %s66 = sphi 0, %s64
    %s67 = sphi 0, %s66
    %s81 = sphi 0, %s67
    %s87 = sphi 0, %s89
    %s90 = sphi 0, %s87
    %s91 = sphi 0, %s90
    %s107 = sphi 0, %s91
    %s115 = sphi 0, %s117
    %s118 = sphi 0, %s115
    %s119 = sphi 0, %s118
    %s135 = sphi 0, %s119
    %s143 = sphi 0, %s145
    %s146 = sphi 0, %s143
    %s147 = sphi 0, %s146
    %s163 = sphi 0, %s147
    %s171 = sphi 0, %s173
    %s174 = sphi 0, %s171
    %s175 = sphi 0, %s174
    %s191 = sphi 0, %s175
    %s199 = sphi 0, %s201
    %s202 = sphi 0, %s199
    %s203 = sphi 0, %s202
    %s219 = sphi 0, %s203
    %s225 = sphi 0, %s227
    %s228 = sphi 0, %s225
    %s229 = sphi 0, %s228
    %s245 = sphi 0, %s229
  $region4: #{step1_forward.3} parent=0 // loop_header_branch
    %17 = sbr.rel (%p15) target = $region8
  $region5: #{step1_forward.3} parent=0 // loop_body
    %s19 = ssub.s32 %s14, 1
    %s20 = ssub.s32 %s14, 2
    %s21 = sadd.s32 %s14, 1
    %s23 = sadd.s32 %s22, 1
    %p26 = scmp.eq.s32.totalorder %s14, 7
    %p27 = scmp.ne.s32.totalorder %s22, %s24
    %p28 = scmp.eq.s32.totalorder %s14, 0
    %p29 = por %p27, %p28
    %p30 = scmp.ne.s32.totalorder %s22, %s24
    %p31 = scmp.eq.s32.totalorder %s19, 7
    %p32 = por %p30, %p31
    %p33 = scmp.ne.s32.totalorder %s24, %s25
    %p34 = scmp.eq.s32.totalorder %s19, 0
    %p35 = por %p33, %p34
    %p36 = scmp.ne.s32.totalorder %s24, %s25
    %p37 = scmp.eq.s32.totalorder %s20, 7
    %p38 = por %p36, %p37
    %p40 = scmp.ne.s32.totalorder %s25, %s39
    %p41 = scmp.eq.s32.totalorder %s20, 0
    %p42 = por %p40, %p41
    %s44 = sadd.s32 %s43, 1
    %p47 = scmp.eq.s32.totalorder %s14, 7
    %p48 = scmp.ne.s32.totalorder %s43, %s45
    %p49 = scmp.eq.s32.totalorder %s14, 0
    %p50 = por %p48, %p49
    %p51 = scmp.ne.s32.totalorder %s43, %s45
    %p52 = scmp.eq.s32.totalorder %s19, 7
    %p53 = por %p51, %p52
    %p54 = scmp.ne.s32.totalorder %s45, %s46
    %p55 = scmp.eq.s32.totalorder %s19, 0
    %p56 = por %p54, %p55
    %p57 = scmp.ne.s32.totalorder %s45, %s46
    %p58 = scmp.eq.s32.totalorder %s20, 7
    %p59 = por %p57, %p58
    %p61 = scmp.ne.s32.totalorder %s46, %s60
    %p62 = scmp.eq.s32.totalorder %s20, 0
    %p63 = por %p61, %p62
    %s65 = sadd.s32 %s64, 1
    %p68 = scmp.eq.s32.totalorder %s14, 7
    %p69 = scmp.ne.s32.totalorder %s64, %s66
    %p70 = scmp.eq.s32.totalorder %s14, 0
    %p71 = por %p69, %p70
    %p72 = scmp.ne.s32.totalorder %s64, %s66
    %p73 = scmp.eq.s32.totalorder %s19, 7
    %p74 = por %p72, %p73
    %p75 = scmp.ne.s32.totalorder %s66, %s67
    %p76 = scmp.eq.s32.totalorder %s19, 0
    %p77 = por %p75, %p76
    %p78 = scmp.ne.s32.totalorder %s66, %s67
    %p79 = scmp.eq.s32.totalorder %s20, 7
    %p80 = por %p78, %p79
    %p82 = scmp.ne.s32.totalorder %s67, %s81
    %p83 = scmp.eq.s32.totalorder %s20, 0
    %p84 = por %p82, %p83
    %s85 = ssub.s32 %s14, %s21
    %p86 = scmp.eq.s32.totalorder %s85, 0
    %s88 = sadd.s32 %s87, 1
    %s89 = scalar_select %p86, %s87, %s88
    %p92 = pneg %p86
    %p93 = scmp.eq.s32.totalorder %s14, 7
    %p94 = por %p92, %p93
    %p95 = scmp.ne.s32.totalorder %s87, %s90
    %p96 = scmp.eq.s32.totalorder %s14, 0
    %p97 = por %p95, %p96
    %p98 = scmp.ne.s32.totalorder %s87, %s90
    %p99 = scmp.eq.s32.totalorder %s19, 7
    %p100 = por %p98, %p99
    %p101 = scmp.ne.s32.totalorder %s90, %s91
    %p102 = scmp.eq.s32.totalorder %s19, 0
    %p103 = por %p101, %p102
    %p104 = scmp.ne.s32.totalorder %s90, %s91
    %p105 = scmp.eq.s32.totalorder %s20, 7
    %p106 = por %p104, %p105
    %p108 = scmp.ne.s32.totalorder %s91, %s107
    %p109 = scmp.eq.s32.totalorder %s20, 0
    %p110 = por %p108, %p109
    %s111 = sadd.s32 %s14, 1
    %s112 = sadd.s32 %s21, 1
    %s113 = ssub.s32 %s111, %s112
    %p114 = scmp.eq.s32.totalorder %s113, 0
    %s116 = sadd.s32 %s115, 1
    %s117 = scalar_select %p114, %s115, %s116
    %p120 = pneg %p114
    %p121 = scmp.eq.s32.totalorder %s14, 7
    %p122 = por %p120, %p121
    %p123 = scmp.ne.s32.totalorder %s115, %s118
    %p124 = scmp.eq.s32.totalorder %s14, 0
    %p125 = por %p123, %p124
    %p126 = scmp.ne.s32.totalorder %s115, %s118
    %p127 = scmp.eq.s32.totalorder %s19, 7
    %p128 = por %p126, %p127
    %p129 = scmp.ne.s32.totalorder %s118, %s119
    %p130 = scmp.eq.s32.totalorder %s19, 0
    %p131 = por %p129, %p130
    %p132 = scmp.ne.s32.totalorder %s118, %s119
    %p133 = scmp.eq.s32.totalorder %s20, 7
    %p134 = por %p132, %p133
    %p136 = scmp.ne.s32.totalorder %s119, %s135
    %p137 = scmp.eq.s32.totalorder %s20, 0
    %p138 = por %p136, %p137
    %s139 = sadd.s32 %s14, 2
    %s140 = sadd.s32 %s21, 2
    %s141 = ssub.s32 %s139, %s140
    %p142 = scmp.eq.s32.totalorder %s141, 0
    %s144 = sadd.s32 %s143, 1
    %s145 = scalar_select %p142, %s143, %s144
    %p148 = pneg %p142
    %p149 = scmp.eq.s32.totalorder %s14, 7
    %p150 = por %p148, %p149
    %p151 = scmp.ne.s32.totalorder %s143, %s146
    %p152 = scmp.eq.s32.totalorder %s14, 0
    %p153 = por %p151, %p152
    %p154 = scmp.ne.s32.totalorder %s143, %s146
    %p155 = scmp.eq.s32.totalorder %s19, 7
    %p156 = por %p154, %p155
    %p157 = scmp.ne.s32.totalorder %s146, %s147
    %p158 = scmp.eq.s32.totalorder %s19, 0
    %p159 = por %p157, %p158
    %p160 = scmp.ne.s32.totalorder %s146, %s147
    %p161 = scmp.eq.s32.totalorder %s20, 7
    %p162 = por %p160, %p161
    %p164 = scmp.ne.s32.totalorder %s147, %s163
    %p165 = scmp.eq.s32.totalorder %s20, 0
    %p166 = por %p164, %p165
    %s167 = sadd.s32 %s14, 3
    %s168 = sadd.s32 %s21, 3
    %s169 = ssub.s32 %s167, %s168
    %p170 = scmp.eq.s32.totalorder %s169, 0
    %s172 = sadd.s32 %s171, 1
    %s173 = scalar_select %p170, %s171, %s172
    %p176 = pneg %p170
    %p177 = scmp.eq.s32.totalorder %s14, 7
    %p178 = por %p176, %p177
    %p179 = scmp.ne.s32.totalorder %s171, %s174
    %p180 = scmp.eq.s32.totalorder %s14, 0
    %p181 = por %p179, %p180
    %p182 = scmp.ne.s32.totalorder %s171, %s174
    %p183 = scmp.eq.s32.totalorder %s19, 7
    %p184 = por %p182, %p183
    %p185 = scmp.ne.s32.totalorder %s174, %s175
    %p186 = scmp.eq.s32.totalorder %s19, 0
    %p187 = por %p185, %p186
    %p188 = scmp.ne.s32.totalorder %s174, %s175
    %p189 = scmp.eq.s32.totalorder %s20, 7
    %p190 = por %p188, %p189
    %p192 = scmp.ne.s32.totalorder %s175, %s191
    %p193 = scmp.eq.s32.totalorder %s20, 0
    %p194 = por %p192, %p193
    %s195 = sadd.s32 %s14, 4
    %s196 = sadd.s32 %s21, 4
    %s197 = ssub.s32 %s195, %s196
    %p198 = scmp.eq.s32.totalorder %s197, 0
    %s200 = sadd.s32 %s199, 1
    %s201 = scalar_select %p198, %s199, %s200
    %p204 = pneg %p198
    %p205 = scmp.eq.s32.totalorder %s14, 7
    %p206 = por %p204, %p205
    %p207 = scmp.ne.s32.totalorder %s199, %s202
    %p208 = scmp.eq.s32.totalorder %s14, 0
    %p209 = por %p207, %p208
    %p210 = scmp.ne.s32.totalorder %s199, %s202
    %p211 = scmp.eq.s32.totalorder %s19, 7
    %p212 = por %p210, %p211
    %p213 = scmp.ne.s32.totalorder %s202, %s203
    %p214 = scmp.eq.s32.totalorder %s19, 0
    %p215 = por %p213, %p214
    %p216 = scmp.ne.s32.totalorder %s202, %s203
    %p217 = scmp.eq.s32.totalorder %s20, 7
    %p218 = por %p216, %p217
    %p220 = scmp.ne.s32.totalorder %s203, %s219
    %p221 = scmp.eq.s32.totalorder %s20, 0
    %p222 = por %p220, %p221
    %s223 = ssub.s32 %s14, %s21
    %p224 = scmp.eq.s32.totalorder %s223, 0
    %s226 = sadd.s32 %s225, 1
    %s227 = scalar_select %p224, %s225, %s226
    %p230 = pneg %p224
    %p231 = scmp.eq.s32.totalorder %s14, 7
    %p232 = por %p230, %p231
    %p233 = scmp.ne.s32.totalorder %s225, %s228
    %p234 = scmp.eq.s32.totalorder %s14, 0
    %p235 = por %p233, %p234
    %p236 = scmp.ne.s32.totalorder %s225, %s228
    %p237 = scmp.eq.s32.totalorder %s19, 7
    %p238 = por %p236, %p237
    %p239 = scmp.ne.s32.totalorder %s228, %s229
    %p240 = scmp.eq.s32.totalorder %s19, 0
    %p241 = por %p239, %p240
    %p242 = scmp.ne.s32.totalorder %s228, %s229
    %p243 = scmp.eq.s32.totalorder %s20, 7
    %p244 = por %p242, %p243
    %p246 = scmp.ne.s32.totalorder %s229, %s245
    %p247 = scmp.eq.s32.totalorder %s20, 0
    %p248 = por %p246, %p247
    %p249 = scmp.le.s32.totalorder 1, %s14
    %p250 = scmp.lt.s32.totalorder %s14, 9
    %p251 = pnand %p249, %p250
    %p252 = pneg %p251
    // Predicated region
    $region9: #{step1_forward.3} parent=5 // pred_check
      _
    $region10: #{step1_forward.3} parent=5 // pred_check_branch
      %254 = sbr.rel (%p251) target = $region12
    $region11: #{step1_forward.3} parent=5 // pred_region
      %s255 = ssub.s32 %s14, 1
      // Predicated region
      $region13: #{step1_forward.3} parent=11 // pred_check
        %p256 = pneg %p35
      $region14: #{step1_forward.3} parent=11 // pred_check_branch
        %258 = sbr.rel (%p256) target = $region16
      $region15: #{step1_forward.3} parent=11 // pred_region
        _
      $region16: #{step1_forward.3} parent=11 // pred_fallthru
        _
      // Predicated region
      $region17: #{step1_forward.3} parent=11 // pred_check
        %p259 = pneg %p56
      $region18: #{step1_forward.3} parent=11 // pred_check_branch
        %261 = sbr.rel (%p259) target = $region20
      $region19: #{step1_forward.3} parent=11 // pred_region
        _
      $region20: #{step1_forward.3} parent=11 // pred_fallthru
        _
      // Predicated region
      $region21: #{step1_forward.3} parent=11 // pred_check
        %p262 = pneg %p77
      $region22: #{step1_forward.3} parent=11 // pred_check_branch
        %264 = sbr.rel (%p262) target = $region24
      $region23: #{step1_forward.3} parent=11 // pred_region
        _
      $region24: #{step1_forward.3} parent=11 // pred_fallthru
        _
    $region12: #{step1_forward.3} parent=5 // pred_fallthru
      _
    %p265 = scmp.lt.s32.totalorder %s14, 8
    // Predicated region
    $region25: #{step1_forward.3} parent=5 // pred_check
      %p266 = pneg %p265
    $region26: #{step1_forward.3} parent=5 // pred_check_branch
      %268 = sbr.rel (%p266) target = $region28
    $region27: #{step1_forward.3} parent=5 // pred_region
      // Predicated region
      $region29: #{step1_forward.3} parent=27 // pred_check
        %p269 = pneg %p97
      $region30: #{step1_forward.3} parent=27 // pred_check_branch
        %271 = sbr.rel (%p269) target = $region32
      $region31: #{step1_forward.3} parent=27 // pred_region
        %p272 = scmp.lt.s32.totalorder %s14, 11
        %s273 = scalar_select %p272, %s14, 11
        %s274 = smul.addr %s273, 2
        %s275 = scalar_lea.vmem %s3, %s274
      $region32: #{step1_forward.3} parent=27 // pred_fallthru
        _
      // Predicated region
      $region33: #{step1_forward.3} parent=27 // pred_check
        %p276 = pneg %p125
      $region34: #{step1_forward.3} parent=27 // pred_check_branch
        %278 = sbr.rel (%p276) target = $region36
      $region35: #{step1_forward.3} parent=27 // pred_region
        %s279 = sadd.s32 %s14, 1
        %p280 = scmp.lt.s32.totalorder %s279, 11
        %s281 = scalar_select %p280, %s279, 11
        %s282 = smul.addr %s281, 2
        %s283 = scalar_lea.vmem %s4, %s282
        %s284 = sadd.s32 %s14, 1
      $region36: #{step1_forward.3} parent=27 // pred_fallthru
        _
      // Predicated region
      $region37: #{step1_forward.3} parent=27 // pred_check
        %p285 = pneg %p153
      $region38: #{step1_forward.3} parent=27 // pred_check_branch
        %287 = sbr.rel (%p285) target = $region40
      $region39: #{step1_forward.3} parent=27 // pred_region
        %s288 = sadd.s32 %s14, 2
        %p289 = scmp.lt.s32.totalorder %s288, 11
        %s290 = scalar_select %p289, %s288, 11
        %s291 = smul.addr %s290, 2
        %s292 = scalar_lea.vmem %s5, %s291
        %s293 = sadd.s32 %s14, 2
      $region40: #{step1_forward.3} parent=27 // pred_fallthru
        _
      // Predicated region
      $region41: #{step1_forward.3} parent=27 // pred_check
        %p294 = pneg %p181
      $region42: #{step1_forward.3} parent=27 // pred_check_branch
        %296 = sbr.rel (%p294) target = $region44
      $region43: #{step1_forward.3} parent=27 // pred_region
        %s297 = sadd.s32 %s14, 3
        %p298 = scmp.lt.s32.totalorder %s297, 11
        %s299 = scalar_select %p298, %s297, 11
        %s300 = smul.addr %s299, 2
        %s301 = scalar_lea.vmem %s6, %s300
        %s302 = sadd.s32 %s14, 3
      $region44: #{step1_forward.3} parent=27 // pred_fallthru
        _
      // Predicated region
      $region45: #{step1_forward.3} parent=27 // pred_check
        %p303 = pneg %p209
      $region46: #{step1_forward.3} parent=27 // pred_check_branch
        %305 = sbr.rel (%p303) target = $region48
      $region47: #{step1_forward.3} parent=27 // pred_region
        %s306 = sadd.s32 %s14, 4
        %p307 = scmp.lt.s32.totalorder %s306, 11
        %s308 = scalar_select %p307, %s306, 11
        %s309 = smul.addr %s308, 2
        %s310 = scalar_lea.vmem %s7, %s309
        %s311 = sadd.s32 %s14, 4
      $region48: #{step1_forward.3} parent=27 // pred_fallthru
        _
    $region28: #{step1_forward.3} parent=5 // pred_fallthru
      _
    %p312 = scmp.le.s32.totalorder 1, %s14
    %p313 = scmp.lt.s32.totalorder %s14, 9
    %p314 = pnand %p312, %p313
    %p315 = pneg %p314
    // Predicated region
    $region49: #{step1_forward.3} parent=5 // pred_check
      _
    $region50: #{step1_forward.3} parent=5 // pred_check_branch
      %317 = sbr.rel (%p314) target = $region52
    $region51: #{step1_forward.3} parent=5 // pred_region
      %s318 = ssub.s32 %s14, 1
      %p319 = pneg %p35
      %p320 = pneg %p32
      %p321 = pneg %p56
      %p322 = pneg %p53
      %p323 = pneg %p77
      %p324 = pneg %p74
      %p325 = scmp.lt.s32.totalorder %s19, 11
      %s326 = scalar_select %p325, %s19, 11
      %s327 = smul.addr %s326, 2
      %s328 = scalar_lea.vmem %s3, %s327
      %p329 = pneg %p103
      %p330 = pneg %p100
      %s331 = sadd.s32 %s19, 1
      %p332 = scmp.lt.s32.totalorder %s331, 11
      %s333 = scalar_select %p332, %s331, 11
      %s334 = smul.addr %s333, 2
      %s335 = scalar_lea.vmem %s4, %s334
      %p336 = pneg %p131
      %p337 = pneg %p128
      %s338 = sadd.s32 %s19, 2
      %p339 = scmp.lt.s32.totalorder %s338, 11
      %s340 = scalar_select %p339, %s338, 11
      %s341 = smul.addr %s340, 2
      %s342 = scalar_lea.vmem %s5, %s341
      %p343 = pneg %p159
      %p344 = pneg %p156
      %s345 = sadd.s32 %s19, 3
      %p346 = scmp.lt.s32.totalorder %s345, 11
      %s347 = scalar_select %p346, %s345, 11
      %s348 = smul.addr %s347, 2
      %s349 = scalar_lea.vmem %s6, %s348
      %p350 = pneg %p187
      %p351 = pneg %p184
      %s352 = sadd.s32 %s19, 4
      %p353 = scmp.lt.s32.totalorder %s352, 11
      %s354 = scalar_select %p353, %s352, 11
      %s355 = smul.addr %s354, 2
      %s356 = scalar_lea.vmem %s7, %s355
      %p357 = pneg %p215
      %p358 = pneg %p212
      %p359 = pneg %p241
      %p360 = pneg %p238
      %p361 = scmp.lt.s32.totalorder %s19, 7
      %s362 = scalar_select %p361, %s19, 7
      %s363 = smul.addr %s362, 2
      %s364 = smul.addr %s363, 8
      %s365 = scalar_lea.vmem %s8, %s364
      %p366 = scmp.lt.s32.totalorder %s19, 11
      %s367 = scalar_select %p366, %s19, 11
      %s368 = smul.addr %s367, 2
      %s369 = scalar_lea.vmem %s3, %s368
      %s370 = sadd.s32 %s19, 1
      %p371 = scmp.lt.s32.totalorder %s370, 11
      %s372 = scalar_select %p371, %s370, 11
      %s373 = smul.addr %s372, 2
      %s374 = scalar_lea.vmem %s4, %s373
      %s375 = sadd.s32 %s19, 1
      %s376 = sadd.s32 %s19, 2
      %p377 = scmp.lt.s32.totalorder %s376, 11
      %s378 = scalar_select %p377, %s376, 11
      %s379 = smul.addr %s378, 2
      %s380 = scalar_lea.vmem %s5, %s379
      %s381 = sadd.s32 %s19, 2
      %s382 = sadd.s32 %s19, 3
      %p383 = scmp.lt.s32.totalorder %s382, 11
      %s384 = scalar_select %p383, %s382, 11
      %s385 = smul.addr %s384, 2
      %s386 = scalar_lea.vmem %s6, %s385
      %s387 = sadd.s32 %s19, 3
      %s388 = sadd.s32 %s19, 4
      %p389 = scmp.lt.s32.totalorder %s388, 11
      %s390 = scalar_select %p389, %s388, 11
      %s391 = smul.addr %s390, 2
      %s392 = scalar_lea.vmem %s7, %s391
      %s393 = sadd.s32 %s19, 4
      %p394 = scmp.lt.s32.totalorder %s19, 7
      %s395 = scalar_select %p394, %s19, 7
      %s396 = smul.addr %s395, 2
      %s397 = smul.addr %s396, 8
      %s398 = scalar_lea.vmem %s8, %s397
      %v399 = vld [vmem:[%s369] sm:$0x1]
      %400 = vst [vmem:[#allocation2] sm:$0x1] %v399
      %v401 = vld [vmem:[%s369] sm:$0x3]
      %v403 = vperm.slane %v401, 0
      %v404 = vperm.slane %v401, 1
      %405 = vrot.lane.b32.xlu0 %v403, 127
      %v406 = vpop.permute.xlu0 %405
      %407 = vrot.lane.b32.xlu0 %v404, 127
      %v408 = vpop.permute.xlu0 %407
      %vm409 = vcmask 1039360
      %v410 = vsel %vm409, %v406, %v408
      %412 = vst [vmem:[#allocation2 + $0x1] sm:$0x1] %v410
      %v413 = vld [vmem:[%s369] sm:$0x3]
      %v415 = vperm.slane %v413, 0
      %v416 = vperm.slane %v413, 1
      %417 = vrot.lane.b32.xlu0 %v415, 126
      %v418 = vpop.permute.xlu0 %417
      %419 = vrot.lane.b32.xlu0 %v416, 126
      %v420 = vpop.permute.xlu0 %419
      %vm421 = vcmask 1031168
      %v422 = vsel %vm421, %v418, %v420
      %424 = vst [vmem:[#allocation2 + $0x2] sm:$0x1] %v422
      %v425 = vld [vmem:[%s369] sm:$0x3]
      %v427 = vperm.slane %v425, 0
      %v428 = vperm.slane %v425, 1
      %429 = vrot.lane.b32.xlu0 %v427, 125
      %v430 = vpop.permute.xlu0 %429
      %431 = vrot.lane.b32.xlu0 %v428, 125
      %v432 = vpop.permute.xlu0 %431
      %vm433 = vcmask 1022976
      %v434 = vsel %vm433, %v430, %v432
      %436 = vst [vmem:[#allocation2 + $0x3] sm:$0x1] %v434
      %v437 = vld [vmem:[%s369] sm:$0x3]
      %v439 = vperm.slane %v437, 0
      %v440 = vperm.slane %v437, 1
      %441 = vrot.lane.b32.xlu0 %v439, 124
      %v442 = vpop.permute.xlu0 %441
      %443 = vrot.lane.b32.xlu0 %v440, 124
      %v444 = vpop.permute.xlu0 %443
      %vm445 = vcmask 1014784
      %v446 = vsel %vm445, %v442, %v444
      %448 = vst [vmem:[#allocation2 + $0x4] sm:$0x1] %v446
      %v449 = vld [vmem:[%s369] sm:$0x3]
      %v451 = vperm.slane %v449, 0
      %v452 = vperm.slane %v449, 1
      %453 = vrot.lane.b32.xlu0 %v451, 116
      %v454 = vpop.permute.xlu0 %453
      %455 = vrot.lane.b32.xlu0 %v452, 116
      %v456 = vpop.permute.xlu0 %455
      %vm457 = vcmask 949248
      %v458 = vsel %vm457, %v454, %v456
      %460 = vst [vmem:[#allocation2 + $0x5] sm:$0x1] %v458
      %v461 = vld [vmem:[%s369] sm:$0x3]
      %v463 = vperm.slane %v461, 0
      %v464 = vperm.slane %v461, 1
      %465 = vrot.lane.b32.xlu0 %v463, 115
      %v466 = vpop.permute.xlu0 %465
      %467 = vrot.lane.b32.xlu0 %v464, 115
      %v468 = vpop.permute.xlu0 %467
      %vm469 = vcmask 941056
      %v470 = vsel %vm469, %v466, %v468
      %472 = vst [vmem:[#allocation2 + $0x6] sm:$0x1] %v470
      %v473 = vld [vmem:[%s369] sm:$0x3]
      %v475 = vperm.slane %v473, 0
      %v476 = vperm.slane %v473, 1
      %477 = vrot.lane.b32.xlu0 %v475, 114
      %v478 = vpop.permute.xlu0 %477
      %479 = vrot.lane.b32.xlu0 %v476, 114
      %v480 = vpop.permute.xlu0 %479
      %vm481 = vcmask 932864
      %v482 = vsel %vm481, %v478, %v480
      %484 = vst [vmem:[#allocation2 + $0x7] sm:$0x1] %v482
      %v485 = vld [vmem:[%s369] sm:$0x3]
      %v487 = vperm.slane %v485, 0
      %v488 = vperm.slane %v485, 1
      %489 = vrot.lane.b32.xlu0 %v487, 113
      %v490 = vpop.permute.xlu0 %489
      %491 = vrot.lane.b32.xlu0 %v488, 113
      %v492 = vpop.permute.xlu0 %491
      %vm493 = vcmask 924672
      %v494 = vsel %vm493, %v490, %v492
      %496 = vst [vmem:[#allocation2 + $0x8] sm:$0x1] %v494
      %v497 = vld [vmem:[%s369] sm:$0x3]
      %v499 = vperm.slane %v497, 0
      %v500 = vperm.slane %v497, 1
      %501 = vrot.lane.b32.xlu0 %v499, 112
      %v502 = vpop.permute.xlu0 %501
      %503 = vrot.lane.b32.xlu0 %v500, 112
      %v504 = vpop.permute.xlu0 %503
      %vm505 = vcmask 916480
      %v506 = vsel %vm505, %v502, %v504
      %508 = vst [vmem:[#allocation2 + $0x9] sm:$0x1] %v506
      %v509 = vld [vmem:[%s369] sm:$0x3]
      %v511 = vperm.slane %v509, 0
      %v512 = vperm.slane %v509, 1
      %513 = vrot.lane.b32.xlu0 %v511, 104
      %v514 = vpop.permute.xlu0 %513
      %515 = vrot.lane.b32.xlu0 %v512, 104
      %v516 = vpop.permute.xlu0 %515
      %vm517 = vcmask 850944
      %v518 = vsel %vm517, %v514, %v516
      %520 = vst [vmem:[#allocation2 + $0xa] sm:$0x1] %v518
      %v521 = vld [vmem:[%s369] sm:$0x3]
      %v523 = vperm.slane %v521, 0
      %v524 = vperm.slane %v521, 1
      %525 = vrot.lane.b32.xlu0 %v523, 103
      %v526 = vpop.permute.xlu0 %525
      %527 = vrot.lane.b32.xlu0 %v524, 103
      %v528 = vpop.permute.xlu0 %527
      %vm529 = vcmask 842752
      %v530 = vsel %vm529, %v526, %v528
      %532 = vst [vmem:[#allocation2 + $0xb] sm:$0x1] %v530
      %v533 = vld [vmem:[%s369] sm:$0x3]
      %v535 = vperm.slane %v533, 0
      %v536 = vperm.slane %v533, 1
      %537 = vrot.lane.b32.xlu0 %v535, 102
      %v538 = vpop.permute.xlu0 %537
      %539 = vrot.lane.b32.xlu0 %v536, 102
      %v540 = vpop.permute.xlu0 %539
      %vm541 = vcmask 834560
      %v542 = vsel %vm541, %v538, %v540
      %544 = vst [vmem:[#allocation2 + $0xc] sm:$0x1] %v542
      %v545 = vld [vmem:[%s369] sm:$0x3]
      %v547 = vperm.slane %v545, 0
      %v548 = vperm.slane %v545, 1
      %549 = vrot.lane.b32.xlu0 %v547, 101
      %v550 = vpop.permute.xlu0 %549
      %551 = vrot.lane.b32.xlu0 %v548, 101
      %v552 = vpop.permute.xlu0 %551
      %vm553 = vcmask 826368
      %v554 = vsel %vm553, %v550, %v552
      %556 = vst [vmem:[#allocation2 + $0xd] sm:$0x1] %v554
      %v557 = vld [vmem:[%s369] sm:$0x3]
      %v559 = vperm.slane %v557, 0
      %v560 = vperm.slane %v557, 1
      %561 = vrot.lane.b32.xlu0 %v559, 100
      %v562 = vpop.permute.xlu0 %561
      %563 = vrot.lane.b32.xlu0 %v560, 100
      %v564 = vpop.permute.xlu0 %563
      %vm565 = vcmask 818176
      %v566 = vsel %vm565, %v562, %v564
      %568 = vst [vmem:[#allocation2 + $0xe] sm:$0x1] %v566
      %v569 = vld [vmem:[%s369] sm:$0x3]
      %v571 = vperm.slane %v569, 0
      %v572 = vperm.slane %v569, 1
      %573 = vrot.lane.b32.xlu0 %v571, 92
      %v574 = vpop.permute.xlu0 %573
      %575 = vrot.lane.b32.xlu0 %v572, 92
      %v576 = vpop.permute.xlu0 %575
      %vm577 = vcmask 752640
      %v578 = vsel %vm577, %v574, %v576
      %580 = vst [vmem:[#allocation2 + $0xf] sm:$0x1] %v578
      %v581 = vld [vmem:[%s369] sm:$0x3]
      %v583 = vperm.slane %v581, 0
      %v584 = vperm.slane %v581, 1
      %585 = vrot.lane.b32.xlu0 %v583, 91
      %v586 = vpop.permute.xlu0 %585
      %587 = vrot.lane.b32.xlu0 %v584, 91
      %v588 = vpop.permute.xlu0 %587
      %vm589 = vcmask 744448
      %v590 = vsel %vm589, %v586, %v588
      %592 = vst [vmem:[#allocation2 + $0x10] sm:$0x1] %v590
      %v593 = vld [vmem:[%s369] sm:$0x3]
      %v595 = vperm.slane %v593, 0
      %v596 = vperm.slane %v593, 1
      %597 = vrot.lane.b32.xlu0 %v595, 90
      %v598 = vpop.permute.xlu0 %597
      %599 = vrot.lane.b32.xlu0 %v596, 90
      %v600 = vpop.permute.xlu0 %599
      %vm601 = vcmask 736256
      %v602 = vsel %vm601, %v598, %v600
      %604 = vst [vmem:[#allocation2 + $0x11] sm:$0x1] %v602
      %v605 = vld [vmem:[%s369] sm:$0x3]
      %v607 = vperm.slane %v605, 0
      %v608 = vperm.slane %v605, 1
      %609 = vrot.lane.b32.xlu0 %v607, 89
      %v610 = vpop.permute.xlu0 %609
      %611 = vrot.lane.b32.xlu0 %v608, 89
      %v612 = vpop.permute.xlu0 %611
      %vm613 = vcmask 728064
      %v614 = vsel %vm613, %v610, %v612
      %616 = vst [vmem:[#allocation2 + $0x12] sm:$0x1] %v614
      %v617 = vld [vmem:[%s369] sm:$0x3]
      %v619 = vperm.slane %v617, 0
      %v620 = vperm.slane %v617, 1
      %621 = vrot.lane.b32.xlu0 %v619, 88
      %v622 = vpop.permute.xlu0 %621
      %623 = vrot.lane.b32.xlu0 %v620, 88
      %v624 = vpop.permute.xlu0 %623
      %vm625 = vcmask 719872
      %v626 = vsel %vm625, %v622, %v624
      %628 = vst [vmem:[#allocation2 + $0x13] sm:$0x1] %v626
      %v629 = vld [vmem:[%s369] sm:$0x3]
      %v631 = vperm.slane %v629, 0
      %v632 = vperm.slane %v629, 1
      %633 = vrot.lane.b32.xlu0 %v631, 80
      %v634 = vpop.permute.xlu0 %633
      %635 = vrot.lane.b32.xlu0 %v632, 80
      %v636 = vpop.permute.xlu0 %635
      %vm637 = vcmask 654336
      %v638 = vsel %vm637, %v634, %v636
      %640 = vst [vmem:[#allocation2 + $0x14] sm:$0x1] %v638
      %v641 = vld [vmem:[%s369] sm:$0x3]
      %v643 = vperm.slane %v641, 0
      %v644 = vperm.slane %v641, 1
      %645 = vrot.lane.b32.xlu0 %v643, 79
      %v646 = vpop.permute.xlu0 %645
      %647 = vrot.lane.b32.xlu0 %v644, 79
      %v648 = vpop.permute.xlu0 %647
      %vm649 = vcmask 646144
      %v650 = vsel %vm649, %v646, %v648
      %652 = vst [vmem:[#allocation2 + $0x15] sm:$0x1] %v650
      %v653 = vld [vmem:[%s369] sm:$0x3]
      %v655 = vperm.slane %v653, 0
      %v656 = vperm.slane %v653, 1
      %657 = vrot.lane.b32.xlu0 %v655, 78
      %v658 = vpop.permute.xlu0 %657
      %659 = vrot.lane.b32.xlu0 %v656, 78
      %v660 = vpop.permute.xlu0 %659
      %vm661 = vcmask 637952
      %v662 = vsel %vm661, %v658, %v660
      %664 = vst [vmem:[#allocation2 + $0x16] sm:$0x1] %v662
      %v665 = vld [vmem:[%s369] sm:$0x3]
      %v667 = vperm.slane %v665, 0
      %v668 = vperm.slane %v665, 1
      %669 = vrot.lane.b32.xlu0 %v667, 77
      %v670 = vpop.permute.xlu0 %669
      %671 = vrot.lane.b32.xlu0 %v668, 77
      %v672 = vpop.permute.xlu0 %671
      %vm673 = vcmask 629760
      %v674 = vsel %vm673, %v670, %v672
      %676 = vst [vmem:[#allocation2 + $0x17] sm:$0x1] %v674
      %v677 = vld [vmem:[%s369] sm:$0x3]
      %v679 = vperm.slane %v677, 0
      %v680 = vperm.slane %v677, 1
      %681 = vrot.lane.b32.xlu0 %v679, 76
      %v682 = vpop.permute.xlu0 %681
      %683 = vrot.lane.b32.xlu0 %v680, 76
      %v684 = vpop.permute.xlu0 %683
      %vm685 = vcmask 621568
      %v686 = vsel %vm685, %v682, %v684
      %688 = vst [vmem:[#allocation2 + $0x18] sm:$0x1] %v686
      %v689 = vld [vmem:[%s374] sm:$0x1]
      %690 = vst [vmem:[#allocation2 + $0x19] sm:$0x1] %v689
      %v691 = vld [vmem:[%s374] sm:$0x3]
      %v693 = vperm.slane %v691, 0
      %v694 = vperm.slane %v691, 1
      %695 = vrot.lane.b32.xlu0 %v693, 127
      %v696 = vpop.permute.xlu0 %695
      %697 = vrot.lane.b32.xlu0 %v694, 127
      %v698 = vpop.permute.xlu0 %697
      %v699 = vsel %vm409, %v696, %v698
      %701 = vst [vmem:[#allocation2 + $0x1a] sm:$0x1] %v699
      %v702 = vld [vmem:[%s374] sm:$0x3]
      %v704 = vperm.slane %v702, 0
      %v705 = vperm.slane %v702, 1
      %706 = vrot.lane.b32.xlu0 %v704, 126
      %v707 = vpop.permute.xlu0 %706
      %708 = vrot.lane.b32.xlu0 %v705, 126
      %v709 = vpop.permute.xlu0 %708
      %v710 = vsel %vm421, %v707, %v709
      %712 = vst [vmem:[#allocation2 + $0x1b] sm:$0x1] %v710
      %v713 = vld [vmem:[%s374] sm:$0x3]
      %v715 = vperm.slane %v713, 0
      %v716 = vperm.slane %v713, 1
      %717 = vrot.lane.b32.xlu0 %v715, 125
      %v718 = vpop.permute.xlu0 %717
      %719 = vrot.lane.b32.xlu0 %v716, 125
      %v720 = vpop.permute.xlu0 %719
      %v721 = vsel %vm433, %v718, %v720
      %723 = vst [vmem:[#allocation2 + $0x1c] sm:$0x1] %v721
      %v724 = vld [vmem:[%s374] sm:$0x3]
      %v726 = vperm.slane %v724, 0
      %v727 = vperm.slane %v724, 1
      %728 = vrot.lane.b32.xlu0 %v726, 124
      %v729 = vpop.permute.xlu0 %728
      %730 = vrot.lane.b32.xlu0 %v727, 124
      %v731 = vpop.permute.xlu0 %730
      %v732 = vsel %vm445, %v729, %v731
      %734 = vst [vmem:[#allocation2 + $0x1d] sm:$0x1] %v732
      %v735 = vld [vmem:[%s374] sm:$0x3]
      %v737 = vperm.slane %v735, 0
      %v738 = vperm.slane %v735, 1
      %739 = vrot.lane.b32.xlu0 %v737, 116
      %v740 = vpop.permute.xlu0 %739
      %741 = vrot.lane.b32.xlu0 %v738, 116
      %v742 = vpop.permute.xlu0 %741
      %v743 = vsel %vm457, %v740, %v742
      %745 = vst [vmem:[#allocation2 + $0x1e] sm:$0x1] %v743
      %v746 = vld [vmem:[%s374] sm:$0x3]
      %v748 = vperm.slane %v746, 0
      %v749 = vperm.slane %v746, 1
      %750 = vrot.lane.b32.xlu0 %v748, 115
      %v751 = vpop.permute.xlu0 %750
      %752 = vrot.lane.b32.xlu0 %v749, 115
      %v753 = vpop.permute.xlu0 %752
      %v754 = vsel %vm469, %v751, %v753
      %756 = vst [vmem:[#allocation2 + $0x1f] sm:$0x1] %v754
      %v757 = vld [vmem:[%s374] sm:$0x3]
      %v759 = vperm.slane %v757, 0
      %v760 = vperm.slane %v757, 1
      %761 = vrot.lane.b32.xlu0 %v759, 114
      %v762 = vpop.permute.xlu0 %761
      %763 = vrot.lane.b32.xlu0 %v760, 114
      %v764 = vpop.permute.xlu0 %763
      %v765 = vsel %vm481, %v762, %v764
      %767 = vst [vmem:[#allocation2 + $0x20] sm:$0x1] %v765
      %v768 = vld [vmem:[%s374] sm:$0x3]
      %v770 = vperm.slane %v768, 0
      %v771 = vperm.slane %v768, 1
      %772 = vrot.lane.b32.xlu0 %v770, 113
      %v773 = vpop.permute.xlu0 %772
      %774 = vrot.lane.b32.xlu0 %v771, 113
      %v775 = vpop.permute.xlu0 %774
      %v776 = vsel %vm493, %v773, %v775
      %778 = vst [vmem:[#allocation2 + $0x21] sm:$0x1] %v776
      %v779 = vld [vmem:[%s374] sm:$0x3]
      %v781 = vperm.slane %v779, 0
      %v782 = vperm.slane %v779, 1
      %783 = vrot.lane.b32.xlu0 %v781, 112
      %v784 = vpop.permute.xlu0 %783
      %785 = vrot.lane.b32.xlu0 %v782, 112
      %v786 = vpop.permute.xlu0 %785
      %v787 = vsel %vm505, %v784, %v786
      %789 = vst [vmem:[#allocation2 + $0x22] sm:$0x1] %v787
      %v790 = vld [vmem:[%s374] sm:$0x3]
      %v792 = vperm.slane %v790, 0
      %v793 = vperm.slane %v790, 1
      %794 = vrot.lane.b32.xlu0 %v792, 104
      %v795 = vpop.permute.xlu0 %794
      %796 = vrot.lane.b32.xlu0 %v793, 104
      %v797 = vpop.permute.xlu0 %796
      %v798 = vsel %vm517, %v795, %v797
      %800 = vst [vmem:[#allocation2 + $0x23] sm:$0x1] %v798
      %v801 = vld [vmem:[%s374] sm:$0x3]
      %v803 = vperm.slane %v801, 0
      %v804 = vperm.slane %v801, 1
      %805 = vrot.lane.b32.xlu0 %v803, 103
      %v806 = vpop.permute.xlu0 %805
      %807 = vrot.lane.b32.xlu0 %v804, 103
      %v808 = vpop.permute.xlu0 %807
      %v809 = vsel %vm529, %v806, %v808
      %811 = vst [vmem:[#allocation2 + $0x24] sm:$0x1] %v809
      %v812 = vld [vmem:[%s374] sm:$0x3]
      %v814 = vperm.slane %v812, 0
      %v815 = vperm.slane %v812, 1
      %816 = vrot.lane.b32.xlu0 %v814, 102
      %v817 = vpop.permute.xlu0 %816
      %818 = vrot.lane.b32.xlu0 %v815, 102
      %v819 = vpop.permute.xlu0 %818
      %v820 = vsel %vm541, %v817, %v819
      %822 = vst [vmem:[#allocation2 + $0x25] sm:$0x1] %v820
      %v823 = vld [vmem:[%s374] sm:$0x3]
      %v825 = vperm.slane %v823, 0
      %v826 = vperm.slane %v823, 1
      %827 = vrot.lane.b32.xlu0 %v825, 101
      %v828 = vpop.permute.xlu0 %827
      %829 = vrot.lane.b32.xlu0 %v826, 101
      %v830 = vpop.permute.xlu0 %829
      %v831 = vsel %vm553, %v828, %v830
      %833 = vst [vmem:[#allocation2 + $0x26] sm:$0x1] %v831
      %v834 = vld [vmem:[%s374] sm:$0x3]
      %v836 = vperm.slane %v834, 0
      %v837 = vperm.slane %v834, 1
      %838 = vrot.lane.b32.xlu0 %v836, 100
      %v839 = vpop.permute.xlu0 %838
      %840 = vrot.lane.b32.xlu0 %v837, 100
      %v841 = vpop.permute.xlu0 %840
      %v842 = vsel %vm565, %v839, %v841
      %844 = vst [vmem:[#allocation2 + $0x27] sm:$0x1] %v842
      %v845 = vld [vmem:[%s374] sm:$0x3]
      %v847 = vperm.slane %v845, 0
      %v848 = vperm.slane %v845, 1
      %849 = vrot.lane.b32.xlu0 %v847, 92
      %v850 = vpop.permute.xlu0 %849
      %851 = vrot.lane.b32.xlu0 %v848, 92
      %v852 = vpop.permute.xlu0 %851
      %v853 = vsel %vm577, %v850, %v852
      %855 = vst [vmem:[#allocation2 + $0x28] sm:$0x1] %v853
      %v856 = vld [vmem:[%s374] sm:$0x3]
      %v858 = vperm.slane %v856, 0
      %v859 = vperm.slane %v856, 1
      %860 = vrot.lane.b32.xlu0 %v858, 91
      %v861 = vpop.permute.xlu0 %860
      %862 = vrot.lane.b32.xlu0 %v859, 91
      %v863 = vpop.permute.xlu0 %862
      %v864 = vsel %vm589, %v861, %v863
      %866 = vst [vmem:[#allocation2 + $0x29] sm:$0x1] %v864
      %v867 = vld [vmem:[%s374] sm:$0x3]
      %v869 = vperm.slane %v867, 0
      %v870 = vperm.slane %v867, 1
      %871 = vrot.lane.b32.xlu0 %v869, 90
      %v872 = vpop.permute.xlu0 %871
      %873 = vrot.lane.b32.xlu0 %v870, 90
      %v874 = vpop.permute.xlu0 %873
      %v875 = vsel %vm601, %v872, %v874
      %877 = vst [vmem:[#allocation2 + $0x2a] sm:$0x1] %v875
      %v878 = vld [vmem:[%s374] sm:$0x3]
      %v880 = vperm.slane %v878, 0
      %v881 = vperm.slane %v878, 1
      %882 = vrot.lane.b32.xlu0 %v880, 89
      %v883 = vpop.permute.xlu0 %882
      %884 = vrot.lane.b32.xlu0 %v881, 89
      %v885 = vpop.permute.xlu0 %884
      %v886 = vsel %vm613, %v883, %v885
      %888 = vst [vmem:[#allocation2 + $0x2b] sm:$0x1] %v886
      %v889 = vld [vmem:[%s374] sm:$0x3]
      %v891 = vperm.slane %v889, 0
      %v892 = vperm.slane %v889, 1
      %893 = vrot.lane.b32.xlu0 %v891, 88
      %v894 = vpop.permute.xlu0 %893
      %895 = vrot.lane.b32.xlu0 %v892, 88
      %v896 = vpop.permute.xlu0 %895
      %v897 = vsel %vm625, %v894, %v896
      %899 = vst [vmem:[#allocation2 + $0x2c] sm:$0x1] %v897
      %v900 = vld [vmem:[%s374] sm:$0x3]
      %v902 = vperm.slane %v900, 0
      %v903 = vperm.slane %v900, 1
      %904 = vrot.lane.b32.xlu0 %v902, 80
      %v905 = vpop.permute.xlu0 %904
      %906 = vrot.lane.b32.xlu0 %v903, 80
      %v907 = vpop.permute.xlu0 %906
      %v908 = vsel %vm637, %v905, %v907
      %910 = vst [vmem:[#allocation2 + $0x2d] sm:$0x1] %v908
      %v911 = vld [vmem:[%s374] sm:$0x3]
      %v913 = vperm.slane %v911, 0
      %v914 = vperm.slane %v911, 1
      %915 = vrot.lane.b32.xlu0 %v913, 79
      %v916 = vpop.permute.xlu0 %915
      %917 = vrot.lane.b32.xlu0 %v914, 79
      %v918 = vpop.permute.xlu0 %917
      %v919 = vsel %vm649, %v916, %v918
      %921 = vst [vmem:[#allocation2 + $0x2e] sm:$0x1] %v919
      %v922 = vld [vmem:[%s374] sm:$0x3]
      %v924 = vperm.slane %v922, 0
      %v925 = vperm.slane %v922, 1
      %926 = vrot.lane.b32.xlu0 %v924, 78
      %v927 = vpop.permute.xlu0 %926
      %928 = vrot.lane.b32.xlu0 %v925, 78
      %v929 = vpop.permute.xlu0 %928
      %v930 = vsel %vm661, %v927, %v929
      %932 = vst [vmem:[#allocation2 + $0x2f] sm:$0x1] %v930
      %v933 = vld [vmem:[%s374] sm:$0x3]
      %v935 = vperm.slane %v933, 0
      %v936 = vperm.slane %v933, 1
      %937 = vrot.lane.b32.xlu0 %v935, 77
      %v938 = vpop.permute.xlu0 %937
      %939 = vrot.lane.b32.xlu0 %v936, 77
      %v940 = vpop.permute.xlu0 %939
      %v941 = vsel %vm673, %v938, %v940
      %943 = vst [vmem:[#allocation2 + $0x30] sm:$0x1] %v941
      %v944 = vld [vmem:[%s374] sm:$0x3]
      %v946 = vperm.slane %v944, 0
      %v947 = vperm.slane %v944, 1
      %948 = vrot.lane.b32.xlu0 %v946, 76
      %v949 = vpop.permute.xlu0 %948
      %950 = vrot.lane.b32.xlu0 %v947, 76
      %v951 = vpop.permute.xlu0 %950
      %v952 = vsel %vm685, %v949, %v951
      %954 = vst [vmem:[#allocation2 + $0x31] sm:$0x1] %v952
      %v955 = vld [vmem:[%s380] sm:$0x1]
      %956 = vst [vmem:[#allocation2 + $0x32] sm:$0x1] %v955
      %v957 = vld [vmem:[%s380] sm:$0x3]
      %v959 = vperm.slane %v957, 0
      %v960 = vperm.slane %v957, 1
      %961 = vrot.lane.b32.xlu0 %v959, 127
      %v962 = vpop.permute.xlu0 %961
      %963 = vrot.lane.b32.xlu0 %v960, 127
      %v964 = vpop.permute.xlu0 %963
      %v965 = vsel %vm409, %v962, %v964
      %967 = vst [vmem:[#allocation2 + $0x33] sm:$0x1] %v965
      %v968 = vld [vmem:[%s380] sm:$0x3]
      %v970 = vperm.slane %v968, 0
      %v971 = vperm.slane %v968, 1
      %972 = vrot.lane.b32.xlu0 %v970, 126
      %v973 = vpop.permute.xlu0 %972
      %974 = vrot.lane.b32.xlu0 %v971, 126
      %v975 = vpop.permute.xlu0 %974
      %v976 = vsel %vm421, %v973, %v975
      %978 = vst [vmem:[#allocation2 + $0x34] sm:$0x1] %v976
      %v979 = vld [vmem:[%s380] sm:$0x3]
      %v981 = vperm.slane %v979, 0
      %v982 = vperm.slane %v979, 1
      %983 = vrot.lane.b32.xlu0 %v981, 125
      %v984 = vpop.permute.xlu0 %983
      %985 = vrot.lane.b32.xlu0 %v982, 125
      %v986 = vpop.permute.xlu0 %985
      %v987 = vsel %vm433, %v984, %v986
      %989 = vst [vmem:[#allocation2 + $0x35] sm:$0x1] %v987
      %v990 = vld [vmem:[%s380] sm:$0x3]
      %v992 = vperm.slane %v990, 0
      %v993 = vperm.slane %v990, 1
      %994 = vrot.lane.b32.xlu0 %v992, 124
      %v995 = vpop.permute.xlu0 %994
      %996 = vrot.lane.b32.xlu0 %v993, 124
      %v997 = vpop.permute.xlu0 %996
      %v998 = vsel %vm445, %v995, %v997
      %1000 = vst [vmem:[#allocation2 + $0x36] sm:$0x1] %v998
      %v1001 = vld [vmem:[%s380] sm:$0x3]
      %v1003 = vperm.slane %v1001, 0
      %v1004 = vperm.slane %v1001, 1
      %1005 = vrot.lane.b32.xlu0 %v1003, 116
      %v1006 = vpop.permute.xlu0 %1005
      %1007 = vrot.lane.b32.xlu0 %v1004, 116
      %v1008 = vpop.permute.xlu0 %1007
      %v1009 = vsel %vm457, %v1006, %v1008
      %1011 = vst [vmem:[#allocation2 + $0x37] sm:$0x1] %v1009
      %v1012 = vld [vmem:[%s380] sm:$0x3]
      %v1014 = vperm.slane %v1012, 0
      %v1015 = vperm.slane %v1012, 1
      %1016 = vrot.lane.b32.xlu0 %v1014, 115
      %v1017 = vpop.permute.xlu0 %1016
      %1018 = vrot.lane.b32.xlu0 %v1015, 115
      %v1019 = vpop.permute.xlu0 %1018
      %v1020 = vsel %vm469, %v1017, %v1019
      %1022 = vst [vmem:[#allocation2 + $0x38] sm:$0x1] %v1020
      %v1023 = vld [vmem:[%s380] sm:$0x3]
      %v1025 = vperm.slane %v1023, 0
      %v1026 = vperm.slane %v1023, 1
      %1027 = vrot.lane.b32.xlu0 %v1025, 114
      %v1028 = vpop.permute.xlu0 %1027
      %1029 = vrot.lane.b32.xlu0 %v1026, 114
      %v1030 = vpop.permute.xlu0 %1029
      %v1031 = vsel %vm481, %v1028, %v1030
      %1033 = vst [vmem:[#allocation2 + $0x39] sm:$0x1] %v1031
      %v1034 = vld [vmem:[%s380] sm:$0x3]
      %v1036 = vperm.slane %v1034, 0
      %v1037 = vperm.slane %v1034, 1
      %1038 = vrot.lane.b32.xlu0 %v1036, 113
      %v1039 = vpop.permute.xlu0 %1038
      %1040 = vrot.lane.b32.xlu0 %v1037, 113
      %v1041 = vpop.permute.xlu0 %1040
      %v1042 = vsel %vm493, %v1039, %v1041
      %1044 = vst [vmem:[#allocation2 + $0x3a] sm:$0x1] %v1042
      %v1045 = vld [vmem:[%s380] sm:$0x3]
      %v1047 = vperm.slane %v1045, 0
      %v1048 = vperm.slane %v1045, 1
      %1049 = vrot.lane.b32.xlu0 %v1047, 112
      %v1050 = vpop.permute.xlu0 %1049
      %1051 = vrot.lane.b32.xlu0 %v1048, 112
      %v1052 = vpop.permute.xlu0 %1051
      %v1053 = vsel %vm505, %v1050, %v1052
      %1055 = vst [vmem:[#allocation2 + $0x3b] sm:$0x1] %v1053
      %v1056 = vld [vmem:[%s380] sm:$0x3]
      %v1058 = vperm.slane %v1056, 0
      %v1059 = vperm.slane %v1056, 1
      %1060 = vrot.lane.b32.xlu0 %v1058, 104
      %v1061 = vpop.permute.xlu0 %1060
      %1062 = vrot.lane.b32.xlu0 %v1059, 104
      %v1063 = vpop.permute.xlu0 %1062
      %v1064 = vsel %vm517, %v1061, %v1063
      %1066 = vst [vmem:[#allocation2 + $0x3c] sm:$0x1] %v1064
      %v1067 = vld [vmem:[%s380] sm:$0x3]
      %v1069 = vperm.slane %v1067, 0
      %v1070 = vperm.slane %v1067, 1
      %1071 = vrot.lane.b32.xlu0 %v1069, 103
      %v1072 = vpop.permute.xlu0 %1071
      %1073 = vrot.lane.b32.xlu0 %v1070, 103
      %v1074 = vpop.permute.xlu0 %1073
      %v1075 = vsel %vm529, %v1072, %v1074
      %1077 = vst [vmem:[#allocation2 + $0x3d] sm:$0x1] %v1075
      %v1078 = vld [vmem:[%s380] sm:$0x3]
      %v1080 = vperm.slane %v1078, 0
      %v1081 = vperm.slane %v1078, 1
      %1082 = vrot.lane.b32.xlu0 %v1080, 102
      %v1083 = vpop.permute.xlu0 %1082
      %1084 = vrot.lane.b32.xlu0 %v1081, 102
      %v1085 = vpop.permute.xlu0 %1084
      %v1086 = vsel %vm541, %v1083, %v1085
      %1088 = vst [vmem:[#allocation2 + $0x3e] sm:$0x1] %v1086
      %v1089 = vld [vmem:[%s380] sm:$0x3]
      %v1091 = vperm.slane %v1089, 0
      %v1092 = vperm.slane %v1089, 1
      %1093 = vrot.lane.b32.xlu0 %v1091, 101
      %v1094 = vpop.permute.xlu0 %1093
      %1095 = vrot.lane.b32.xlu0 %v1092, 101
      %v1096 = vpop.permute.xlu0 %1095
      %v1097 = vsel %vm553, %v1094, %v1096
      %1099 = vst [vmem:[#allocation2 + $0x3f] sm:$0x1] %v1097
      %v1100 = vld [vmem:[%s380] sm:$0x3]
      %v1102 = vperm.slane %v1100, 0
      %v1103 = vperm.slane %v1100, 1
      %1104 = vrot.lane.b32.xlu0 %v1102, 100
      %v1105 = vpop.permute.xlu0 %1104
      %1106 = vrot.lane.b32.xlu0 %v1103, 100
      %v1107 = vpop.permute.xlu0 %1106
      %v1108 = vsel %vm565, %v1105, %v1107
      %1110 = vst [vmem:[#allocation2 + $0x40] sm:$0x1] %v1108
      %v1111 = vld [vmem:[%s380] sm:$0x3]
      %v1113 = vperm.slane %v1111, 0
      %v1114 = vperm.slane %v1111, 1
      %1115 = vrot.lane.b32.xlu0 %v1113, 92
      %v1116 = vpop.permute.xlu0 %1115
      %1117 = vrot.lane.b32.xlu0 %v1114, 92
      %v1118 = vpop.permute.xlu0 %1117
      %v1119 = vsel %vm577, %v1116, %v1118
      %1121 = vst [vmem:[#allocation2 + $0x41] sm:$0x1] %v1119
      %v1122 = vld [vmem:[%s380] sm:$0x3]
      %v1124 = vperm.slane %v1122, 0
      %v1125 = vperm.slane %v1122, 1
      %1126 = vrot.lane.b32.xlu0 %v1124, 91
      %v1127 = vpop.permute.xlu0 %1126
      %1128 = vrot.lane.b32.xlu0 %v1125, 91
      %v1129 = vpop.permute.xlu0 %1128
      %v1130 = vsel %vm589, %v1127, %v1129
      %1132 = vst [vmem:[#allocation2 + $0x42] sm:$0x1] %v1130
      %v1133 = vld [vmem:[%s380] sm:$0x3]
      %v1135 = vperm.slane %v1133, 0
      %v1136 = vperm.slane %v1133, 1
      %1137 = vrot.lane.b32.xlu0 %v1135, 90
      %v1138 = vpop.permute.xlu0 %1137
      %1139 = vrot.lane.b32.xlu0 %v1136, 90
      %v1140 = vpop.permute.xlu0 %1139
      %v1141 = vsel %vm601, %v1138, %v1140
      %1143 = vst [vmem:[#allocation2 + $0x43] sm:$0x1] %v1141
      %v1144 = vld [vmem:[%s380] sm:$0x3]
      %v1146 = vperm.slane %v1144, 0
      %v1147 = vperm.slane %v1144, 1
      %1148 = vrot.lane.b32.xlu0 %v1146, 89
      %v1149 = vpop.permute.xlu0 %1148
      %1150 = vrot.lane.b32.xlu0 %v1147, 89
      %v1151 = vpop.permute.xlu0 %1150
      %v1152 = vsel %vm613, %v1149, %v1151
      %1154 = vst [vmem:[#allocation2 + $0x44] sm:$0x1] %v1152
      %v1155 = vld [vmem:[%s380] sm:$0x3]
      %v1157 = vperm.slane %v1155, 0
      %v1158 = vperm.slane %v1155, 1
      %1159 = vrot.lane.b32.xlu0 %v1157, 88
      %v1160 = vpop.permute.xlu0 %1159
      %1161 = vrot.lane.b32.xlu0 %v1158, 88
      %v1162 = vpop.permute.xlu0 %1161
      %v1163 = vsel %vm625, %v1160, %v1162
      %1165 = vst [vmem:[#allocation2 + $0x45] sm:$0x1] %v1163
      %v1166 = vld [vmem:[%s380] sm:$0x3]
      %v1168 = vperm.slane %v1166, 0
      %v1169 = vperm.slane %v1166, 1
      %1170 = vrot.lane.b32.xlu0 %v1168, 80
      %v1171 = vpop.permute.xlu0 %1170
      %1172 = vrot.lane.b32.xlu0 %v1169, 80
      %v1173 = vpop.permute.xlu0 %1172
      %v1174 = vsel %vm637, %v1171, %v1173
      %1176 = vst [vmem:[#allocation2 + $0x46] sm:$0x1] %v1174
      %v1177 = vld [vmem:[%s380] sm:$0x3]
      %v1179 = vperm.slane %v1177, 0
      %v1180 = vperm.slane %v1177, 1
      %1181 = vrot.lane.b32.xlu0 %v1179, 79
      %v1182 = vpop.permute.xlu0 %1181
      %1183 = vrot.lane.b32.xlu0 %v1180, 79
      %v1184 = vpop.permute.xlu0 %1183
      %v1185 = vsel %vm649, %v1182, %v1184
      %1187 = vst [vmem:[#allocation2 + $0x47] sm:$0x1] %v1185
      %v1188 = vld [vmem:[%s380] sm:$0x3]
      %v1190 = vperm.slane %v1188, 0
      %v1191 = vperm.slane %v1188, 1
      %1192 = vrot.lane.b32.xlu0 %v1190, 78
      %v1193 = vpop.permute.xlu0 %1192
      %1194 = vrot.lane.b32.xlu0 %v1191, 78
      %v1195 = vpop.permute.xlu0 %1194
      %v1196 = vsel %vm661, %v1193, %v1195
      %1198 = vst [vmem:[#allocation2 + $0x48] sm:$0x1] %v1196
      %v1199 = vld [vmem:[%s380] sm:$0x3]
      %v1201 = vperm.slane %v1199, 0
      %v1202 = vperm.slane %v1199, 1
      %1203 = vrot.lane.b32.xlu0 %v1201, 77
      %v1204 = vpop.permute.xlu0 %1203
      %1205 = vrot.lane.b32.xlu0 %v1202, 77
      %v1206 = vpop.permute.xlu0 %1205
      %v1207 = vsel %vm673, %v1204, %v1206
      %1209 = vst [vmem:[#allocation2 + $0x49] sm:$0x1] %v1207
      %v1210 = vld [vmem:[%s380] sm:$0x3]
      %v1212 = vperm.slane %v1210, 0
      %v1213 = vperm.slane %v1210, 1
      %1214 = vrot.lane.b32.xlu0 %v1212, 76
      %v1215 = vpop.permute.xlu0 %1214
      %1216 = vrot.lane.b32.xlu0 %v1213, 76
      %v1217 = vpop.permute.xlu0 %1216
      %v1218 = vsel %vm685, %v1215, %v1217
      %1220 = vst [vmem:[#allocation2 + $0x4a] sm:$0x1] %v1218
      %v1221 = vld [vmem:[%s386] sm:$0x1]
      %1222 = vst [vmem:[#allocation2 + $0x4b] sm:$0x1] %v1221
      %v1223 = vld [vmem:[%s386] sm:$0x3]
      %v1225 = vperm.slane %v1223, 0
      %v1226 = vperm.slane %v1223, 1
      %1227 = vrot.lane.b32.xlu0 %v1225, 127
      %v1228 = vpop.permute.xlu0 %1227
      %1229 = vrot.lane.b32.xlu0 %v1226, 127
      %v1230 = vpop.permute.xlu0 %1229
      %v1231 = vsel %vm409, %v1228, %v1230
      %1233 = vst [vmem:[#allocation2 + $0x4c] sm:$0x1] %v1231
      %v1234 = vld [vmem:[%s386] sm:$0x3]
      %v1236 = vperm.slane %v1234, 0
      %v1237 = vperm.slane %v1234, 1
      %1238 = vrot.lane.b32.xlu0 %v1236, 126
      %v1239 = vpop.permute.xlu0 %1238
      %1240 = vrot.lane.b32.xlu0 %v1237, 126
      %v1241 = vpop.permute.xlu0 %1240
      %v1242 = vsel %vm421, %v1239, %v1241
      %1244 = vst [vmem:[#allocation2 + $0x4d] sm:$0x1] %v1242
      %v1245 = vld [vmem:[%s386] sm:$0x3]
      %v1247 = vperm.slane %v1245, 0
      %v1248 = vperm.slane %v1245, 1
      %1249 = vrot.lane.b32.xlu0 %v1247, 125
      %v1250 = vpop.permute.xlu0 %1249
      %1251 = vrot.lane.b32.xlu0 %v1248, 125
      %v1252 = vpop.permute.xlu0 %1251
      %v1253 = vsel %vm433, %v1250, %v1252
      %1255 = vst [vmem:[#allocation2 + $0x4e] sm:$0x1] %v1253
      %v1256 = vld [vmem:[%s386] sm:$0x3]
      %v1258 = vperm.slane %v1256, 0
      %v1259 = vperm.slane %v1256, 1
      %1260 = vrot.lane.b32.xlu0 %v1258, 124
      %v1261 = vpop.permute.xlu0 %1260
      %1262 = vrot.lane.b32.xlu0 %v1259, 124
      %v1263 = vpop.permute.xlu0 %1262
      %v1264 = vsel %vm445, %v1261, %v1263
      %1266 = vst [vmem:[#allocation2 + $0x4f] sm:$0x1] %v1264
      %v1267 = vld [vmem:[%s386] sm:$0x3]
      %v1269 = vperm.slane %v1267, 0
      %v1270 = vperm.slane %v1267, 1
      %1271 = vrot.lane.b32.xlu0 %v1269, 116
      %v1272 = vpop.permute.xlu0 %1271
      %1273 = vrot.lane.b32.xlu0 %v1270, 116
      %v1274 = vpop.permute.xlu0 %1273
      %v1275 = vsel %vm457, %v1272, %v1274
      %1277 = vst [vmem:[#allocation2 + $0x50] sm:$0x1] %v1275
      %v1278 = vld [vmem:[%s386] sm:$0x3]
      %v1280 = vperm.slane %v1278, 0
      %v1281 = vperm.slane %v1278, 1
      %1282 = vrot.lane.b32.xlu0 %v1280, 115
      %v1283 = vpop.permute.xlu0 %1282
      %1284 = vrot.lane.b32.xlu0 %v1281, 115
      %v1285 = vpop.permute.xlu0 %1284
      %v1286 = vsel %vm469, %v1283, %v1285
      %1288 = vst [vmem:[#allocation2 + $0x51] sm:$0x1] %v1286
      %v1289 = vld [vmem:[%s386] sm:$0x3]
      %v1291 = vperm.slane %v1289, 0
      %v1292 = vperm.slane %v1289, 1
      %1293 = vrot.lane.b32.xlu0 %v1291, 114
      %v1294 = vpop.permute.xlu0 %1293
      %1295 = vrot.lane.b32.xlu0 %v1292, 114
      %v1296 = vpop.permute.xlu0 %1295
      %v1297 = vsel %vm481, %v1294, %v1296
      %1299 = vst [vmem:[#allocation2 + $0x52] sm:$0x1] %v1297
      %v1300 = vld [vmem:[%s386] sm:$0x3]
      %v1302 = vperm.slane %v1300, 0
      %v1303 = vperm.slane %v1300, 1
      %1304 = vrot.lane.b32.xlu0 %v1302, 113
      %v1305 = vpop.permute.xlu0 %1304
      %1306 = vrot.lane.b32.xlu0 %v1303, 113
      %v1307 = vpop.permute.xlu0 %1306
      %v1308 = vsel %vm493, %v1305, %v1307
      %1310 = vst [vmem:[#allocation2 + $0x53] sm:$0x1] %v1308
      %v1311 = vld [vmem:[%s386] sm:$0x3]
      %v1313 = vperm.slane %v1311, 0
      %v1314 = vperm.slane %v1311, 1
      %1315 = vrot.lane.b32.xlu0 %v1313, 112
      %v1316 = vpop.permute.xlu0 %1315
      %1317 = vrot.lane.b32.xlu0 %v1314, 112
      %v1318 = vpop.permute.xlu0 %1317
      %v1319 = vsel %vm505, %v1316, %v1318
      %1321 = vst [vmem:[#allocation2 + $0x54] sm:$0x1] %v1319
      %v1322 = vld [vmem:[%s386] sm:$0x3]
      %v1324 = vperm.slane %v1322, 0
      %v1325 = vperm.slane %v1322, 1
      %1326 = vrot.lane.b32.xlu0 %v1324, 104
      %v1327 = vpop.permute.xlu0 %1326
      %1328 = vrot.lane.b32.xlu0 %v1325, 104
      %v1329 = vpop.permute.xlu0 %1328
      %v1330 = vsel %vm517, %v1327, %v1329
      %1332 = vst [vmem:[#allocation2 + $0x55] sm:$0x1] %v1330
      %v1333 = vld [vmem:[%s386] sm:$0x3]
      %v1335 = vperm.slane %v1333, 0
      %v1336 = vperm.slane %v1333, 1
      %1337 = vrot.lane.b32.xlu0 %v1335, 103
      %v1338 = vpop.permute.xlu0 %1337
      %1339 = vrot.lane.b32.xlu0 %v1336, 103
      %v1340 = vpop.permute.xlu0 %1339
      %v1341 = vsel %vm529, %v1338, %v1340
      %1343 = vst [vmem:[#allocation2 + $0x56] sm:$0x1] %v1341
      %v1344 = vld [vmem:[%s386] sm:$0x3]
      %v1346 = vperm.slane %v1344, 0
      %v1347 = vperm.slane %v1344, 1
      %1348 = vrot.lane.b32.xlu0 %v1346, 102
      %v1349 = vpop.permute.xlu0 %1348
      %1350 = vrot.lane.b32.xlu0 %v1347, 102
      %v1351 = vpop.permute.xlu0 %1350
      %v1352 = vsel %vm541, %v1349, %v1351
      %1354 = vst [vmem:[#allocation2 + $0x57] sm:$0x1] %v1352
      %v1355 = vld [vmem:[%s386] sm:$0x3]
      %v1357 = vperm.slane %v1355, 0
      %v1358 = vperm.slane %v1355, 1
      %1359 = vrot.lane.b32.xlu0 %v1357, 101
      %v1360 = vpop.permute.xlu0 %1359
      %1361 = vrot.lane.b32.xlu0 %v1358, 101
      %v1362 = vpop.permute.xlu0 %1361
      %v1363 = vsel %vm553, %v1360, %v1362
      %1365 = vst [vmem:[#allocation2 + $0x58] sm:$0x1] %v1363
      %v1366 = vld [vmem:[%s386] sm:$0x3]
      %v1368 = vperm.slane %v1366, 0
      %v1369 = vperm.slane %v1366, 1
      %1370 = vrot.lane.b32.xlu0 %v1368, 100
      %v1371 = vpop.permute.xlu0 %1370
      %1372 = vrot.lane.b32.xlu0 %v1369, 100
      %v1373 = vpop.permute.xlu0 %1372
      %v1374 = vsel %vm565, %v1371, %v1373
      %1376 = vst [vmem:[#allocation2 + $0x59] sm:$0x1] %v1374
      %v1377 = vld [vmem:[%s386] sm:$0x3]
      %v1379 = vperm.slane %v1377, 0
      %v1380 = vperm.slane %v1377, 1
      %1381 = vrot.lane.b32.xlu0 %v1379, 92
      %v1382 = vpop.permute.xlu0 %1381
      %1383 = vrot.lane.b32.xlu0 %v1380, 92
      %v1384 = vpop.permute.xlu0 %1383
      %v1385 = vsel %vm577, %v1382, %v1384
      %1387 = vst [vmem:[#allocation2 + $0x5a] sm:$0x1] %v1385
      %v1388 = vld [vmem:[%s386] sm:$0x3]
      %v1390 = vperm.slane %v1388, 0
      %v1391 = vperm.slane %v1388, 1
      %1392 = vrot.lane.b32.xlu0 %v1390, 91
      %v1393 = vpop.permute.xlu0 %1392
      %1394 = vrot.lane.b32.xlu0 %v1391, 91
      %v1395 = vpop.permute.xlu0 %1394
      %v1396 = vsel %vm589, %v1393, %v1395
      %1398 = vst [vmem:[#allocation2 + $0x5b] sm:$0x1] %v1396
      %v1399 = vld [vmem:[%s386] sm:$0x3]
      %v1401 = vperm.slane %v1399, 0
      %v1402 = vperm.slane %v1399, 1
      %1403 = vrot.lane.b32.xlu0 %v1401, 90
      %v1404 = vpop.permute.xlu0 %1403
      %1405 = vrot.lane.b32.xlu0 %v1402, 90
      %v1406 = vpop.permute.xlu0 %1405
      %v1407 = vsel %vm601, %v1404, %v1406
      %1409 = vst [vmem:[#allocation2 + $0x5c] sm:$0x1] %v1407
      %v1410 = vld [vmem:[%s386] sm:$0x3]
      %v1412 = vperm.slane %v1410, 0
      %v1413 = vperm.slane %v1410, 1
      %1414 = vrot.lane.b32.xlu0 %v1412, 89
      %v1415 = vpop.permute.xlu0 %1414
      %1416 = vrot.lane.b32.xlu0 %v1413, 89
      %v1417 = vpop.permute.xlu0 %1416
      %v1418 = vsel %vm613, %v1415, %v1417
      %1420 = vst [vmem:[#allocation2 + $0x5d] sm:$0x1] %v1418
      %v1421 = vld [vmem:[%s386] sm:$0x3]
      %v1423 = vperm.slane %v1421, 0
      %v1424 = vperm.slane %v1421, 1
      %1425 = vrot.lane.b32.xlu0 %v1423, 88
      %v1426 = vpop.permute.xlu0 %1425
      %1427 = vrot.lane.b32.xlu0 %v1424, 88
      %v1428 = vpop.permute.xlu0 %1427
      %v1429 = vsel %vm625, %v1426, %v1428
      %1431 = vst [vmem:[#allocation2 + $0x5e] sm:$0x1] %v1429
      %v1432 = vld [vmem:[%s386] sm:$0x3]
      %v1434 = vperm.slane %v1432, 0
      %v1435 = vperm.slane %v1432, 1
      %1436 = vrot.lane.b32.xlu0 %v1434, 80
      %v1437 = vpop.permute.xlu0 %1436
      %1438 = vrot.lane.b32.xlu0 %v1435, 80
      %v1439 = vpop.permute.xlu0 %1438
      %v1440 = vsel %vm637, %v1437, %v1439
      %1442 = vst [vmem:[#allocation2 + $0x5f] sm:$0x1] %v1440
      %v1443 = vld [vmem:[%s386] sm:$0x3]
      %v1445 = vperm.slane %v1443, 0
      %v1446 = vperm.slane %v1443, 1
      %1447 = vrot.lane.b32.xlu0 %v1445, 79
      %v1448 = vpop.permute.xlu0 %1447
      %1449 = vrot.lane.b32.xlu0 %v1446, 79
      %v1450 = vpop.permute.xlu0 %1449
      %v1451 = vsel %vm649, %v1448, %v1450
      %1453 = vst [vmem:[#allocation2 + $0x60] sm:$0x1] %v1451
      %v1454 = vld [vmem:[%s386] sm:$0x3]
      %v1456 = vperm.slane %v1454, 0
      %v1457 = vperm.slane %v1454, 1
      %1458 = vrot.lane.b32.xlu0 %v1456, 78
      %v1459 = vpop.permute.xlu0 %1458
      %1460 = vrot.lane.b32.xlu0 %v1457, 78
      %v1461 = vpop.permute.xlu0 %1460
      %v1462 = vsel %vm661, %v1459, %v1461
      %1464 = vst [vmem:[#allocation2 + $0x61] sm:$0x1] %v1462
      %v1465 = vld [vmem:[%s386] sm:$0x3]
      %v1467 = vperm.slane %v1465, 0
      %v1468 = vperm.slane %v1465, 1
      %1469 = vrot.lane.b32.xlu0 %v1467, 77
      %v1470 = vpop.permute.xlu0 %1469
      %1471 = vrot.lane.b32.xlu0 %v1468, 77
      %v1472 = vpop.permute.xlu0 %1471
      %v1473 = vsel %vm673, %v1470, %v1472
      %1475 = vst [vmem:[#allocation2 + $0x62] sm:$0x1] %v1473
      %v1476 = vld [vmem:[%s386] sm:$0x3]
      %v1478 = vperm.slane %v1476, 0
      %v1479 = vperm.slane %v1476, 1
      %1480 = vrot.lane.b32.xlu0 %v1478, 76
      %v1481 = vpop.permute.xlu0 %1480
      %1482 = vrot.lane.b32.xlu0 %v1479, 76
      %v1483 = vpop.permute.xlu0 %1482
      %v1484 = vsel %vm685, %v1481, %v1483
      %1486 = vst [vmem:[#allocation2 + $0x63] sm:$0x1] %v1484
      %v1487 = vld [vmem:[%s392] sm:$0x1]
      %1488 = vst [vmem:[#allocation2 + $0x64] sm:$0x1] %v1487
      %v1489 = vld [vmem:[%s392] sm:$0x3]
      %v1491 = vperm.slane %v1489, 0
      %v1492 = vperm.slane %v1489, 1
      %1493 = vrot.lane.b32.xlu0 %v1491, 127
      %v1494 = vpop.permute.xlu0 %1493
      %1495 = vrot.lane.b32.xlu0 %v1492, 127
      %v1496 = vpop.permute.xlu0 %1495
      %v1497 = vsel %vm409, %v1494, %v1496
      %1499 = vst [vmem:[#allocation2 + $0x65] sm:$0x1] %v1497
      %v1500 = vld [vmem:[%s392] sm:$0x3]
      %v1502 = vperm.slane %v1500, 0
      %v1503 = vperm.slane %v1500, 1
      %1504 = vrot.lane.b32.xlu0 %v1502, 126
      %v1505 = vpop.permute.xlu0 %1504
      %1506 = vrot.lane.b32.xlu0 %v1503, 126
      %v1507 = vpop.permute.xlu0 %1506
      %v1508 = vsel %vm421, %v1505, %v1507
      %1510 = vst [vmem:[#allocation2 + $0x66] sm:$0x1] %v1508
      %v1511 = vld [vmem:[%s392] sm:$0x3]
      %v1513 = vperm.slane %v1511, 0
      %v1514 = vperm.slane %v1511, 1
      %1515 = vrot.lane.b32.xlu0 %v1513, 125
      %v1516 = vpop.permute.xlu0 %1515
      %1517 = vrot.lane.b32.xlu0 %v1514, 125
      %v1518 = vpop.permute.xlu0 %1517
      %v1519 = vsel %vm433, %v1516, %v1518
      %1521 = vst [vmem:[#allocation2 + $0x67] sm:$0x1] %v1519
      %v1522 = vld [vmem:[%s392] sm:$0x3]
      %v1524 = vperm.slane %v1522, 0
      %v1525 = vperm.slane %v1522, 1
      %1526 = vrot.lane.b32.xlu0 %v1524, 124
      %v1527 = vpop.permute.xlu0 %1526
      %1528 = vrot.lane.b32.xlu0 %v1525, 124
      %v1529 = vpop.permute.xlu0 %1528
      %v1530 = vsel %vm445, %v1527, %v1529
      %1532 = vst [vmem:[#allocation2 + $0x68] sm:$0x1] %v1530
      %v1533 = vld [vmem:[%s392] sm:$0x3]
      %v1535 = vperm.slane %v1533, 0
      %v1536 = vperm.slane %v1533, 1
      %1537 = vrot.lane.b32.xlu0 %v1535, 116
      %v1538 = vpop.permute.xlu0 %1537
      %1539 = vrot.lane.b32.xlu0 %v1536, 116
      %v1540 = vpop.permute.xlu0 %1539
      %v1541 = vsel %vm457, %v1538, %v1540
      %1543 = vst [vmem:[#allocation2 + $0x69] sm:$0x1] %v1541
      %v1544 = vld [vmem:[%s392] sm:$0x3]
      %v1546 = vperm.slane %v1544, 0
      %v1547 = vperm.slane %v1544, 1
      %1548 = vrot.lane.b32.xlu0 %v1546, 115
      %v1549 = vpop.permute.xlu0 %1548
      %1550 = vrot.lane.b32.xlu0 %v1547, 115
      %v1551 = vpop.permute.xlu0 %1550
      %v1552 = vsel %vm469, %v1549, %v1551
      %1554 = vst [vmem:[#allocation2 + $0x6a] sm:$0x1] %v1552
      %v1555 = vld [vmem:[%s392] sm:$0x3]
      %v1557 = vperm.slane %v1555, 0
      %v1558 = vperm.slane %v1555, 1
      %1559 = vrot.lane.b32.xlu0 %v1557, 114
      %v1560 = vpop.permute.xlu0 %1559
      %1561 = vrot.lane.b32.xlu0 %v1558, 114
      %v1562 = vpop.permute.xlu0 %1561
      %v1563 = vsel %vm481, %v1560, %v1562
      %1565 = vst [vmem:[#allocation2 + $0x6b] sm:$0x1] %v1563
      %v1566 = vld [vmem:[%s392] sm:$0x3]
      %v1568 = vperm.slane %v1566, 0
      %v1569 = vperm.slane %v1566, 1
      %1570 = vrot.lane.b32.xlu0 %v1568, 113
      %v1571 = vpop.permute.xlu0 %1570
      %1572 = vrot.lane.b32.xlu0 %v1569, 113
      %v1573 = vpop.permute.xlu0 %1572
      %v1574 = vsel %vm493, %v1571, %v1573
      %1576 = vst [vmem:[#allocation2 + $0x6c] sm:$0x1] %v1574
      %v1577 = vld [vmem:[%s392] sm:$0x3]
      %v1579 = vperm.slane %v1577, 0
      %v1580 = vperm.slane %v1577, 1
      %1581 = vrot.lane.b32.xlu0 %v1579, 112
      %v1582 = vpop.permute.xlu0 %1581
      %1583 = vrot.lane.b32.xlu0 %v1580, 112
      %v1584 = vpop.permute.xlu0 %1583
      %v1585 = vsel %vm505, %v1582, %v1584
      %1587 = vst [vmem:[#allocation2 + $0x6d] sm:$0x1] %v1585
      %v1588 = vld [vmem:[%s392] sm:$0x3]
      %v1590 = vperm.slane %v1588, 0
      %v1591 = vperm.slane %v1588, 1
      %1592 = vrot.lane.b32.xlu0 %v1590, 104
      %v1593 = vpop.permute.xlu0 %1592
      %1594 = vrot.lane.b32.xlu0 %v1591, 104
      %v1595 = vpop.permute.xlu0 %1594
      %v1596 = vsel %vm517, %v1593, %v1595
      %1598 = vst [vmem:[#allocation2 + $0x6e] sm:$0x1] %v1596
      %v1599 = vld [vmem:[%s392] sm:$0x3]
      %v1601 = vperm.slane %v1599, 0
      %v1602 = vperm.slane %v1599, 1
      %1603 = vrot.lane.b32.xlu0 %v1601, 103
      %v1604 = vpop.permute.xlu0 %1603
      %1605 = vrot.lane.b32.xlu0 %v1602, 103
      %v1606 = vpop.permute.xlu0 %1605
      %v1607 = vsel %vm529, %v1604, %v1606
      %1609 = vst [vmem:[#allocation2 + $0x6f] sm:$0x1] %v1607
      %v1610 = vld [vmem:[%s392] sm:$0x3]
      %v1612 = vperm.slane %v1610, 0
      %v1613 = vperm.slane %v1610, 1
      %1614 = vrot.lane.b32.xlu0 %v1612, 102
      %v1615 = vpop.permute.xlu0 %1614
      %1616 = vrot.lane.b32.xlu0 %v1613, 102
      %v1617 = vpop.permute.xlu0 %1616
      %v1618 = vsel %vm541, %v1615, %v1617
      %1620 = vst [vmem:[#allocation2 + $0x70] sm:$0x1] %v1618
      %v1621 = vld [vmem:[%s392] sm:$0x3]
      %v1623 = vperm.slane %v1621, 0
      %v1624 = vperm.slane %v1621, 1
      %1625 = vrot.lane.b32.xlu0 %v1623, 101
      %v1626 = vpop.permute.xlu0 %1625
      %1627 = vrot.lane.b32.xlu0 %v1624, 101
      %v1628 = vpop.permute.xlu0 %1627
      %v1629 = vsel %vm553, %v1626, %v1628
      %1631 = vst [vmem:[#allocation2 + $0x71] sm:$0x1] %v1629
      %v1632 = vld [vmem:[%s392] sm:$0x3]
      %v1634 = vperm.slane %v1632, 0
      %v1635 = vperm.slane %v1632, 1
      %1636 = vrot.lane.b32.xlu0 %v1634, 100
      %v1637 = vpop.permute.xlu0 %1636
      %1638 = vrot.lane.b32.xlu0 %v1635, 100
      %v1639 = vpop.permute.xlu0 %1638
      %v1640 = vsel %vm565, %v1637, %v1639
      %1642 = vst [vmem:[#allocation2 + $0x72] sm:$0x1] %v1640
      %v1643 = vld [vmem:[%s392] sm:$0x3]
      %v1645 = vperm.slane %v1643, 0
      %v1646 = vperm.slane %v1643, 1
      %1647 = vrot.lane.b32.xlu0 %v1645, 92
      %v1648 = vpop.permute.xlu0 %1647
      %1649 = vrot.lane.b32.xlu0 %v1646, 92
      %v1650 = vpop.permute.xlu0 %1649
      %v1651 = vsel %vm577, %v1648, %v1650
      %1653 = vst [vmem:[#allocation2 + $0x73] sm:$0x1] %v1651
      %v1654 = vld [vmem:[%s392] sm:$0x3]
      %v1656 = vperm.slane %v1654, 0
      %v1657 = vperm.slane %v1654, 1
      %1658 = vrot.lane.b32.xlu0 %v1656, 91
      %v1659 = vpop.permute.xlu0 %1658
      %1660 = vrot.lane.b32.xlu0 %v1657, 91
      %v1661 = vpop.permute.xlu0 %1660
      %v1662 = vsel %vm589, %v1659, %v1661
      %1664 = vst [vmem:[#allocation2 + $0x74] sm:$0x1] %v1662
      %v1665 = vld [vmem:[%s392] sm:$0x3]
      %v1667 = vperm.slane %v1665, 0
      %v1668 = vperm.slane %v1665, 1
      %1669 = vrot.lane.b32.xlu0 %v1667, 90
      %v1670 = vpop.permute.xlu0 %1669
      %1671 = vrot.lane.b32.xlu0 %v1668, 90
      %v1672 = vpop.permute.xlu0 %1671
      %v1673 = vsel %vm601, %v1670, %v1672
      %1675 = vst [vmem:[#allocation2 + $0x75] sm:$0x1] %v1673
      %v1676 = vld [vmem:[%s392] sm:$0x3]
      %v1678 = vperm.slane %v1676, 0
      %v1679 = vperm.slane %v1676, 1
      %1680 = vrot.lane.b32.xlu0 %v1678, 89
      %v1681 = vpop.permute.xlu0 %1680
      %1682 = vrot.lane.b32.xlu0 %v1679, 89
      %v1683 = vpop.permute.xlu0 %1682
      %v1684 = vsel %vm613, %v1681, %v1683
      %1686 = vst [vmem:[#allocation2 + $0x76] sm:$0x1] %v1684
      %v1687 = vld [vmem:[%s392] sm:$0x3]
      %v1689 = vperm.slane %v1687, 0
      %v1690 = vperm.slane %v1687, 1
      %1691 = vrot.lane.b32.xlu0 %v1689, 88
      %v1692 = vpop.permute.xlu0 %1691
      %1693 = vrot.lane.b32.xlu0 %v1690, 88
      %v1694 = vpop.permute.xlu0 %1693
      %v1695 = vsel %vm625, %v1692, %v1694
      %1697 = vst [vmem:[#allocation2 + $0x77] sm:$0x1] %v1695
      %v1698 = vld [vmem:[%s392] sm:$0x3]
      %v1700 = vperm.slane %v1698, 0
      %v1701 = vperm.slane %v1698, 1
      %1702 = vrot.lane.b32.xlu0 %v1700, 80
      %v1703 = vpop.permute.xlu0 %1702
      %1704 = vrot.lane.b32.xlu0 %v1701, 80
      %v1705 = vpop.permute.xlu0 %1704
      %v1706 = vsel %vm637, %v1703, %v1705
      %1708 = vst [vmem:[#allocation2 + $0x78] sm:$0x1] %v1706
      %v1709 = vld [vmem:[%s392] sm:$0x3]
      %v1711 = vperm.slane %v1709, 0
      %v1712 = vperm.slane %v1709, 1
      %1713 = vrot.lane.b32.xlu0 %v1711, 79
      %v1714 = vpop.permute.xlu0 %1713
      %1715 = vrot.lane.b32.xlu0 %v1712, 79
      %v1716 = vpop.permute.xlu0 %1715
      %v1717 = vsel %vm649, %v1714, %v1716
      %1719 = vst [vmem:[#allocation2 + $0x79] sm:$0x1] %v1717
      %v1720 = vld [vmem:[%s392] sm:$0x3]
      %v1722 = vperm.slane %v1720, 0
      %v1723 = vperm.slane %v1720, 1
      %1724 = vrot.lane.b32.xlu0 %v1722, 78
      %v1725 = vpop.permute.xlu0 %1724
      %1726 = vrot.lane.b32.xlu0 %v1723, 78
      %v1727 = vpop.permute.xlu0 %1726
      %v1728 = vsel %vm661, %v1725, %v1727
      %1730 = vst [vmem:[#allocation2 + $0x7a] sm:$0x1] %v1728
      %v1731 = vld [vmem:[%s392] sm:$0x3]
      %v1733 = vperm.slane %v1731, 0
      %v1734 = vperm.slane %v1731, 1
      %1735 = vrot.lane.b32.xlu0 %v1733, 77
      %v1736 = vpop.permute.xlu0 %1735
      %1737 = vrot.lane.b32.xlu0 %v1734, 77
      %v1738 = vpop.permute.xlu0 %1737
      %v1739 = vsel %vm673, %v1736, %v1738
      %1741 = vst [vmem:[#allocation2 + $0x7b] sm:$0x1] %v1739
      %v1742 = vld [vmem:[%s392] sm:$0x3]
      %v1744 = vperm.slane %v1742, 0
      %v1745 = vperm.slane %v1742, 1
      %1746 = vrot.lane.b32.xlu0 %v1744, 76
      %v1747 = vpop.permute.xlu0 %1746
      %1748 = vrot.lane.b32.xlu0 %v1745, 76
      %v1749 = vpop.permute.xlu0 %1748
      %v1750 = vsel %vm685, %v1747, %v1749
      %1752 = vst [vmem:[#allocation2 + $0x7c] sm:$0x1] %v1750
      %1753 = vst [vmem:[#allocation2 + $0x7d] sm:$0x1] 1.0
      %1754 = vst [vmem:[#allocation2 + $0x7e] sm:$0x3] 0.0
      %v1755 = vld [vmem:[%s2] sm:$0xff]
      %v1756 = vld [vmem:[%s2 + $0x8] sm:$0xff]
      %v1757 = vld [vmem:[#allocation2] sm:$0xff]
      %v1758 = vld [vmem:[#allocation2 + $0x8] sm:$0xff]
      %v1759 = vld [vmem:[#allocation2 + $0x10] sm:$0xff]
      %v1760 = vld [vmem:[#allocation2 + $0x18] sm:$0xff]
      %v1761 = vld [vmem:[#allocation2 + $0x20] sm:$0xff]
      %v1762 = vld [vmem:[#allocation2 + $0x28] sm:$0xff]
      %v1763 = vld [vmem:[#allocation2 + $0x30] sm:$0xff]
      %v1764 = vld [vmem:[#allocation2 + $0x38] sm:$0xff]
      %v1765 = vld [vmem:[#allocation2 + $0x40] sm:$0xff]
      %v1766 = vld [vmem:[#allocation2 + $0x48] sm:$0xff]
      %v1767 = vld [vmem:[#allocation2 + $0x50] sm:$0xff]
      %v1768 = vld [vmem:[#allocation2 + $0x58] sm:$0xff]
      %v1769 = vld [vmem:[#allocation2 + $0x60] sm:$0xff]
      %v1770 = vld [vmem:[#allocation2 + $0x68] sm:$0xff]
      %v1771 = vld [vmem:[#allocation2 + $0x70] sm:$0xff]
      %v1772 = vld [vmem:[#allocation2 + $0x78] sm:$0xff]
      %v1773 = vand.u32 %v1772, 4294901760
      %1774 = vmatpush.msra.mxu0 %v1773
      %v1775 = vand.u32 %v1771, 4294901760
      %1776 = vmatpush.msra.mxu0 %v1775
      %v1777 = vand.u32 %v1770, 4294901760
      %1778 = vmatpush.msra.mxu0 %v1777
      %v1779 = vand.u32 %v1769, 4294901760
      %1780 = vmatpush.msra.mxu0 %v1779
      %v1781 = vand.u32 %v1768, 4294901760
      %1782 = vmatpush.msra.mxu0 %v1781
      %v1783 = vand.u32 %v1767, 4294901760
      %1784 = vmatpush.msra.mxu0 %v1783
      %v1785 = vand.u32 %v1766, 4294901760
      %1786 = vmatpush.msra.mxu0 %v1785
      %v1787 = vand.u32 %v1765, 4294901760
      %1788 = vmatpush.msra.mxu0 %v1787
      %v1789 = vand.u32 %v1764, 4294901760
      %1790 = vmatpush.msra.mxu0 %v1789
      %v1791 = vand.u32 %v1763, 4294901760
      %1792 = vmatpush.msra.mxu0 %v1791
      %v1793 = vand.u32 %v1762, 4294901760
      %1794 = vmatpush.msra.mxu0 %v1793
      %v1795 = vand.u32 %v1761, 4294901760
      %1796 = vmatpush.msra.mxu0 %v1795
      %v1797 = vand.u32 %v1760, 4294901760
      %1798 = vmatpush.msra.mxu0 %v1797
      %v1799 = vand.u32 %v1759, 4294901760
      %1800 = vmatpush.msra.mxu0 %v1799
      %v1801 = vand.u32 %v1758, 4294901760
      %1802 = vmatpush.msra.mxu0 %v1801
      %v1803 = vand.u32 %v1757, 4294901760
      %1804 = vmatpush.msra.mxu0 %v1803
      %v1805 = vand.u32 %v1755, 4294901760
      %v1806 = vsub.f32 %v1755, %v1805
      %v1807 = vand.u32 %v1806, 4294901760
      %v1808 = vsub.f32 %v1806, %v1807
      %v1809 = vand.u32 %v1808, 4294901760
      %1810 = vmatmul.f32.gmra.mxu0 %v1809
      %v1811 = vpop.f32.mrf.mxu0
      %v1812 = vadd.f32 0.0, %v1811
      %v1813 = vand.u32 %v1756, 4294901760
      %v1814 = vsub.f32 %v1756, %v1813
      %v1815 = vand.u32 %v1814, 4294901760
      %v1816 = vsub.f32 %v1814, %v1815
      %v1817 = vand.u32 %v1816, 4294901760
      %1818 = vmatmul.f32.gmra.mxu0 %v1817
      %v1819 = vpop.f32.mrf.mxu0
      %v1820 = vadd.f32 0.0, %v1819
      %1821 = vdwg.mxu0
      %v1822 = vand.u32 %v1772, 4294901760
      %v1823 = vsub.f32 %v1772, %v1822
      %v1824 = vand.u32 %v1823, 4294901760
      %v1825 = vsub.f32 %v1823, %v1824
      %v1826 = vand.u32 %v1825, 4294901760
      %1827 = vmatpush.msra.mxu0 %v1826
      %v1828 = vand.u32 %v1771, 4294901760
      %v1829 = vsub.f32 %v1771, %v1828
      %v1830 = vand.u32 %v1829, 4294901760
      %v1831 = vsub.f32 %v1829, %v1830
      %v1832 = vand.u32 %v1831, 4294901760
      %1833 = vmatpush.msra.mxu0 %v1832
      %v1834 = vand.u32 %v1770, 4294901760
      %v1835 = vsub.f32 %v1770, %v1834
      %v1836 = vand.u32 %v1835, 4294901760
      %v1837 = vsub.f32 %v1835, %v1836
      %v1838 = vand.u32 %v1837, 4294901760
      %1839 = vmatpush.msra.mxu0 %v1838
      %v1840 = vand.u32 %v1769, 4294901760
      %v1841 = vsub.f32 %v1769, %v1840
      %v1842 = vand.u32 %v1841, 4294901760
      %v1843 = vsub.f32 %v1841, %v1842
      %v1844 = vand.u32 %v1843, 4294901760
      %1845 = vmatpush.msra.mxu0 %v1844
      %v1846 = vand.u32 %v1768, 4294901760
      %v1847 = vsub.f32 %v1768, %v1846
      %v1848 = vand.u32 %v1847, 4294901760
      %v1849 = vsub.f32 %v1847, %v1848
      %v1850 = vand.u32 %v1849, 4294901760
      %1851 = vmatpush.msra.mxu0 %v1850
      %v1852 = vand.u32 %v1767, 4294901760
      %v1853 = vsub.f32 %v1767, %v1852
      %v1854 = vand.u32 %v1853, 4294901760
      %v1855 = vsub.f32 %v1853, %v1854
      %v1856 = vand.u32 %v1855, 4294901760
      %1857 = vmatpush.msra.mxu0 %v1856
      %v1858 = vand.u32 %v1766, 4294901760
      %v1859 = vsub.f32 %v1766, %v1858
      %v1860 = vand.u32 %v1859, 4294901760
      %v1861 = vsub.f32 %v1859, %v1860
      %v1862 = vand.u32 %v1861, 4294901760
      %1863 = vmatpush.msra.mxu0 %v1862
      %v1864 = vand.u32 %v1765, 4294901760
      %v1865 = vsub.f32 %v1765, %v1864
      %v1866 = vand.u32 %v1865, 4294901760
      %v1867 = vsub.f32 %v1865, %v1866
      %v1868 = vand.u32 %v1867, 4294901760
      %1869 = vmatpush.msra.mxu0 %v1868
      %v1870 = vand.u32 %v1764, 4294901760
      %v1871 = vsub.f32 %v1764, %v1870
      %v1872 = vand.u32 %v1871, 4294901760
      %v1873 = vsub.f32 %v1871, %v1872
      %v1874 = vand.u32 %v1873, 4294901760
      %1875 = vmatpush.msra.mxu0 %v1874
      %v1876 = vand.u32 %v1763, 4294901760
      %v1877 = vsub.f32 %v1763, %v1876
      %v1878 = vand.u32 %v1877, 4294901760
      %v1879 = vsub.f32 %v1877, %v1878
      %v1880 = vand.u32 %v1879, 4294901760
      %1881 = vmatpush.msra.mxu0 %v1880
      %v1882 = vand.u32 %v1762, 4294901760
      %v1883 = vsub.f32 %v1762, %v1882
      %v1884 = vand.u32 %v1883, 4294901760
      %v1885 = vsub.f32 %v1883, %v1884
      %v1886 = vand.u32 %v1885, 4294901760
      %1887 = vmatpush.msra.mxu0 %v1886
      %v1888 = vand.u32 %v1761, 4294901760
      %v1889 = vsub.f32 %v1761, %v1888
      %v1890 = vand.u32 %v1889, 4294901760
      %v1891 = vsub.f32 %v1889, %v1890
      %v1892 = vand.u32 %v1891, 4294901760
      %1893 = vmatpush.msra.mxu0 %v1892
      %v1894 = vand.u32 %v1760, 4294901760
      %v1895 = vsub.f32 %v1760, %v1894
      %v1896 = vand.u32 %v1895, 4294901760
      %v1897 = vsub.f32 %v1895, %v1896
      %v1898 = vand.u32 %v1897, 4294901760
      %1899 = vmatpush.msra.mxu0 %v1898
      %v1900 = vand.u32 %v1759, 4294901760
      %v1901 = vsub.f32 %v1759, %v1900
      %v1902 = vand.u32 %v1901, 4294901760
      %v1903 = vsub.f32 %v1901, %v1902
      %v1904 = vand.u32 %v1903, 4294901760
      %1905 = vmatpush.msra.mxu0 %v1904
      %v1906 = vand.u32 %v1758, 4294901760
      %v1907 = vsub.f32 %v1758, %v1906
      %v1908 = vand.u32 %v1907, 4294901760
      %v1909 = vsub.f32 %v1907, %v1908
      %v1910 = vand.u32 %v1909, 4294901760
      %1911 = vmatpush.msra.mxu0 %v1910
      %v1912 = vand.u32 %v1757, 4294901760
      %v1913 = vsub.f32 %v1757, %v1912
      %v1914 = vand.u32 %v1913, 4294901760
      %v1915 = vsub.f32 %v1913, %v1914
      %v1916 = vand.u32 %v1915, 4294901760
      %1917 = vmatpush.msra.mxu0 %v1916
      %v1918 = vand.u32 %v1755, 4294901760
      %1919 = vmatmul.f32.gmra.mxu0 %v1918
      %v1920 = vpop.f32.mrf.mxu0
      %v1921 = vadd.f32 %v1812, %v1920
      %v1922 = vand.u32 %v1756, 4294901760
      %1923 = vmatmul.f32.gmra.mxu0 %v1922
      %v1924 = vpop.f32.mrf.mxu0
      %v1925 = vadd.f32 %v1820, %v1924
      %1926 = vdwg.mxu0
      %v1927 = vand.u32 %v1772, 4294901760
      %v1928 = vsub.f32 %v1772, %v1927
      %1929 = vmatpush.msra.mxu0 %v1928
      %v1930 = vand.u32 %v1771, 4294901760
      %v1931 = vsub.f32 %v1771, %v1930
      %1932 = vmatpush.msra.mxu0 %v1931
      %v1933 = vand.u32 %v1770, 4294901760
      %v1934 = vsub.f32 %v1770, %v1933
      %1935 = vmatpush.msra.mxu0 %v1934
      %v1936 = vand.u32 %v1769, 4294901760
      %v1937 = vsub.f32 %v1769, %v1936
      %1938 = vmatpush.msra.mxu0 %v1937
      %v1939 = vand.u32 %v1768, 4294901760
      %v1940 = vsub.f32 %v1768, %v1939
      %1941 = vmatpush.msra.mxu0 %v1940
      %v1942 = vand.u32 %v1767, 4294901760
      %v1943 = vsub.f32 %v1767, %v1942
      %1944 = vmatpush.msra.mxu0 %v1943
      %v1945 = vand.u32 %v1766, 4294901760
      %v1946 = vsub.f32 %v1766, %v1945
      %1947 = vmatpush.msra.mxu0 %v1946
      %v1948 = vand.u32 %v1765, 4294901760
      %v1949 = vsub.f32 %v1765, %v1948
      %1950 = vmatpush.msra.mxu0 %v1949
      %v1951 = vand.u32 %v1764, 4294901760
      %v1952 = vsub.f32 %v1764, %v1951
      %1953 = vmatpush.msra.mxu0 %v1952
      %v1954 = vand.u32 %v1763, 4294901760
      %v1955 = vsub.f32 %v1763, %v1954
      %1956 = vmatpush.msra.mxu0 %v1955
      %v1957 = vand.u32 %v1762, 4294901760
      %v1958 = vsub.f32 %v1762, %v1957
      %1959 = vmatpush.msra.mxu0 %v1958
      %v1960 = vand.u32 %v1761, 4294901760
      %v1961 = vsub.f32 %v1761, %v1960
      %1962 = vmatpush.msra.mxu0 %v1961
      %v1963 = vand.u32 %v1760, 4294901760
      %v1964 = vsub.f32 %v1760, %v1963
      %1965 = vmatpush.msra.mxu0 %v1964
      %v1966 = vand.u32 %v1759, 4294901760
      %v1967 = vsub.f32 %v1759, %v1966
      %1968 = vmatpush.msra.mxu0 %v1967
      %v1969 = vand.u32 %v1758, 4294901760
      %v1970 = vsub.f32 %v1758, %v1969
      %1971 = vmatpush.msra.mxu0 %v1970
      %v1972 = vand.u32 %v1757, 4294901760
      %v1973 = vsub.f32 %v1757, %v1972
      %1974 = vmatpush.msra.mxu0 %v1973
      %v1975 = vand.u32 %v1755, 4294901760
      %v1976 = vsub.f32 %v1755, %v1975
      %1977 = vmatmul.f32.gmra.mxu0 %v1976
      %v1978 = vpop.f32.mrf.mxu0
      %v1979 = vadd.f32 %v1921, %v1978
      %v1980 = vand.u32 %v1756, 4294901760
      %v1981 = vsub.f32 %v1756, %v1980
      %1982 = vmatmul.f32.gmra.mxu0 %v1981
      %v1983 = vpop.f32.mrf.mxu0
      %v1984 = vadd.f32 %v1925, %v1983
      %1985 = vdwg.mxu0
      %v1986 = vand.u32 %v1772, 4294901760
      %1987 = vmatpush.msra.mxu0 %v1986
      %v1988 = vand.u32 %v1771, 4294901760
      %1989 = vmatpush.msra.mxu0 %v1988
      %v1990 = vand.u32 %v1770, 4294901760
      %1991 = vmatpush.msra.mxu0 %v1990
      %v1992 = vand.u32 %v1769, 4294901760
      %1993 = vmatpush.msra.mxu0 %v1992
      %v1994 = vand.u32 %v1768, 4294901760
      %1995 = vmatpush.msra.mxu0 %v1994
      %v1996 = vand.u32 %v1767, 4294901760
      %1997 = vmatpush.msra.mxu0 %v1996
      %v1998 = vand.u32 %v1766, 4294901760
      %1999 = vmatpush.msra.mxu0 %v1998
      %v2000 = vand.u32 %v1765, 4294901760
      %2001 = vmatpush.msra.mxu0 %v2000
      %v2002 = vand.u32 %v1764, 4294901760
      %2003 = vmatpush.msra.mxu0 %v2002
      %v2004 = vand.u32 %v1763, 4294901760
      %2005 = vmatpush.msra.mxu0 %v2004
      %v2006 = vand.u32 %v1762, 4294901760
      %2007 = vmatpush.msra.mxu0 %v2006
      %v2008 = vand.u32 %v1761, 4294901760
      %2009 = vmatpush.msra.mxu0 %v2008
      %v2010 = vand.u32 %v1760, 4294901760
      %2011 = vmatpush.msra.mxu0 %v2010
      %v2012 = vand.u32 %v1759, 4294901760
      %2013 = vmatpush.msra.mxu0 %v2012
      %v2014 = vand.u32 %v1758, 4294901760
      %2015 = vmatpush.msra.mxu0 %v2014
      %v2016 = vand.u32 %v1757, 4294901760
      %2017 = vmatpush.msra.mxu0 %v2016
      %v2018 = vand.u32 %v1755, 4294901760
      %v2019 = vsub.f32 %v1755, %v2018
      %v2020 = vand.u32 %v2019, 4294901760
      %2021 = vmatmul.f32.gmra.mxu0 %v2020
      %v2022 = vpop.f32.mrf.mxu0
      %v2023 = vadd.f32 %v1979, %v2022
      %v2024 = vand.u32 %v1756, 4294901760
      %v2025 = vsub.f32 %v1756, %v2024
      %v2026 = vand.u32 %v2025, 4294901760
      %2027 = vmatmul.f32.gmra.mxu0 %v2026
      %v2028 = vpop.f32.mrf.mxu0
      %v2029 = vadd.f32 %v1984, %v2028
      %2030 = vdwg.mxu0
      %v2031 = vand.u32 %v1772, 4294901760
      %v2032 = vsub.f32 %v1772, %v2031
      %v2033 = vand.u32 %v2032, 4294901760
      %2034 = vmatpush.msra.mxu0 %v2033
      %v2035 = vand.u32 %v1771, 4294901760
      %v2036 = vsub.f32 %v1771, %v2035
      %v2037 = vand.u32 %v2036, 4294901760
      %2038 = vmatpush.msra.mxu0 %v2037
      %v2039 = vand.u32 %v1770, 4294901760
      %v2040 = vsub.f32 %v1770, %v2039
      %v2041 = vand.u32 %v2040, 4294901760
      %2042 = vmatpush.msra.mxu0 %v2041
      %v2043 = vand.u32 %v1769, 4294901760
      %v2044 = vsub.f32 %v1769, %v2043
      %v2045 = vand.u32 %v2044, 4294901760
      %2046 = vmatpush.msra.mxu0 %v2045
      %v2047 = vand.u32 %v1768, 4294901760
      %v2048 = vsub.f32 %v1768, %v2047
      %v2049 = vand.u32 %v2048, 4294901760
      %2050 = vmatpush.msra.mxu0 %v2049
      %v2051 = vand.u32 %v1767, 4294901760
      %v2052 = vsub.f32 %v1767, %v2051
      %v2053 = vand.u32 %v2052, 4294901760
      %2054 = vmatpush.msra.mxu0 %v2053
      %v2055 = vand.u32 %v1766, 4294901760
      %v2056 = vsub.f32 %v1766, %v2055
      %v2057 = vand.u32 %v2056, 4294901760
      %2058 = vmatpush.msra.mxu0 %v2057
      %v2059 = vand.u32 %v1765, 4294901760
      %v2060 = vsub.f32 %v1765, %v2059
      %v2061 = vand.u32 %v2060, 4294901760
      %2062 = vmatpush.msra.mxu0 %v2061
      %v2063 = vand.u32 %v1764, 4294901760
      %v2064 = vsub.f32 %v1764, %v2063
      %v2065 = vand.u32 %v2064, 4294901760
      %2066 = vmatpush.msra.mxu0 %v2065
      %v2067 = vand.u32 %v1763, 4294901760
      %v2068 = vsub.f32 %v1763, %v2067
      %v2069 = vand.u32 %v2068, 4294901760
      %2070 = vmatpush.msra.mxu0 %v2069
      %v2071 = vand.u32 %v1762, 4294901760
      %v2072 = vsub.f32 %v1762, %v2071
      %v2073 = vand.u32 %v2072, 4294901760
      %2074 = vmatpush.msra.mxu0 %v2073
      %v2075 = vand.u32 %v1761, 4294901760
      %v2076 = vsub.f32 %v1761, %v2075
      %v2077 = vand.u32 %v2076, 4294901760
      %2078 = vmatpush.msra.mxu0 %v2077
      %v2079 = vand.u32 %v1760, 4294901760
      %v2080 = vsub.f32 %v1760, %v2079
      %v2081 = vand.u32 %v2080, 4294901760
      %2082 = vmatpush.msra.mxu0 %v2081
      %v2083 = vand.u32 %v1759, 4294901760
      %v2084 = vsub.f32 %v1759, %v2083
      %v2085 = vand.u32 %v2084, 4294901760
      %2086 = vmatpush.msra.mxu0 %v2085
      %v2087 = vand.u32 %v1758, 4294901760
      %v2088 = vsub.f32 %v1758, %v2087
      %v2089 = vand.u32 %v2088, 4294901760
      %2090 = vmatpush.msra.mxu0 %v2089
      %v2091 = vand.u32 %v1757, 4294901760
      %v2092 = vsub.f32 %v1757, %v2091
      %v2093 = vand.u32 %v2092, 4294901760
      %2094 = vmatpush.msra.mxu0 %v2093
      %v2095 = vand.u32 %v1755, 4294901760
      %2096 = vmatmul.f32.gmra.mxu0 %v2095
      %v2097 = vpop.f32.mrf.mxu0
      %v2098 = vadd.f32 %v2023, %v2097
      %v2099 = vand.u32 %v1756, 4294901760
      %2100 = vmatmul.f32.gmra.mxu0 %v2099
      %v2101 = vpop.f32.mrf.mxu0
      %v2102 = vadd.f32 %v2029, %v2101
      %2103 = vdwg.mxu0
      %v2104 = vand.u32 %v1772, 4294901760
      %2105 = vmatpush.msra.mxu0 %v2104
      %v2106 = vand.u32 %v1771, 4294901760
      %2107 = vmatpush.msra.mxu0 %v2106
      %v2108 = vand.u32 %v1770, 4294901760
      %2109 = vmatpush.msra.mxu0 %v2108
      %v2110 = vand.u32 %v1769, 4294901760
      %2111 = vmatpush.msra.mxu0 %v2110
      %v2112 = vand.u32 %v1768, 4294901760
      %2113 = vmatpush.msra.mxu0 %v2112
      %v2114 = vand.u32 %v1767, 4294901760
      %2115 = vmatpush.msra.mxu0 %v2114
      %v2116 = vand.u32 %v1766, 4294901760
      %2117 = vmatpush.msra.mxu0 %v2116
      %v2118 = vand.u32 %v1765, 4294901760
      %2119 = vmatpush.msra.mxu0 %v2118
      %v2120 = vand.u32 %v1764, 4294901760
      %2121 = vmatpush.msra.mxu0 %v2120
      %v2122 = vand.u32 %v1763, 4294901760
      %2123 = vmatpush.msra.mxu0 %v2122
      %v2124 = vand.u32 %v1762, 4294901760
      %2125 = vmatpush.msra.mxu0 %v2124
      %v2126 = vand.u32 %v1761, 4294901760
      %2127 = vmatpush.msra.mxu0 %v2126
      %v2128 = vand.u32 %v1760, 4294901760
      %2129 = vmatpush.msra.mxu0 %v2128
      %v2130 = vand.u32 %v1759, 4294901760
      %2131 = vmatpush.msra.mxu0 %v2130
      %v2132 = vand.u32 %v1758, 4294901760
      %2133 = vmatpush.msra.mxu0 %v2132
      %v2134 = vand.u32 %v1757, 4294901760
      %2135 = vmatpush.msra.mxu0 %v2134
      %v2136 = vand.u32 %v1755, 4294901760
      %2137 = vmatmul.f32.gmra.mxu0 %v2136
      %v2138 = vpop.f32.mrf.mxu0
      %v2139 = vadd.f32 %v2098, %v2138
      %v2140 = vand.u32 %v1756, 4294901760
      %2141 = vmatmul.f32.gmra.mxu0 %v2140
      %v2142 = vpop.f32.mrf.mxu0
      %v2143 = vadd.f32 %v2102, %v2142
      %2144 = vdwg.mxu0
      %v2145 = vld [vmem:[%s0] sm:$0xff]
      %v2146 = vld [vmem:[%s0 + $0x8] sm:$0xff]
      %2148 = vset.pattern.permute.xlu0 0
      %2149 = vperm.xlu0 %2148, %v2145
      %v2150 = vpop.permute.xlu0 %2149
      %2153 = vset.pattern.permute.xlu0 0
      %2154 = vperm.xlu0 %2153, %v2146
      %v2155 = vpop.permute.xlu0 %2154
      %v2157 = vmul.f32 %v2139, %v2150
      %v2158 = vmul.f32 %v2143, %v2155
      %v2159 = vld [vmem:[%s1] sm:$0xff]
      %v2160 = vld [vmem:[%s1 + $0x8] sm:$0xff]
      %2162 = vset.pattern.permute.xlu0 0
      %2163 = vperm.xlu0 %2162, %v2159
      %v2164 = vpop.permute.xlu0 %2163
      %2167 = vset.pattern.permute.xlu0 0
      %2168 = vperm.xlu0 %2167, %v2160
      %v2169 = vpop.permute.xlu0 %2168
      %v2171 = vadd.f32 %v2157, %v2164
      %v2172 = vadd.f32 %v2158, %v2169
      %v2173 = vld [vmem:[#allocation2 + $0x3e] sm:$0x1]
      %v2174 = vperm.slane %v2173, 0
      %v2175 = vadd.f32 %v2171, %v2174
      %v2176 = vadd.f32 %v2172, %v2174
      %vm2177 = vcmp.gt.f32.partialorder %v2175, 0.0
      %vm2178 = vcmp.gt.f32.partialorder %v2176, 0.0
      %v2179 = vmin.f32 %v2175, 0.0
      %v2180 = vmin.f32 %v2176, 0.0
      %v2181 = vmul.f32 %v2179, 1.442695
      %v2182 = vpow.pop %v2181
      %v2183 = vmul.f32 %v2180, 1.442695
      %v2184 = vpow.pop %v2183
      %v2185 = vsub.f32 %v2182, 1.0
      %v2186 = vsub.f32 %v2184, 1.0
      %v2187 = vsel %vm2177, %v2175, %v2185
      %v2188 = vsel %vm2178, %v2176, %v2186
      %2189 = vst [vmem:[%s398] sm:$0xff] %v2187
      %2190 = vst [vmem:[%s398 + $0x8] sm:$0xff] %v2188
      %p2191 = scmp.lt.s32.totalorder %s19, 7
      %s2192 = scalar_select %p2191, %s19, 7
      %s2193 = smul.addr %s2192, 2
      %s2194 = smul.addr %s2193, 8
      %s2195 = scalar_lea.vmem %s8, %s2194
      // Predicated region
      $region53: #{step1_forward.3} parent=51 // pred_check
        %p2196 = pneg %p238
      $region54: #{step1_forward.3} parent=51 // pred_check_branch
        %2198 = sbr.rel (%p2196) target = $region56
      $region55: #{step1_forward.3} parent=51 // pred_region
        _
      $region56: #{step1_forward.3} parent=51 // pred_fallthru
        _
    $region52: #{step1_forward.3} parent=5 // pred_fallthru
      _
    %p2199 = scmp.le.s32.totalorder 2, %s14
    // Predicated region
    $region57: #{step1_forward.3} parent=5 // pred_check
      %p2200 = pneg %p2199
    $region58: #{step1_forward.3} parent=5 // pred_check_branch
      %2202 = sbr.rel (%p2200) target = $region60
    $region59: #{step1_forward.3} parent=5 // pred_region
      %s2203 = ssub.s32 %s14, 2
      // Predicated region
      $region61: #{step1_forward.3} parent=59 // pred_check
        %p2204 = pneg %p244
      $region62: #{step1_forward.3} parent=59 // pred_check_branch
        %2206 = sbr.rel (%p2204) target = $region64
      $region63: #{step1_forward.3} parent=59 // pred_region
        %p2207 = scmp.lt.s32.totalorder %s20, 7
        %s2208 = scalar_select %p2207, %s20, 7
        %s2209 = smul.addr %s2208, 2
        %s2210 = smul.addr %s2209, 8
        %s2211 = scalar_lea.vmem %s8, %s2210
      $region64: #{step1_forward.3} parent=59 // pred_fallthru
        _
    $region60: #{step1_forward.3} parent=5 // pred_fallthru
      _
  $region6: #{step1_forward.3} parent=0 // loop_footer
    %s18 = sadd.s32 1, %s14
  $region7: #{step1_forward.3} parent=0 // loop_footer_branch
    %13 = sbr.rel target = $region3
  $region8: #{step1_forward.3} parent=0 // loop_exit
    _

// kernel: step1_forward.2
$region0: #{step1_forward.2}
  #allocation0 [shape = 'u32[]', space=smem, size = 0x4, offset = 0x4, fixed_abs, tag = 'smem constant byte address 0x4 - core index']
  #allocation1 [shape = 'u32[72,128]{1,0:T(1,128)}', space=vmem, size = 0x9000, scoped, tag = 'internal scratch']
  #allocation2 [shape = 'f32[128,128]{1,0:T(8,128)}', space=vmem, size = 0x10000, scoped, tag = 'scratch operand']
  %s0 = inlined_call_operand.vmem [shape: f32[1,128], index: 0, kind: input, shape index: {}]
  %s1 = inlined_call_operand.vmem [shape: f32[16,128], index: 1, kind: input, shape index: {}]
  %s2 = inlined_call_operand.vmem [shape: f32[12,1,256], index: 2, kind: input, shape index: {}, may-alias: {2,3,4,5,6}]
  %s3 = inlined_call_operand.vmem [shape: f32[12,1,256], index: 3, kind: input, shape index: {}, may-alias: {2,3,4,5,6}]
  %s4 = inlined_call_operand.vmem [shape: f32[12,1,256], index: 4, kind: input, shape index: {}, may-alias: {2,3,4,5,6}]
  %s5 = inlined_call_operand.vmem [shape: f32[12,1,256], index: 5, kind: input, shape index: {}, may-alias: {2,3,4,5,6}]
  %s6 = inlined_call_operand.vmem [shape: f32[12,1,256], index: 6, kind: input, shape index: {}, may-alias: {2,3,4,5,6}]
  %s7 = inlined_call_operand.vmem [shape: f32[16,1], index: 7, kind: output, shape index: {0}]
  %s8 = inlined_call_operand.vmem [shape: f32[16,1], index: 8, kind: output, shape index: {1}]
  %9 = xla_tuple %s7, %s8
  %s10 = sld [smem:[#allocation0]]
  $region73: #{step1_forward.2} parent=0
    _
  %s12 = ssub.s32 1, %s10
  %s13 = scalar_select 0, %s12, %s10
  loop: start=0, step=1, limit=10
  $region2: #{step1_forward.2} parent=0 // loop_pre_header
    _
  $region3: #{step1_forward.2} parent=0 // loop_header
    %s15 = sphi 0, %s19
    %p16 = scmp.ge.s32.totalorder %s15, 10
    %s23 = sphi 0, %s23
    %s25 = sphi 0, %s23
    %s26 = sphi 0, %s25
    %s40 = sphi 0, %s26
    %s44 = sphi 0, %s44
    %s46 = sphi 0, %s44
    %s47 = sphi 0, %s46
    %s61 = sphi 0, %s47
    %s67 = sphi 0, %s69
    %s70 = sphi 0, %s67
    %s71 = sphi 0, %s70
    %s87 = sphi 0, %s71
    %s95 = sphi 0, %s97
    %s98 = sphi 0, %s95
    %s99 = sphi 0, %s98
    %s115 = sphi 0, %s99
    %s123 = sphi 0, %s125
    %s126 = sphi 0, %s123
    %s127 = sphi 0, %s126
    %s143 = sphi 0, %s127
    %s151 = sphi 0, %s153
    %s154 = sphi 0, %s151
    %s155 = sphi 0, %s154
    %s171 = sphi 0, %s155
    %s179 = sphi 0, %s181
    %s182 = sphi 0, %s179
    %s183 = sphi 0, %s182
    %s199 = sphi 0, %s183
    %s203 = sphi 0, %s203
    %s205 = sphi 0, %s203
    %s206 = sphi 0, %s205
    %s220 = sphi 0, %s206
    %s224 = sphi 0, %s224
    %s226 = sphi 0, %s224
    %s227 = sphi 0, %s226
    %s241 = sphi 0, %s227
  $region4: #{step1_forward.2} parent=0 // loop_header_branch
    %18 = sbr.rel (%p16) target = $region8
  $region5: #{step1_forward.2} parent=0 // loop_body
    %s20 = ssub.s32 %s15, 1
    %s21 = ssub.s32 %s15, 2
    %s22 = sadd.s32 %s15, 1
    %s24 = sadd.s32 %s23, 1
    %p27 = scmp.eq.s32.totalorder %s15, 7
    %p28 = scmp.ne.s32.totalorder %s23, %s25
    %p29 = scmp.eq.s32.totalorder %s15, 0
    %p30 = por %p28, %p29
    %p31 = scmp.ne.s32.totalorder %s23, %s25
    %p32 = scmp.eq.s32.totalorder %s20, 7
    %p33 = por %p31, %p32
    %p34 = scmp.ne.s32.totalorder %s25, %s26
    %p35 = scmp.eq.s32.totalorder %s20, 0
    %p36 = por %p34, %p35
    %p37 = scmp.ne.s32.totalorder %s25, %s26
    %p38 = scmp.eq.s32.totalorder %s21, 7
    %p39 = por %p37, %p38
    %p41 = scmp.ne.s32.totalorder %s26, %s40
    %p42 = scmp.eq.s32.totalorder %s21, 0
    %p43 = por %p41, %p42
    %s45 = sadd.s32 %s44, 1
    %p48 = scmp.eq.s32.totalorder %s15, 7
    %p49 = scmp.ne.s32.totalorder %s44, %s46
    %p50 = scmp.eq.s32.totalorder %s15, 0
    %p51 = por %p49, %p50
    %p52 = scmp.ne.s32.totalorder %s44, %s46
    %p53 = scmp.eq.s32.totalorder %s20, 7
    %p54 = por %p52, %p53
    %p55 = scmp.ne.s32.totalorder %s46, %s47
    %p56 = scmp.eq.s32.totalorder %s20, 0
    %p57 = por %p55, %p56
    %p58 = scmp.ne.s32.totalorder %s46, %s47
    %p59 = scmp.eq.s32.totalorder %s21, 7
    %p60 = por %p58, %p59
    %p62 = scmp.ne.s32.totalorder %s47, %s61
    %p63 = scmp.eq.s32.totalorder %s21, 0
    %p64 = por %p62, %p63
    %s65 = ssub.s32 %s15, %s22
    %p66 = scmp.eq.s32.totalorder %s65, 0
    %s68 = sadd.s32 %s67, 1
    %s69 = scalar_select %p66, %s67, %s68
    %p72 = pneg %p66
    %p73 = scmp.eq.s32.totalorder %s15, 7
    %p74 = por %p72, %p73
    %p75 = scmp.ne.s32.totalorder %s67, %s70
    %p76 = scmp.eq.s32.totalorder %s15, 0
    %p77 = por %p75, %p76
    %p78 = scmp.ne.s32.totalorder %s67, %s70
    %p79 = scmp.eq.s32.totalorder %s20, 7
    %p80 = por %p78, %p79
    %p81 = scmp.ne.s32.totalorder %s70, %s71
    %p82 = scmp.eq.s32.totalorder %s20, 0
    %p83 = por %p81, %p82
    %p84 = scmp.ne.s32.totalorder %s70, %s71
    %p85 = scmp.eq.s32.totalorder %s21, 7
    %p86 = por %p84, %p85
    %p88 = scmp.ne.s32.totalorder %s71, %s87
    %p89 = scmp.eq.s32.totalorder %s21, 0
    %p90 = por %p88, %p89
    %s91 = sadd.s32 %s15, 1
    %s92 = sadd.s32 %s22, 1
    %s93 = ssub.s32 %s91, %s92
    %p94 = scmp.eq.s32.totalorder %s93, 0
    %s96 = sadd.s32 %s95, 1
    %s97 = scalar_select %p94, %s95, %s96
    %p100 = pneg %p94
    %p101 = scmp.eq.s32.totalorder %s15, 7
    %p102 = por %p100, %p101
    %p103 = scmp.ne.s32.totalorder %s95, %s98
    %p104 = scmp.eq.s32.totalorder %s15, 0
    %p105 = por %p103, %p104
    %p106 = scmp.ne.s32.totalorder %s95, %s98
    %p107 = scmp.eq.s32.totalorder %s20, 7
    %p108 = por %p106, %p107
    %p109 = scmp.ne.s32.totalorder %s98, %s99
    %p110 = scmp.eq.s32.totalorder %s20, 0
    %p111 = por %p109, %p110
    %p112 = scmp.ne.s32.totalorder %s98, %s99
    %p113 = scmp.eq.s32.totalorder %s21, 7
    %p114 = por %p112, %p113
    %p116 = scmp.ne.s32.totalorder %s99, %s115
    %p117 = scmp.eq.s32.totalorder %s21, 0
    %p118 = por %p116, %p117
    %s119 = sadd.s32 %s15, 2
    %s120 = sadd.s32 %s22, 2
    %s121 = ssub.s32 %s119, %s120
    %p122 = scmp.eq.s32.totalorder %s121, 0
    %s124 = sadd.s32 %s123, 1
    %s125 = scalar_select %p122, %s123, %s124
    %p128 = pneg %p122
    %p129 = scmp.eq.s32.totalorder %s15, 7
    %p130 = por %p128, %p129
    %p131 = scmp.ne.s32.totalorder %s123, %s126
    %p132 = scmp.eq.s32.totalorder %s15, 0
    %p133 = por %p131, %p132
    %p134 = scmp.ne.s32.totalorder %s123, %s126
    %p135 = scmp.eq.s32.totalorder %s20, 7
    %p136 = por %p134, %p135
    %p137 = scmp.ne.s32.totalorder %s126, %s127
    %p138 = scmp.eq.s32.totalorder %s20, 0
    %p139 = por %p137, %p138
    %p140 = scmp.ne.s32.totalorder %s126, %s127
    %p141 = scmp.eq.s32.totalorder %s21, 7
    %p142 = por %p140, %p141
    %p144 = scmp.ne.s32.totalorder %s127, %s143
    %p145 = scmp.eq.s32.totalorder %s21, 0
    %p146 = por %p144, %p145
    %s147 = sadd.s32 %s15, 3
    %s148 = sadd.s32 %s22, 3
    %s149 = ssub.s32 %s147, %s148
    %p150 = scmp.eq.s32.totalorder %s149, 0
    %s152 = sadd.s32 %s151, 1
    %s153 = scalar_select %p150, %s151, %s152
    %p156 = pneg %p150
    %p157 = scmp.eq.s32.totalorder %s15, 7
    %p158 = por %p156, %p157
    %p159 = scmp.ne.s32.totalorder %s151, %s154
    %p160 = scmp.eq.s32.totalorder %s15, 0
    %p161 = por %p159, %p160
    %p162 = scmp.ne.s32.totalorder %s151, %s154
    %p163 = scmp.eq.s32.totalorder %s20, 7
    %p164 = por %p162, %p163
    %p165 = scmp.ne.s32.totalorder %s154, %s155
    %p166 = scmp.eq.s32.totalorder %s20, 0
    %p167 = por %p165, %p166
    %p168 = scmp.ne.s32.totalorder %s154, %s155
    %p169 = scmp.eq.s32.totalorder %s21, 7
    %p170 = por %p168, %p169
    %p172 = scmp.ne.s32.totalorder %s155, %s171
    %p173 = scmp.eq.s32.totalorder %s21, 0
    %p174 = por %p172, %p173
    %s175 = sadd.s32 %s15, 4
    %s176 = sadd.s32 %s22, 4
    %s177 = ssub.s32 %s175, %s176
    %p178 = scmp.eq.s32.totalorder %s177, 0
    %s180 = sadd.s32 %s179, 1
    %s181 = scalar_select %p178, %s179, %s180
    %p184 = pneg %p178
    %p185 = scmp.eq.s32.totalorder %s15, 7
    %p186 = por %p184, %p185
    %p187 = scmp.ne.s32.totalorder %s179, %s182
    %p188 = scmp.eq.s32.totalorder %s15, 0
    %p189 = por %p187, %p188
    %p190 = scmp.ne.s32.totalorder %s179, %s182
    %p191 = scmp.eq.s32.totalorder %s20, 7
    %p192 = por %p190, %p191
    %p193 = scmp.ne.s32.totalorder %s182, %s183
    %p194 = scmp.eq.s32.totalorder %s20, 0
    %p195 = por %p193, %p194
    %p196 = scmp.ne.s32.totalorder %s182, %s183
    %p197 = scmp.eq.s32.totalorder %s21, 7
    %p198 = por %p196, %p197
    %p200 = scmp.ne.s32.totalorder %s183, %s199
    %p201 = scmp.eq.s32.totalorder %s21, 0
    %p202 = por %p200, %p201
    %s204 = sadd.s32 %s203, 1
    %p207 = scmp.eq.s32.totalorder %s15, 7
    %p208 = scmp.ne.s32.totalorder %s203, %s205
    %p209 = scmp.eq.s32.totalorder %s15, 0
    %p210 = por %p208, %p209
    %p211 = scmp.ne.s32.totalorder %s203, %s205
    %p212 = scmp.eq.s32.totalorder %s20, 7
    %p213 = por %p211, %p212
    %p214 = scmp.ne.s32.totalorder %s205, %s206
    %p215 = scmp.eq.s32.totalorder %s20, 0
    %p216 = por %p214, %p215
    %p217 = scmp.ne.s32.totalorder %s205, %s206
    %p218 = scmp.eq.s32.totalorder %s21, 7
    %p219 = por %p217, %p218
    %p221 = scmp.ne.s32.totalorder %s206, %s220
    %p222 = scmp.eq.s32.totalorder %s21, 0
    %p223 = por %p221, %p222
    %s225 = sadd.s32 %s224, 1
    %p228 = scmp.eq.s32.totalorder %s15, 7
    %p229 = scmp.ne.s32.totalorder %s224, %s226
    %p230 = scmp.eq.s32.totalorder %s15, 0
    %p231 = por %p229, %p230
    %p232 = scmp.ne.s32.totalorder %s224, %s226
    %p233 = scmp.eq.s32.totalorder %s20, 7
    %p234 = por %p232, %p233
    %p235 = scmp.ne.s32.totalorder %s226, %s227
    %p236 = scmp.eq.s32.totalorder %s20, 0
    %p237 = por %p235, %p236
    %p238 = scmp.ne.s32.totalorder %s226, %s227
    %p239 = scmp.eq.s32.totalorder %s21, 7
    %p240 = por %p238, %p239
    %p242 = scmp.ne.s32.totalorder %s227, %s241
    %p243 = scmp.eq.s32.totalorder %s21, 0
    %p244 = por %p242, %p243
    %p245 = scmp.le.s32.totalorder 1, %s15
    %p246 = scmp.lt.s32.totalorder %s15, 9
    %p247 = pnand %p245, %p246
    %p248 = pneg %p247
    // Predicated region
    $region9: #{step1_forward.2} parent=5 // pred_check
      _
    $region10: #{step1_forward.2} parent=5 // pred_check_branch
      %250 = sbr.rel (%p247) target = $region12
    $region11: #{step1_forward.2} parent=5 // pred_region
      %s251 = ssub.s32 %s15, 1
      // Predicated region
      $region13: #{step1_forward.2} parent=11 // pred_check
        %p252 = pneg %p36
      $region14: #{step1_forward.2} parent=11 // pred_check_branch
        %254 = sbr.rel (%p252) target = $region16
      $region15: #{step1_forward.2} parent=11 // pred_region
        _
      $region16: #{step1_forward.2} parent=11 // pred_fallthru
        _
      // Predicated region
      $region17: #{step1_forward.2} parent=11 // pred_check
        %p255 = pneg %p57
      $region18: #{step1_forward.2} parent=11 // pred_check_branch
        %257 = sbr.rel (%p255) target = $region20
      $region19: #{step1_forward.2} parent=11 // pred_region
        _
      $region20: #{step1_forward.2} parent=11 // pred_fallthru
        _
    $region12: #{step1_forward.2} parent=5 // pred_fallthru
      _
    %p258 = scmp.lt.s32.totalorder %s15, 8
    // Predicated region
    $region21: #{step1_forward.2} parent=5 // pred_check
      %p259 = pneg %p258
    $region22: #{step1_forward.2} parent=5 // pred_check_branch
      %261 = sbr.rel (%p259) target = $region24
    $region23: #{step1_forward.2} parent=5 // pred_region
      // Predicated region
      $region25: #{step1_forward.2} parent=23 // pred_check
        %p262 = pneg %p77
      $region26: #{step1_forward.2} parent=23 // pred_check_branch
        %264 = sbr.rel (%p262) target = $region28
      $region27: #{step1_forward.2} parent=23 // pred_region
        %p265 = scmp.lt.s32.totalorder %s15, 11
        %s266 = scalar_select %p265, %s15, 11
        %s267 = smul.addr %s266, 2
        %s268 = scalar_lea.vmem %s2, %s267
      $region28: #{step1_forward.2} parent=23 // pred_fallthru
        _
      // Predicated region
      $region29: #{step1_forward.2} parent=23 // pred_check
        %p269 = pneg %p105
      $region30: #{step1_forward.2} parent=23 // pred_check_branch
        %271 = sbr.rel (%p269) target = $region32
      $region31: #{step1_forward.2} parent=23 // pred_region
        %s272 = sadd.s32 %s15, 1
        %p273 = scmp.lt.s32.totalorder %s272, 11
        %s274 = scalar_select %p273, %s272, 11
        %s275 = smul.addr %s274, 2
        %s276 = scalar_lea.vmem %s3, %s275
        %s277 = sadd.s32 %s15, 1
      $region32: #{step1_forward.2} parent=23 // pred_fallthru
        _
      // Predicated region
      $region33: #{step1_forward.2} parent=23 // pred_check
        %p278 = pneg %p133
      $region34: #{step1_forward.2} parent=23 // pred_check_branch
        %280 = sbr.rel (%p278) target = $region36
      $region35: #{step1_forward.2} parent=23 // pred_region
        %s281 = sadd.s32 %s15, 2
        %p282 = scmp.lt.s32.totalorder %s281, 11
        %s283 = scalar_select %p282, %s281, 11
        %s284 = smul.addr %s283, 2
        %s285 = scalar_lea.vmem %s4, %s284
        %s286 = sadd.s32 %s15, 2
      $region36: #{step1_forward.2} parent=23 // pred_fallthru
        _
      // Predicated region
      $region37: #{step1_forward.2} parent=23 // pred_check
        %p287 = pneg %p161
      $region38: #{step1_forward.2} parent=23 // pred_check_branch
        %289 = sbr.rel (%p287) target = $region40
      $region39: #{step1_forward.2} parent=23 // pred_region
        %s290 = sadd.s32 %s15, 3
        %p291 = scmp.lt.s32.totalorder %s290, 11
        %s292 = scalar_select %p291, %s290, 11
        %s293 = smul.addr %s292, 2
        %s294 = scalar_lea.vmem %s5, %s293
        %s295 = sadd.s32 %s15, 3
      $region40: #{step1_forward.2} parent=23 // pred_fallthru
        _
      // Predicated region
      $region41: #{step1_forward.2} parent=23 // pred_check
        %p296 = pneg %p189
      $region42: #{step1_forward.2} parent=23 // pred_check_branch
        %298 = sbr.rel (%p296) target = $region44
      $region43: #{step1_forward.2} parent=23 // pred_region
        %s299 = sadd.s32 %s15, 4
        %p300 = scmp.lt.s32.totalorder %s299, 11
        %s301 = scalar_select %p300, %s299, 11
        %s302 = smul.addr %s301, 2
        %s303 = scalar_lea.vmem %s6, %s302
        %s304 = sadd.s32 %s15, 4
      $region44: #{step1_forward.2} parent=23 // pred_fallthru
        _
    $region24: #{step1_forward.2} parent=5 // pred_fallthru
      _
    %p305 = scmp.le.s32.totalorder 1, %s15
    %p306 = scmp.lt.s32.totalorder %s15, 9
    %p307 = pnand %p305, %p306
    %p308 = pneg %p307
    // Predicated region
    $region45: #{step1_forward.2} parent=5 // pred_check
      _
    $region46: #{step1_forward.2} parent=5 // pred_check_branch
      %310 = sbr.rel (%p307) target = $region48
    $region47: #{step1_forward.2} parent=5 // pred_region
      %s311 = ssub.s32 %s15, 1
      %p312 = pneg %p36
      %p313 = pneg %p33
      %p314 = pneg %p57
      %p315 = pneg %p54
      %p316 = scmp.lt.s32.totalorder %s20, 11
      %s317 = scalar_select %p316, %s20, 11
      %s318 = smul.addr %s317, 2
      %s319 = scalar_lea.vmem %s2, %s318
      %p320 = pneg %p83
      %p321 = pneg %p80
      %s322 = sadd.s32 %s20, 1
      %p323 = scmp.lt.s32.totalorder %s322, 11
      %s324 = scalar_select %p323, %s322, 11
      %s325 = smul.addr %s324, 2
      %s326 = scalar_lea.vmem %s3, %s325
      %p327 = pneg %p111
      %p328 = pneg %p108
      %s329 = sadd.s32 %s20, 2
      %p330 = scmp.lt.s32.totalorder %s329, 11
      %s331 = scalar_select %p330, %s329, 11
      %s332 = smul.addr %s331, 2
      %s333 = scalar_lea.vmem %s4, %s332
      %p334 = pneg %p139
      %p335 = pneg %p136
      %s336 = sadd.s32 %s20, 3
      %p337 = scmp.lt.s32.totalorder %s336, 11
      %s338 = scalar_select %p337, %s336, 11
      %s339 = smul.addr %s338, 2
      %s340 = scalar_lea.vmem %s5, %s339
      %p341 = pneg %p167
      %p342 = pneg %p164
      %s343 = sadd.s32 %s20, 4
      %p344 = scmp.lt.s32.totalorder %s343, 11
      %s345 = scalar_select %p344, %s343, 11
      %s346 = smul.addr %s345, 2
      %s347 = scalar_lea.vmem %s6, %s346
      %p348 = pneg %p195
      %p349 = pneg %p192
      %p350 = pneg %p216
      %p351 = pneg %p213
      %p352 = pneg %p237
      %p353 = pneg %p234
      %p354 = scmp.lt.s32.totalorder %s20, 11
      %s355 = scalar_select %p354, %s20, 11
      %s356 = smul.addr %s355, 2
      %s357 = scalar_lea.vmem %s2, %s356
      %s358 = sadd.s32 %s20, 1
      %p359 = scmp.lt.s32.totalorder %s358, 11
      %s360 = scalar_select %p359, %s358, 11
      %s361 = smul.addr %s360, 2
      %s362 = scalar_lea.vmem %s3, %s361
      %s363 = sadd.s32 %s20, 1
      %s364 = sadd.s32 %s20, 2
      %p365 = scmp.lt.s32.totalorder %s364, 11
      %s366 = scalar_select %p365, %s364, 11
      %s367 = smul.addr %s366, 2
      %s368 = scalar_lea.vmem %s4, %s367
      %s369 = sadd.s32 %s20, 2
      %s370 = sadd.s32 %s20, 3
      %p371 = scmp.lt.s32.totalorder %s370, 11
      %s372 = scalar_select %p371, %s370, 11
      %s373 = smul.addr %s372, 2
      %s374 = scalar_lea.vmem %s5, %s373
      %s375 = sadd.s32 %s20, 3
      %s376 = sadd.s32 %s20, 4
      %p377 = scmp.lt.s32.totalorder %s376, 11
      %s378 = scalar_select %p377, %s376, 11
      %s379 = smul.addr %s378, 2
      %s380 = scalar_lea.vmem %s6, %s379
      %s381 = sadd.s32 %s20, 4
      %v382 = vld [vmem:[%s357] sm:$0x1]
      %383 = vst [vmem:[#allocation2] sm:$0x1] %v382
      %v384 = vld [vmem:[%s357] sm:$0x3]
      %v386 = vperm.slane %v384, 0
      %v387 = vperm.slane %v384, 1
      %388 = vrot.lane.b32.xlu0 %v386, 127
      %v389 = vpop.permute.xlu0 %388
      %390 = vrot.lane.b32.xlu0 %v387, 127
      %v391 = vpop.permute.xlu0 %390
      %vm392 = vcmask 1039360
      %v393 = vsel %vm392, %v389, %v391
      %395 = vst [vmem:[#allocation2 + $0x1] sm:$0x1] %v393
      %v396 = vld [vmem:[%s357] sm:$0x3]
      %v398 = vperm.slane %v396, 0
      %v399 = vperm.slane %v396, 1
      %400 = vrot.lane.b32.xlu0 %v398, 126
      %v401 = vpop.permute.xlu0 %400
      %402 = vrot.lane.b32.xlu0 %v399, 126
      %v403 = vpop.permute.xlu0 %402
      %vm404 = vcmask 1031168
      %v405 = vsel %vm404, %v401, %v403
      %407 = vst [vmem:[#allocation2 + $0x2] sm:$0x1] %v405
      %v408 = vld [vmem:[%s357] sm:$0x3]
      %v410 = vperm.slane %v408, 0
      %v411 = vperm.slane %v408, 1
      %412 = vrot.lane.b32.xlu0 %v410, 125
      %v413 = vpop.permute.xlu0 %412
      %414 = vrot.lane.b32.xlu0 %v411, 125
      %v415 = vpop.permute.xlu0 %414
      %vm416 = vcmask 1022976
      %v417 = vsel %vm416, %v413, %v415
      %419 = vst [vmem:[#allocation2 + $0x3] sm:$0x1] %v417
      %v420 = vld [vmem:[%s357] sm:$0x3]
      %v422 = vperm.slane %v420, 0
      %v423 = vperm.slane %v420, 1
      %424 = vrot.lane.b32.xlu0 %v422, 124
      %v425 = vpop.permute.xlu0 %424
      %426 = vrot.lane.b32.xlu0 %v423, 124
      %v427 = vpop.permute.xlu0 %426
      %vm428 = vcmask 1014784
      %v429 = vsel %vm428, %v425, %v427
      %431 = vst [vmem:[#allocation2 + $0x4] sm:$0x1] %v429
      %v432 = vld [vmem:[%s357] sm:$0x3]
      %v434 = vperm.slane %v432, 0
      %v435 = vperm.slane %v432, 1
      %436 = vrot.lane.b32.xlu0 %v434, 116
      %v437 = vpop.permute.xlu0 %436
      %438 = vrot.lane.b32.xlu0 %v435, 116
      %v439 = vpop.permute.xlu0 %438
      %vm440 = vcmask 949248
      %v441 = vsel %vm440, %v437, %v439
      %443 = vst [vmem:[#allocation2 + $0x5] sm:$0x1] %v441
      %v444 = vld [vmem:[%s357] sm:$0x3]
      %v446 = vperm.slane %v444, 0
      %v447 = vperm.slane %v444, 1
      %448 = vrot.lane.b32.xlu0 %v446, 115
      %v449 = vpop.permute.xlu0 %448
      %450 = vrot.lane.b32.xlu0 %v447, 115
      %v451 = vpop.permute.xlu0 %450
      %vm452 = vcmask 941056
      %v453 = vsel %vm452, %v449, %v451
      %455 = vst [vmem:[#allocation2 + $0x6] sm:$0x1] %v453
      %v456 = vld [vmem:[%s357] sm:$0x3]
      %v458 = vperm.slane %v456, 0
      %v459 = vperm.slane %v456, 1
      %460 = vrot.lane.b32.xlu0 %v458, 114
      %v461 = vpop.permute.xlu0 %460
      %462 = vrot.lane.b32.xlu0 %v459, 114
      %v463 = vpop.permute.xlu0 %462
      %vm464 = vcmask 932864
      %v465 = vsel %vm464, %v461, %v463
      %467 = vst [vmem:[#allocation2 + $0x7] sm:$0x1] %v465
      %v468 = vld [vmem:[%s357] sm:$0x3]
      %v470 = vperm.slane %v468, 0
      %v471 = vperm.slane %v468, 1
      %472 = vrot.lane.b32.xlu0 %v470, 113
      %v473 = vpop.permute.xlu0 %472
      %474 = vrot.lane.b32.xlu0 %v471, 113
      %v475 = vpop.permute.xlu0 %474
      %vm476 = vcmask 924672
      %v477 = vsel %vm476, %v473, %v475
      %479 = vst [vmem:[#allocation2 + $0x8] sm:$0x1] %v477
      %v480 = vld [vmem:[%s357] sm:$0x3]
      %v482 = vperm.slane %v480, 0
      %v483 = vperm.slane %v480, 1
      %484 = vrot.lane.b32.xlu0 %v482, 112
      %v485 = vpop.permute.xlu0 %484
      %486 = vrot.lane.b32.xlu0 %v483, 112
      %v487 = vpop.permute.xlu0 %486
      %vm488 = vcmask 916480
      %v489 = vsel %vm488, %v485, %v487
      %491 = vst [vmem:[#allocation2 + $0x9] sm:$0x1] %v489
      %v492 = vld [vmem:[%s357] sm:$0x3]
      %v494 = vperm.slane %v492, 0
      %v495 = vperm.slane %v492, 1
      %496 = vrot.lane.b32.xlu0 %v494, 104
      %v497 = vpop.permute.xlu0 %496
      %498 = vrot.lane.b32.xlu0 %v495, 104
      %v499 = vpop.permute.xlu0 %498
      %vm500 = vcmask 850944
      %v501 = vsel %vm500, %v497, %v499
      %503 = vst [vmem:[#allocation2 + $0xa] sm:$0x1] %v501
      %v504 = vld [vmem:[%s357] sm:$0x3]
      %v506 = vperm.slane %v504, 0
      %v507 = vperm.slane %v504, 1
      %508 = vrot.lane.b32.xlu0 %v506, 103
      %v509 = vpop.permute.xlu0 %508
      %510 = vrot.lane.b32.xlu0 %v507, 103
      %v511 = vpop.permute.xlu0 %510
      %vm512 = vcmask 842752
      %v513 = vsel %vm512, %v509, %v511
      %515 = vst [vmem:[#allocation2 + $0xb] sm:$0x1] %v513
      %v516 = vld [vmem:[%s357] sm:$0x3]
      %v518 = vperm.slane %v516, 0
      %v519 = vperm.slane %v516, 1
      %520 = vrot.lane.b32.xlu0 %v518, 102
      %v521 = vpop.permute.xlu0 %520
      %522 = vrot.lane.b32.xlu0 %v519, 102
      %v523 = vpop.permute.xlu0 %522
      %vm524 = vcmask 834560
      %v525 = vsel %vm524, %v521, %v523
      %527 = vst [vmem:[#allocation2 + $0xc] sm:$0x1] %v525
      %v528 = vld [vmem:[%s357] sm:$0x3]
      %v530 = vperm.slane %v528, 0
      %v531 = vperm.slane %v528, 1
      %532 = vrot.lane.b32.xlu0 %v530, 101
      %v533 = vpop.permute.xlu0 %532
      %534 = vrot.lane.b32.xlu0 %v531, 101
      %v535 = vpop.permute.xlu0 %534
      %vm536 = vcmask 826368
      %v537 = vsel %vm536, %v533, %v535
      %539 = vst [vmem:[#allocation2 + $0xd] sm:$0x1] %v537
      %v540 = vld [vmem:[%s357] sm:$0x3]
      %v542 = vperm.slane %v540, 0
      %v543 = vperm.slane %v540, 1
      %544 = vrot.lane.b32.xlu0 %v542, 100
      %v545 = vpop.permute.xlu0 %544
      %546 = vrot.lane.b32.xlu0 %v543, 100
      %v547 = vpop.permute.xlu0 %546
      %vm548 = vcmask 818176
      %v549 = vsel %vm548, %v545, %v547
      %551 = vst [vmem:[#allocation2 + $0xe] sm:$0x1] %v549
      %v552 = vld [vmem:[%s357] sm:$0x3]
      %v554 = vperm.slane %v552, 0
      %v555 = vperm.slane %v552, 1
      %556 = vrot.lane.b32.xlu0 %v554, 92
      %v557 = vpop.permute.xlu0 %556
      %558 = vrot.lane.b32.xlu0 %v555, 92
      %v559 = vpop.permute.xlu0 %558
      %vm560 = vcmask 752640
      %v561 = vsel %vm560, %v557, %v559
      %563 = vst [vmem:[#allocation2 + $0xf] sm:$0x1] %v561
      %v564 = vld [vmem:[%s357] sm:$0x3]
      %v566 = vperm.slane %v564, 0
      %v567 = vperm.slane %v564, 1
      %568 = vrot.lane.b32.xlu0 %v566, 91
      %v569 = vpop.permute.xlu0 %568
      %570 = vrot.lane.b32.xlu0 %v567, 91
      %v571 = vpop.permute.xlu0 %570
      %vm572 = vcmask 744448
      %v573 = vsel %vm572, %v569, %v571
      %575 = vst [vmem:[#allocation2 + $0x10] sm:$0x1] %v573
      %v576 = vld [vmem:[%s357] sm:$0x3]
      %v578 = vperm.slane %v576, 0
      %v579 = vperm.slane %v576, 1
      %580 = vrot.lane.b32.xlu0 %v578, 90
      %v581 = vpop.permute.xlu0 %580
      %582 = vrot.lane.b32.xlu0 %v579, 90
      %v583 = vpop.permute.xlu0 %582
      %vm584 = vcmask 736256
      %v585 = vsel %vm584, %v581, %v583
      %587 = vst [vmem:[#allocation2 + $0x11] sm:$0x1] %v585
      %v588 = vld [vmem:[%s357] sm:$0x3]
      %v590 = vperm.slane %v588, 0
      %v591 = vperm.slane %v588, 1
      %592 = vrot.lane.b32.xlu0 %v590, 89
      %v593 = vpop.permute.xlu0 %592
      %594 = vrot.lane.b32.xlu0 %v591, 89
      %v595 = vpop.permute.xlu0 %594
      %vm596 = vcmask 728064
      %v597 = vsel %vm596, %v593, %v595
      %599 = vst [vmem:[#allocation2 + $0x12] sm:$0x1] %v597
      %v600 = vld [vmem:[%s357] sm:$0x3]
      %v602 = vperm.slane %v600, 0
      %v603 = vperm.slane %v600, 1
      %604 = vrot.lane.b32.xlu0 %v602, 88
      %v605 = vpop.permute.xlu0 %604
      %606 = vrot.lane.b32.xlu0 %v603, 88
      %v607 = vpop.permute.xlu0 %606
      %vm608 = vcmask 719872
      %v609 = vsel %vm608, %v605, %v607
      %611 = vst [vmem:[#allocation2 + $0x13] sm:$0x1] %v609
      %v612 = vld [vmem:[%s357] sm:$0x3]
      %v614 = vperm.slane %v612, 0
      %v615 = vperm.slane %v612, 1
      %616 = vrot.lane.b32.xlu0 %v614, 80
      %v617 = vpop.permute.xlu0 %616
      %618 = vrot.lane.b32.xlu0 %v615, 80
      %v619 = vpop.permute.xlu0 %618
      %vm620 = vcmask 654336
      %v621 = vsel %vm620, %v617, %v619
      %623 = vst [vmem:[#allocation2 + $0x14] sm:$0x1] %v621
      %v624 = vld [vmem:[%s357] sm:$0x3]
      %v626 = vperm.slane %v624, 0
      %v627 = vperm.slane %v624, 1
      %628 = vrot.lane.b32.xlu0 %v626, 79
      %v629 = vpop.permute.xlu0 %628
      %630 = vrot.lane.b32.xlu0 %v627, 79
      %v631 = vpop.permute.xlu0 %630
      %vm632 = vcmask 646144
      %v633 = vsel %vm632, %v629, %v631
      %635 = vst [vmem:[#allocation2 + $0x15] sm:$0x1] %v633
      %v636 = vld [vmem:[%s357] sm:$0x3]
      %v638 = vperm.slane %v636, 0
      %v639 = vperm.slane %v636, 1
      %640 = vrot.lane.b32.xlu0 %v638, 78
      %v641 = vpop.permute.xlu0 %640
      %642 = vrot.lane.b32.xlu0 %v639, 78
      %v643 = vpop.permute.xlu0 %642
      %vm644 = vcmask 637952
      %v645 = vsel %vm644, %v641, %v643
      %647 = vst [vmem:[#allocation2 + $0x16] sm:$0x1] %v645
      %v648 = vld [vmem:[%s357] sm:$0x3]
      %v650 = vperm.slane %v648, 0
      %v651 = vperm.slane %v648, 1
      %652 = vrot.lane.b32.xlu0 %v650, 77
      %v653 = vpop.permute.xlu0 %652
      %654 = vrot.lane.b32.xlu0 %v651, 77
      %v655 = vpop.permute.xlu0 %654
      %vm656 = vcmask 629760
      %v657 = vsel %vm656, %v653, %v655
      %659 = vst [vmem:[#allocation2 + $0x17] sm:$0x1] %v657
      %v660 = vld [vmem:[%s357] sm:$0x3]
      %v662 = vperm.slane %v660, 0
      %v663 = vperm.slane %v660, 1
      %664 = vrot.lane.b32.xlu0 %v662, 76
      %v665 = vpop.permute.xlu0 %664
      %666 = vrot.lane.b32.xlu0 %v663, 76
      %v667 = vpop.permute.xlu0 %666
      %vm668 = vcmask 621568
      %v669 = vsel %vm668, %v665, %v667
      %671 = vst [vmem:[#allocation2 + $0x18] sm:$0x1] %v669
      %v672 = vld [vmem:[%s362] sm:$0x1]
      %673 = vst [vmem:[#allocation2 + $0x19] sm:$0x1] %v672
      %v674 = vld [vmem:[%s362] sm:$0x3]
      %v676 = vperm.slane %v674, 0
      %v677 = vperm.slane %v674, 1
      %678 = vrot.lane.b32.xlu0 %v676, 127
      %v679 = vpop.permute.xlu0 %678
      %680 = vrot.lane.b32.xlu0 %v677, 127
      %v681 = vpop.permute.xlu0 %680
      %v682 = vsel %vm392, %v679, %v681
      %684 = vst [vmem:[#allocation2 + $0x1a] sm:$0x1] %v682
      %v685 = vld [vmem:[%s362] sm:$0x3]
      %v687 = vperm.slane %v685, 0
      %v688 = vperm.slane %v685, 1
      %689 = vrot.lane.b32.xlu0 %v687, 126
      %v690 = vpop.permute.xlu0 %689
      %691 = vrot.lane.b32.xlu0 %v688, 126
      %v692 = vpop.permute.xlu0 %691
      %v693 = vsel %vm404, %v690, %v692
      %695 = vst [vmem:[#allocation2 + $0x1b] sm:$0x1] %v693
      %v696 = vld [vmem:[%s362] sm:$0x3]
      %v698 = vperm.slane %v696, 0
      %v699 = vperm.slane %v696, 1
      %700 = vrot.lane.b32.xlu0 %v698, 125
      %v701 = vpop.permute.xlu0 %700
      %702 = vrot.lane.b32.xlu0 %v699, 125
      %v703 = vpop.permute.xlu0 %702
      %v704 = vsel %vm416, %v701, %v703
      %706 = vst [vmem:[#allocation2 + $0x1c] sm:$0x1] %v704
      %v707 = vld [vmem:[%s362] sm:$0x3]
      %v709 = vperm.slane %v707, 0
      %v710 = vperm.slane %v707, 1
      %711 = vrot.lane.b32.xlu0 %v709, 124
      %v712 = vpop.permute.xlu0 %711
      %713 = vrot.lane.b32.xlu0 %v710, 124
      %v714 = vpop.permute.xlu0 %713
      %v715 = vsel %vm428, %v712, %v714
      %717 = vst [vmem:[#allocation2 + $0x1d] sm:$0x1] %v715
      %v718 = vld [vmem:[%s362] sm:$0x3]
      %v720 = vperm.slane %v718, 0
      %v721 = vperm.slane %v718, 1
      %722 = vrot.lane.b32.xlu0 %v720, 116
      %v723 = vpop.permute.xlu0 %722
      %724 = vrot.lane.b32.xlu0 %v721, 116
      %v725 = vpop.permute.xlu0 %724
      %v726 = vsel %vm440, %v723, %v725
      %728 = vst [vmem:[#allocation2 + $0x1e] sm:$0x1] %v726
      %v729 = vld [vmem:[%s362] sm:$0x3]
      %v731 = vperm.slane %v729, 0
      %v732 = vperm.slane %v729, 1
      %733 = vrot.lane.b32.xlu0 %v731, 115
      %v734 = vpop.permute.xlu0 %733
      %735 = vrot.lane.b32.xlu0 %v732, 115
      %v736 = vpop.permute.xlu0 %735
      %v737 = vsel %vm452, %v734, %v736
      %739 = vst [vmem:[#allocation2 + $0x1f] sm:$0x1] %v737
      %v740 = vld [vmem:[%s362] sm:$0x3]
      %v742 = vperm.slane %v740, 0
      %v743 = vperm.slane %v740, 1
      %744 = vrot.lane.b32.xlu0 %v742, 114
      %v745 = vpop.permute.xlu0 %744
      %746 = vrot.lane.b32.xlu0 %v743, 114
      %v747 = vpop.permute.xlu0 %746
      %v748 = vsel %vm464, %v745, %v747
      %750 = vst [vmem:[#allocation2 + $0x20] sm:$0x1] %v748
      %v751 = vld [vmem:[%s362] sm:$0x3]
      %v753 = vperm.slane %v751, 0
      %v754 = vperm.slane %v751, 1
      %755 = vrot.lane.b32.xlu0 %v753, 113
      %v756 = vpop.permute.xlu0 %755
      %757 = vrot.lane.b32.xlu0 %v754, 113
      %v758 = vpop.permute.xlu0 %757
      %v759 = vsel %vm476, %v756, %v758
      %761 = vst [vmem:[#allocation2 + $0x21] sm:$0x1] %v759
      %v762 = vld [vmem:[%s362] sm:$0x3]
      %v764 = vperm.slane %v762, 0
      %v765 = vperm.slane %v762, 1
      %766 = vrot.lane.b32.xlu0 %v764, 112
      %v767 = vpop.permute.xlu0 %766
      %768 = vrot.lane.b32.xlu0 %v765, 112
      %v769 = vpop.permute.xlu0 %768
      %v770 = vsel %vm488, %v767, %v769
      %772 = vst [vmem:[#allocation2 + $0x22] sm:$0x1] %v770
      %v773 = vld [vmem:[%s362] sm:$0x3]
      %v775 = vperm.slane %v773, 0
      %v776 = vperm.slane %v773, 1
      %777 = vrot.lane.b32.xlu0 %v775, 104
      %v778 = vpop.permute.xlu0 %777
      %779 = vrot.lane.b32.xlu0 %v776, 104
      %v780 = vpop.permute.xlu0 %779
      %v781 = vsel %vm500, %v778, %v780
      %783 = vst [vmem:[#allocation2 + $0x23] sm:$0x1] %v781
      %v784 = vld [vmem:[%s362] sm:$0x3]
      %v786 = vperm.slane %v784, 0
      %v787 = vperm.slane %v784, 1
      %788 = vrot.lane.b32.xlu0 %v786, 103
      %v789 = vpop.permute.xlu0 %788
      %790 = vrot.lane.b32.xlu0 %v787, 103
      %v791 = vpop.permute.xlu0 %790
      %v792 = vsel %vm512, %v789, %v791
      %794 = vst [vmem:[#allocation2 + $0x24] sm:$0x1] %v792
      %v795 = vld [vmem:[%s362] sm:$0x3]
      %v797 = vperm.slane %v795, 0
      %v798 = vperm.slane %v795, 1
      %799 = vrot.lane.b32.xlu0 %v797, 102
      %v800 = vpop.permute.xlu0 %799
      %801 = vrot.lane.b32.xlu0 %v798, 102
      %v802 = vpop.permute.xlu0 %801
      %v803 = vsel %vm524, %v800, %v802
      %805 = vst [vmem:[#allocation2 + $0x25] sm:$0x1] %v803
      %v806 = vld [vmem:[%s362] sm:$0x3]
      %v808 = vperm.slane %v806, 0
      %v809 = vperm.slane %v806, 1
      %810 = vrot.lane.b32.xlu0 %v808, 101
      %v811 = vpop.permute.xlu0 %810
      %812 = vrot.lane.b32.xlu0 %v809, 101
      %v813 = vpop.permute.xlu0 %812
      %v814 = vsel %vm536, %v811, %v813
      %816 = vst [vmem:[#allocation2 + $0x26] sm:$0x1] %v814
      %v817 = vld [vmem:[%s362] sm:$0x3]
      %v819 = vperm.slane %v817, 0
      %v820 = vperm.slane %v817, 1
      %821 = vrot.lane.b32.xlu0 %v819, 100
      %v822 = vpop.permute.xlu0 %821
      %823 = vrot.lane.b32.xlu0 %v820, 100
      %v824 = vpop.permute.xlu0 %823
      %v825 = vsel %vm548, %v822, %v824
      %827 = vst [vmem:[#allocation2 + $0x27] sm:$0x1] %v825
      %v828 = vld [vmem:[%s362] sm:$0x3]
      %v830 = vperm.slane %v828, 0
      %v831 = vperm.slane %v828, 1
      %832 = vrot.lane.b32.xlu0 %v830, 92
      %v833 = vpop.permute.xlu0 %832
      %834 = vrot.lane.b32.xlu0 %v831, 92
      %v835 = vpop.permute.xlu0 %834
      %v836 = vsel %vm560, %v833, %v835
      %838 = vst [vmem:[#allocation2 + $0x28] sm:$0x1] %v836
      %v839 = vld [vmem:[%s362] sm:$0x3]
      %v841 = vperm.slane %v839, 0
      %v842 = vperm.slane %v839, 1
      %843 = vrot.lane.b32.xlu0 %v841, 91
      %v844 = vpop.permute.xlu0 %843
      %845 = vrot.lane.b32.xlu0 %v842, 91
      %v846 = vpop.permute.xlu0 %845
      %v847 = vsel %vm572, %v844, %v846
      %849 = vst [vmem:[#allocation2 + $0x29] sm:$0x1] %v847
      %v850 = vld [vmem:[%s362] sm:$0x3]
      %v852 = vperm.slane %v850, 0
      %v853 = vperm.slane %v850, 1
      %854 = vrot.lane.b32.xlu0 %v852, 90
      %v855 = vpop.permute.xlu0 %854
      %856 = vrot.lane.b32.xlu0 %v853, 90
      %v857 = vpop.permute.xlu0 %856
      %v858 = vsel %vm584, %v855, %v857
      %860 = vst [vmem:[#allocation2 + $0x2a] sm:$0x1] %v858
      %v861 = vld [vmem:[%s362] sm:$0x3]
      %v863 = vperm.slane %v861, 0
      %v864 = vperm.slane %v861, 1
      %865 = vrot.lane.b32.xlu0 %v863, 89
      %v866 = vpop.permute.xlu0 %865
      %867 = vrot.lane.b32.xlu0 %v864, 89
      %v868 = vpop.permute.xlu0 %867
      %v869 = vsel %vm596, %v866, %v868
      %871 = vst [vmem:[#allocation2 + $0x2b] sm:$0x1] %v869
      %v872 = vld [vmem:[%s362] sm:$0x3]
      %v874 = vperm.slane %v872, 0
      %v875 = vperm.slane %v872, 1
      %876 = vrot.lane.b32.xlu0 %v874, 88
      %v877 = vpop.permute.xlu0 %876
      %878 = vrot.lane.b32.xlu0 %v875, 88
      %v879 = vpop.permute.xlu0 %878
      %v880 = vsel %vm608, %v877, %v879
      %882 = vst [vmem:[#allocation2 + $0x2c] sm:$0x1] %v880
      %v883 = vld [vmem:[%s362] sm:$0x3]
      %v885 = vperm.slane %v883, 0
      %v886 = vperm.slane %v883, 1
      %887 = vrot.lane.b32.xlu0 %v885, 80
      %v888 = vpop.permute.xlu0 %887
      %889 = vrot.lane.b32.xlu0 %v886, 80
      %v890 = vpop.permute.xlu0 %889
      %v891 = vsel %vm620, %v888, %v890
      %893 = vst [vmem:[#allocation2 + $0x2d] sm:$0x1] %v891
      %v894 = vld [vmem:[%s362] sm:$0x3]
      %v896 = vperm.slane %v894, 0
      %v897 = vperm.slane %v894, 1
      %898 = vrot.lane.b32.xlu0 %v896, 79
      %v899 = vpop.permute.xlu0 %898
      %900 = vrot.lane.b32.xlu0 %v897, 79
      %v901 = vpop.permute.xlu0 %900
      %v902 = vsel %vm632, %v899, %v901
      %904 = vst [vmem:[#allocation2 + $0x2e] sm:$0x1] %v902
      %v905 = vld [vmem:[%s362] sm:$0x3]
      %v907 = vperm.slane %v905, 0
      %v908 = vperm.slane %v905, 1
      %909 = vrot.lane.b32.xlu0 %v907, 78
      %v910 = vpop.permute.xlu0 %909
      %911 = vrot.lane.b32.xlu0 %v908, 78
      %v912 = vpop.permute.xlu0 %911
      %v913 = vsel %vm644, %v910, %v912
      %915 = vst [vmem:[#allocation2 + $0x2f] sm:$0x1] %v913
      %v916 = vld [vmem:[%s362] sm:$0x3]
      %v918 = vperm.slane %v916, 0
      %v919 = vperm.slane %v916, 1
      %920 = vrot.lane.b32.xlu0 %v918, 77
      %v921 = vpop.permute.xlu0 %920
      %922 = vrot.lane.b32.xlu0 %v919, 77
      %v923 = vpop.permute.xlu0 %922
      %v924 = vsel %vm656, %v921, %v923
      %926 = vst [vmem:[#allocation2 + $0x30] sm:$0x1] %v924
      %v927 = vld [vmem:[%s362] sm:$0x3]
      %v929 = vperm.slane %v927, 0
      %v930 = vperm.slane %v927, 1
      %931 = vrot.lane.b32.xlu0 %v929, 76
      %v932 = vpop.permute.xlu0 %931
      %933 = vrot.lane.b32.xlu0 %v930, 76
      %v934 = vpop.permute.xlu0 %933
      %v935 = vsel %vm668, %v932, %v934
      %937 = vst [vmem:[#allocation2 + $0x31] sm:$0x1] %v935
      %v938 = vld [vmem:[%s368] sm:$0x1]
      %939 = vst [vmem:[#allocation2 + $0x32] sm:$0x1] %v938
      %v940 = vld [vmem:[%s368] sm:$0x3]
      %v942 = vperm.slane %v940, 0
      %v943 = vperm.slane %v940, 1
      %944 = vrot.lane.b32.xlu0 %v942, 127
      %v945 = vpop.permute.xlu0 %944
      %946 = vrot.lane.b32.xlu0 %v943, 127
      %v947 = vpop.permute.xlu0 %946
      %v948 = vsel %vm392, %v945, %v947
      %950 = vst [vmem:[#allocation2 + $0x33] sm:$0x1] %v948
      %v951 = vld [vmem:[%s368] sm:$0x3]
      %v953 = vperm.slane %v951, 0
      %v954 = vperm.slane %v951, 1
      %955 = vrot.lane.b32.xlu0 %v953, 126
      %v956 = vpop.permute.xlu0 %955
      %957 = vrot.lane.b32.xlu0 %v954, 126
      %v958 = vpop.permute.xlu0 %957
      %v959 = vsel %vm404, %v956, %v958
      %961 = vst [vmem:[#allocation2 + $0x34] sm:$0x1] %v959
      %v962 = vld [vmem:[%s368] sm:$0x3]
      %v964 = vperm.slane %v962, 0
      %v965 = vperm.slane %v962, 1
      %966 = vrot.lane.b32.xlu0 %v964, 125
      %v967 = vpop.permute.xlu0 %966
      %968 = vrot.lane.b32.xlu0 %v965, 125
      %v969 = vpop.permute.xlu0 %968
      %v970 = vsel %vm416, %v967, %v969
      %972 = vst [vmem:[#allocation2 + $0x35] sm:$0x1] %v970
      %v973 = vld [vmem:[%s368] sm:$0x3]
      %v975 = vperm.slane %v973, 0
      %v976 = vperm.slane %v973, 1
      %977 = vrot.lane.b32.xlu0 %v975, 124
      %v978 = vpop.permute.xlu0 %977
      %979 = vrot.lane.b32.xlu0 %v976, 124
      %v980 = vpop.permute.xlu0 %979
      %v981 = vsel %vm428, %v978, %v980
      %983 = vst [vmem:[#allocation2 + $0x36] sm:$0x1] %v981
      %v984 = vld [vmem:[%s368] sm:$0x3]
      %v986 = vperm.slane %v984, 0
      %v987 = vperm.slane %v984, 1
      %988 = vrot.lane.b32.xlu0 %v986, 116
      %v989 = vpop.permute.xlu0 %988
      %990 = vrot.lane.b32.xlu0 %v987, 116
      %v991 = vpop.permute.xlu0 %990
      %v992 = vsel %vm440, %v989, %v991
      %994 = vst [vmem:[#allocation2 + $0x37] sm:$0x1] %v992
      %v995 = vld [vmem:[%s368] sm:$0x3]
      %v997 = vperm.slane %v995, 0
      %v998 = vperm.slane %v995, 1
      %999 = vrot.lane.b32.xlu0 %v997, 115
      %v1000 = vpop.permute.xlu0 %999
      %1001 = vrot.lane.b32.xlu0 %v998, 115
      %v1002 = vpop.permute.xlu0 %1001
      %v1003 = vsel %vm452, %v1000, %v1002
      %1005 = vst [vmem:[#allocation2 + $0x38] sm:$0x1] %v1003
      %v1006 = vld [vmem:[%s368] sm:$0x3]
      %v1008 = vperm.slane %v1006, 0
      %v1009 = vperm.slane %v1006, 1
      %1010 = vrot.lane.b32.xlu0 %v1008, 114
      %v1011 = vpop.permute.xlu0 %1010
      %1012 = vrot.lane.b32.xlu0 %v1009, 114
      %v1013 = vpop.permute.xlu0 %1012
      %v1014 = vsel %vm464, %v1011, %v1013
      %1016 = vst [vmem:[#allocation2 + $0x39] sm:$0x1] %v1014
      %v1017 = vld [vmem:[%s368] sm:$0x3]
      %v1019 = vperm.slane %v1017, 0
      %v1020 = vperm.slane %v1017, 1
      %1021 = vrot.lane.b32.xlu0 %v1019, 113
      %v1022 = vpop.permute.xlu0 %1021
      %1023 = vrot.lane.b32.xlu0 %v1020, 113
      %v1024 = vpop.permute.xlu0 %1023
      %v1025 = vsel %vm476, %v1022, %v1024
      %1027 = vst [vmem:[#allocation2 + $0x3a] sm:$0x1] %v1025
      %v1028 = vld [vmem:[%s368] sm:$0x3]
      %v1030 = vperm.slane %v1028, 0
      %v1031 = vperm.slane %v1028, 1
      %1032 = vrot.lane.b32.xlu0 %v1030, 112
      %v1033 = vpop.permute.xlu0 %1032
      %1034 = vrot.lane.b32.xlu0 %v1031, 112
      %v1035 = vpop.permute.xlu0 %1034
      %v1036 = vsel %vm488, %v1033, %v1035
      %1038 = vst [vmem:[#allocation2 + $0x3b] sm:$0x1] %v1036
      %v1039 = vld [vmem:[%s368] sm:$0x3]
      %v1041 = vperm.slane %v1039, 0
      %v1042 = vperm.slane %v1039, 1
      %1043 = vrot.lane.b32.xlu0 %v1041, 104
      %v1044 = vpop.permute.xlu0 %1043
      %1045 = vrot.lane.b32.xlu0 %v1042, 104
      %v1046 = vpop.permute.xlu0 %1045
      %v1047 = vsel %vm500, %v1044, %v1046
      %1049 = vst [vmem:[#allocation2 + $0x3c] sm:$0x1] %v1047
      %v1050 = vld [vmem:[%s368] sm:$0x3]
      %v1052 = vperm.slane %v1050, 0
      %v1053 = vperm.slane %v1050, 1
      %1054 = vrot.lane.b32.xlu0 %v1052, 103
      %v1055 = vpop.permute.xlu0 %1054
      %1056 = vrot.lane.b32.xlu0 %v1053, 103
      %v1057 = vpop.permute.xlu0 %1056
      %v1058 = vsel %vm512, %v1055, %v1057
      %1060 = vst [vmem:[#allocation2 + $0x3d] sm:$0x1] %v1058
      %v1061 = vld [vmem:[%s368] sm:$0x3]
      %v1063 = vperm.slane %v1061, 0
      %v1064 = vperm.slane %v1061, 1
      %1065 = vrot.lane.b32.xlu0 %v1063, 102
      %v1066 = vpop.permute.xlu0 %1065
      %1067 = vrot.lane.b32.xlu0 %v1064, 102
      %v1068 = vpop.permute.xlu0 %1067
      %v1069 = vsel %vm524, %v1066, %v1068
      %1071 = vst [vmem:[#allocation2 + $0x3e] sm:$0x1] %v1069
      %v1072 = vld [vmem:[%s368] sm:$0x3]
      %v1074 = vperm.slane %v1072, 0
      %v1075 = vperm.slane %v1072, 1
      %1076 = vrot.lane.b32.xlu0 %v1074, 101
      %v1077 = vpop.permute.xlu0 %1076
      %1078 = vrot.lane.b32.xlu0 %v1075, 101
      %v1079 = vpop.permute.xlu0 %1078
      %v1080 = vsel %vm536, %v1077, %v1079
      %1082 = vst [vmem:[#allocation2 + $0x3f] sm:$0x1] %v1080
      %v1083 = vld [vmem:[%s368] sm:$0x3]
      %v1085 = vperm.slane %v1083, 0
      %v1086 = vperm.slane %v1083, 1
      %1087 = vrot.lane.b32.xlu0 %v1085, 100
      %v1088 = vpop.permute.xlu0 %1087
      %1089 = vrot.lane.b32.xlu0 %v1086, 100
      %v1090 = vpop.permute.xlu0 %1089
      %v1091 = vsel %vm548, %v1088, %v1090
      %1093 = vst [vmem:[#allocation2 + $0x40] sm:$0x1] %v1091
      %v1094 = vld [vmem:[%s368] sm:$0x3]
      %v1096 = vperm.slane %v1094, 0
      %v1097 = vperm.slane %v1094, 1
      %1098 = vrot.lane.b32.xlu0 %v1096, 92
      %v1099 = vpop.permute.xlu0 %1098
      %1100 = vrot.lane.b32.xlu0 %v1097, 92
      %v1101 = vpop.permute.xlu0 %1100
      %v1102 = vsel %vm560, %v1099, %v1101
      %1104 = vst [vmem:[#allocation2 + $0x41] sm:$0x1] %v1102
      %v1105 = vld [vmem:[%s368] sm:$0x3]
      %v1107 = vperm.slane %v1105, 0
      %v1108 = vperm.slane %v1105, 1
      %1109 = vrot.lane.b32.xlu0 %v1107, 91
      %v1110 = vpop.permute.xlu0 %1109
      %1111 = vrot.lane.b32.xlu0 %v1108, 91
      %v1112 = vpop.permute.xlu0 %1111
      %v1113 = vsel %vm572, %v1110, %v1112
      %1115 = vst [vmem:[#allocation2 + $0x42] sm:$0x1] %v1113
      %v1116 = vld [vmem:[%s368] sm:$0x3]
      %v1118 = vperm.slane %v1116, 0
      %v1119 = vperm.slane %v1116, 1
      %1120 = vrot.lane.b32.xlu0 %v1118, 90
      %v1121 = vpop.permute.xlu0 %1120
      %1122 = vrot.lane.b32.xlu0 %v1119, 90
      %v1123 = vpop.permute.xlu0 %1122
      %v1124 = vsel %vm584, %v1121, %v1123
      %1126 = vst [vmem:[#allocation2 + $0x43] sm:$0x1] %v1124
      %v1127 = vld [vmem:[%s368] sm:$0x3]
      %v1129 = vperm.slane %v1127, 0
      %v1130 = vperm.slane %v1127, 1
      %1131 = vrot.lane.b32.xlu0 %v1129, 89
      %v1132 = vpop.permute.xlu0 %1131
      %1133 = vrot.lane.b32.xlu0 %v1130, 89
      %v1134 = vpop.permute.xlu0 %1133
      %v1135 = vsel %vm596, %v1132, %v1134
      %1137 = vst [vmem:[#allocation2 + $0x44] sm:$0x1] %v1135
      %v1138 = vld [vmem:[%s368] sm:$0x3]
      %v1140 = vperm.slane %v1138, 0
      %v1141 = vperm.slane %v1138, 1
      %1142 = vrot.lane.b32.xlu0 %v1140, 88
      %v1143 = vpop.permute.xlu0 %1142
      %1144 = vrot.lane.b32.xlu0 %v1141, 88
      %v1145 = vpop.permute.xlu0 %1144
      %v1146 = vsel %vm608, %v1143, %v1145
      %1148 = vst [vmem:[#allocation2 + $0x45] sm:$0x1] %v1146
      %v1149 = vld [vmem:[%s368] sm:$0x3]
      %v1151 = vperm.slane %v1149, 0
      %v1152 = vperm.slane %v1149, 1
      %1153 = vrot.lane.b32.xlu0 %v1151, 80
      %v1154 = vpop.permute.xlu0 %1153
      %1155 = vrot.lane.b32.xlu0 %v1152, 80
      %v1156 = vpop.permute.xlu0 %1155
      %v1157 = vsel %vm620, %v1154, %v1156
      %1159 = vst [vmem:[#allocation2 + $0x46] sm:$0x1] %v1157
      %v1160 = vld [vmem:[%s368] sm:$0x3]
      %v1162 = vperm.slane %v1160, 0
      %v1163 = vperm.slane %v1160, 1
      %1164 = vrot.lane.b32.xlu0 %v1162, 79
      %v1165 = vpop.permute.xlu0 %1164
      %1166 = vrot.lane.b32.xlu0 %v1163, 79
      %v1167 = vpop.permute.xlu0 %1166
      %v1168 = vsel %vm632, %v1165, %v1167
      %1170 = vst [vmem:[#allocation2 + $0x47] sm:$0x1] %v1168
      %v1171 = vld [vmem:[%s368] sm:$0x3]
      %v1173 = vperm.slane %v1171, 0
      %v1174 = vperm.slane %v1171, 1
      %1175 = vrot.lane.b32.xlu0 %v1173, 78
      %v1176 = vpop.permute.xlu0 %1175
      %1177 = vrot.lane.b32.xlu0 %v1174, 78
      %v1178 = vpop.permute.xlu0 %1177
      %v1179 = vsel %vm644, %v1176, %v1178
      %1181 = vst [vmem:[#allocation2 + $0x48] sm:$0x1] %v1179
      %v1182 = vld [vmem:[%s368] sm:$0x3]
      %v1184 = vperm.slane %v1182, 0
      %v1185 = vperm.slane %v1182, 1
      %1186 = vrot.lane.b32.xlu0 %v1184, 77
      %v1187 = vpop.permute.xlu0 %1186
      %1188 = vrot.lane.b32.xlu0 %v1185, 77
      %v1189 = vpop.permute.xlu0 %1188
      %v1190 = vsel %vm656, %v1187, %v1189
      %1192 = vst [vmem:[#allocation2 + $0x49] sm:$0x1] %v1190
      %v1193 = vld [vmem:[%s368] sm:$0x3]
      %v1195 = vperm.slane %v1193, 0
      %v1196 = vperm.slane %v1193, 1
      %1197 = vrot.lane.b32.xlu0 %v1195, 76
      %v1198 = vpop.permute.xlu0 %1197
      %1199 = vrot.lane.b32.xlu0 %v1196, 76
      %v1200 = vpop.permute.xlu0 %1199
      %v1201 = vsel %vm668, %v1198, %v1200
      %1203 = vst [vmem:[#allocation2 + $0x4a] sm:$0x1] %v1201
      %v1204 = vld [vmem:[%s374] sm:$0x1]
      %1205 = vst [vmem:[#allocation2 + $0x4b] sm:$0x1] %v1204
      %v1206 = vld [vmem:[%s374] sm:$0x3]
      %v1208 = vperm.slane %v1206, 0
      %v1209 = vperm.slane %v1206, 1
      %1210 = vrot.lane.b32.xlu0 %v1208, 127
      %v1211 = vpop.permute.xlu0 %1210
      %1212 = vrot.lane.b32.xlu0 %v1209, 127
      %v1213 = vpop.permute.xlu0 %1212
      %v1214 = vsel %vm392, %v1211, %v1213
      %1216 = vst [vmem:[#allocation2 + $0x4c] sm:$0x1] %v1214
      %v1217 = vld [vmem:[%s374] sm:$0x3]
      %v1219 = vperm.slane %v1217, 0
      %v1220 = vperm.slane %v1217, 1
      %1221 = vrot.lane.b32.xlu0 %v1219, 126
      %v1222 = vpop.permute.xlu0 %1221
      %1223 = vrot.lane.b32.xlu0 %v1220, 126
      %v1224 = vpop.permute.xlu0 %1223
      %v1225 = vsel %vm404, %v1222, %v1224
      %1227 = vst [vmem:[#allocation2 + $0x4d] sm:$0x1] %v1225
      %v1228 = vld [vmem:[%s374] sm:$0x3]
      %v1230 = vperm.slane %v1228, 0
      %v1231 = vperm.slane %v1228, 1
      %1232 = vrot.lane.b32.xlu0 %v1230, 125
      %v1233 = vpop.permute.xlu0 %1232
      %1234 = vrot.lane.b32.xlu0 %v1231, 125
      %v1235 = vpop.permute.xlu0 %1234
      %v1236 = vsel %vm416, %v1233, %v1235
      %1238 = vst [vmem:[#allocation2 + $0x4e] sm:$0x1] %v1236
      %v1239 = vld [vmem:[%s374] sm:$0x3]
      %v1241 = vperm.slane %v1239, 0
      %v1242 = vperm.slane %v1239, 1
      %1243 = vrot.lane.b32.xlu0 %v1241, 124
      %v1244 = vpop.permute.xlu0 %1243
      %1245 = vrot.lane.b32.xlu0 %v1242, 124
      %v1246 = vpop.permute.xlu0 %1245
      %v1247 = vsel %vm428, %v1244, %v1246
      %1249 = vst [vmem:[#allocation2 + $0x4f] sm:$0x1] %v1247
      %v1250 = vld [vmem:[%s374] sm:$0x3]
      %v1252 = vperm.slane %v1250, 0
      %v1253 = vperm.slane %v1250, 1
      %1254 = vrot.lane.b32.xlu0 %v1252, 116
      %v1255 = vpop.permute.xlu0 %1254
      %1256 = vrot.lane.b32.xlu0 %v1253, 116
      %v1257 = vpop.permute.xlu0 %1256
      %v1258 = vsel %vm440, %v1255, %v1257
      %1260 = vst [vmem:[#allocation2 + $0x50] sm:$0x1] %v1258
      %v1261 = vld [vmem:[%s374] sm:$0x3]
      %v1263 = vperm.slane %v1261, 0
      %v1264 = vperm.slane %v1261, 1
      %1265 = vrot.lane.b32.xlu0 %v1263, 115
      %v1266 = vpop.permute.xlu0 %1265
      %1267 = vrot.lane.b32.xlu0 %v1264, 115
      %v1268 = vpop.permute.xlu0 %1267
      %v1269 = vsel %vm452, %v1266, %v1268
      %1271 = vst [vmem:[#allocation2 + $0x51] sm:$0x1] %v1269
      %v1272 = vld [vmem:[%s374] sm:$0x3]
      %v1274 = vperm.slane %v1272, 0
      %v1275 = vperm.slane %v1272, 1
      %1276 = vrot.lane.b32.xlu0 %v1274, 114
      %v1277 = vpop.permute.xlu0 %1276
      %1278 = vrot.lane.b32.xlu0 %v1275, 114
      %v1279 = vpop.permute.xlu0 %1278
      %v1280 = vsel %vm464, %v1277, %v1279
      %1282 = vst [vmem:[#allocation2 + $0x52] sm:$0x1] %v1280
      %v1283 = vld [vmem:[%s374] sm:$0x3]
      %v1285 = vperm.slane %v1283, 0
      %v1286 = vperm.slane %v1283, 1
      %1287 = vrot.lane.b32.xlu0 %v1285, 113
      %v1288 = vpop.permute.xlu0 %1287
      %1289 = vrot.lane.b32.xlu0 %v1286, 113
      %v1290 = vpop.permute.xlu0 %1289
      %v1291 = vsel %vm476, %v1288, %v1290
      %1293 = vst [vmem:[#allocation2 + $0x53] sm:$0x1] %v1291
      %v1294 = vld [vmem:[%s374] sm:$0x3]
      %v1296 = vperm.slane %v1294, 0
      %v1297 = vperm.slane %v1294, 1
      %1298 = vrot.lane.b32.xlu0 %v1296, 112
      %v1299 = vpop.permute.xlu0 %1298
      %1300 = vrot.lane.b32.xlu0 %v1297, 112
      %v1301 = vpop.permute.xlu0 %1300
      %v1302 = vsel %vm488, %v1299, %v1301
      %1304 = vst [vmem:[#allocation2 + $0x54] sm:$0x1] %v1302
      %v1305 = vld [vmem:[%s374] sm:$0x3]
      %v1307 = vperm.slane %v1305, 0
      %v1308 = vperm.slane %v1305, 1
      %1309 = vrot.lane.b32.xlu0 %v1307, 104
      %v1310 = vpop.permute.xlu0 %1309
      %1311 = vrot.lane.b32.xlu0 %v1308, 104
      %v1312 = vpop.permute.xlu0 %1311
      %v1313 = vsel %vm500, %v1310, %v1312
      %1315 = vst [vmem:[#allocation2 + $0x55] sm:$0x1] %v1313
      %v1316 = vld [vmem:[%s374] sm:$0x3]
      %v1318 = vperm.slane %v1316, 0
      %v1319 = vperm.slane %v1316, 1
      %1320 = vrot.lane.b32.xlu0 %v1318, 103
      %v1321 = vpop.permute.xlu0 %1320
      %1322 = vrot.lane.b32.xlu0 %v1319, 103
      %v1323 = vpop.permute.xlu0 %1322
      %v1324 = vsel %vm512, %v1321, %v1323
      %1326 = vst [vmem:[#allocation2 + $0x56] sm:$0x1] %v1324
      %v1327 = vld [vmem:[%s374] sm:$0x3]
      %v1329 = vperm.slane %v1327, 0
      %v1330 = vperm.slane %v1327, 1
      %1331 = vrot.lane.b32.xlu0 %v1329, 102
      %v1332 = vpop.permute.xlu0 %1331
      %1333 = vrot.lane.b32.xlu0 %v1330, 102
      %v1334 = vpop.permute.xlu0 %1333
      %v1335 = vsel %vm524, %v1332, %v1334
      %1337 = vst [vmem:[#allocation2 + $0x57] sm:$0x1] %v1335
      %v1338 = vld [vmem:[%s374] sm:$0x3]
      %v1340 = vperm.slane %v1338, 0
      %v1341 = vperm.slane %v1338, 1
      %1342 = vrot.lane.b32.xlu0 %v1340, 101
      %v1343 = vpop.permute.xlu0 %1342
      %1344 = vrot.lane.b32.xlu0 %v1341, 101
      %v1345 = vpop.permute.xlu0 %1344
      %v1346 = vsel %vm536, %v1343, %v1345
      %1348 = vst [vmem:[#allocation2 + $0x58] sm:$0x1] %v1346
      %v1349 = vld [vmem:[%s374] sm:$0x3]
      %v1351 = vperm.slane %v1349, 0
      %v1352 = vperm.slane %v1349, 1
      %1353 = vrot.lane.b32.xlu0 %v1351, 100
      %v1354 = vpop.permute.xlu0 %1353
      %1355 = vrot.lane.b32.xlu0 %v1352, 100
      %v1356 = vpop.permute.xlu0 %1355
      %v1357 = vsel %vm548, %v1354, %v1356
      %1359 = vst [vmem:[#allocation2 + $0x59] sm:$0x1] %v1357
      %v1360 = vld [vmem:[%s374] sm:$0x3]
      %v1362 = vperm.slane %v1360, 0
      %v1363 = vperm.slane %v1360, 1
      %1364 = vrot.lane.b32.xlu0 %v1362, 92
      %v1365 = vpop.permute.xlu0 %1364
      %1366 = vrot.lane.b32.xlu0 %v1363, 92
      %v1367 = vpop.permute.xlu0 %1366
      %v1368 = vsel %vm560, %v1365, %v1367
      %1370 = vst [vmem:[#allocation2 + $0x5a] sm:$0x1] %v1368
      %v1371 = vld [vmem:[%s374] sm:$0x3]
      %v1373 = vperm.slane %v1371, 0
      %v1374 = vperm.slane %v1371, 1
      %1375 = vrot.lane.b32.xlu0 %v1373, 91
      %v1376 = vpop.permute.xlu0 %1375
      %1377 = vrot.lane.b32.xlu0 %v1374, 91
      %v1378 = vpop.permute.xlu0 %1377
      %v1379 = vsel %vm572, %v1376, %v1378
      %1381 = vst [vmem:[#allocation2 + $0x5b] sm:$0x1] %v1379
      %v1382 = vld [vmem:[%s374] sm:$0x3]
      %v1384 = vperm.slane %v1382, 0
      %v1385 = vperm.slane %v1382, 1
      %1386 = vrot.lane.b32.xlu0 %v1384, 90
      %v1387 = vpop.permute.xlu0 %1386
      %1388 = vrot.lane.b32.xlu0 %v1385, 90
      %v1389 = vpop.permute.xlu0 %1388
      %v1390 = vsel %vm584, %v1387, %v1389
      %1392 = vst [vmem:[#allocation2 + $0x5c] sm:$0x1] %v1390
      %v1393 = vld [vmem:[%s374] sm:$0x3]
      %v1395 = vperm.slane %v1393, 0
      %v1396 = vperm.slane %v1393, 1
      %1397 = vrot.lane.b32.xlu0 %v1395, 89
      %v1398 = vpop.permute.xlu0 %1397
      %1399 = vrot.lane.b32.xlu0 %v1396, 89
      %v1400 = vpop.permute.xlu0 %1399
      %v1401 = vsel %vm596, %v1398, %v1400
      %1403 = vst [vmem:[#allocation2 + $0x5d] sm:$0x1] %v1401
      %v1404 = vld [vmem:[%s374] sm:$0x3]
      %v1406 = vperm.slane %v1404, 0
      %v1407 = vperm.slane %v1404, 1
      %1408 = vrot.lane.b32.xlu0 %v1406, 88
      %v1409 = vpop.permute.xlu0 %1408
      %1410 = vrot.lane.b32.xlu0 %v1407, 88
      %v1411 = vpop.permute.xlu0 %1410
      %v1412 = vsel %vm608, %v1409, %v1411
      %1414 = vst [vmem:[#allocation2 + $0x5e] sm:$0x1] %v1412
      %v1415 = vld [vmem:[%s374] sm:$0x3]
      %v1417 = vperm.slane %v1415, 0
      %v1418 = vperm.slane %v1415, 1
      %1419 = vrot.lane.b32.xlu0 %v1417, 80
      %v1420 = vpop.permute.xlu0 %1419
      %1421 = vrot.lane.b32.xlu0 %v1418, 80
      %v1422 = vpop.permute.xlu0 %1421
      %v1423 = vsel %vm620, %v1420, %v1422
      %1425 = vst [vmem:[#allocation2 + $0x5f] sm:$0x1] %v1423
      %v1426 = vld [vmem:[%s374] sm:$0x3]
      %v1428 = vperm.slane %v1426, 0
      %v1429 = vperm.slane %v1426, 1
      %1430 = vrot.lane.b32.xlu0 %v1428, 79
      %v1431 = vpop.permute.xlu0 %1430
      %1432 = vrot.lane.b32.xlu0 %v1429, 79
      %v1433 = vpop.permute.xlu0 %1432
      %v1434 = vsel %vm632, %v1431, %v1433
      %1436 = vst [vmem:[#allocation2 + $0x60] sm:$0x1] %v1434
      %v1437 = vld [vmem:[%s374] sm:$0x3]
      %v1439 = vperm.slane %v1437, 0
      %v1440 = vperm.slane %v1437, 1
      %1441 = vrot.lane.b32.xlu0 %v1439, 78
      %v1442 = vpop.permute.xlu0 %1441
      %1443 = vrot.lane.b32.xlu0 %v1440, 78
      %v1444 = vpop.permute.xlu0 %1443
      %v1445 = vsel %vm644, %v1442, %v1444
      %1447 = vst [vmem:[#allocation2 + $0x61] sm:$0x1] %v1445
      %v1448 = vld [vmem:[%s374] sm:$0x3]
      %v1450 = vperm.slane %v1448, 0
      %v1451 = vperm.slane %v1448, 1
      %1452 = vrot.lane.b32.xlu0 %v1450, 77
      %v1453 = vpop.permute.xlu0 %1452
      %1454 = vrot.lane.b32.xlu0 %v1451, 77
      %v1455 = vpop.permute.xlu0 %1454
      %v1456 = vsel %vm656, %v1453, %v1455
      %1458 = vst [vmem:[#allocation2 + $0x62] sm:$0x1] %v1456
      %v1459 = vld [vmem:[%s374] sm:$0x3]
      %v1461 = vperm.slane %v1459, 0
      %v1462 = vperm.slane %v1459, 1
      %1463 = vrot.lane.b32.xlu0 %v1461, 76
      %v1464 = vpop.permute.xlu0 %1463
      %1465 = vrot.lane.b32.xlu0 %v1462, 76
      %v1466 = vpop.permute.xlu0 %1465
      %v1467 = vsel %vm668, %v1464, %v1466
      %1469 = vst [vmem:[#allocation2 + $0x63] sm:$0x1] %v1467
      %v1470 = vld [vmem:[%s380] sm:$0x1]
      %1471 = vst [vmem:[#allocation2 + $0x64] sm:$0x1] %v1470
      %v1472 = vld [vmem:[%s380] sm:$0x3]
      %v1474 = vperm.slane %v1472, 0
      %v1475 = vperm.slane %v1472, 1
      %1476 = vrot.lane.b32.xlu0 %v1474, 127
      %v1477 = vpop.permute.xlu0 %1476
      %1478 = vrot.lane.b32.xlu0 %v1475, 127
      %v1479 = vpop.permute.xlu0 %1478
      %v1480 = vsel %vm392, %v1477, %v1479
      %1482 = vst [vmem:[#allocation2 + $0x65] sm:$0x1] %v1480
      %v1483 = vld [vmem:[%s380] sm:$0x3]
      %v1485 = vperm.slane %v1483, 0
      %v1486 = vperm.slane %v1483, 1
      %1487 = vrot.lane.b32.xlu0 %v1485, 126
      %v1488 = vpop.permute.xlu0 %1487
      %1489 = vrot.lane.b32.xlu0 %v1486, 126
      %v1490 = vpop.permute.xlu0 %1489
      %v1491 = vsel %vm404, %v1488, %v1490
      %1493 = vst [vmem:[#allocation2 + $0x66] sm:$0x1] %v1491
      %v1494 = vld [vmem:[%s380] sm:$0x3]
      %v1496 = vperm.slane %v1494, 0
      %v1497 = vperm.slane %v1494, 1
      %1498 = vrot.lane.b32.xlu0 %v1496, 125
      %v1499 = vpop.permute.xlu0 %1498
      %1500 = vrot.lane.b32.xlu0 %v1497, 125
      %v1501 = vpop.permute.xlu0 %1500
      %v1502 = vsel %vm416, %v1499, %v1501
      %1504 = vst [vmem:[#allocation2 + $0x67] sm:$0x1] %v1502
      %v1505 = vld [vmem:[%s380] sm:$0x3]
      %v1507 = vperm.slane %v1505, 0
      %v1508 = vperm.slane %v1505, 1
      %1509 = vrot.lane.b32.xlu0 %v1507, 124
      %v1510 = vpop.permute.xlu0 %1509
      %1511 = vrot.lane.b32.xlu0 %v1508, 124
      %v1512 = vpop.permute.xlu0 %1511
      %v1513 = vsel %vm428, %v1510, %v1512
      %1515 = vst [vmem:[#allocation2 + $0x68] sm:$0x1] %v1513
      %v1516 = vld [vmem:[%s380] sm:$0x3]
      %v1518 = vperm.slane %v1516, 0
      %v1519 = vperm.slane %v1516, 1
      %1520 = vrot.lane.b32.xlu0 %v1518, 116
      %v1521 = vpop.permute.xlu0 %1520
      %1522 = vrot.lane.b32.xlu0 %v1519, 116
      %v1523 = vpop.permute.xlu0 %1522
      %v1524 = vsel %vm440, %v1521, %v1523
      %1526 = vst [vmem:[#allocation2 + $0x69] sm:$0x1] %v1524
      %v1527 = vld [vmem:[%s380] sm:$0x3]
      %v1529 = vperm.slane %v1527, 0
      %v1530 = vperm.slane %v1527, 1
      %1531 = vrot.lane.b32.xlu0 %v1529, 115
      %v1532 = vpop.permute.xlu0 %1531
      %1533 = vrot.lane.b32.xlu0 %v1530, 115
      %v1534 = vpop.permute.xlu0 %1533
      %v1535 = vsel %vm452, %v1532, %v1534
      %1537 = vst [vmem:[#allocation2 + $0x6a] sm:$0x1] %v1535
      %v1538 = vld [vmem:[%s380] sm:$0x3]
      %v1540 = vperm.slane %v1538, 0
      %v1541 = vperm.slane %v1538, 1
      %1542 = vrot.lane.b32.xlu0 %v1540, 114
      %v1543 = vpop.permute.xlu0 %1542
      %1544 = vrot.lane.b32.xlu0 %v1541, 114
      %v1545 = vpop.permute.xlu0 %1544
      %v1546 = vsel %vm464, %v1543, %v1545
      %1548 = vst [vmem:[#allocation2 + $0x6b] sm:$0x1] %v1546
      %v1549 = vld [vmem:[%s380] sm:$0x3]
      %v1551 = vperm.slane %v1549, 0
      %v1552 = vperm.slane %v1549, 1
      %1553 = vrot.lane.b32.xlu0 %v1551, 113
      %v1554 = vpop.permute.xlu0 %1553
      %1555 = vrot.lane.b32.xlu0 %v1552, 113
      %v1556 = vpop.permute.xlu0 %1555
      %v1557 = vsel %vm476, %v1554, %v1556
      %1559 = vst [vmem:[#allocation2 + $0x6c] sm:$0x1] %v1557
      %v1560 = vld [vmem:[%s380] sm:$0x3]
      %v1562 = vperm.slane %v1560, 0
      %v1563 = vperm.slane %v1560, 1
      %1564 = vrot.lane.b32.xlu0 %v1562, 112
      %v1565 = vpop.permute.xlu0 %1564
      %1566 = vrot.lane.b32.xlu0 %v1563, 112
      %v1567 = vpop.permute.xlu0 %1566
      %v1568 = vsel %vm488, %v1565, %v1567
      %1570 = vst [vmem:[#allocation2 + $0x6d] sm:$0x1] %v1568
      %v1571 = vld [vmem:[%s380] sm:$0x3]
      %v1573 = vperm.slane %v1571, 0
      %v1574 = vperm.slane %v1571, 1
      %1575 = vrot.lane.b32.xlu0 %v1573, 104
      %v1576 = vpop.permute.xlu0 %1575
      %1577 = vrot.lane.b32.xlu0 %v1574, 104
      %v1578 = vpop.permute.xlu0 %1577
      %v1579 = vsel %vm500, %v1576, %v1578
      %1581 = vst [vmem:[#allocation2 + $0x6e] sm:$0x1] %v1579
      %v1582 = vld [vmem:[%s380] sm:$0x3]
      %v1584 = vperm.slane %v1582, 0
      %v1585 = vperm.slane %v1582, 1
      %1586 = vrot.lane.b32.xlu0 %v1584, 103
      %v1587 = vpop.permute.xlu0 %1586
      %1588 = vrot.lane.b32.xlu0 %v1585, 103
      %v1589 = vpop.permute.xlu0 %1588
      %v1590 = vsel %vm512, %v1587, %v1589
      %1592 = vst [vmem:[#allocation2 + $0x6f] sm:$0x1] %v1590
      %v1593 = vld [vmem:[%s380] sm:$0x3]
      %v1595 = vperm.slane %v1593, 0
      %v1596 = vperm.slane %v1593, 1
      %1597 = vrot.lane.b32.xlu0 %v1595, 102
      %v1598 = vpop.permute.xlu0 %1597
      %1599 = vrot.lane.b32.xlu0 %v1596, 102
      %v1600 = vpop.permute.xlu0 %1599
      %v1601 = vsel %vm524, %v1598, %v1600
      %1603 = vst [vmem:[#allocation2 + $0x70] sm:$0x1] %v1601
      %v1604 = vld [vmem:[%s380] sm:$0x3]
      %v1606 = vperm.slane %v1604, 0
      %v1607 = vperm.slane %v1604, 1
      %1608 = vrot.lane.b32.xlu0 %v1606, 101
      %v1609 = vpop.permute.xlu0 %1608
      %1610 = vrot.lane.b32.xlu0 %v1607, 101
      %v1611 = vpop.permute.xlu0 %1610
      %v1612 = vsel %vm536, %v1609, %v1611
      %1614 = vst [vmem:[#allocation2 + $0x71] sm:$0x1] %v1612
      %v1615 = vld [vmem:[%s380] sm:$0x3]
      %v1617 = vperm.slane %v1615, 0
      %v1618 = vperm.slane %v1615, 1
      %1619 = vrot.lane.b32.xlu0 %v1617, 100
      %v1620 = vpop.permute.xlu0 %1619
      %1621 = vrot.lane.b32.xlu0 %v1618, 100
      %v1622 = vpop.permute.xlu0 %1621
      %v1623 = vsel %vm548, %v1620, %v1622
      %1625 = vst [vmem:[#allocation2 + $0x72] sm:$0x1] %v1623
      %v1626 = vld [vmem:[%s380] sm:$0x3]
      %v1628 = vperm.slane %v1626, 0
      %v1629 = vperm.slane %v1626, 1
      %1630 = vrot.lane.b32.xlu0 %v1628, 92
      %v1631 = vpop.permute.xlu0 %1630
      %1632 = vrot.lane.b32.xlu0 %v1629, 92
      %v1633 = vpop.permute.xlu0 %1632
      %v1634 = vsel %vm560, %v1631, %v1633
      %1636 = vst [vmem:[#allocation2 + $0x73] sm:$0x1] %v1634
      %v1637 = vld [vmem:[%s380] sm:$0x3]
      %v1639 = vperm.slane %v1637, 0
      %v1640 = vperm.slane %v1637, 1
      %1641 = vrot.lane.b32.xlu0 %v1639, 91
      %v1642 = vpop.permute.xlu0 %1641
      %1643 = vrot.lane.b32.xlu0 %v1640, 91
      %v1644 = vpop.permute.xlu0 %1643
      %v1645 = vsel %vm572, %v1642, %v1644
      %1647 = vst [vmem:[#allocation2 + $0x74] sm:$0x1] %v1645
      %v1648 = vld [vmem:[%s380] sm:$0x3]
      %v1650 = vperm.slane %v1648, 0
      %v1651 = vperm.slane %v1648, 1
      %1652 = vrot.lane.b32.xlu0 %v1650, 90
      %v1653 = vpop.permute.xlu0 %1652
      %1654 = vrot.lane.b32.xlu0 %v1651, 90
      %v1655 = vpop.permute.xlu0 %1654
      %v1656 = vsel %vm584, %v1653, %v1655
      %1658 = vst [vmem:[#allocation2 + $0x75] sm:$0x1] %v1656
      %v1659 = vld [vmem:[%s380] sm:$0x3]
      %v1661 = vperm.slane %v1659, 0
      %v1662 = vperm.slane %v1659, 1
      %1663 = vrot.lane.b32.xlu0 %v1661, 89
      %v1664 = vpop.permute.xlu0 %1663
      %1665 = vrot.lane.b32.xlu0 %v1662, 89
      %v1666 = vpop.permute.xlu0 %1665
      %v1667 = vsel %vm596, %v1664, %v1666
      %1669 = vst [vmem:[#allocation2 + $0x76] sm:$0x1] %v1667
      %v1670 = vld [vmem:[%s380] sm:$0x3]
      %v1672 = vperm.slane %v1670, 0
      %v1673 = vperm.slane %v1670, 1
      %1674 = vrot.lane.b32.xlu0 %v1672, 88
      %v1675 = vpop.permute.xlu0 %1674
      %1676 = vrot.lane.b32.xlu0 %v1673, 88
      %v1677 = vpop.permute.xlu0 %1676
      %v1678 = vsel %vm608, %v1675, %v1677
      %1680 = vst [vmem:[#allocation2 + $0x77] sm:$0x1] %v1678
      %v1681 = vld [vmem:[%s380] sm:$0x3]
      %v1683 = vperm.slane %v1681, 0
      %v1684 = vperm.slane %v1681, 1
      %1685 = vrot.lane.b32.xlu0 %v1683, 80
      %v1686 = vpop.permute.xlu0 %1685
      %1687 = vrot.lane.b32.xlu0 %v1684, 80
      %v1688 = vpop.permute.xlu0 %1687
      %v1689 = vsel %vm620, %v1686, %v1688
      %1691 = vst [vmem:[#allocation2 + $0x78] sm:$0x1] %v1689
      %v1692 = vld [vmem:[%s380] sm:$0x3]
      %v1694 = vperm.slane %v1692, 0
      %v1695 = vperm.slane %v1692, 1
      %1696 = vrot.lane.b32.xlu0 %v1694, 79
      %v1697 = vpop.permute.xlu0 %1696
      %1698 = vrot.lane.b32.xlu0 %v1695, 79
      %v1699 = vpop.permute.xlu0 %1698
      %v1700 = vsel %vm632, %v1697, %v1699
      %1702 = vst [vmem:[#allocation2 + $0x79] sm:$0x1] %v1700
      %v1703 = vld [vmem:[%s380] sm:$0x3]
      %v1705 = vperm.slane %v1703, 0
      %v1706 = vperm.slane %v1703, 1
      %1707 = vrot.lane.b32.xlu0 %v1705, 78
      %v1708 = vpop.permute.xlu0 %1707
      %1709 = vrot.lane.b32.xlu0 %v1706, 78
      %v1710 = vpop.permute.xlu0 %1709
      %v1711 = vsel %vm644, %v1708, %v1710
      %1713 = vst [vmem:[#allocation2 + $0x7a] sm:$0x1] %v1711
      %v1714 = vld [vmem:[%s380] sm:$0x3]
      %v1716 = vperm.slane %v1714, 0
      %v1717 = vperm.slane %v1714, 1
      %1718 = vrot.lane.b32.xlu0 %v1716, 77
      %v1719 = vpop.permute.xlu0 %1718
      %1720 = vrot.lane.b32.xlu0 %v1717, 77
      %v1721 = vpop.permute.xlu0 %1720
      %v1722 = vsel %vm656, %v1719, %v1721
      %1724 = vst [vmem:[#allocation2 + $0x7b] sm:$0x1] %v1722
      %v1725 = vld [vmem:[%s380] sm:$0x3]
      %v1727 = vperm.slane %v1725, 0
      %v1728 = vperm.slane %v1725, 1
      %1729 = vrot.lane.b32.xlu0 %v1727, 76
      %v1730 = vpop.permute.xlu0 %1729
      %1731 = vrot.lane.b32.xlu0 %v1728, 76
      %v1732 = vpop.permute.xlu0 %1731
      %v1733 = vsel %vm668, %v1730, %v1732
      %1735 = vst [vmem:[#allocation2 + $0x7c] sm:$0x1] %v1733
      %1736 = vst [vmem:[#allocation2 + $0x7d] sm:$0x1] 1.0
      %1737 = vst [vmem:[#allocation2 + $0x7e] sm:$0x3] 0.0
      %v1738 = vld [vmem:[%s1] sm:$0xff]
      %v1739 = vld [vmem:[%s1 + $0x8] sm:$0xff]
      %v1740 = vld [vmem:[#allocation2] sm:$0xff]
      %v1741 = vld [vmem:[#allocation2 + $0x8] sm:$0xff]
      %v1742 = vld [vmem:[#allocation2 + $0x10] sm:$0xff]
      %v1743 = vld [vmem:[#allocation2 + $0x18] sm:$0xff]
      %v1744 = vld [vmem:[#allocation2 + $0x20] sm:$0xff]
      %v1745 = vld [vmem:[#allocation2 + $0x28] sm:$0xff]
      %v1746 = vld [vmem:[#allocation2 + $0x30] sm:$0xff]
      %v1747 = vld [vmem:[#allocation2 + $0x38] sm:$0xff]
      %v1748 = vld [vmem:[#allocation2 + $0x40] sm:$0xff]
      %v1749 = vld [vmem:[#allocation2 + $0x48] sm:$0xff]
      %v1750 = vld [vmem:[#allocation2 + $0x50] sm:$0xff]
      %v1751 = vld [vmem:[#allocation2 + $0x58] sm:$0xff]
      %v1752 = vld [vmem:[#allocation2 + $0x60] sm:$0xff]
      %v1753 = vld [vmem:[#allocation2 + $0x68] sm:$0xff]
      %v1754 = vld [vmem:[#allocation2 + $0x70] sm:$0xff]
      %v1755 = vld [vmem:[#allocation2 + $0x78] sm:$0xff]
      %v1756 = vand.u32 %v1755, 4294901760
      %1757 = vmatpush.msra.mxu0 %v1756
      %v1758 = vand.u32 %v1754, 4294901760
      %1759 = vmatpush.msra.mxu0 %v1758
      %v1760 = vand.u32 %v1753, 4294901760
      %1761 = vmatpush.msra.mxu0 %v1760
      %v1762 = vand.u32 %v1752, 4294901760
      %1763 = vmatpush.msra.mxu0 %v1762
      %v1764 = vand.u32 %v1751, 4294901760
      %1765 = vmatpush.msra.mxu0 %v1764
      %v1766 = vand.u32 %v1750, 4294901760
      %1767 = vmatpush.msra.mxu0 %v1766
      %v1768 = vand.u32 %v1749, 4294901760
      %1769 = vmatpush.msra.mxu0 %v1768
      %v1770 = vand.u32 %v1748, 4294901760
      %1771 = vmatpush.msra.mxu0 %v1770
      %v1772 = vand.u32 %v1747, 4294901760
      %1773 = vmatpush.msra.mxu0 %v1772
      %v1774 = vand.u32 %v1746, 4294901760
      %1775 = vmatpush.msra.mxu0 %v1774
      %v1776 = vand.u32 %v1745, 4294901760
      %1777 = vmatpush.msra.mxu0 %v1776
      %v1778 = vand.u32 %v1744, 4294901760
      %1779 = vmatpush.msra.mxu0 %v1778
      %v1780 = vand.u32 %v1743, 4294901760
      %1781 = vmatpush.msra.mxu0 %v1780
      %v1782 = vand.u32 %v1742, 4294901760
      %1783 = vmatpush.msra.mxu0 %v1782
      %v1784 = vand.u32 %v1741, 4294901760
      %1785 = vmatpush.msra.mxu0 %v1784
      %v1786 = vand.u32 %v1740, 4294901760
      %1787 = vmatpush.msra.mxu0 %v1786
      %v1788 = vand.u32 %v1738, 4294901760
      %v1789 = vsub.f32 %v1738, %v1788
      %v1790 = vand.u32 %v1789, 4294901760
      %v1791 = vsub.f32 %v1789, %v1790
      %v1792 = vand.u32 %v1791, 4294901760
      %1793 = vmatmul.f32.gmra.mxu0 %v1792
      %v1794 = vpop.f32.mrf.mxu0
      %v1795 = vadd.f32 0.0, %v1794
      %v1796 = vand.u32 %v1739, 4294901760
      %v1797 = vsub.f32 %v1739, %v1796
      %v1798 = vand.u32 %v1797, 4294901760
      %v1799 = vsub.f32 %v1797, %v1798
      %v1800 = vand.u32 %v1799, 4294901760
      %1801 = vmatmul.f32.gmra.mxu0 %v1800
      %v1802 = vpop.f32.mrf.mxu0
      %v1803 = vadd.f32 0.0, %v1802
      %1804 = vdwg.mxu0
      %v1805 = vand.u32 %v1755, 4294901760
      %v1806 = vsub.f32 %v1755, %v1805
      %v1807 = vand.u32 %v1806, 4294901760
      %v1808 = vsub.f32 %v1806, %v1807
      %v1809 = vand.u32 %v1808, 4294901760
      %1810 = vmatpush.msra.mxu0 %v1809
      %v1811 = vand.u32 %v1754, 4294901760
      %v1812 = vsub.f32 %v1754, %v1811
      %v1813 = vand.u32 %v1812, 4294901760
      %v1814 = vsub.f32 %v1812, %v1813
      %v1815 = vand.u32 %v1814, 4294901760
      %1816 = vmatpush.msra.mxu0 %v1815
      %v1817 = vand.u32 %v1753, 4294901760
      %v1818 = vsub.f32 %v1753, %v1817
      %v1819 = vand.u32 %v1818, 4294901760
      %v1820 = vsub.f32 %v1818, %v1819
      %v1821 = vand.u32 %v1820, 4294901760
      %1822 = vmatpush.msra.mxu0 %v1821
      %v1823 = vand.u32 %v1752, 4294901760
      %v1824 = vsub.f32 %v1752, %v1823
      %v1825 = vand.u32 %v1824, 4294901760
      %v1826 = vsub.f32 %v1824, %v1825
      %v1827 = vand.u32 %v1826, 4294901760
      %1828 = vmatpush.msra.mxu0 %v1827
      %v1829 = vand.u32 %v1751, 4294901760
      %v1830 = vsub.f32 %v1751, %v1829
      %v1831 = vand.u32 %v1830, 4294901760
      %v1832 = vsub.f32 %v1830, %v1831
      %v1833 = vand.u32 %v1832, 4294901760
      %1834 = vmatpush.msra.mxu0 %v1833
      %v1835 = vand.u32 %v1750, 4294901760
      %v1836 = vsub.f32 %v1750, %v1835
      %v1837 = vand.u32 %v1836, 4294901760
      %v1838 = vsub.f32 %v1836, %v1837
      %v1839 = vand.u32 %v1838, 4294901760
      %1840 = vmatpush.msra.mxu0 %v1839
      %v1841 = vand.u32 %v1749, 4294901760
      %v1842 = vsub.f32 %v1749, %v1841
      %v1843 = vand.u32 %v1842, 4294901760
      %v1844 = vsub.f32 %v1842, %v1843
      %v1845 = vand.u32 %v1844, 4294901760
      %1846 = vmatpush.msra.mxu0 %v1845
      %v1847 = vand.u32 %v1748, 4294901760
      %v1848 = vsub.f32 %v1748, %v1847
      %v1849 = vand.u32 %v1848, 4294901760
      %v1850 = vsub.f32 %v1848, %v1849
      %v1851 = vand.u32 %v1850, 4294901760
      %1852 = vmatpush.msra.mxu0 %v1851
      %v1853 = vand.u32 %v1747, 4294901760
      %v1854 = vsub.f32 %v1747, %v1853
      %v1855 = vand.u32 %v1854, 4294901760
      %v1856 = vsub.f32 %v1854, %v1855
      %v1857 = vand.u32 %v1856, 4294901760
      %1858 = vmatpush.msra.mxu0 %v1857
      %v1859 = vand.u32 %v1746, 4294901760
      %v1860 = vsub.f32 %v1746, %v1859
      %v1861 = vand.u32 %v1860, 4294901760
      %v1862 = vsub.f32 %v1860, %v1861
      %v1863 = vand.u32 %v1862, 4294901760
      %1864 = vmatpush.msra.mxu0 %v1863
      %v1865 = vand.u32 %v1745, 4294901760
      %v1866 = vsub.f32 %v1745, %v1865
      %v1867 = vand.u32 %v1866, 4294901760
      %v1868 = vsub.f32 %v1866, %v1867
      %v1869 = vand.u32 %v1868, 4294901760
      %1870 = vmatpush.msra.mxu0 %v1869
      %v1871 = vand.u32 %v1744, 4294901760
      %v1872 = vsub.f32 %v1744, %v1871
      %v1873 = vand.u32 %v1872, 4294901760
      %v1874 = vsub.f32 %v1872, %v1873
      %v1875 = vand.u32 %v1874, 4294901760
      %1876 = vmatpush.msra.mxu0 %v1875
      %v1877 = vand.u32 %v1743, 4294901760
      %v1878 = vsub.f32 %v1743, %v1877
      %v1879 = vand.u32 %v1878, 4294901760
      %v1880 = vsub.f32 %v1878, %v1879
      %v1881 = vand.u32 %v1880, 4294901760
      %1882 = vmatpush.msra.mxu0 %v1881
      %v1883 = vand.u32 %v1742, 4294901760
      %v1884 = vsub.f32 %v1742, %v1883
      %v1885 = vand.u32 %v1884, 4294901760
      %v1886 = vsub.f32 %v1884, %v1885
      %v1887 = vand.u32 %v1886, 4294901760
      %1888 = vmatpush.msra.mxu0 %v1887
      %v1889 = vand.u32 %v1741, 4294901760
      %v1890 = vsub.f32 %v1741, %v1889
      %v1891 = vand.u32 %v1890, 4294901760
      %v1892 = vsub.f32 %v1890, %v1891
      %v1893 = vand.u32 %v1892, 4294901760
      %1894 = vmatpush.msra.mxu0 %v1893
      %v1895 = vand.u32 %v1740, 4294901760
      %v1896 = vsub.f32 %v1740, %v1895
      %v1897 = vand.u32 %v1896, 4294901760
      %v1898 = vsub.f32 %v1896, %v1897
      %v1899 = vand.u32 %v1898, 4294901760
      %1900 = vmatpush.msra.mxu0 %v1899
      %v1901 = vand.u32 %v1738, 4294901760
      %1902 = vmatmul.f32.gmra.mxu0 %v1901
      %v1903 = vpop.f32.mrf.mxu0
      %v1904 = vadd.f32 %v1795, %v1903
      %v1905 = vand.u32 %v1739, 4294901760
      %1906 = vmatmul.f32.gmra.mxu0 %v1905
      %v1907 = vpop.f32.mrf.mxu0
      %v1908 = vadd.f32 %v1803, %v1907
      %1909 = vdwg.mxu0
      %v1910 = vand.u32 %v1755, 4294901760
      %v1911 = vsub.f32 %v1755, %v1910
      %1912 = vmatpush.msra.mxu0 %v1911
      %v1913 = vand.u32 %v1754, 4294901760
      %v1914 = vsub.f32 %v1754, %v1913
      %1915 = vmatpush.msra.mxu0 %v1914
      %v1916 = vand.u32 %v1753, 4294901760
      %v1917 = vsub.f32 %v1753, %v1916
      %1918 = vmatpush.msra.mxu0 %v1917
      %v1919 = vand.u32 %v1752, 4294901760
      %v1920 = vsub.f32 %v1752, %v1919
      %1921 = vmatpush.msra.mxu0 %v1920
      %v1922 = vand.u32 %v1751, 4294901760
      %v1923 = vsub.f32 %v1751, %v1922
      %1924 = vmatpush.msra.mxu0 %v1923
      %v1925 = vand.u32 %v1750, 4294901760
      %v1926 = vsub.f32 %v1750, %v1925
      %1927 = vmatpush.msra.mxu0 %v1926
      %v1928 = vand.u32 %v1749, 4294901760
      %v1929 = vsub.f32 %v1749, %v1928
      %1930 = vmatpush.msra.mxu0 %v1929
      %v1931 = vand.u32 %v1748, 4294901760
      %v1932 = vsub.f32 %v1748, %v1931
      %1933 = vmatpush.msra.mxu0 %v1932
      %v1934 = vand.u32 %v1747, 4294901760
      %v1935 = vsub.f32 %v1747, %v1934
      %1936 = vmatpush.msra.mxu0 %v1935
      %v1937 = vand.u32 %v1746, 4294901760
      %v1938 = vsub.f32 %v1746, %v1937
      %1939 = vmatpush.msra.mxu0 %v1938
      %v1940 = vand.u32 %v1745, 4294901760
      %v1941 = vsub.f32 %v1745, %v1940
      %1942 = vmatpush.msra.mxu0 %v1941
      %v1943 = vand.u32 %v1744, 4294901760
      %v1944 = vsub.f32 %v1744, %v1943
      %1945 = vmatpush.msra.mxu0 %v1944
      %v1946 = vand.u32 %v1743, 4294901760
      %v1947 = vsub.f32 %v1743, %v1946
      %1948 = vmatpush.msra.mxu0 %v1947
      %v1949 = vand.u32 %v1742, 4294901760
      %v1950 = vsub.f32 %v1742, %v1949
      %1951 = vmatpush.msra.mxu0 %v1950
      %v1952 = vand.u32 %v1741, 4294901760
      %v1953 = vsub.f32 %v1741, %v1952
      %1954 = vmatpush.msra.mxu0 %v1953
      %v1955 = vand.u32 %v1740, 4294901760
      %v1956 = vsub.f32 %v1740, %v1955
      %1957 = vmatpush.msra.mxu0 %v1956
      %v1958 = vand.u32 %v1738, 4294901760
      %v1959 = vsub.f32 %v1738, %v1958
      %1960 = vmatmul.f32.gmra.mxu0 %v1959
      %v1961 = vpop.f32.mrf.mxu0
      %v1962 = vadd.f32 %v1904, %v1961
      %v1963 = vand.u32 %v1739, 4294901760
      %v1964 = vsub.f32 %v1739, %v1963
      %1965 = vmatmul.f32.gmra.mxu0 %v1964
      %v1966 = vpop.f32.mrf.mxu0
      %v1967 = vadd.f32 %v1908, %v1966
      %1968 = vdwg.mxu0
      %v1969 = vand.u32 %v1755, 4294901760
      %1970 = vmatpush.msra.mxu0 %v1969
      %v1971 = vand.u32 %v1754, 4294901760
      %1972 = vmatpush.msra.mxu0 %v1971
      %v1973 = vand.u32 %v1753, 4294901760
      %1974 = vmatpush.msra.mxu0 %v1973
      %v1975 = vand.u32 %v1752, 4294901760
      %1976 = vmatpush.msra.mxu0 %v1975
      %v1977 = vand.u32 %v1751, 4294901760
      %1978 = vmatpush.msra.mxu0 %v1977
      %v1979 = vand.u32 %v1750, 4294901760
      %1980 = vmatpush.msra.mxu0 %v1979
      %v1981 = vand.u32 %v1749, 4294901760
      %1982 = vmatpush.msra.mxu0 %v1981
      %v1983 = vand.u32 %v1748, 4294901760
      %1984 = vmatpush.msra.mxu0 %v1983
      %v1985 = vand.u32 %v1747, 4294901760
      %1986 = vmatpush.msra.mxu0 %v1985
      %v1987 = vand.u32 %v1746, 4294901760
      %1988 = vmatpush.msra.mxu0 %v1987
      %v1989 = vand.u32 %v1745, 4294901760
      %1990 = vmatpush.msra.mxu0 %v1989
      %v1991 = vand.u32 %v1744, 4294901760
      %1992 = vmatpush.msra.mxu0 %v1991
      %v1993 = vand.u32 %v1743, 4294901760
      %1994 = vmatpush.msra.mxu0 %v1993
      %v1995 = vand.u32 %v1742, 4294901760
      %1996 = vmatpush.msra.mxu0 %v1995
      %v1997 = vand.u32 %v1741, 4294901760
      %1998 = vmatpush.msra.mxu0 %v1997
      %v1999 = vand.u32 %v1740, 4294901760
      %2000 = vmatpush.msra.mxu0 %v1999
      %v2001 = vand.u32 %v1738, 4294901760
      %v2002 = vsub.f32 %v1738, %v2001
      %v2003 = vand.u32 %v2002, 4294901760
      %2004 = vmatmul.f32.gmra.mxu0 %v2003
      %v2005 = vpop.f32.mrf.mxu0
      %v2006 = vadd.f32 %v1962, %v2005
      %v2007 = vand.u32 %v1739, 4294901760
      %v2008 = vsub.f32 %v1739, %v2007
      %v2009 = vand.u32 %v2008, 4294901760
      %2010 = vmatmul.f32.gmra.mxu0 %v2009
      %v2011 = vpop.f32.mrf.mxu0
      %v2012 = vadd.f32 %v1967, %v2011
      %2013 = vdwg.mxu0
      %v2014 = vand.u32 %v1755, 4294901760
      %v2015 = vsub.f32 %v1755, %v2014
      %v2016 = vand.u32 %v2015, 4294901760
      %2017 = vmatpush.msra.mxu0 %v2016
      %v2018 = vand.u32 %v1754, 4294901760
      %v2019 = vsub.f32 %v1754, %v2018
      %v2020 = vand.u32 %v2019, 4294901760
      %2021 = vmatpush.msra.mxu0 %v2020
      %v2022 = vand.u32 %v1753, 4294901760
      %v2023 = vsub.f32 %v1753, %v2022
      %v2024 = vand.u32 %v2023, 4294901760
      %2025 = vmatpush.msra.mxu0 %v2024
      %v2026 = vand.u32 %v1752, 4294901760
      %v2027 = vsub.f32 %v1752, %v2026
      %v2028 = vand.u32 %v2027, 4294901760
      %2029 = vmatpush.msra.mxu0 %v2028
      %v2030 = vand.u32 %v1751, 4294901760
      %v2031 = vsub.f32 %v1751, %v2030
      %v2032 = vand.u32 %v2031, 4294901760
      %2033 = vmatpush.msra.mxu0 %v2032
      %v2034 = vand.u32 %v1750, 4294901760
      %v2035 = vsub.f32 %v1750, %v2034
      %v2036 = vand.u32 %v2035, 4294901760
      %2037 = vmatpush.msra.mxu0 %v2036
      %v2038 = vand.u32 %v1749, 4294901760
      %v2039 = vsub.f32 %v1749, %v2038
      %v2040 = vand.u32 %v2039, 4294901760
      %2041 = vmatpush.msra.mxu0 %v2040
      %v2042 = vand.u32 %v1748, 4294901760
      %v2043 = vsub.f32 %v1748, %v2042
      %v2044 = vand.u32 %v2043, 4294901760
      %2045 = vmatpush.msra.mxu0 %v2044
      %v2046 = vand.u32 %v1747, 4294901760
      %v2047 = vsub.f32 %v1747, %v2046
      %v2048 = vand.u32 %v2047, 4294901760
      %2049 = vmatpush.msra.mxu0 %v2048
      %v2050 = vand.u32 %v1746, 4294901760
      %v2051 = vsub.f32 %v1746, %v2050
      %v2052 = vand.u32 %v2051, 4294901760
      %2053 = vmatpush.msra.mxu0 %v2052
      %v2054 = vand.u32 %v1745, 4294901760
      %v2055 = vsub.f32 %v1745, %v2054
      %v2056 = vand.u32 %v2055, 4294901760
      %2057 = vmatpush.msra.mxu0 %v2056
      %v2058 = vand.u32 %v1744, 4294901760
      %v2059 = vsub.f32 %v1744, %v2058
      %v2060 = vand.u32 %v2059, 4294901760
      %2061 = vmatpush.msra.mxu0 %v2060
      %v2062 = vand.u32 %v1743, 4294901760
      %v2063 = vsub.f32 %v1743, %v2062
      %v2064 = vand.u32 %v2063, 4294901760
      %2065 = vmatpush.msra.mxu0 %v2064
      %v2066 = vand.u32 %v1742, 4294901760
      %v2067 = vsub.f32 %v1742, %v2066
      %v2068 = vand.u32 %v2067, 4294901760
      %2069 = vmatpush.msra.mxu0 %v2068
      %v2070 = vand.u32 %v1741, 4294901760
      %v2071 = vsub.f32 %v1741, %v2070
      %v2072 = vand.u32 %v2071, 4294901760
      %2073 = vmatpush.msra.mxu0 %v2072
      %v2074 = vand.u32 %v1740, 4294901760
      %v2075 = vsub.f32 %v1740, %v2074
      %v2076 = vand.u32 %v2075, 4294901760
      %2077 = vmatpush.msra.mxu0 %v2076
      %v2078 = vand.u32 %v1738, 4294901760
      %2079 = vmatmul.f32.gmra.mxu0 %v2078
      %v2080 = vpop.f32.mrf.mxu0
      %v2081 = vadd.f32 %v2006, %v2080
      %v2082 = vand.u32 %v1739, 4294901760
      %2083 = vmatmul.f32.gmra.mxu0 %v2082
      %v2084 = vpop.f32.mrf.mxu0
      %v2085 = vadd.f32 %v2012, %v2084
      %2086 = vdwg.mxu0
      %v2087 = vand.u32 %v1755, 4294901760
      %2088 = vmatpush.msra.mxu0 %v2087
      %v2089 = vand.u32 %v1754, 4294901760
      %2090 = vmatpush.msra.mxu0 %v2089
      %v2091 = vand.u32 %v1753, 4294901760
      %2092 = vmatpush.msra.mxu0 %v2091
      %v2093 = vand.u32 %v1752, 4294901760
      %2094 = vmatpush.msra.mxu0 %v2093
      %v2095 = vand.u32 %v1751, 4294901760
      %2096 = vmatpush.msra.mxu0 %v2095
      %v2097 = vand.u32 %v1750, 4294901760
      %2098 = vmatpush.msra.mxu0 %v2097
      %v2099 = vand.u32 %v1749, 4294901760
      %2100 = vmatpush.msra.mxu0 %v2099
      %v2101 = vand.u32 %v1748, 4294901760
      %2102 = vmatpush.msra.mxu0 %v2101
      %v2103 = vand.u32 %v1747, 4294901760
      %2104 = vmatpush.msra.mxu0 %v2103
      %v2105 = vand.u32 %v1746, 4294901760
      %2106 = vmatpush.msra.mxu0 %v2105
      %v2107 = vand.u32 %v1745, 4294901760
      %2108 = vmatpush.msra.mxu0 %v2107
      %v2109 = vand.u32 %v1744, 4294901760
      %2110 = vmatpush.msra.mxu0 %v2109
      %v2111 = vand.u32 %v1743, 4294901760
      %2112 = vmatpush.msra.mxu0 %v2111
      %v2113 = vand.u32 %v1742, 4294901760
      %2114 = vmatpush.msra.mxu0 %v2113
      %v2115 = vand.u32 %v1741, 4294901760
      %2116 = vmatpush.msra.mxu0 %v2115
      %v2117 = vand.u32 %v1740, 4294901760
      %2118 = vmatpush.msra.mxu0 %v2117
      %v2119 = vand.u32 %v1738, 4294901760
      %2120 = vmatmul.f32.gmra.mxu0 %v2119
      %v2121 = vpop.f32.mrf.mxu0
      %v2122 = vadd.f32 %v2081, %v2121
      %v2123 = vand.u32 %v1739, 4294901760
      %2124 = vmatmul.f32.gmra.mxu0 %v2123
      %v2125 = vpop.f32.mrf.mxu0
      %v2126 = vadd.f32 %v2085, %v2125
      %2127 = vdwg.mxu0
      %p2128 = scmp.eq.s32.totalorder %s20, 0
      // Predicated region
      $region49: #{step1_forward.2} parent=47 // pred_check
        %p2129 = pneg %p2128
      $region50: #{step1_forward.2} parent=47 // pred_check_branch
        %2131 = sbr.rel (%p2129) target = $region52
      $region51: #{step1_forward.2} parent=47 // pred_region
        %vm2132 = vcmask 7168
        %2133 = vst.msk [vmem:[%s7] sm:$0xff] %vm2132, 0.0
        %2134 = vst.msk [vmem:[%s7 + $0x8] sm:$0xff] %vm2132, 0.0
        %2135 = vst.msk [vmem:[%s8] sm:$0xff] %vm2132, 0.0
        %2136 = vst.msk [vmem:[%s8 + $0x8] sm:$0xff] %vm2132, 0.0
      $region52: #{step1_forward.2} parent=47 // pred_fallthru
        _
      %v2137 = vld [vmem:[%s0] sm:$0x1]
      %v2139 = vperm.slane %v2137, 0
      %v2141 = vmul.f32 %v2122, %v2139
      %v2142 = vmul.f32 %v2126, %v2139
      %v2143 = vld [vmem:[%s7] sm:$0xff]
      %v2144 = vld [vmem:[%s7 + $0x8] sm:$0xff]
      %2145 = vadd.xlane.f32.xlu0 %v2141
      %v2146 = vpop.xlane.xlu0 %2145
      %2147 = vadd.xlane.f32.xlu0 %v2142
      %v2148 = vpop.xlane.xlu0 %2147
      %v2149 = vadd.f32 %v2143, %v2146
      %v2150 = vadd.f32 %v2144, %v2148
      %vm2151 = vcmask 7168
      %2152 = vst.msk [vmem:[%s7] sm:$0xff] %vm2151, %v2149
      %2153 = vst.msk [vmem:[%s7 + $0x8] sm:$0xff] %vm2151, %v2150
      %v2154 = vld [vmem:[%s8] sm:$0xff]
      %v2155 = vld [vmem:[%s8 + $0x8] sm:$0xff]
      %v2156 = vmul.f32 %v2141, %v2122
      %v2157 = vmul.f32 %v2142, %v2126
      %2158 = vadd.xlane.f32.xlu0 %v2156
      %v2159 = vpop.xlane.xlu0 %2158
      %2160 = vadd.xlane.f32.xlu0 %v2157
      %v2161 = vpop.xlane.xlu0 %2160
      %v2162 = vadd.f32 %v2154, %v2159
      %v2163 = vadd.f32 %v2155, %v2161
      %2164 = vst.msk [vmem:[%s8] sm:$0xff] %vm2151, %v2162
      %2165 = vst.msk [vmem:[%s8 + $0x8] sm:$0xff] %vm2151, %v2163
      // Predicated region
      $region53: #{step1_forward.2} parent=47 // pred_check
        %p2166 = pneg %p213
      $region54: #{step1_forward.2} parent=47 // pred_check_branch
        %2168 = sbr.rel (%p2166) target = $region56
      $region55: #{step1_forward.2} parent=47 // pred_region
        _
      $region56: #{step1_forward.2} parent=47 // pred_fallthru
        _
      // Predicated region
      $region57: #{step1_forward.2} parent=47 // pred_check
        %p2169 = pneg %p234
      $region58: #{step1_forward.2} parent=47 // pred_check_branch
        %2171 = sbr.rel (%p2169) target = $region60
      $region59: #{step1_forward.2} parent=47 // pred_region
        _
      $region60: #{step1_forward.2} parent=47 // pred_fallthru
        _
      // Predicated region
      $region61: #{step1_forward.2} parent=47 // pred_check
        %p2172 = pneg %p213
      $region62: #{step1_forward.2} parent=47 // pred_check_branch
        %2174 = sbr.rel (%p2172) target = $region64
      $region63: #{step1_forward.2} parent=47 // pred_region
        _
      $region64: #{step1_forward.2} parent=47 // pred_fallthru
        _
      // Predicated region
      $region65: #{step1_forward.2} parent=47 // pred_check
        %p2175 = pneg %p234
      $region66: #{step1_forward.2} parent=47 // pred_check_branch
        %2177 = sbr.rel (%p2175) target = $region68
      $region67: #{step1_forward.2} parent=47 // pred_region
        _
      $region68: #{step1_forward.2} parent=47 // pred_fallthru
        _
    $region48: #{step1_forward.2} parent=5 // pred_fallthru
      _
    %p2178 = scmp.le.s32.totalorder 2, %s15
    // Predicated region
    $region69: #{step1_forward.2} parent=5 // pred_check
      %p2179 = pneg %p2178
    $region70: #{step1_forward.2} parent=5 // pred_check_branch
      %2181 = sbr.rel (%p2179) target = $region72
    $region71: #{step1_forward.2} parent=5 // pred_region
      %s2182 = ssub.s32 %s15, 2
    $region72: #{step1_forward.2} parent=5 // pred_fallthru
      _
  $region6: #{step1_forward.2} parent=0 // loop_footer
    %s19 = sadd.s32 1, %s15
  $region7: #{step1_forward.2} parent=0 // loop_footer_branch
    %14 = sbr.rel target = $region3
  $region8: #{step1_forward.2} parent=0 // loop_exit
    _

</llo_original>
